<compile_context>
chip_gen: v7x
topology: tpu7x:2x2x1
jax: 0.10.0
libtpu: 0.0.40
codegen_flags: <defaults>
</compile_context>

<pallas_src>
import functools

import jax
import jax.numpy as jnp
from jax.experimental import pallas as pl
from jax.experimental.pallas import tpu as pltpu

# ---------------- config ----------------
GRID_INPUT_CHANNELS = 4
CONV_FILTERS = (16, 32)
NUM_RESIDUAL_BLOCKS = 1
RESIDUAL_BLOCK_FILTERS = 32
OTHER_NN_INPUT_FEATURES_DIM = 16
FC_DIMS_SHARED = (64,)
POLICY_HEAD_DIMS = (64,)
VALUE_HEAD_DIMS = (64,)
NUM_VALUE_ATOMS = 51
ROWS, COLS, NUM_SHAPE_SLOTS = 8, 8, 3
ACTION_DIM = NUM_SHAPE_SLOTS * ROWS * COLS               # 192
HEAD_OUT = ACTION_DIM + NUM_VALUE_ATOMS                  # 243
HEAD_OUT_PAD = 256                                       # lane-dense padded output slab
FLAT_DIM = RESIDUAL_BLOCK_FILTERS * ROWS * COLS          # 2048
COMBINED_DIM = FLAT_DIM + OTHER_NN_INPUT_FEATURES_DIM    # 2064


# ---------------- fused Pallas kernel ----------------
def _fused_forward_kernel(
    x_ref, other_ref,
    w1_ref, b1_ref, w2_ref, b2_ref,
    wr1_ref, br1_ref, wr2_ref, br2_ref,
    wfc_ref, bfc_ref, wh1_ref, bh1_ref, wh2_ref, bh2_ref,
    out_ref,
    pad4_ref, pad16_ref, pad32_ref, col_ref, comb_ref,
    *, B, H, W):
  """Entire AlphaTriangleNet forward for one small batch, fully in VMEM."""
  HW = H * W
  BHW = B * HW

  # 'SAME' padding in-kernel: zero the padded scratch buffers once; every conv
  # overwrites the interior and the 1-pixel borders stay zero.
  pad4_ref[...] = jnp.zeros_like(pad4_ref)
  pad16_ref[...] = jnp.zeros_like(pad16_ref)
  pad32_ref[...] = jnp.zeros_like(pad32_ref)

  def conv3x3(x_bhwc, pad_ref, w_ref, b_ref, *, relu, residual=None):
    """3x3 / stride 1 / SAME conv as a single im2col matmul over B*H*W rows."""
    cin = x_bhwc.shape[-1]
    pad_ref[:, 1:H + 1, 1:W + 1, :] = x_bhwc            # write interior
    xp = pad_ref[...]                                    # (B, H+2, W+2, cin)
    # im2col: pack the 9 taps into a (B*H*W, 9*cin) patch matrix in VMEM.
    for dh in range(3):
      for dw in range(3):
        k = dh * 3 + dw
        tap = xp[:, dh:dh + H, dw:dw + W, :].reshape(BHW, cin)
        col_ref[:, k * cin:(k + 1) * cin] = tap
    patches = col_ref[:, 0:9 * cin]                      # (BHW, 9*cin)
    y = jnp.dot(patches, w_ref[...], preferred_element_type=jnp.float32)
    y = y + b_ref[...]                                   # (1, cout) broadcast
    if residual is not None:
      y = y + residual
    if relu:
      y = jnp.maximum(y, 0.0)
    return y                                             # (BHW, cout)

  # --- conv body: conv + bias + ReLU per layer ---
  c1 = conv3x3(x_ref[...], pad4_ref, w1_ref, b1_ref, relu=True)            # (BHW, 16)
  c2 = conv3x3(c1.reshape(B, H, W, -1), pad16_ref, w2_ref, b2_ref,
               relu=True)                                                  # (BHW, 32)

  # --- residual block (channels already match -> no 1x1 projection) ---
  r1 = conv3x3(c2.reshape(B, H, W, -1), pad32_ref, wr1_ref, br1_ref,
               relu=True)
  r2 = conv3x3(r1.reshape(B, H, W, -1), pad32_ref, wr2_ref, br2_ref,
               relu=True, residual=c2)                                     # (BHW, 32)

  # --- flatten + concat(other) into one lane-dense (B, 2064) feature row ---
  # The shared-FC weight rows were permuted host-side to this (h, w, c) order,
  # so torch's NCHW res_out.view(B,-1) semantics hold without any runtime
  # transpose.
  C = r2.shape[-1]
  for b in range(B):
    for p in range(HW):
      comb_ref[b:b + 1, p * C:(p + 1) * C] = r2[b * HW + p:b * HW + p + 1, :]
  comb_ref[:, HW * C:HW * C + other_ref.shape[-1]] = other_ref[...]

  # --- shared FC + fused policy/value heads ---
  comb = comb_ref[...]                                                     # (B, 2064)
  h = jnp.dot(comb, wfc_ref[...], preferred_element_type=jnp.float32)
  h = jnp.maximum(h + bfc_ref[...], 0.0)                                   # (B, 64)
  hh = jnp.dot(h, wh1_ref[...], preferred_element_type=jnp.float32)
  hh = jnp.maximum(hh + bh1_ref[...], 0.0)                                 # (B, 128) = [policy | value] hidden
  out = jnp.dot(hh, wh2_ref[...], preferred_element_type=jnp.float32)
  out_ref[...] = out + bh2_ref[...]                                        # (B, 256): [policy 0:192 | value 192:243 | zero pad]


# ---------------- parameters (torch-equivalent layout) ----------------
def init_params(key):
  def nrm(k, shape, scale=0.05):
    return scale * jax.random.normal(k, shape, dtype=jnp.float32)

  keys = iter(jax.random.split(key, 64))
  params = {}

  convs = []
  cin = GRID_INPUT_CHANNELS
  for cout in CONV_FILTERS:
    convs.append((nrm(next(keys), (3, 3, cin, cout)), nrm(next(keys), (cout,))))
    cin = cout
  params["conv_body"] = convs

  res = []
  for _ in range(NUM_RESIDUAL_BLOCKS):
    res.append({
        "w1": nrm(next(keys), (3, 3, cin, cin)),
        "b1": nrm(next(keys), (cin,)),
        "w2": nrm(next(keys), (3, 3, cin, cin)),
        "b2": nrm(next(keys), (cin,)),
    })
  params["res_body"] = res

  combined = FLAT_DIM + OTHER_NN_INPUT_FEATURES_DIM

  def fc_stack(in_dim, dims, out_dim=None):
    layers = []
    d = in_dim
    for hdim in dims:
      layers.append((nrm(next(keys), (d, hdim)), nrm(next(keys), (hdim,))))
      d = hdim
    if out_dim is not None:
      layers.append((nrm(next(keys), (d, out_dim)), nrm(next(keys), (out_dim,))))
    return layers, d

  params["shared_fc"], shared_out = fc_stack(combined, FC_DIMS_SHARED)
  params["policy_head"], _ = fc_stack(shared_out, POLICY_HEAD_DIMS, ACTION_DIM)
  params["value_head"], _ = fc_stack(shared_out, VALUE_HEAD_DIMS, NUM_VALUE_ATOMS)
  return params


def prepare_fused_params(params):
  """One-time host-side repack: im2col conv weights, permuted shared-FC rows,
  concatenated/block-diagonal head weights with lane padding."""
  (w1, b1), (w2, b2) = params["conv_body"]
  blk = params["res_body"][0]
  wfc, bfc = params["shared_fc"][0]
  (wp1, bp1), (wp2, bp2) = params["policy_head"]
  (wv1, bv1), (wv2, bv2) = params["value_head"]

  def conv_w(w):  # (3,3,cin,cout) -> (9*cin, cout), row order (dh, dw, cin)
    return w.reshape(-1, w.shape[-1])

  def row(b):     # bias as (1, N) for broadcast against (M, N)
    return b.reshape(1, -1)

  C, HW = RESIDUAL_BLOCK_FILTERS, ROWS * COLS
  # torch flatten order is (c, h, w); the kernel flattens (h, w, c).
  w_conv_part = jnp.transpose(wfc[:FLAT_DIM].reshape(C, HW, -1), (1, 0, 2))
  w_conv_part = w_conv_part.reshape(HW * C, -1)
  wfc_perm = jnp.concatenate([w_conv_part, wfc[FLAT_DIM:]], axis=0)

  # fused heads: first layer side-by-side, final layer block-diagonal + padded.
  wh1 = jnp.concatenate([wp1, wv1], axis=1)             # (64, 128)
  bh1 = jnp.concatenate([bp1, bv1], axis=0)             # (128,)
  ph = wp1.shape[1]
  wh2 = jnp.zeros((ph + wv1.shape[1], HEAD_OUT_PAD), jnp.float32)
  wh2 = wh2.at[:ph, :ACTION_DIM].set(wp2)
  wh2 = wh2.at[ph:, ACTION_DIM:HEAD_OUT].set(wv2)
  bh2 = jnp.zeros((HEAD_OUT_PAD,), jnp.float32)
  bh2 = bh2.at[:ACTION_DIM].set(bp2)
  bh2 = bh2.at[ACTION_DIM:HEAD_OUT].set(bv2)

  return dict(
      w1=conv_w(w1), b1=row(b1), w2=conv_w(w2), b2=row(b2),
      wr1=conv_w(blk["w1"]), br1=row(blk["b1"]),
      wr2=conv_w(blk["w2"]), br2=row(blk["b2"]),
      wfc=wfc_perm, bfc=row(bfc),
      wh1=wh1, bh1=row(bh1), wh2=wh2, bh2=row(bh2))


# ---------------- model forward (single fused pallas_call) ----------------
def alpha_triangle_net_pallas(fused, grid_state_nchw, other_features):
  B = grid_state_nchw.shape[0]
  x_nhwc = jnp.transpose(grid_state_nchw, (0, 2, 3, 1)).astype(jnp.float32)
  other = other_features.astype(jnp.float32)

  kernel = functools.partial(_fused_forward_kernel, B=B, H=ROWS, W=COLS)
  vmem = pl.BlockSpec(memory_space=pltpu.MemorySpace.VMEM)

  out = pl.pallas_call(
      kernel,
      out_shape=jax.ShapeDtypeStruct((B, HEAD_OUT_PAD), jnp.float32),
      in_specs=[vmem] * 16,
      out_specs=vmem,
      scratch_shapes=[
          pltpu.VMEM((B, ROWS + 2, COLS + 2, GRID_INPUT_CHANNELS), jnp.float32),
          pltpu.VMEM((B, ROWS + 2, COLS + 2, CONV_FILTERS[0]), jnp.float32),
          pltpu.VMEM((B, ROWS + 2, COLS + 2, CONV_FILTERS[1]), jnp.float32),
          pltpu.VMEM((B * ROWS * COLS, 9 * RESIDUAL_BLOCK_FILTERS), jnp.float32),
          pltpu.VMEM((B, COMBINED_DIM), jnp.float32),
      ],
  )(x_nhwc, other,
    fused["w1"], fused["b1"], fused["w2"], fused["b2"],
    fused["wr1"], fused["br1"], fused["wr2"], fused["br2"],
    fused["wfc"], fused["bfc"], fused["wh1"], fused["bh1"],
    fused["wh2"], fused["bh2"])

  policy_logits = out[:, :ACTION_DIM]
  value_logits = out[:, ACTION_DIM:HEAD_OUT]
  return policy_logits, value_logits


# ---------------- pure-JAX reference (for correctness check) ----------------
def _conv_ref(x, w, b, relu, residual=None):
  y = jax.lax.conv_general_dilated(
      x, w, window_strides=(1, 1), padding="SAME",
      dimension_numbers=("NHWC", "HWIO", "NHWC")) + b[None, None, None, :]
  if residual is not None:
    y = y + residual
  return jnp.maximum(y, 0.0) if relu else y


def reference_forward(params, grid_state_nchw, other_features):
  x = jnp.transpose(grid_state_nchw, (0, 2, 3, 1)).astype(jnp.float32)
  for w, b in params["conv_body"]:
    x = _conv_ref(x, w, b, relu=True)
  for blk in params["res_body"]:
    residual = x
    h = _conv_ref(x, blk["w1"], blk["b1"], relu=True)
    x = _conv_ref(h, blk["w2"], blk["b2"], relu=True, residual=residual)
  B = x.shape[0]
  flat = jnp.transpose(x, (0, 3, 1, 2)).reshape(B, -1)       # NCHW flatten (torch)
  h = jnp.concatenate([flat, other_features.astype(jnp.float32)], axis=1)

  def lin(x, w, b, relu):
    y = x @ w + b[None, :]
    return jnp.maximum(y, 0.0) if relu else y

  for w, b in params["shared_fc"]:
    h = lin(h, w, b, True)
  p = h
  for w, b in params["policy_head"][:-1]:
    p = lin(p, w, b, True)
  wp, bp = params["policy_head"][-1]
  policy = lin(p, wp, bp, False)
  v = h
  for w, b in params["value_head"][:-1]:
    v = lin(v, w, b, True)
  wv, bv = params["value_head"][-1]
  value = lin(v, wv, bv, False)
  return policy, value


# ---------------- main ----------------
if __name__ == "__main__":
  key = jax.random.PRNGKey(0)
  k_params, k_grid, k_other = jax.random.split(key, 3)

  params = init_params(k_params)
  fused = prepare_fused_params(params)   # one-time host-side weight repack

  B = 2
  grid_state = jax.random.normal(
      k_grid, (B, GRID_INPUT_CHANNELS, ROWS, COLS), dtype=jnp.float32)
  other_features = jax.random.normal(
      k_other, (B, OTHER_NN_INPUT_FEATURES_DIM), dtype=jnp.float32)

  fwd = jax.jit(alpha_triangle_net_pallas)
  policy_logits, value_logits = fwd(fused, grid_state, other_features)
  policy_logits = jax.block_until_ready(policy_logits)
  value_logits = jax.block_until_ready(value_logits)

  assert policy_logits.shape == (B, ACTION_DIM)
  assert value_logits.shape == (B, NUM_VALUE_ATOMS)

  # correctness check vs. pure-JAX reference
  ref_policy, ref_value = reference_forward(params, grid_state, other_features)
  assert jnp.allclose(policy_logits, ref_policy, atol=1e-4, rtol=1e-4), \
      "policy mismatch"
  assert jnp.allclose(value_logits, ref_value, atol=1e-4, rtol=1e-4), \
      "value mismatch"

  print("KERNEL_OK")
</pallas_src>

<mosaic_0001>
module attributes {stable_mosaic.version = 11 : i64} {
  func.func @_fused_forward_kernel(%arg0: memref<2x8x8x4xf32, #tpu.memory_space<vmem>>, %arg1: memref<2x16xf32, #tpu.memory_space<vmem>>, %arg2: memref<36x16xf32, #tpu.memory_space<vmem>>, %arg3: memref<1x16xf32, #tpu.memory_space<vmem>>, %arg4: memref<144x32xf32, #tpu.memory_space<vmem>>, %arg5: memref<1x32xf32, #tpu.memory_space<vmem>>, %arg6: memref<288x32xf32, #tpu.memory_space<vmem>>, %arg7: memref<1x32xf32, #tpu.memory_space<vmem>>, %arg8: memref<288x32xf32, #tpu.memory_space<vmem>>, %arg9: memref<1x32xf32, #tpu.memory_space<vmem>>, %arg10: memref<2064x64xf32, #tpu.memory_space<vmem>>, %arg11: memref<1x64xf32, #tpu.memory_space<vmem>>, %arg12: memref<64x128xf32, #tpu.memory_space<vmem>>, %arg13: memref<1x128xf32, #tpu.memory_space<vmem>>, %arg14: memref<128x256xf32, #tpu.memory_space<vmem>>, %arg15: memref<1x256xf32, #tpu.memory_space<vmem>>, %arg16: memref<2x256xf32, #tpu.memory_space<vmem>>, %arg17: memref<2x10x10x4xf32, #tpu.memory_space<vmem>>, %arg18: memref<2x10x10x16xf32, #tpu.memory_space<vmem>>, %arg19: memref<2x10x10x32xf32, #tpu.memory_space<vmem>>, %arg20: memref<128x288xf32, #tpu.memory_space<vmem>>, %arg21: memref<2x2064xf32, #tpu.memory_space<vmem>>) attributes {dimension_semantics = [], scalar_prefetch = 0 : i64, scratch_operands = 5 : i64, tpu.core_type = #tpu.core_type<tc>} {
    %cst = arith.constant 0.000000e+00 : f32
    %0 = vector.broadcast %cst : f32 to vector<2x10x10x4xf32>
    %c0 = arith.constant 0 : index
    %c0_0 = arith.constant 0 : index
    %c0_1 = arith.constant 0 : index
    %c0_2 = arith.constant 0 : index
    %1 = vector.load %arg17[%c0, %c0_0, %c0_1, %c0_2] : memref<2x10x10x4xf32, #tpu.memory_space<vmem>>, vector<2x10x10x4xf32>
    tpu.vector_store %arg17[%c0, %c0_0, %c0_1, %c0_2], %0 {strides = array<i32>} : memref<2x10x10x4xf32, #tpu.memory_space<vmem>>, vector<2x10x10x4xf32>,
    %cst_3 = arith.constant 0.000000e+00 : f32
    %2 = vector.broadcast %cst_3 : f32 to vector<2x10x10x16xf32>
    %c0_4 = arith.constant 0 : index
    %c0_5 = arith.constant 0 : index
    %c0_6 = arith.constant 0 : index
    %c0_7 = arith.constant 0 : index
    %3 = vector.load %arg18[%c0_4, %c0_5, %c0_6, %c0_7] : memref<2x10x10x16xf32, #tpu.memory_space<vmem>>, vector<2x10x10x16xf32>
    tpu.vector_store %arg18[%c0_4, %c0_5, %c0_6, %c0_7], %2 {strides = array<i32>} : memref<2x10x10x16xf32, #tpu.memory_space<vmem>>, vector<2x10x10x16xf32>,
    %cst_8 = arith.constant 0.000000e+00 : f32
    %4 = vector.broadcast %cst_8 : f32 to vector<2x10x10x32xf32>
    %c0_9 = arith.constant 0 : index
    %c0_10 = arith.constant 0 : index
    %c0_11 = arith.constant 0 : index
    %c0_12 = arith.constant 0 : index
    %5 = vector.load %arg19[%c0_9, %c0_10, %c0_11, %c0_12] : memref<2x10x10x32xf32, #tpu.memory_space<vmem>>, vector<2x10x10x32xf32>
    tpu.vector_store %arg19[%c0_9, %c0_10, %c0_11, %c0_12], %4 {strides = array<i32>} : memref<2x10x10x32xf32, #tpu.memory_space<vmem>>, vector<2x10x10x32xf32>,
    %c0_13 = arith.constant 0 : index
    %c0_14 = arith.constant 0 : index
    %c0_15 = arith.constant 0 : index
    %c0_16 = arith.constant 0 : index
    %6 = vector.load %arg0[%c0_13, %c0_14, %c0_15, %c0_16] : memref<2x8x8x4xf32, #tpu.memory_space<vmem>>, vector<2x8x8x4xf32>
    %c0_17 = arith.constant 0 : index
    %c1 = arith.constant 1 : index
    %c1_18 = arith.constant 1 : index
    %c0_19 = arith.constant 0 : index
    %7 = vector.load %arg17[%c0_17, %c1, %c1_18, %c0_19] : memref<2x10x10x4xf32, #tpu.memory_space<vmem>>, vector<2x8x8x4xf32>
    tpu.vector_store %arg17[%c0_17, %c1, %c1_18, %c0_19], %6 {strides = array<i32>} : memref<2x10x10x4xf32, #tpu.memory_space<vmem>>, vector<2x8x8x4xf32>,
    %c0_20 = arith.constant 0 : index
    %c0_21 = arith.constant 0 : index
    %c0_22 = arith.constant 0 : index
    %c0_23 = arith.constant 0 : index
    %8 = vector.load %arg17[%c0_20, %c0_21, %c0_22, %c0_23] : memref<2x10x10x4xf32, #tpu.memory_space<vmem>>, vector<2x10x10x4xf32>
    %9 = vector.extract_strided_slice %8 {offsets = [0, 0, 0, 0], sizes = [2, 8, 8, 4], strides = [1, 1, 1, 1]} : vector<2x10x10x4xf32> to vector<2x8x8x4xf32>
    %10 = vector.shape_cast %9 : vector<2x8x8x4xf32> to vector<128x4xf32>
    %c0_24 = arith.constant 0 : index
    %c0_25 = arith.constant 0 : index
    %11 = vector.load %arg20[%c0_24, %c0_25] : memref<128x288xf32, #tpu.memory_space<vmem>>, vector<128x4xf32>
    tpu.vector_store %arg20[%c0_24, %c0_25], %10 {strides = array<i32>} : memref<128x288xf32, #tpu.memory_space<vmem>>, vector<128x4xf32>,
    %12 = vector.extract_strided_slice %8 {offsets = [0, 0, 1, 0], sizes = [2, 8, 8, 4], strides = [1, 1, 1, 1]} : vector<2x10x10x4xf32> to vector<2x8x8x4xf32>
    %13 = vector.shape_cast %12 : vector<2x8x8x4xf32> to vector<128x4xf32>
    %c0_26 = arith.constant 0 : index
    %c4 = arith.constant 4 : index
    %14 = vector.load %arg20[%c0_26, %c4] : memref<128x288xf32, #tpu.memory_space<vmem>>, vector<128x4xf32>
    tpu.vector_store %arg20[%c0_26, %c4], %13 {strides = array<i32>} : memref<128x288xf32, #tpu.memory_space<vmem>>, vector<128x4xf32>,
    %15 = vector.extract_strided_slice %8 {offsets = [0, 0, 2, 0], sizes = [2, 8, 8, 4], strides = [1, 1, 1, 1]} : vector<2x10x10x4xf32> to vector<2x8x8x4xf32>
    %16 = vector.shape_cast %15 : vector<2x8x8x4xf32> to vector<128x4xf32>
    %c0_27 = arith.constant 0 : index
    %c8 = arith.constant 8 : index
    %17 = vector.load %arg20[%c0_27, %c8] : memref<128x288xf32, #tpu.memory_space<vmem>>, vector<128x4xf32>
    tpu.vector_store %arg20[%c0_27, %c8], %16 {strides = array<i32>} : memref<128x288xf32, #tpu.memory_space<vmem>>, vector<128x4xf32>,
    %18 = vector.extract_strided_slice %8 {offsets = [0, 1, 0, 0], sizes = [2, 8, 8, 4], strides = [1, 1, 1, 1]} : vector<2x10x10x4xf32> to vector<2x8x8x4xf32>
    %19 = vector.shape_cast %18 : vector<2x8x8x4xf32> to vector<128x4xf32>
    %c0_28 = arith.constant 0 : index
    %c12 = arith.constant 12 : index
    %20 = vector.load %arg20[%c0_28, %c12] : memref<128x288xf32, #tpu.memory_space<vmem>>, vector<128x4xf32>
    tpu.vector_store %arg20[%c0_28, %c12], %19 {strides = array<i32>} : memref<128x288xf32, #tpu.memory_space<vmem>>, vector<128x4xf32>,
    %21 = vector.extract_strided_slice %8 {offsets = [0, 1, 1, 0], sizes = [2, 8, 8, 4], strides = [1, 1, 1, 1]} : vector<2x10x10x4xf32> to vector<2x8x8x4xf32>
    %22 = vector.shape_cast %21 : vector<2x8x8x4xf32> to vector<128x4xf32>
    %c0_29 = arith.constant 0 : index
    %c16 = arith.constant 16 : index
    %23 = vector.load %arg20[%c0_29, %c16] : memref<128x288xf32, #tpu.memory_space<vmem>>, vector<128x4xf32>
    tpu.vector_store %arg20[%c0_29, %c16], %22 {strides = array<i32>} : memref<128x288xf32, #tpu.memory_space<vmem>>, vector<128x4xf32>,
    %24 = vector.extract_strided_slice %8 {offsets = [0, 1, 2, 0], sizes = [2, 8, 8, 4], strides = [1, 1, 1, 1]} : vector<2x10x10x4xf32> to vector<2x8x8x4xf32>
    %25 = vector.shape_cast %24 : vector<2x8x8x4xf32> to vector<128x4xf32>
    %c0_30 = arith.constant 0 : index
    %c20 = arith.constant 20 : index
    %26 = vector.load %arg20[%c0_30, %c20] : memref<128x288xf32, #tpu.memory_space<vmem>>, vector<128x4xf32>
    tpu.vector_store %arg20[%c0_30, %c20], %25 {strides = array<i32>} : memref<128x288xf32, #tpu.memory_space<vmem>>, vector<128x4xf32>,
    %27 = vector.extract_strided_slice %8 {offsets = [0, 2, 0, 0], sizes = [2, 8, 8, 4], strides = [1, 1, 1, 1]} : vector<2x10x10x4xf32> to vector<2x8x8x4xf32>
    %28 = vector.shape_cast %27 : vector<2x8x8x4xf32> to vector<128x4xf32>
    %c0_31 = arith.constant 0 : index
    %c24 = arith.constant 24 : index
    %29 = vector.load %arg20[%c0_31, %c24] : memref<128x288xf32, #tpu.memory_space<vmem>>, vector<128x4xf32>
    tpu.vector_store %arg20[%c0_31, %c24], %28 {strides = array<i32>} : memref<128x288xf32, #tpu.memory_space<vmem>>, vector<128x4xf32>,
    %30 = vector.extract_strided_slice %8 {offsets = [0, 2, 1, 0], sizes = [2, 8, 8, 4], strides = [1, 1, 1, 1]} : vector<2x10x10x4xf32> to vector<2x8x8x4xf32>
    %31 = vector.shape_cast %30 : vector<2x8x8x4xf32> to vector<128x4xf32>
    %c0_32 = arith.constant 0 : index
    %c28 = arith.constant 28 : index
    %32 = vector.load %arg20[%c0_32, %c28] : memref<128x288xf32, #tpu.memory_space<vmem>>, vector<128x4xf32>
    tpu.vector_store %arg20[%c0_32, %c28], %31 {strides = array<i32>} : memref<128x288xf32, #tpu.memory_space<vmem>>, vector<128x4xf32>,
    %33 = vector.extract_strided_slice %8 {offsets = [0, 2, 2, 0], sizes = [2, 8, 8, 4], strides = [1, 1, 1, 1]} : vector<2x10x10x4xf32> to vector<2x8x8x4xf32>
    %34 = vector.shape_cast %33 : vector<2x8x8x4xf32> to vector<128x4xf32>
    %c0_33 = arith.constant 0 : index
    %c32 = arith.constant 32 : index
    %35 = vector.load %arg20[%c0_33, %c32] : memref<128x288xf32, #tpu.memory_space<vmem>>, vector<128x4xf32>
    tpu.vector_store %arg20[%c0_33, %c32], %34 {strides = array<i32>} : memref<128x288xf32, #tpu.memory_space<vmem>>, vector<128x4xf32>,
    %c0_34 = arith.constant 0 : index
    %c0_35 = arith.constant 0 : index
    %36 = vector.load %arg20[%c0_34, %c0_35] : memref<128x288xf32, #tpu.memory_space<vmem>>, vector<128x36xf32>
    %c0_36 = arith.constant 0 : index
    %c0_37 = arith.constant 0 : index
    %37 = vector.load %arg2[%c0_36, %c0_37] : memref<36x16xf32, #tpu.memory_space<vmem>>, vector<36x16xf32>
    %cst_38 = arith.constant dense<0.000000e+00> : vector<128x16xf32>
    %38 = tpu.matmul %36, %37, %cst_38 {dimension_numbers = #tpu.dot_dimension_numbers<[1], [0], [0], [1], [0, 0, 1, 1], [], []>} : vector<128x36xf32>, vector<36x16xf32>, vector<128x16xf32> -> vector<128x16xf32>
    %c0_39 = arith.constant 0 : index
    %c0_40 = arith.constant 0 : index
    %39 = vector.load %arg3[%c0_39, %c0_40] : memref<1x16xf32, #tpu.memory_space<vmem>>, vector<1x16xf32>
    %40 = vector.broadcast %39 : vector<1x16xf32> to vector<128x16xf32>
    %41 = arith.addf %38, %40 : vector<128x16xf32>
    %cst_41 = arith.constant 0.000000e+00 : f32
    %42 = vector.broadcast %cst_41 : f32 to vector<128x16xf32>
    %43 = arith.maximumf %41, %42 : vector<128x16xf32>
    %44 = vector.shape_cast %43 : vector<128x16xf32> to vector<2x8x8x16xf32>
    %c0_42 = arith.constant 0 : index
    %c1_43 = arith.constant 1 : index
    %c1_44 = arith.constant 1 : index
    %c0_45 = arith.constant 0 : index
    %45 = vector.load %arg18[%c0_42, %c1_43, %c1_44, %c0_45] : memref<2x10x10x16xf32, #tpu.memory_space<vmem>>, vector<2x8x8x16xf32>
    tpu.vector_store %arg18[%c0_42, %c1_43, %c1_44, %c0_45], %44 {strides = array<i32>} : memref<2x10x10x16xf32, #tpu.memory_space<vmem>>, vector<2x8x8x16xf32>,
    %c0_46 = arith.constant 0 : index
    %c0_47 = arith.constant 0 : index
    %c0_48 = arith.constant 0 : index
    %c0_49 = arith.constant 0 : index
    %46 = vector.load %arg18[%c0_46, %c0_47, %c0_48, %c0_49] : memref<2x10x10x16xf32, #tpu.memory_space<vmem>>, vector<2x10x10x16xf32>
    %47 = vector.extract_strided_slice %46 {offsets = [0, 0, 0, 0], sizes = [2, 8, 8, 16], strides = [1, 1, 1, 1]} : vector<2x10x10x16xf32> to vector<2x8x8x16xf32>
    %48 = vector.shape_cast %47 : vector<2x8x8x16xf32> to vector<128x16xf32>
    %c0_50 = arith.constant 0 : index
    %c0_51 = arith.constant 0 : index
    %49 = vector.load %arg20[%c0_50, %c0_51] : memref<128x288xf32, #tpu.memory_space<vmem>>, vector<128x16xf32>
    tpu.vector_store %arg20[%c0_50, %c0_51], %48 {strides = array<i32>} : memref<128x288xf32, #tpu.memory_space<vmem>>, vector<128x16xf32>,
    %50 = vector.extract_strided_slice %46 {offsets = [0, 0, 1, 0], sizes = [2, 8, 8, 16], strides = [1, 1, 1, 1]} : vector<2x10x10x16xf32> to vector<2x8x8x16xf32>
    %51 = vector.shape_cast %50 : vector<2x8x8x16xf32> to vector<128x16xf32>
    %c0_52 = arith.constant 0 : index
    %c16_53 = arith.constant 16 : index
    %52 = vector.load %arg20[%c0_52, %c16_53] : memref<128x288xf32, #tpu.memory_space<vmem>>, vector<128x16xf32>
    tpu.vector_store %arg20[%c0_52, %c16_53], %51 {strides = array<i32>} : memref<128x288xf32, #tpu.memory_space<vmem>>, vector<128x16xf32>,
    %53 = vector.extract_strided_slice %46 {offsets = [0, 0, 2, 0], sizes = [2, 8, 8, 16], strides = [1, 1, 1, 1]} : vector<2x10x10x16xf32> to vector<2x8x8x16xf32>
    %54 = vector.shape_cast %53 : vector<2x8x8x16xf32> to vector<128x16xf32>
    %c0_54 = arith.constant 0 : index
    %c32_55 = arith.constant 32 : index
    %55 = vector.load %arg20[%c0_54, %c32_55] : memref<128x288xf32, #tpu.memory_space<vmem>>, vector<128x16xf32>
    tpu.vector_store %arg20[%c0_54, %c32_55], %54 {strides = array<i32>} : memref<128x288xf32, #tpu.memory_space<vmem>>, vector<128x16xf32>,
    %56 = vector.extract_strided_slice %46 {offsets = [0, 1, 0, 0], sizes = [2, 8, 8, 16], strides = [1, 1, 1, 1]} : vector<2x10x10x16xf32> to vector<2x8x8x16xf32>
    %57 = vector.shape_cast %56 : vector<2x8x8x16xf32> to vector<128x16xf32>
    %c0_56 = arith.constant 0 : index
    %c48 = arith.constant 48 : index
    %58 = vector.load %arg20[%c0_56, %c48] : memref<128x288xf32, #tpu.memory_space<vmem>>, vector<128x16xf32>
    tpu.vector_store %arg20[%c0_56, %c48], %57 {strides = array<i32>} : memref<128x288xf32, #tpu.memory_space<vmem>>, vector<128x16xf32>,
    %59 = vector.extract_strided_slice %46 {offsets = [0, 1, 1, 0], sizes = [2, 8, 8, 16], strides = [1, 1, 1, 1]} : vector<2x10x10x16xf32> to vector<2x8x8x16xf32>
    %60 = vector.shape_cast %59 : vector<2x8x8x16xf32> to vector<128x16xf32>
    %c0_57 = arith.constant 0 : index
    %c64 = arith.constant 64 : index
    %61 = vector.load %arg20[%c0_57, %c64] : memref<128x288xf32, #tpu.memory_space<vmem>>, vector<128x16xf32>
    tpu.vector_store %arg20[%c0_57, %c64], %60 {strides = array<i32>} : memref<128x288xf32, #tpu.memory_space<vmem>>, vector<128x16xf32>,
    %62 = vector.extract_strided_slice %46 {offsets = [0, 1, 2, 0], sizes = [2, 8, 8, 16], strides = [1, 1, 1, 1]} : vector<2x10x10x16xf32> to vector<2x8x8x16xf32>
    %63 = vector.shape_cast %62 : vector<2x8x8x16xf32> to vector<128x16xf32>
    %c0_58 = arith.constant 0 : index
    %c80 = arith.constant 80 : index
    %64 = vector.load %arg20[%c0_58, %c80] : memref<128x288xf32, #tpu.memory_space<vmem>>, vector<128x16xf32>
    tpu.vector_store %arg20[%c0_58, %c80], %63 {strides = array<i32>} : memref<128x288xf32, #tpu.memory_space<vmem>>, vector<128x16xf32>,
    %65 = vector.extract_strided_slice %46 {offsets = [0, 2, 0, 0], sizes = [2, 8, 8, 16], strides = [1, 1, 1, 1]} : vector<2x10x10x16xf32> to vector<2x8x8x16xf32>
    %66 = vector.shape_cast %65 : vector<2x8x8x16xf32> to vector<128x16xf32>
    %c0_59 = arith.constant 0 : index
    %c96 = arith.constant 96 : index
    %67 = vector.load %arg20[%c0_59, %c96] : memref<128x288xf32, #tpu.memory_space<vmem>>, vector<128x16xf32>
    tpu.vector_store %arg20[%c0_59, %c96], %66 {strides = array<i32>} : memref<128x288xf32, #tpu.memory_space<vmem>>, vector<128x16xf32>,
    %68 = vector.extract_strided_slice %46 {offsets = [0, 2, 1, 0], sizes = [2, 8, 8, 16], strides = [1, 1, 1, 1]} : vector<2x10x10x16xf32> to vector<2x8x8x16xf32>
    %69 = vector.shape_cast %68 : vector<2x8x8x16xf32> to vector<128x16xf32>
    %c0_60 = arith.constant 0 : index
    %c112 = arith.constant 112 : index
    %70 = vector.load %arg20[%c0_60, %c112] : memref<128x288xf32, #tpu.memory_space<vmem>>, vector<128x16xf32>
    tpu.vector_store %arg20[%c0_60, %c112], %69 {strides = array<i32>} : memref<128x288xf32, #tpu.memory_space<vmem>>, vector<128x16xf32>,
    %71 = vector.extract_strided_slice %46 {offsets = [0, 2, 2, 0], sizes = [2, 8, 8, 16], strides = [1, 1, 1, 1]} : vector<2x10x10x16xf32> to vector<2x8x8x16xf32>
    %72 = vector.shape_cast %71 : vector<2x8x8x16xf32> to vector<128x16xf32>
    %c0_61 = arith.constant 0 : index
    %c128 = arith.constant 128 : index
    %73 = vector.load %arg20[%c0_61, %c128] : memref<128x288xf32, #tpu.memory_space<vmem>>, vector<128x16xf32>
    tpu.vector_store %arg20[%c0_61, %c128], %72 {strides = array<i32>} : memref<128x288xf32, #tpu.memory_space<vmem>>, vector<128x16xf32>,
    %c0_62 = arith.constant 0 : index
    %c0_63 = arith.constant 0 : index
    %74 = vector.load %arg20[%c0_62, %c0_63] : memref<128x288xf32, #tpu.memory_space<vmem>>, vector<128x144xf32>
    %c0_64 = arith.constant 0 : index
    %c0_65 = arith.constant 0 : index
    %75 = vector.load %arg4[%c0_64, %c0_65] : memref<144x32xf32, #tpu.memory_space<vmem>>, vector<144x32xf32>
    %cst_66 = arith.constant dense<0.000000e+00> : vector<128x32xf32>
    %76 = tpu.matmul %74, %75, %cst_66 {dimension_numbers = #tpu.dot_dimension_numbers<[1], [0], [0], [1], [0, 0, 1, 1], [], []>} : vector<128x144xf32>, vector<144x32xf32>, vector<128x32xf32> -> vector<128x32xf32>
    %c0_67 = arith.constant 0 : index
    %c0_68 = arith.constant 0 : index
    %77 = vector.load %arg5[%c0_67, %c0_68] : memref<1x32xf32, #tpu.memory_space<vmem>>, vector<1x32xf32>
    %78 = vector.broadcast %77 : vector<1x32xf32> to vector<128x32xf32>
    %79 = arith.addf %76, %78 : vector<128x32xf32>
    %cst_69 = arith.constant 0.000000e+00 : f32
    %80 = vector.broadcast %cst_69 : f32 to vector<128x32xf32>
    %81 = arith.maximumf %79, %80 : vector<128x32xf32>
    %82 = vector.shape_cast %81 : vector<128x32xf32> to vector<2x8x8x32xf32>
    %c0_70 = arith.constant 0 : index
    %c1_71 = arith.constant 1 : index
    %c1_72 = arith.constant 1 : index
    %c0_73 = arith.constant 0 : index
    %83 = vector.load %arg19[%c0_70, %c1_71, %c1_72, %c0_73] : memref<2x10x10x32xf32, #tpu.memory_space<vmem>>, vector<2x8x8x32xf32>
    tpu.vector_store %arg19[%c0_70, %c1_71, %c1_72, %c0_73], %82 {strides = array<i32>} : memref<2x10x10x32xf32, #tpu.memory_space<vmem>>, vector<2x8x8x32xf32>,
    %c0_74 = arith.constant 0 : index
    %c0_75 = arith.constant 0 : index
    %c0_76 = arith.constant 0 : index
    %c0_77 = arith.constant 0 : index
    %84 = vector.load %arg19[%c0_74, %c0_75, %c0_76, %c0_77] : memref<2x10x10x32xf32, #tpu.memory_space<vmem>>, vector<2x10x10x32xf32>
    %85 = vector.extract_strided_slice %84 {offsets = [0, 0, 0, 0], sizes = [2, 8, 8, 32], strides = [1, 1, 1, 1]} : vector<2x10x10x32xf32> to vector<2x8x8x32xf32>
    %86 = vector.shape_cast %85 : vector<2x8x8x32xf32> to vector<128x32xf32>
    %c0_78 = arith.constant 0 : index
    %c0_79 = arith.constant 0 : index
    %87 = vector.load %arg20[%c0_78, %c0_79] : memref<128x288xf32, #tpu.memory_space<vmem>>, vector<128x32xf32>
    tpu.vector_store %arg20[%c0_78, %c0_79], %86 {strides = array<i32>} : memref<128x288xf32, #tpu.memory_space<vmem>>, vector<128x32xf32>,
    %88 = vector.extract_strided_slice %84 {offsets = [0, 0, 1, 0], sizes = [2, 8, 8, 32], strides = [1, 1, 1, 1]} : vector<2x10x10x32xf32> to vector<2x8x8x32xf32>
    %89 = vector.shape_cast %88 : vector<2x8x8x32xf32> to vector<128x32xf32>
    %c0_80 = arith.constant 0 : index
    %c32_81 = arith.constant 32 : index
    %90 = vector.load %arg20[%c0_80, %c32_81] : memref<128x288xf32, #tpu.memory_space<vmem>>, vector<128x32xf32>
    tpu.vector_store %arg20[%c0_80, %c32_81], %89 {strides = array<i32>} : memref<128x288xf32, #tpu.memory_space<vmem>>, vector<128x32xf32>,
    %91 = vector.extract_strided_slice %84 {offsets = [0, 0, 2, 0], sizes = [2, 8, 8, 32], strides = [1, 1, 1, 1]} : vector<2x10x10x32xf32> to vector<2x8x8x32xf32>
    %92 = vector.shape_cast %91 : vector<2x8x8x32xf32> to vector<128x32xf32>
    %c0_82 = arith.constant 0 : index
    %c64_83 = arith.constant 64 : index
    %93 = vector.load %arg20[%c0_82, %c64_83] : memref<128x288xf32, #tpu.memory_space<vmem>>, vector<128x32xf32>
    tpu.vector_store %arg20[%c0_82, %c64_83], %92 {strides = array<i32>} : memref<128x288xf32, #tpu.memory_space<vmem>>, vector<128x32xf32>,
    %94 = vector.extract_strided_slice %84 {offsets = [0, 1, 0, 0], sizes = [2, 8, 8, 32], strides = [1, 1, 1, 1]} : vector<2x10x10x32xf32> to vector<2x8x8x32xf32>
    %95 = vector.shape_cast %94 : vector<2x8x8x32xf32> to vector<128x32xf32>
    %c0_84 = arith.constant 0 : index
    %c96_85 = arith.constant 96 : index
    %96 = vector.load %arg20[%c0_84, %c96_85] : memref<128x288xf32, #tpu.memory_space<vmem>>, vector<128x32xf32>
    tpu.vector_store %arg20[%c0_84, %c96_85], %95 {strides = array<i32>} : memref<128x288xf32, #tpu.memory_space<vmem>>, vector<128x32xf32>,
    %97 = vector.extract_strided_slice %84 {offsets = [0, 1, 1, 0], sizes = [2, 8, 8, 32], strides = [1, 1, 1, 1]} : vector<2x10x10x32xf32> to vector<2x8x8x32xf32>
    %98 = vector.shape_cast %97 : vector<2x8x8x32xf32> to vector<128x32xf32>
    %c0_86 = arith.constant 0 : index
    %c128_87 = arith.constant 128 : index
    %99 = vector.load %arg20[%c0_86, %c128_87] : memref<128x288xf32, #tpu.memory_space<vmem>>, vector<128x32xf32>
    tpu.vector_store %arg20[%c0_86, %c128_87], %98 {strides = array<i32>} : memref<128x288xf32, #tpu.memory_space<vmem>>, vector<128x32xf32>,
    %100 = vector.extract_strided_slice %84 {offsets = [0, 1, 2, 0], sizes = [2, 8, 8, 32], strides = [1, 1, 1, 1]} : vector<2x10x10x32xf32> to vector<2x8x8x32xf32>
    %101 = vector.shape_cast %100 : vector<2x8x8x32xf32> to vector<128x32xf32>
    %c0_88 = arith.constant 0 : index
    %c160 = arith.constant 160 : index
    %102 = vector.load %arg20[%c0_88, %c160] : memref<128x288xf32, #tpu.memory_space<vmem>>, vector<128x32xf32>
    tpu.vector_store %arg20[%c0_88, %c160], %101 {strides = array<i32>} : memref<128x288xf32, #tpu.memory_space<vmem>>, vector<128x32xf32>,
    %103 = vector.extract_strided_slice %84 {offsets = [0, 2, 0, 0], sizes = [2, 8, 8, 32], strides = [1, 1, 1, 1]} : vector<2x10x10x32xf32> to vector<2x8x8x32xf32>
    %104 = vector.shape_cast %103 : vector<2x8x8x32xf32> to vector<128x32xf32>
    %c0_89 = arith.constant 0 : index
    %c192 = arith.constant 192 : index
    %105 = vector.load %arg20[%c0_89, %c192] : memref<128x288xf32, #tpu.memory_space<vmem>>, vector<128x32xf32>
    tpu.vector_store %arg20[%c0_89, %c192], %104 {strides = array<i32>} : memref<128x288xf32, #tpu.memory_space<vmem>>, vector<128x32xf32>,
    %106 = vector.extract_strided_slice %84 {offsets = [0, 2, 1, 0], sizes = [2, 8, 8, 32], strides = [1, 1, 1, 1]} : vector<2x10x10x32xf32> to vector<2x8x8x32xf32>
    %107 = vector.shape_cast %106 : vector<2x8x8x32xf32> to vector<128x32xf32>
    %c0_90 = arith.constant 0 : index
    %c224 = arith.constant 224 : index
    %108 = vector.load %arg20[%c0_90, %c224] : memref<128x288xf32, #tpu.memory_space<vmem>>, vector<128x32xf32>
    tpu.vector_store %arg20[%c0_90, %c224], %107 {strides = array<i32>} : memref<128x288xf32, #tpu.memory_space<vmem>>, vector<128x32xf32>,
    %109 = vector.extract_strided_slice %84 {offsets = [0, 2, 2, 0], sizes = [2, 8, 8, 32], strides = [1, 1, 1, 1]} : vector<2x10x10x32xf32> to vector<2x8x8x32xf32>
    %110 = vector.shape_cast %109 : vector<2x8x8x32xf32> to vector<128x32xf32>
    %c0_91 = arith.constant 0 : index
    %c256 = arith.constant 256 : index
    %111 = vector.load %arg20[%c0_91, %c256] : memref<128x288xf32, #tpu.memory_space<vmem>>, vector<128x32xf32>
    tpu.vector_store %arg20[%c0_91, %c256], %110 {strides = array<i32>} : memref<128x288xf32, #tpu.memory_space<vmem>>, vector<128x32xf32>,
    %c0_92 = arith.constant 0 : index
    %c0_93 = arith.constant 0 : index
    %112 = vector.load %arg20[%c0_92, %c0_93] : memref<128x288xf32, #tpu.memory_space<vmem>>, vector<128x288xf32>
    %c0_94 = arith.constant 0 : index
    %c0_95 = arith.constant 0 : index
    %113 = vector.load %arg6[%c0_94, %c0_95] : memref<288x32xf32, #tpu.memory_space<vmem>>, vector<288x32xf32>
    %cst_96 = arith.constant dense<0.000000e+00> : vector<128x32xf32>
    %114 = tpu.matmul %112, %113, %cst_96 {dimension_numbers = #tpu.dot_dimension_numbers<[1], [0], [0], [1], [0, 0, 1, 1], [], []>} : vector<128x288xf32>, vector<288x32xf32>, vector<128x32xf32> -> vector<128x32xf32>
    %c0_97 = arith.constant 0 : index
    %c0_98 = arith.constant 0 : index
    %115 = vector.load %arg7[%c0_97, %c0_98] : memref<1x32xf32, #tpu.memory_space<vmem>>, vector<1x32xf32>
    %116 = vector.broadcast %115 : vector<1x32xf32> to vector<128x32xf32>
    %117 = arith.addf %114, %116 : vector<128x32xf32>
    %cst_99 = arith.constant 0.000000e+00 : f32
    %118 = vector.broadcast %cst_99 : f32 to vector<128x32xf32>
    %119 = arith.maximumf %117, %118 : vector<128x32xf32>
    %120 = vector.shape_cast %119 : vector<128x32xf32> to vector<2x8x8x32xf32>
    %c0_100 = arith.constant 0 : index
    %c1_101 = arith.constant 1 : index
    %c1_102 = arith.constant 1 : index
    %c0_103 = arith.constant 0 : index
    %121 = vector.load %arg19[%c0_100, %c1_101, %c1_102, %c0_103] : memref<2x10x10x32xf32, #tpu.memory_space<vmem>>, vector<2x8x8x32xf32>
    tpu.vector_store %arg19[%c0_100, %c1_101, %c1_102, %c0_103], %120 {strides = array<i32>} : memref<2x10x10x32xf32, #tpu.memory_space<vmem>>, vector<2x8x8x32xf32>,
    %c0_104 = arith.constant 0 : index
    %c0_105 = arith.constant 0 : index
    %c0_106 = arith.constant 0 : index
    %c0_107 = arith.constant 0 : index
    %122 = vector.load %arg19[%c0_104, %c0_105, %c0_106, %c0_107] : memref<2x10x10x32xf32, #tpu.memory_space<vmem>>, vector<2x10x10x32xf32>
    %123 = vector.extract_strided_slice %122 {offsets = [0, 0, 0, 0], sizes = [2, 8, 8, 32], strides = [1, 1, 1, 1]} : vector<2x10x10x32xf32> to vector<2x8x8x32xf32>
    %124 = vector.shape_cast %123 : vector<2x8x8x32xf32> to vector<128x32xf32>
    %c0_108 = arith.constant 0 : index
    %c0_109 = arith.constant 0 : index
    %125 = vector.load %arg20[%c0_108, %c0_109] : memref<128x288xf32, #tpu.memory_space<vmem>>, vector<128x32xf32>
    tpu.vector_store %arg20[%c0_108, %c0_109], %124 {strides = array<i32>} : memref<128x288xf32, #tpu.memory_space<vmem>>, vector<128x32xf32>,
    %126 = vector.extract_strided_slice %122 {offsets = [0, 0, 1, 0], sizes = [2, 8, 8, 32], strides = [1, 1, 1, 1]} : vector<2x10x10x32xf32> to vector<2x8x8x32xf32>
    %127 = vector.shape_cast %126 : vector<2x8x8x32xf32> to vector<128x32xf32>
    %c0_110 = arith.constant 0 : index
    %c32_111 = arith.constant 32 : index
    %128 = vector.load %arg20[%c0_110, %c32_111] : memref<128x288xf32, #tpu.memory_space<vmem>>, vector<128x32xf32>
    tpu.vector_store %arg20[%c0_110, %c32_111], %127 {strides = array<i32>} : memref<128x288xf32, #tpu.memory_space<vmem>>, vector<128x32xf32>,
    %129 = vector.extract_strided_slice %122 {offsets = [0, 0, 2, 0], sizes = [2, 8, 8, 32], strides = [1, 1, 1, 1]} : vector<2x10x10x32xf32> to vector<2x8x8x32xf32>
    %130 = vector.shape_cast %129 : vector<2x8x8x32xf32> to vector<128x32xf32>
    %c0_112 = arith.constant 0 : index
    %c64_113 = arith.constant 64 : index
    %131 = vector.load %arg20[%c0_112, %c64_113] : memref<128x288xf32, #tpu.memory_space<vmem>>, vector<128x32xf32>
    tpu.vector_store %arg20[%c0_112, %c64_113], %130 {strides = array<i32>} : memref<128x288xf32, #tpu.memory_space<vmem>>, vector<128x32xf32>,
    %132 = vector.extract_strided_slice %122 {offsets = [0, 1, 0, 0], sizes = [2, 8, 8, 32], strides = [1, 1, 1, 1]} : vector<2x10x10x32xf32> to vector<2x8x8x32xf32>
    %133 = vector.shape_cast %132 : vector<2x8x8x32xf32> to vector<128x32xf32>
    %c0_114 = arith.constant 0 : index
    %c96_115 = arith.constant 96 : index
    %134 = vector.load %arg20[%c0_114, %c96_115] : memref<128x288xf32, #tpu.memory_space<vmem>>, vector<128x32xf32>
    tpu.vector_store %arg20[%c0_114, %c96_115], %133 {strides = array<i32>} : memref<128x288xf32, #tpu.memory_space<vmem>>, vector<128x32xf32>,
    %135 = vector.extract_strided_slice %122 {offsets = [0, 1, 1, 0], sizes = [2, 8, 8, 32], strides = [1, 1, 1, 1]} : vector<2x10x10x32xf32> to vector<2x8x8x32xf32>
    %136 = vector.shape_cast %135 : vector<2x8x8x32xf32> to vector<128x32xf32>
    %c0_116 = arith.constant 0 : index
    %c128_117 = arith.constant 128 : index
    %137 = vector.load %arg20[%c0_116, %c128_117] : memref<128x288xf32, #tpu.memory_space<vmem>>, vector<128x32xf32>
    tpu.vector_store %arg20[%c0_116, %c128_117], %136 {strides = array<i32>} : memref<128x288xf32, #tpu.memory_space<vmem>>, vector<128x32xf32>,
    %138 = vector.extract_strided_slice %122 {offsets = [0, 1, 2, 0], sizes = [2, 8, 8, 32], strides = [1, 1, 1, 1]} : vector<2x10x10x32xf32> to vector<2x8x8x32xf32>
    %139 = vector.shape_cast %138 : vector<2x8x8x32xf32> to vector<128x32xf32>
    %c0_118 = arith.constant 0 : index
    %c160_119 = arith.constant 160 : index
    %140 = vector.load %arg20[%c0_118, %c160_119] : memref<128x288xf32, #tpu.memory_space<vmem>>, vector<128x32xf32>
    tpu.vector_store %arg20[%c0_118, %c160_119], %139 {strides = array<i32>} : memref<128x288xf32, #tpu.memory_space<vmem>>, vector<128x32xf32>,
    %141 = vector.extract_strided_slice %122 {offsets = [0, 2, 0, 0], sizes = [2, 8, 8, 32], strides = [1, 1, 1, 1]} : vector<2x10x10x32xf32> to vector<2x8x8x32xf32>
    %142 = vector.shape_cast %141 : vector<2x8x8x32xf32> to vector<128x32xf32>
    %c0_120 = arith.constant 0 : index
    %c192_121 = arith.constant 192 : index
    %143 = vector.load %arg20[%c0_120, %c192_121] : memref<128x288xf32, #tpu.memory_space<vmem>>, vector<128x32xf32>
    tpu.vector_store %arg20[%c0_120, %c192_121], %142 {strides = array<i32>} : memref<128x288xf32, #tpu.memory_space<vmem>>, vector<128x32xf32>,
    %144 = vector.extract_strided_slice %122 {offsets = [0, 2, 1, 0], sizes = [2, 8, 8, 32], strides = [1, 1, 1, 1]} : vector<2x10x10x32xf32> to vector<2x8x8x32xf32>
    %145 = vector.shape_cast %144 : vector<2x8x8x32xf32> to vector<128x32xf32>
    %c0_122 = arith.constant 0 : index
    %c224_123 = arith.constant 224 : index
    %146 = vector.load %arg20[%c0_122, %c224_123] : memref<128x288xf32, #tpu.memory_space<vmem>>, vector<128x32xf32>
    tpu.vector_store %arg20[%c0_122, %c224_123], %145 {strides = array<i32>} : memref<128x288xf32, #tpu.memory_space<vmem>>, vector<128x32xf32>,
    %147 = vector.extract_strided_slice %122 {offsets = [0, 2, 2, 0], sizes = [2, 8, 8, 32], strides = [1, 1, 1, 1]} : vector<2x10x10x32xf32> to vector<2x8x8x32xf32>
    %148 = vector.shape_cast %147 : vector<2x8x8x32xf32> to vector<128x32xf32>
    %c0_124 = arith.constant 0 : index
    %c256_125 = arith.constant 256 : index
    %149 = vector.load %arg20[%c0_124, %c256_125] : memref<128x288xf32, #tpu.memory_space<vmem>>, vector<128x32xf32>
    tpu.vector_store %arg20[%c0_124, %c256_125], %148 {strides = array<i32>} : memref<128x288xf32, #tpu.memory_space<vmem>>, vector<128x32xf32>,
    %c0_126 = arith.constant 0 : index
    %c0_127 = arith.constant 0 : index
    %150 = vector.load %arg20[%c0_126, %c0_127] : memref<128x288xf32, #tpu.memory_space<vmem>>, vector<128x288xf32>
    %c0_128 = arith.constant 0 : index
    %c0_129 = arith.constant 0 : index
    %151 = vector.load %arg8[%c0_128, %c0_129] : memref<288x32xf32, #tpu.memory_space<vmem>>, vector<288x32xf32>
    %cst_130 = arith.constant dense<0.000000e+00> : vector<128x32xf32>
    %152 = tpu.matmul %150, %151, %cst_130 {dimension_numbers = #tpu.dot_dimension_numbers<[1], [0], [0], [1], [0, 0, 1, 1], [], []>} : vector<128x288xf32>, vector<288x32xf32>, vector<128x32xf32> -> vector<128x32xf32>
    %c0_131 = arith.constant 0 : index
    %c0_132 = arith.constant 0 : index
    %153 = vector.load %arg9[%c0_131, %c0_132] : memref<1x32xf32, #tpu.memory_space<vmem>>, vector<1x32xf32>
    %154 = vector.broadcast %153 : vector<1x32xf32> to vector<128x32xf32>
    %155 = arith.addf %152, %154 : vector<128x32xf32>
    %156 = arith.addf %155, %81 : vector<128x32xf32>
    %cst_133 = arith.constant 0.000000e+00 : f32
    %157 = vector.broadcast %cst_133 : f32 to vector<128x32xf32>
    %158 = arith.maximumf %156, %157 : vector<128x32xf32>
    %159 = vector.extract_strided_slice %158 {offsets = [0, 0], sizes = [1, 32], strides = [1, 1]} : vector<128x32xf32> to vector<1x32xf32>
    %c0_134 = arith.constant 0 : index
    %c0_135 = arith.constant 0 : index
    %160 = vector.load %arg21[%c0_134, %c0_135] : memref<2x2064xf32, #tpu.memory_space<vmem>>, vector<1x32xf32>
    tpu.vector_store %arg21[%c0_134, %c0_135], %159 {strides = array<i32>} : memref<2x2064xf32, #tpu.memory_space<vmem>>, vector<1x32xf32>,
    %161 = vector.extract_strided_slice %158 {offsets = [1, 0], sizes = [1, 32], strides = [1, 1]} : vector<128x32xf32> to vector<1x32xf32>
    %c0_136 = arith.constant 0 : index
    %c32_137 = arith.constant 32 : index
    %162 = vector.load %arg21[%c0_136, %c32_137] : memref<2x2064xf32, #tpu.memory_space<vmem>>, vector<1x32xf32>
    tpu.vector_store %arg21[%c0_136, %c32_137], %161 {strides = array<i32>} : memref<2x2064xf32, #tpu.memory_space<vmem>>, vector<1x32xf32>,
    %163 = vector.extract_strided_slice %158 {offsets = [2, 0], sizes = [1, 32], strides = [1, 1]} : vector<128x32xf32> to vector<1x32xf32>
    %c0_138 = arith.constant 0 : index
    %c64_139 = arith.constant 64 : index
    %164 = vector.load %arg21[%c0_138, %c64_139] : memref<2x2064xf32, #tpu.memory_space<vmem>>, vector<1x32xf32>
    tpu.vector_store %arg21[%c0_138, %c64_139], %163 {strides = array<i32>} : memref<2x2064xf32, #tpu.memory_space<vmem>>, vector<1x32xf32>,
    %165 = vector.extract_strided_slice %158 {offsets = [3, 0], sizes = [1, 32], strides = [1, 1]} : vector<128x32xf32> to vector<1x32xf32>
    %c0_140 = arith.constant 0 : index
    %c96_141 = arith.constant 96 : index
    %166 = vector.load %arg21[%c0_140, %c96_141] : memref<2x2064xf32, #tpu.memory_space<vmem>>, vector<1x32xf32>
    tpu.vector_store %arg21[%c0_140, %c96_141], %165 {strides = array<i32>} : memref<2x2064xf32, #tpu.memory_space<vmem>>, vector<1x32xf32>,
    %167 = vector.extract_strided_slice %158 {offsets = [4, 0], sizes = [1, 32], strides = [1, 1]} : vector<128x32xf32> to vector<1x32xf32>
    %c0_142 = arith.constant 0 : index
    %c128_143 = arith.constant 128 : index
    %168 = vector.load %arg21[%c0_142, %c128_143] : memref<2x2064xf32, #tpu.memory_space<vmem>>, vector<1x32xf32>
    tpu.vector_store %arg21[%c0_142, %c128_143], %167 {strides = array<i32>} : memref<2x2064xf32, #tpu.memory_space<vmem>>, vector<1x32xf32>,
    %169 = vector.extract_strided_slice %158 {offsets = [5, 0], sizes = [1, 32], strides = [1, 1]} : vector<128x32xf32> to vector<1x32xf32>
    %c0_144 = arith.constant 0 : index
    %c160_145 = arith.constant 160 : index
    %170 = vector.load %arg21[%c0_144, %c160_145] : memref<2x2064xf32, #tpu.memory_space<vmem>>, vector<1x32xf32>
    tpu.vector_store %arg21[%c0_144, %c160_145], %169 {strides = array<i32>} : memref<2x2064xf32, #tpu.memory_space<vmem>>, vector<1x32xf32>,
    %171 = vector.extract_strided_slice %158 {offsets = [6, 0], sizes = [1, 32], strides = [1, 1]} : vector<128x32xf32> to vector<1x32xf32>
    %c0_146 = arith.constant 0 : index
    %c192_147 = arith.constant 192 : index
    %172 = vector.load %arg21[%c0_146, %c192_147] : memref<2x2064xf32, #tpu.memory_space<vmem>>, vector<1x32xf32>
    tpu.vector_store %arg21[%c0_146, %c192_147], %171 {strides = array<i32>} : memref<2x2064xf32, #tpu.memory_space<vmem>>, vector<1x32xf32>,
    %173 = vector.extract_strided_slice %158 {offsets = [7, 0], sizes = [1, 32], strides = [1, 1]} : vector<128x32xf32> to vector<1x32xf32>
    %c0_148 = arith.constant 0 : index
    %c224_149 = arith.constant 224 : index
    %174 = vector.load %arg21[%c0_148, %c224_149] : memref<2x2064xf32, #tpu.memory_space<vmem>>, vector<1x32xf32>
    tpu.vector_store %arg21[%c0_148, %c224_149], %173 {strides = array<i32>} : memref<2x2064xf32, #tpu.memory_space<vmem>>, vector<1x32xf32>,
    %175 = vector.extract_strided_slice %158 {offsets = [8, 0], sizes = [1, 32], strides = [1, 1]} : vector<128x32xf32> to vector<1x32xf32>
    %c0_150 = arith.constant 0 : index
    %c256_151 = arith.constant 256 : index
    %176 = vector.load %arg21[%c0_150, %c256_151] : memref<2x2064xf32, #tpu.memory_space<vmem>>, vector<1x32xf32>
    tpu.vector_store %arg21[%c0_150, %c256_151], %175 {strides = array<i32>} : memref<2x2064xf32, #tpu.memory_space<vmem>>, vector<1x32xf32>,
    %177 = vector.extract_strided_slice %158 {offsets = [9, 0], sizes = [1, 32], strides = [1, 1]} : vector<128x32xf32> to vector<1x32xf32>
    %c0_152 = arith.constant 0 : index
    %c288 = arith.constant 288 : index
    %178 = vector.load %arg21[%c0_152, %c288] : memref<2x2064xf32, #tpu.memory_space<vmem>>, vector<1x32xf32>
    tpu.vector_store %arg21[%c0_152, %c288], %177 {strides = array<i32>} : memref<2x2064xf32, #tpu.memory_space<vmem>>, vector<1x32xf32>,
    %179 = vector.extract_strided_slice %158 {offsets = [10, 0], sizes = [1, 32], strides = [1, 1]} : vector<128x32xf32> to vector<1x32xf32>
    %c0_153 = arith.constant 0 : index
    %c320 = arith.constant 320 : index
    %180 = vector.load %arg21[%c0_153, %c320] : memref<2x2064xf32, #tpu.memory_space<vmem>>, vector<1x32xf32>
    tpu.vector_store %arg21[%c0_153, %c320], %179 {strides = array<i32>} : memref<2x2064xf32, #tpu.memory_space<vmem>>, vector<1x32xf32>,
    %181 = vector.extract_strided_slice %158 {offsets = [11, 0], sizes = [1, 32], strides = [1, 1]} : vector<128x32xf32> to vector<1x32xf32>
    %c0_154 = arith.constant 0 : index
    %c352 = arith.constant 352 : index
    %182 = vector.load %arg21[%c0_154, %c352] : memref<2x2064xf32, #tpu.memory_space<vmem>>, vector<1x32xf32>
    tpu.vector_store %arg21[%c0_154, %c352], %181 {strides = array<i32>} : memref<2x2064xf32, #tpu.memory_space<vmem>>, vector<1x32xf32>,
    %183 = vector.extract_strided_slice %158 {offsets = [12, 0], sizes = [1, 32], strides = [1, 1]} : vector<128x32xf32> to vector<1x32xf32>
    %c0_155 = arith.constant 0 : index
    %c384 = arith.constant 384 : index
    %184 = vector.load %arg21[%c0_155, %c384] : memref<2x2064xf32, #tpu.memory_space<vmem>>, vector<1x32xf32>
    tpu.vector_store %arg21[%c0_155, %c384], %183 {strides = array<i32>} : memref<2x2064xf32, #tpu.memory_space<vmem>>, vector<1x32xf32>,
    %185 = vector.extract_strided_slice %158 {offsets = [13, 0], sizes = [1, 32], strides = [1, 1]} : vector<128x32xf32> to vector<1x32xf32>
    %c0_156 = arith.constant 0 : index
    %c416 = arith.constant 416 : index
    %186 = vector.load %arg21[%c0_156, %c416] : memref<2x2064xf32, #tpu.memory_space<vmem>>, vector<1x32xf32>
    tpu.vector_store %arg21[%c0_156, %c416], %185 {strides = array<i32>} : memref<2x2064xf32, #tpu.memory_space<vmem>>, vector<1x32xf32>,
    %187 = vector.extract_strided_slice %158 {offsets = [14, 0], sizes = [1, 32], strides = [1, 1]} : vector<128x32xf32> to vector<1x32xf32>
    %c0_157 = arith.constant 0 : index
    %c448 = arith.constant 448 : index
    %188 = vector.load %arg21[%c0_157, %c448] : memref<2x2064xf32, #tpu.memory_space<vmem>>, vector<1x32xf32>
    tpu.vector_store %arg21[%c0_157, %c448], %187 {strides = array<i32>} : memref<2x2064xf32, #tpu.memory_space<vmem>>, vector<1x32xf32>,
    %189 = vector.extract_strided_slice %158 {offsets = [15, 0], sizes = [1, 32], strides = [1, 1]} : vector<128x32xf32> to vector<1x32xf32>
    %c0_158 = arith.constant 0 : index
    %c480 = arith.constant 480 : index
    %190 = vector.load %arg21[%c0_158, %c480] : memref<2x2064xf32, #tpu.memory_space<vmem>>, vector<1x32xf32>
    tpu.vector_store %arg21[%c0_158, %c480], %189 {strides = array<i32>} : memref<2x2064xf32, #tpu.memory_space<vmem>>, vector<1x32xf32>,
    %191 = vector.extract_strided_slice %158 {offsets = [16, 0], sizes = [1, 32], strides = [1, 1]} : vector<128x32xf32> to vector<1x32xf32>
    %c0_159 = arith.constant 0 : index
    %c512 = arith.constant 512 : index
    %192 = vector.load %arg21[%c0_159, %c512] : memref<2x2064xf32, #tpu.memory_space<vmem>>, vector<1x32xf32>
    tpu.vector_store %arg21[%c0_159, %c512], %191 {strides = array<i32>} : memref<2x2064xf32, #tpu.memory_space<vmem>>, vector<1x32xf32>,
    %193 = vector.extract_strided_slice %158 {offsets = [17, 0], sizes = [1, 32], strides = [1, 1]} : vector<128x32xf32> to vector<1x32xf32>
    %c0_160 = arith.constant 0 : index
    %c544 = arith.constant 544 : index
    %194 = vector.load %arg21[%c0_160, %c544] : memref<2x2064xf32, #tpu.memory_space<vmem>>, vector<1x32xf32>
    tpu.vector_store %arg21[%c0_160, %c544], %193 {strides = array<i32>} : memref<2x2064xf32, #tpu.memory_space<vmem>>, vector<1x32xf32>,
    %195 = vector.extract_strided_slice %158 {offsets = [18, 0], sizes = [1, 32], strides = [1, 1]} : vector<128x32xf32> to vector<1x32xf32>
    %c0_161 = arith.constant 0 : index
    %c576 = arith.constant 576 : index
    %196 = vector.load %arg21[%c0_161, %c576] : memref<2x2064xf32, #tpu.memory_space<vmem>>, vector<1x32xf32>
    tpu.vector_store %arg21[%c0_161, %c576], %195 {strides = array<i32>} : memref<2x2064xf32, #tpu.memory_space<vmem>>, vector<1x32xf32>,
    %197 = vector.extract_strided_slice %158 {offsets = [19, 0], sizes = [1, 32], strides = [1, 1]} : vector<128x32xf32> to vector<1x32xf32>
    %c0_162 = arith.constant 0 : index
    %c608 = arith.constant 608 : index
    %198 = vector.load %arg21[%c0_162, %c608] : memref<2x2064xf32, #tpu.memory_space<vmem>>, vector<1x32xf32>
    tpu.vector_store %arg21[%c0_162, %c608], %197 {strides = array<i32>} : memref<2x2064xf32, #tpu.memory_space<vmem>>, vector<1x32xf32>,
    %199 = vector.extract_strided_slice %158 {offsets = [20, 0], sizes = [1, 32], strides = [1, 1]} : vector<128x32xf32> to vector<1x32xf32>
    %c0_163 = arith.constant 0 : index
    %c640 = arith.constant 640 : index
    %200 = vector.load %arg21[%c0_163, %c640] : memref<2x2064xf32, #tpu.memory_space<vmem>>, vector<1x32xf32>
    tpu.vector_store %arg21[%c0_163, %c640], %199 {strides = array<i32>} : memref<2x2064xf32, #tpu.memory_space<vmem>>, vector<1x32xf32>,
    %201 = vector.extract_strided_slice %158 {offsets = [21, 0], sizes = [1, 32], strides = [1, 1]} : vector<128x32xf32> to vector<1x32xf32>
    %c0_164 = arith.constant 0 : index
    %c672 = arith.constant 672 : index
    %202 = vector.load %arg21[%c0_164, %c672] : memref<2x2064xf32, #tpu.memory_space<vmem>>, vector<1x32xf32>
    tpu.vector_store %arg21[%c0_164, %c672], %201 {strides = array<i32>} : memref<2x2064xf32, #tpu.memory_space<vmem>>, vector<1x32xf32>,
    %203 = vector.extract_strided_slice %158 {offsets = [22, 0], sizes = [1, 32], strides = [1, 1]} : vector<128x32xf32> to vector<1x32xf32>
    %c0_165 = arith.constant 0 : index
    %c704 = arith.constant 704 : index
    %204 = vector.load %arg21[%c0_165, %c704] : memref<2x2064xf32, #tpu.memory_space<vmem>>, vector<1x32xf32>
    tpu.vector_store %arg21[%c0_165, %c704], %203 {strides = array<i32>} : memref<2x2064xf32, #tpu.memory_space<vmem>>, vector<1x32xf32>,
    %205 = vector.extract_strided_slice %158 {offsets = [23, 0], sizes = [1, 32], strides = [1, 1]} : vector<128x32xf32> to vector<1x32xf32>
    %c0_166 = arith.constant 0 : index
    %c736 = arith.constant 736 : index
    %206 = vector.load %arg21[%c0_166, %c736] : memref<2x2064xf32, #tpu.memory_space<vmem>>, vector<1x32xf32>
    tpu.vector_store %arg21[%c0_166, %c736], %205 {strides = array<i32>} : memref<2x2064xf32, #tpu.memory_space<vmem>>, vector<1x32xf32>,
    %207 = vector.extract_strided_slice %158 {offsets = [24, 0], sizes = [1, 32], strides = [1, 1]} : vector<128x32xf32> to vector<1x32xf32>
    %c0_167 = arith.constant 0 : index
    %c768 = arith.constant 768 : index
    %208 = vector.load %arg21[%c0_167, %c768] : memref<2x2064xf32, #tpu.memory_space<vmem>>, vector<1x32xf32>
    tpu.vector_store %arg21[%c0_167, %c768], %207 {strides = array<i32>} : memref<2x2064xf32, #tpu.memory_space<vmem>>, vector<1x32xf32>,
    %209 = vector.extract_strided_slice %158 {offsets = [25, 0], sizes = [1, 32], strides = [1, 1]} : vector<128x32xf32> to vector<1x32xf32>
    %c0_168 = arith.constant 0 : index
    %c800 = arith.constant 800 : index
    %210 = vector.load %arg21[%c0_168, %c800] : memref<2x2064xf32, #tpu.memory_space<vmem>>, vector<1x32xf32>
    tpu.vector_store %arg21[%c0_168, %c800], %209 {strides = array<i32>} : memref<2x2064xf32, #tpu.memory_space<vmem>>, vector<1x32xf32>,
    %211 = vector.extract_strided_slice %158 {offsets = [26, 0], sizes = [1, 32], strides = [1, 1]} : vector<128x32xf32> to vector<1x32xf32>
    %c0_169 = arith.constant 0 : index
    %c832 = arith.constant 832 : index
    %212 = vector.load %arg21[%c0_169, %c832] : memref<2x2064xf32, #tpu.memory_space<vmem>>, vector<1x32xf32>
    tpu.vector_store %arg21[%c0_169, %c832], %211 {strides = array<i32>} : memref<2x2064xf32, #tpu.memory_space<vmem>>, vector<1x32xf32>,
    %213 = vector.extract_strided_slice %158 {offsets = [27, 0], sizes = [1, 32], strides = [1, 1]} : vector<128x32xf32> to vector<1x32xf32>
    %c0_170 = arith.constant 0 : index
    %c864 = arith.constant 864 : index
    %214 = vector.load %arg21[%c0_170, %c864] : memref<2x2064xf32, #tpu.memory_space<vmem>>, vector<1x32xf32>
    tpu.vector_store %arg21[%c0_170, %c864], %213 {strides = array<i32>} : memref<2x2064xf32, #tpu.memory_space<vmem>>, vector<1x32xf32>,
    %215 = vector.extract_strided_slice %158 {offsets = [28, 0], sizes = [1, 32], strides = [1, 1]} : vector<128x32xf32> to vector<1x32xf32>
    %c0_171 = arith.constant 0 : index
    %c896 = arith.constant 896 : index
    %216 = vector.load %arg21[%c0_171, %c896] : memref<2x2064xf32, #tpu.memory_space<vmem>>, vector<1x32xf32>
    tpu.vector_store %arg21[%c0_171, %c896], %215 {strides = array<i32>} : memref<2x2064xf32, #tpu.memory_space<vmem>>, vector<1x32xf32>,
    %217 = vector.extract_strided_slice %158 {offsets = [29, 0], sizes = [1, 32], strides = [1, 1]} : vector<128x32xf32> to vector<1x32xf32>
    %c0_172 = arith.constant 0 : index
    %c928 = arith.constant 928 : index
    %218 = vector.load %arg21[%c0_172, %c928] : memref<2x2064xf32, #tpu.memory_space<vmem>>, vector<1x32xf32>
    tpu.vector_store %arg21[%c0_172, %c928], %217 {strides = array<i32>} : memref<2x2064xf32, #tpu.memory_space<vmem>>, vector<1x32xf32>,
    %219 = vector.extract_strided_slice %158 {offsets = [30, 0], sizes = [1, 32], strides = [1, 1]} : vector<128x32xf32> to vector<1x32xf32>
    %c0_173 = arith.constant 0 : index
    %c960 = arith.constant 960 : index
    %220 = vector.load %arg21[%c0_173, %c960] : memref<2x2064xf32, #tpu.memory_space<vmem>>, vector<1x32xf32>
    tpu.vector_store %arg21[%c0_173, %c960], %219 {strides = array<i32>} : memref<2x2064xf32, #tpu.memory_space<vmem>>, vector<1x32xf32>,
    %221 = vector.extract_strided_slice %158 {offsets = [31, 0], sizes = [1, 32], strides = [1, 1]} : vector<128x32xf32> to vector<1x32xf32>
    %c0_174 = arith.constant 0 : index
    %c992 = arith.constant 992 : index
    %222 = vector.load %arg21[%c0_174, %c992] : memref<2x2064xf32, #tpu.memory_space<vmem>>, vector<1x32xf32>
    tpu.vector_store %arg21[%c0_174, %c992], %221 {strides = array<i32>} : memref<2x2064xf32, #tpu.memory_space<vmem>>, vector<1x32xf32>,
    %223 = vector.extract_strided_slice %158 {offsets = [32, 0], sizes = [1, 32], strides = [1, 1]} : vector<128x32xf32> to vector<1x32xf32>
    %c0_175 = arith.constant 0 : index
    %c1024 = arith.constant 1024 : index
    %224 = vector.load %arg21[%c0_175, %c1024] : memref<2x2064xf32, #tpu.memory_space<vmem>>, vector<1x32xf32>
    tpu.vector_store %arg21[%c0_175, %c1024], %223 {strides = array<i32>} : memref<2x2064xf32, #tpu.memory_space<vmem>>, vector<1x32xf32>,
    %225 = vector.extract_strided_slice %158 {offsets = [33, 0], sizes = [1, 32], strides = [1, 1]} : vector<128x32xf32> to vector<1x32xf32>
    %c0_176 = arith.constant 0 : index
    %c1056 = arith.constant 1056 : index
    %226 = vector.load %arg21[%c0_176, %c1056] : memref<2x2064xf32, #tpu.memory_space<vmem>>, vector<1x32xf32>
    tpu.vector_store %arg21[%c0_176, %c1056], %225 {strides = array<i32>} : memref<2x2064xf32, #tpu.memory_space<vmem>>, vector<1x32xf32>,
    %227 = vector.extract_strided_slice %158 {offsets = [34, 0], sizes = [1, 32], strides = [1, 1]} : vector<128x32xf32> to vector<1x32xf32>
    %c0_177 = arith.constant 0 : index
    %c1088 = arith.constant 1088 : index
    %228 = vector.load %arg21[%c0_177, %c1088] : memref<2x2064xf32, #tpu.memory_space<vmem>>, vector<1x32xf32>
    tpu.vector_store %arg21[%c0_177, %c1088], %227 {strides = array<i32>} : memref<2x2064xf32, #tpu.memory_space<vmem>>, vector<1x32xf32>,
    %229 = vector.extract_strided_slice %158 {offsets = [35, 0], sizes = [1, 32], strides = [1, 1]} : vector<128x32xf32> to vector<1x32xf32>
    %c0_178 = arith.constant 0 : index
    %c1120 = arith.constant 1120 : index
    %230 = vector.load %arg21[%c0_178, %c1120] : memref<2x2064xf32, #tpu.memory_space<vmem>>, vector<1x32xf32>
    tpu.vector_store %arg21[%c0_178, %c1120], %229 {strides = array<i32>} : memref<2x2064xf32, #tpu.memory_space<vmem>>, vector<1x32xf32>,
    %231 = vector.extract_strided_slice %158 {offsets = [36, 0], sizes = [1, 32], strides = [1, 1]} : vector<128x32xf32> to vector<1x32xf32>
    %c0_179 = arith.constant 0 : index
    %c1152 = arith.constant 1152 : index
    %232 = vector.load %arg21[%c0_179, %c1152] : memref<2x2064xf32, #tpu.memory_space<vmem>>, vector<1x32xf32>
    tpu.vector_store %arg21[%c0_179, %c1152], %231 {strides = array<i32>} : memref<2x2064xf32, #tpu.memory_space<vmem>>, vector<1x32xf32>,
    %233 = vector.extract_strided_slice %158 {offsets = [37, 0], sizes = [1, 32], strides = [1, 1]} : vector<128x32xf32> to vector<1x32xf32>
    %c0_180 = arith.constant 0 : index
    %c1184 = arith.constant 1184 : index
    %234 = vector.load %arg21[%c0_180, %c1184] : memref<2x2064xf32, #tpu.memory_space<vmem>>, vector<1x32xf32>
    tpu.vector_store %arg21[%c0_180, %c1184], %233 {strides = array<i32>} : memref<2x2064xf32, #tpu.memory_space<vmem>>, vector<1x32xf32>,
    %235 = vector.extract_strided_slice %158 {offsets = [38, 0], sizes = [1, 32], strides = [1, 1]} : vector<128x32xf32> to vector<1x32xf32>
    %c0_181 = arith.constant 0 : index
    %c1216 = arith.constant 1216 : index
    %236 = vector.load %arg21[%c0_181, %c1216] : memref<2x2064xf32, #tpu.memory_space<vmem>>, vector<1x32xf32>
    tpu.vector_store %arg21[%c0_181, %c1216], %235 {strides = array<i32>} : memref<2x2064xf32, #tpu.memory_space<vmem>>, vector<1x32xf32>,
    %237 = vector.extract_strided_slice %158 {offsets = [39, 0], sizes = [1, 32], strides = [1, 1]} : vector<128x32xf32> to vector<1x32xf32>
    %c0_182 = arith.constant 0 : index
    %c1248 = arith.constant 1248 : index
    %238 = vector.load %arg21[%c0_182, %c1248] : memref<2x2064xf32, #tpu.memory_space<vmem>>, vector<1x32xf32>
    tpu.vector_store %arg21[%c0_182, %c1248], %237 {strides = array<i32>} : memref<2x2064xf32, #tpu.memory_space<vmem>>, vector<1x32xf32>,
    %239 = vector.extract_strided_slice %158 {offsets = [40, 0], sizes = [1, 32], strides = [1, 1]} : vector<128x32xf32> to vector<1x32xf32>
    %c0_183 = arith.constant 0 : index
    %c1280 = arith.constant 1280 : index
    %240 = vector.load %arg21[%c0_183, %c1280] : memref<2x2064xf32, #tpu.memory_space<vmem>>, vector<1x32xf32>
    tpu.vector_store %arg21[%c0_183, %c1280], %239 {strides = array<i32>} : memref<2x2064xf32, #tpu.memory_space<vmem>>, vector<1x32xf32>,
    %241 = vector.extract_strided_slice %158 {offsets = [41, 0], sizes = [1, 32], strides = [1, 1]} : vector<128x32xf32> to vector<1x32xf32>
    %c0_184 = arith.constant 0 : index
    %c1312 = arith.constant 1312 : index
    %242 = vector.load %arg21[%c0_184, %c1312] : memref<2x2064xf32, #tpu.memory_space<vmem>>, vector<1x32xf32>
    tpu.vector_store %arg21[%c0_184, %c1312], %241 {strides = array<i32>} : memref<2x2064xf32, #tpu.memory_space<vmem>>, vector<1x32xf32>,
    %243 = vector.extract_strided_slice %158 {offsets = [42, 0], sizes = [1, 32], strides = [1, 1]} : vector<128x32xf32> to vector<1x32xf32>
    %c0_185 = arith.constant 0 : index
    %c1344 = arith.constant 1344 : index
    %244 = vector.load %arg21[%c0_185, %c1344] : memref<2x2064xf32, #tpu.memory_space<vmem>>, vector<1x32xf32>
    tpu.vector_store %arg21[%c0_185, %c1344], %243 {strides = array<i32>} : memref<2x2064xf32, #tpu.memory_space<vmem>>, vector<1x32xf32>,
    %245 = vector.extract_strided_slice %158 {offsets = [43, 0], sizes = [1, 32], strides = [1, 1]} : vector<128x32xf32> to vector<1x32xf32>
    %c0_186 = arith.constant 0 : index
    %c1376 = arith.constant 1376 : index
    %246 = vector.load %arg21[%c0_186, %c1376] : memref<2x2064xf32, #tpu.memory_space<vmem>>, vector<1x32xf32>
    tpu.vector_store %arg21[%c0_186, %c1376], %245 {strides = array<i32>} : memref<2x2064xf32, #tpu.memory_space<vmem>>, vector<1x32xf32>,
    %247 = vector.extract_strided_slice %158 {offsets = [44, 0], sizes = [1, 32], strides = [1, 1]} : vector<128x32xf32> to vector<1x32xf32>
    %c0_187 = arith.constant 0 : index
    %c1408 = arith.constant 1408 : index
    %248 = vector.load %arg21[%c0_187, %c1408] : memref<2x2064xf32, #tpu.memory_space<vmem>>, vector<1x32xf32>
    tpu.vector_store %arg21[%c0_187, %c1408], %247 {strides = array<i32>} : memref<2x2064xf32, #tpu.memory_space<vmem>>, vector<1x32xf32>,
    %249 = vector.extract_strided_slice %158 {offsets = [45, 0], sizes = [1, 32], strides = [1, 1]} : vector<128x32xf32> to vector<1x32xf32>
    %c0_188 = arith.constant 0 : index
    %c1440 = arith.constant 1440 : index
    %250 = vector.load %arg21[%c0_188, %c1440] : memref<2x2064xf32, #tpu.memory_space<vmem>>, vector<1x32xf32>
    tpu.vector_store %arg21[%c0_188, %c1440], %249 {strides = array<i32>} : memref<2x2064xf32, #tpu.memory_space<vmem>>, vector<1x32xf32>,
    %251 = vector.extract_strided_slice %158 {offsets = [46, 0], sizes = [1, 32], strides = [1, 1]} : vector<128x32xf32> to vector<1x32xf32>
    %c0_189 = arith.constant 0 : index
    %c1472 = arith.constant 1472 : index
    %252 = vector.load %arg21[%c0_189, %c1472] : memref<2x2064xf32, #tpu.memory_space<vmem>>, vector<1x32xf32>
    tpu.vector_store %arg21[%c0_189, %c1472], %251 {strides = array<i32>} : memref<2x2064xf32, #tpu.memory_space<vmem>>, vector<1x32xf32>,
    %253 = vector.extract_strided_slice %158 {offsets = [47, 0], sizes = [1, 32], strides = [1, 1]} : vector<128x32xf32> to vector<1x32xf32>
    %c0_190 = arith.constant 0 : index
    %c1504 = arith.constant 1504 : index
    %254 = vector.load %arg21[%c0_190, %c1504] : memref<2x2064xf32, #tpu.memory_space<vmem>>, vector<1x32xf32>
    tpu.vector_store %arg21[%c0_190, %c1504], %253 {strides = array<i32>} : memref<2x2064xf32, #tpu.memory_space<vmem>>, vector<1x32xf32>,
    %255 = vector.extract_strided_slice %158 {offsets = [48, 0], sizes = [1, 32], strides = [1, 1]} : vector<128x32xf32> to vector<1x32xf32>
    %c0_191 = arith.constant 0 : index
    %c1536 = arith.constant 1536 : index
    %256 = vector.load %arg21[%c0_191, %c1536] : memref<2x2064xf32, #tpu.memory_space<vmem>>, vector<1x32xf32>
    tpu.vector_store %arg21[%c0_191, %c1536], %255 {strides = array<i32>} : memref<2x2064xf32, #tpu.memory_space<vmem>>, vector<1x32xf32>,
    %257 = vector.extract_strided_slice %158 {offsets = [49, 0], sizes = [1, 32], strides = [1, 1]} : vector<128x32xf32> to vector<1x32xf32>
    %c0_192 = arith.constant 0 : index
    %c1568 = arith.constant 1568 : index
    %258 = vector.load %arg21[%c0_192, %c1568] : memref<2x2064xf32, #tpu.memory_space<vmem>>, vector<1x32xf32>
    tpu.vector_store %arg21[%c0_192, %c1568], %257 {strides = array<i32>} : memref<2x2064xf32, #tpu.memory_space<vmem>>, vector<1x32xf32>,
    %259 = vector.extract_strided_slice %158 {offsets = [50, 0], sizes = [1, 32], strides = [1, 1]} : vector<128x32xf32> to vector<1x32xf32>
    %c0_193 = arith.constant 0 : index
    %c1600 = arith.constant 1600 : index
    %260 = vector.load %arg21[%c0_193, %c1600] : memref<2x2064xf32, #tpu.memory_space<vmem>>, vector<1x32xf32>
    tpu.vector_store %arg21[%c0_193, %c1600], %259 {strides = array<i32>} : memref<2x2064xf32, #tpu.memory_space<vmem>>, vector<1x32xf32>,
    %261 = vector.extract_strided_slice %158 {offsets = [51, 0], sizes = [1, 32], strides = [1, 1]} : vector<128x32xf32> to vector<1x32xf32>
    %c0_194 = arith.constant 0 : index
    %c1632 = arith.constant 1632 : index
    %262 = vector.load %arg21[%c0_194, %c1632] : memref<2x2064xf32, #tpu.memory_space<vmem>>, vector<1x32xf32>
    tpu.vector_store %arg21[%c0_194, %c1632], %261 {strides = array<i32>} : memref<2x2064xf32, #tpu.memory_space<vmem>>, vector<1x32xf32>,
    %263 = vector.extract_strided_slice %158 {offsets = [52, 0], sizes = [1, 32], strides = [1, 1]} : vector<128x32xf32> to vector<1x32xf32>
    %c0_195 = arith.constant 0 : index
    %c1664 = arith.constant 1664 : index
    %264 = vector.load %arg21[%c0_195, %c1664] : memref<2x2064xf32, #tpu.memory_space<vmem>>, vector<1x32xf32>
    tpu.vector_store %arg21[%c0_195, %c1664], %263 {strides = array<i32>} : memref<2x2064xf32, #tpu.memory_space<vmem>>, vector<1x32xf32>,
    %265 = vector.extract_strided_slice %158 {offsets = [53, 0], sizes = [1, 32], strides = [1, 1]} : vector<128x32xf32> to vector<1x32xf32>
    %c0_196 = arith.constant 0 : index
    %c1696 = arith.constant 1696 : index
    %266 = vector.load %arg21[%c0_196, %c1696] : memref<2x2064xf32, #tpu.memory_space<vmem>>, vector<1x32xf32>
    tpu.vector_store %arg21[%c0_196, %c1696], %265 {strides = array<i32>} : memref<2x2064xf32, #tpu.memory_space<vmem>>, vector<1x32xf32>,
    %267 = vector.extract_strided_slice %158 {offsets = [54, 0], sizes = [1, 32], strides = [1, 1]} : vector<128x32xf32> to vector<1x32xf32>
    %c0_197 = arith.constant 0 : index
    %c1728 = arith.constant 1728 : index
    %268 = vector.load %arg21[%c0_197, %c1728] : memref<2x2064xf32, #tpu.memory_space<vmem>>, vector<1x32xf32>
    tpu.vector_store %arg21[%c0_197, %c1728], %267 {strides = array<i32>} : memref<2x2064xf32, #tpu.memory_space<vmem>>, vector<1x32xf32>,
    %269 = vector.extract_strided_slice %158 {offsets = [55, 0], sizes = [1, 32], strides = [1, 1]} : vector<128x32xf32> to vector<1x32xf32>
    %c0_198 = arith.constant 0 : index
    %c1760 = arith.constant 1760 : index
    %270 = vector.load %arg21[%c0_198, %c1760] : memref<2x2064xf32, #tpu.memory_space<vmem>>, vector<1x32xf32>
    tpu.vector_store %arg21[%c0_198, %c1760], %269 {strides = array<i32>} : memref<2x2064xf32, #tpu.memory_space<vmem>>, vector<1x32xf32>,
    %271 = vector.extract_strided_slice %158 {offsets = [56, 0], sizes = [1, 32], strides = [1, 1]} : vector<128x32xf32> to vector<1x32xf32>
    %c0_199 = arith.constant 0 : index
    %c1792 = arith.constant 1792 : index
    %272 = vector.load %arg21[%c0_199, %c1792] : memref<2x2064xf32, #tpu.memory_space<vmem>>, vector<1x32xf32>
    tpu.vector_store %arg21[%c0_199, %c1792], %271 {strides = array<i32>} : memref<2x2064xf32, #tpu.memory_space<vmem>>, vector<1x32xf32>,
    %273 = vector.extract_strided_slice %158 {offsets = [57, 0], sizes = [1, 32], strides = [1, 1]} : vector<128x32xf32> to vector<1x32xf32>
    %c0_200 = arith.constant 0 : index
    %c1824 = arith.constant 1824 : index
    %274 = vector.load %arg21[%c0_200, %c1824] : memref<2x2064xf32, #tpu.memory_space<vmem>>, vector<1x32xf32>
    tpu.vector_store %arg21[%c0_200, %c1824], %273 {strides = array<i32>} : memref<2x2064xf32, #tpu.memory_space<vmem>>, vector<1x32xf32>,
    %275 = vector.extract_strided_slice %158 {offsets = [58, 0], sizes = [1, 32], strides = [1, 1]} : vector<128x32xf32> to vector<1x32xf32>
    %c0_201 = arith.constant 0 : index
    %c1856 = arith.constant 1856 : index
    %276 = vector.load %arg21[%c0_201, %c1856] : memref<2x2064xf32, #tpu.memory_space<vmem>>, vector<1x32xf32>
    tpu.vector_store %arg21[%c0_201, %c1856], %275 {strides = array<i32>} : memref<2x2064xf32, #tpu.memory_space<vmem>>, vector<1x32xf32>,
    %277 = vector.extract_strided_slice %158 {offsets = [59, 0], sizes = [1, 32], strides = [1, 1]} : vector<128x32xf32> to vector<1x32xf32>
    %c0_202 = arith.constant 0 : index
    %c1888 = arith.constant 1888 : index
    %278 = vector.load %arg21[%c0_202, %c1888] : memref<2x2064xf32, #tpu.memory_space<vmem>>, vector<1x32xf32>
    tpu.vector_store %arg21[%c0_202, %c1888], %277 {strides = array<i32>} : memref<2x2064xf32, #tpu.memory_space<vmem>>, vector<1x32xf32>,
    %279 = vector.extract_strided_slice %158 {offsets = [60, 0], sizes = [1, 32], strides = [1, 1]} : vector<128x32xf32> to vector<1x32xf32>
    %c0_203 = arith.constant 0 : index
    %c1920 = arith.constant 1920 : index
    %280 = vector.load %arg21[%c0_203, %c1920] : memref<2x2064xf32, #tpu.memory_space<vmem>>, vector<1x32xf32>
    tpu.vector_store %arg21[%c0_203, %c1920], %279 {strides = array<i32>} : memref<2x2064xf32, #tpu.memory_space<vmem>>, vector<1x32xf32>,
    %281 = vector.extract_strided_slice %158 {offsets = [61, 0], sizes = [1, 32], strides = [1, 1]} : vector<128x32xf32> to vector<1x32xf32>
    %c0_204 = arith.constant 0 : index
    %c1952 = arith.constant 1952 : index
    %282 = vector.load %arg21[%c0_204, %c1952] : memref<2x2064xf32, #tpu.memory_space<vmem>>, vector<1x32xf32>
    tpu.vector_store %arg21[%c0_204, %c1952], %281 {strides = array<i32>} : memref<2x2064xf32, #tpu.memory_space<vmem>>, vector<1x32xf32>,
    %283 = vector.extract_strided_slice %158 {offsets = [62, 0], sizes = [1, 32], strides = [1, 1]} : vector<128x32xf32> to vector<1x32xf32>
    %c0_205 = arith.constant 0 : index
    %c1984 = arith.constant 1984 : index
    %284 = vector.load %arg21[%c0_205, %c1984] : memref<2x2064xf32, #tpu.memory_space<vmem>>, vector<1x32xf32>
    tpu.vector_store %arg21[%c0_205, %c1984], %283 {strides = array<i32>} : memref<2x2064xf32, #tpu.memory_space<vmem>>, vector<1x32xf32>,
    %285 = vector.extract_strided_slice %158 {offsets = [63, 0], sizes = [1, 32], strides = [1, 1]} : vector<128x32xf32> to vector<1x32xf32>
    %c0_206 = arith.constant 0 : index
    %c2016 = arith.constant 2016 : index
    %286 = vector.load %arg21[%c0_206, %c2016] : memref<2x2064xf32, #tpu.memory_space<vmem>>, vector<1x32xf32>
    tpu.vector_store %arg21[%c0_206, %c2016], %285 {strides = array<i32>} : memref<2x2064xf32, #tpu.memory_space<vmem>>, vector<1x32xf32>,
    %287 = vector.extract_strided_slice %158 {offsets = [64, 0], sizes = [1, 32], strides = [1, 1]} : vector<128x32xf32> to vector<1x32xf32>
    %c1_207 = arith.constant 1 : index
    %c0_208 = arith.constant 0 : index
    %288 = vector.load %arg21[%c1_207, %c0_208] : memref<2x2064xf32, #tpu.memory_space<vmem>>, vector<1x32xf32>
    tpu.vector_store %arg21[%c1_207, %c0_208], %287 {strides = array<i32>} : memref<2x2064xf32, #tpu.memory_space<vmem>>, vector<1x32xf32>,
    %289 = vector.extract_strided_slice %158 {offsets = [65, 0], sizes = [1, 32], strides = [1, 1]} : vector<128x32xf32> to vector<1x32xf32>
    %c1_209 = arith.constant 1 : index
    %c32_210 = arith.constant 32 : index
    %290 = vector.load %arg21[%c1_209, %c32_210] : memref<2x2064xf32, #tpu.memory_space<vmem>>, vector<1x32xf32>
    tpu.vector_store %arg21[%c1_209, %c32_210], %289 {strides = array<i32>} : memref<2x2064xf32, #tpu.memory_space<vmem>>, vector<1x32xf32>,
    %291 = vector.extract_strided_slice %158 {offsets = [66, 0], sizes = [1, 32], strides = [1, 1]} : vector<128x32xf32> to vector<1x32xf32>
    %c1_211 = arith.constant 1 : index
    %c64_212 = arith.constant 64 : index
    %292 = vector.load %arg21[%c1_211, %c64_212] : memref<2x2064xf32, #tpu.memory_space<vmem>>, vector<1x32xf32>
    tpu.vector_store %arg21[%c1_211, %c64_212], %291 {strides = array<i32>} : memref<2x2064xf32, #tpu.memory_space<vmem>>, vector<1x32xf32>,
    %293 = vector.extract_strided_slice %158 {offsets = [67, 0], sizes = [1, 32], strides = [1, 1]} : vector<128x32xf32> to vector<1x32xf32>
    %c1_213 = arith.constant 1 : index
    %c96_214 = arith.constant 96 : index
    %294 = vector.load %arg21[%c1_213, %c96_214] : memref<2x2064xf32, #tpu.memory_space<vmem>>, vector<1x32xf32>
    tpu.vector_store %arg21[%c1_213, %c96_214], %293 {strides = array<i32>} : memref<2x2064xf32, #tpu.memory_space<vmem>>, vector<1x32xf32>,
    %295 = vector.extract_strided_slice %158 {offsets = [68, 0], sizes = [1, 32], strides = [1, 1]} : vector<128x32xf32> to vector<1x32xf32>
    %c1_215 = arith.constant 1 : index
    %c128_216 = arith.constant 128 : index
    %296 = vector.load %arg21[%c1_215, %c128_216] : memref<2x2064xf32, #tpu.memory_space<vmem>>, vector<1x32xf32>
    tpu.vector_store %arg21[%c1_215, %c128_216], %295 {strides = array<i32>} : memref<2x2064xf32, #tpu.memory_space<vmem>>, vector<1x32xf32>,
    %297 = vector.extract_strided_slice %158 {offsets = [69, 0], sizes = [1, 32], strides = [1, 1]} : vector<128x32xf32> to vector<1x32xf32>
    %c1_217 = arith.constant 1 : index
    %c160_218 = arith.constant 160 : index
    %298 = vector.load %arg21[%c1_217, %c160_218] : memref<2x2064xf32, #tpu.memory_space<vmem>>, vector<1x32xf32>
    tpu.vector_store %arg21[%c1_217, %c160_218], %297 {strides = array<i32>} : memref<2x2064xf32, #tpu.memory_space<vmem>>, vector<1x32xf32>,
    %299 = vector.extract_strided_slice %158 {offsets = [70, 0], sizes = [1, 32], strides = [1, 1]} : vector<128x32xf32> to vector<1x32xf32>
    %c1_219 = arith.constant 1 : index
    %c192_220 = arith.constant 192 : index
    %300 = vector.load %arg21[%c1_219, %c192_220] : memref<2x2064xf32, #tpu.memory_space<vmem>>, vector<1x32xf32>
    tpu.vector_store %arg21[%c1_219, %c192_220], %299 {strides = array<i32>} : memref<2x2064xf32, #tpu.memory_space<vmem>>, vector<1x32xf32>,
    %301 = vector.extract_strided_slice %158 {offsets = [71, 0], sizes = [1, 32], strides = [1, 1]} : vector<128x32xf32> to vector<1x32xf32>
    %c1_221 = arith.constant 1 : index
    %c224_222 = arith.constant 224 : index
    %302 = vector.load %arg21[%c1_221, %c224_222] : memref<2x2064xf32, #tpu.memory_space<vmem>>, vector<1x32xf32>
    tpu.vector_store %arg21[%c1_221, %c224_222], %301 {strides = array<i32>} : memref<2x2064xf32, #tpu.memory_space<vmem>>, vector<1x32xf32>,
    %303 = vector.extract_strided_slice %158 {offsets = [72, 0], sizes = [1, 32], strides = [1, 1]} : vector<128x32xf32> to vector<1x32xf32>
    %c1_223 = arith.constant 1 : index
    %c256_224 = arith.constant 256 : index
    %304 = vector.load %arg21[%c1_223, %c256_224] : memref<2x2064xf32, #tpu.memory_space<vmem>>, vector<1x32xf32>
    tpu.vector_store %arg21[%c1_223, %c256_224], %303 {strides = array<i32>} : memref<2x2064xf32, #tpu.memory_space<vmem>>, vector<1x32xf32>,
    %305 = vector.extract_strided_slice %158 {offsets = [73, 0], sizes = [1, 32], strides = [1, 1]} : vector<128x32xf32> to vector<1x32xf32>
    %c1_225 = arith.constant 1 : index
    %c288_226 = arith.constant 288 : index
    %306 = vector.load %arg21[%c1_225, %c288_226] : memref<2x2064xf32, #tpu.memory_space<vmem>>, vector<1x32xf32>
    tpu.vector_store %arg21[%c1_225, %c288_226], %305 {strides = array<i32>} : memref<2x2064xf32, #tpu.memory_space<vmem>>, vector<1x32xf32>,
    %307 = vector.extract_strided_slice %158 {offsets = [74, 0], sizes = [1, 32], strides = [1, 1]} : vector<128x32xf32> to vector<1x32xf32>
    %c1_227 = arith.constant 1 : index
    %c320_228 = arith.constant 320 : index
    %308 = vector.load %arg21[%c1_227, %c320_228] : memref<2x2064xf32, #tpu.memory_space<vmem>>, vector<1x32xf32>
    tpu.vector_store %arg21[%c1_227, %c320_228], %307 {strides = array<i32>} : memref<2x2064xf32, #tpu.memory_space<vmem>>, vector<1x32xf32>,
    %309 = vector.extract_strided_slice %158 {offsets = [75, 0], sizes = [1, 32], strides = [1, 1]} : vector<128x32xf32> to vector<1x32xf32>
    %c1_229 = arith.constant 1 : index
    %c352_230 = arith.constant 352 : index
    %310 = vector.load %arg21[%c1_229, %c352_230] : memref<2x2064xf32, #tpu.memory_space<vmem>>, vector<1x32xf32>
    tpu.vector_store %arg21[%c1_229, %c352_230], %309 {strides = array<i32>} : memref<2x2064xf32, #tpu.memory_space<vmem>>, vector<1x32xf32>,
    %311 = vector.extract_strided_slice %158 {offsets = [76, 0], sizes = [1, 32], strides = [1, 1]} : vector<128x32xf32> to vector<1x32xf32>
    %c1_231 = arith.constant 1 : index
    %c384_232 = arith.constant 384 : index
    %312 = vector.load %arg21[%c1_231, %c384_232] : memref<2x2064xf32, #tpu.memory_space<vmem>>, vector<1x32xf32>
    tpu.vector_store %arg21[%c1_231, %c384_232], %311 {strides = array<i32>} : memref<2x2064xf32, #tpu.memory_space<vmem>>, vector<1x32xf32>,
    %313 = vector.extract_strided_slice %158 {offsets = [77, 0], sizes = [1, 32], strides = [1, 1]} : vector<128x32xf32> to vector<1x32xf32>
    %c1_233 = arith.constant 1 : index
    %c416_234 = arith.constant 416 : index
    %314 = vector.load %arg21[%c1_233, %c416_234] : memref<2x2064xf32, #tpu.memory_space<vmem>>, vector<1x32xf32>
    tpu.vector_store %arg21[%c1_233, %c416_234], %313 {strides = array<i32>} : memref<2x2064xf32, #tpu.memory_space<vmem>>, vector<1x32xf32>,
    %315 = vector.extract_strided_slice %158 {offsets = [78, 0], sizes = [1, 32], strides = [1, 1]} : vector<128x32xf32> to vector<1x32xf32>
    %c1_235 = arith.constant 1 : index
    %c448_236 = arith.constant 448 : index
    %316 = vector.load %arg21[%c1_235, %c448_236] : memref<2x2064xf32, #tpu.memory_space<vmem>>, vector<1x32xf32>
    tpu.vector_store %arg21[%c1_235, %c448_236], %315 {strides = array<i32>} : memref<2x2064xf32, #tpu.memory_space<vmem>>, vector<1x32xf32>,
    %317 = vector.extract_strided_slice %158 {offsets = [79, 0], sizes = [1, 32], strides = [1, 1]} : vector<128x32xf32> to vector<1x32xf32>
    %c1_237 = arith.constant 1 : index
    %c480_238 = arith.constant 480 : index
    %318 = vector.load %arg21[%c1_237, %c480_238] : memref<2x2064xf32, #tpu.memory_space<vmem>>, vector<1x32xf32>
    tpu.vector_store %arg21[%c1_237, %c480_238], %317 {strides = array<i32>} : memref<2x2064xf32, #tpu.memory_space<vmem>>, vector<1x32xf32>,
    %319 = vector.extract_strided_slice %158 {offsets = [80, 0], sizes = [1, 32], strides = [1, 1]} : vector<128x32xf32> to vector<1x32xf32>
    %c1_239 = arith.constant 1 : index
    %c512_240 = arith.constant 512 : index
    %320 = vector.load %arg21[%c1_239, %c512_240] : memref<2x2064xf32, #tpu.memory_space<vmem>>, vector<1x32xf32>
    tpu.vector_store %arg21[%c1_239, %c512_240], %319 {strides = array<i32>} : memref<2x2064xf32, #tpu.memory_space<vmem>>, vector<1x32xf32>,
    %321 = vector.extract_strided_slice %158 {offsets = [81, 0], sizes = [1, 32], strides = [1, 1]} : vector<128x32xf32> to vector<1x32xf32>
    %c1_241 = arith.constant 1 : index
    %c544_242 = arith.constant 544 : index
    %322 = vector.load %arg21[%c1_241, %c544_242] : memref<2x2064xf32, #tpu.memory_space<vmem>>, vector<1x32xf32>
    tpu.vector_store %arg21[%c1_241, %c544_242], %321 {strides = array<i32>} : memref<2x2064xf32, #tpu.memory_space<vmem>>, vector<1x32xf32>,
    %323 = vector.extract_strided_slice %158 {offsets = [82, 0], sizes = [1, 32], strides = [1, 1]} : vector<128x32xf32> to vector<1x32xf32>
    %c1_243 = arith.constant 1 : index
    %c576_244 = arith.constant 576 : index
    %324 = vector.load %arg21[%c1_243, %c576_244] : memref<2x2064xf32, #tpu.memory_space<vmem>>, vector<1x32xf32>
    tpu.vector_store %arg21[%c1_243, %c576_244], %323 {strides = array<i32>} : memref<2x2064xf32, #tpu.memory_space<vmem>>, vector<1x32xf32>,
    %325 = vector.extract_strided_slice %158 {offsets = [83, 0], sizes = [1, 32], strides = [1, 1]} : vector<128x32xf32> to vector<1x32xf32>
    %c1_245 = arith.constant 1 : index
    %c608_246 = arith.constant 608 : index
    %326 = vector.load %arg21[%c1_245, %c608_246] : memref<2x2064xf32, #tpu.memory_space<vmem>>, vector<1x32xf32>
    tpu.vector_store %arg21[%c1_245, %c608_246], %325 {strides = array<i32>} : memref<2x2064xf32, #tpu.memory_space<vmem>>, vector<1x32xf32>,
    %327 = vector.extract_strided_slice %158 {offsets = [84, 0], sizes = [1, 32], strides = [1, 1]} : vector<128x32xf32> to vector<1x32xf32>
    %c1_247 = arith.constant 1 : index
    %c640_248 = arith.constant 640 : index
    %328 = vector.load %arg21[%c1_247, %c640_248] : memref<2x2064xf32, #tpu.memory_space<vmem>>, vector<1x32xf32>
    tpu.vector_store %arg21[%c1_247, %c640_248], %327 {strides = array<i32>} : memref<2x2064xf32, #tpu.memory_space<vmem>>, vector<1x32xf32>,
    %329 = vector.extract_strided_slice %158 {offsets = [85, 0], sizes = [1, 32], strides = [1, 1]} : vector<128x32xf32> to vector<1x32xf32>
    %c1_249 = arith.constant 1 : index
    %c672_250 = arith.constant 672 : index
    %330 = vector.load %arg21[%c1_249, %c672_250] : memref<2x2064xf32, #tpu.memory_space<vmem>>, vector<1x32xf32>
    tpu.vector_store %arg21[%c1_249, %c672_250], %329 {strides = array<i32>} : memref<2x2064xf32, #tpu.memory_space<vmem>>, vector<1x32xf32>,
    %331 = vector.extract_strided_slice %158 {offsets = [86, 0], sizes = [1, 32], strides = [1, 1]} : vector<128x32xf32> to vector<1x32xf32>
    %c1_251 = arith.constant 1 : index
    %c704_252 = arith.constant 704 : index
    %332 = vector.load %arg21[%c1_251, %c704_252] : memref<2x2064xf32, #tpu.memory_space<vmem>>, vector<1x32xf32>
    tpu.vector_store %arg21[%c1_251, %c704_252], %331 {strides = array<i32>} : memref<2x2064xf32, #tpu.memory_space<vmem>>, vector<1x32xf32>,
    %333 = vector.extract_strided_slice %158 {offsets = [87, 0], sizes = [1, 32], strides = [1, 1]} : vector<128x32xf32> to vector<1x32xf32>
    %c1_253 = arith.constant 1 : index
    %c736_254 = arith.constant 736 : index
    %334 = vector.load %arg21[%c1_253, %c736_254] : memref<2x2064xf32, #tpu.memory_space<vmem>>, vector<1x32xf32>
    tpu.vector_store %arg21[%c1_253, %c736_254], %333 {strides = array<i32>} : memref<2x2064xf32, #tpu.memory_space<vmem>>, vector<1x32xf32>,
    %335 = vector.extract_strided_slice %158 {offsets = [88, 0], sizes = [1, 32], strides = [1, 1]} : vector<128x32xf32> to vector<1x32xf32>
    %c1_255 = arith.constant 1 : index
    %c768_256 = arith.constant 768 : index
    %336 = vector.load %arg21[%c1_255, %c768_256] : memref<2x2064xf32, #tpu.memory_space<vmem>>, vector<1x32xf32>
    tpu.vector_store %arg21[%c1_255, %c768_256], %335 {strides = array<i32>} : memref<2x2064xf32, #tpu.memory_space<vmem>>, vector<1x32xf32>,
    %337 = vector.extract_strided_slice %158 {offsets = [89, 0], sizes = [1, 32], strides = [1, 1]} : vector<128x32xf32> to vector<1x32xf32>
    %c1_257 = arith.constant 1 : index
    %c800_258 = arith.constant 800 : index
    %338 = vector.load %arg21[%c1_257, %c800_258] : memref<2x2064xf32, #tpu.memory_space<vmem>>, vector<1x32xf32>
    tpu.vector_store %arg21[%c1_257, %c800_258], %337 {strides = array<i32>} : memref<2x2064xf32, #tpu.memory_space<vmem>>, vector<1x32xf32>,
    %339 = vector.extract_strided_slice %158 {offsets = [90, 0], sizes = [1, 32], strides = [1, 1]} : vector<128x32xf32> to vector<1x32xf32>
    %c1_259 = arith.constant 1 : index
    %c832_260 = arith.constant 832 : index
    %340 = vector.load %arg21[%c1_259, %c832_260] : memref<2x2064xf32, #tpu.memory_space<vmem>>, vector<1x32xf32>
    tpu.vector_store %arg21[%c1_259, %c832_260], %339 {strides = array<i32>} : memref<2x2064xf32, #tpu.memory_space<vmem>>, vector<1x32xf32>,
    %341 = vector.extract_strided_slice %158 {offsets = [91, 0], sizes = [1, 32], strides = [1, 1]} : vector<128x32xf32> to vector<1x32xf32>
    %c1_261 = arith.constant 1 : index
    %c864_262 = arith.constant 864 : index
    %342 = vector.load %arg21[%c1_261, %c864_262] : memref<2x2064xf32, #tpu.memory_space<vmem>>, vector<1x32xf32>
    tpu.vector_store %arg21[%c1_261, %c864_262], %341 {strides = array<i32>} : memref<2x2064xf32, #tpu.memory_space<vmem>>, vector<1x32xf32>,
    %343 = vector.extract_strided_slice %158 {offsets = [92, 0], sizes = [1, 32], strides = [1, 1]} : vector<128x32xf32> to vector<1x32xf32>
    %c1_263 = arith.constant 1 : index
    %c896_264 = arith.constant 896 : index
    %344 = vector.load %arg21[%c1_263, %c896_264] : memref<2x2064xf32, #tpu.memory_space<vmem>>, vector<1x32xf32>
    tpu.vector_store %arg21[%c1_263, %c896_264], %343 {strides = array<i32>} : memref<2x2064xf32, #tpu.memory_space<vmem>>, vector<1x32xf32>,
    %345 = vector.extract_strided_slice %158 {offsets = [93, 0], sizes = [1, 32], strides = [1, 1]} : vector<128x32xf32> to vector<1x32xf32>
    %c1_265 = arith.constant 1 : index
    %c928_266 = arith.constant 928 : index
    %346 = vector.load %arg21[%c1_265, %c928_266] : memref<2x2064xf32, #tpu.memory_space<vmem>>, vector<1x32xf32>
    tpu.vector_store %arg21[%c1_265, %c928_266], %345 {strides = array<i32>} : memref<2x2064xf32, #tpu.memory_space<vmem>>, vector<1x32xf32>,
    %347 = vector.extract_strided_slice %158 {offsets = [94, 0], sizes = [1, 32], strides = [1, 1]} : vector<128x32xf32> to vector<1x32xf32>
    %c1_267 = arith.constant 1 : index
    %c960_268 = arith.constant 960 : index
    %348 = vector.load %arg21[%c1_267, %c960_268] : memref<2x2064xf32, #tpu.memory_space<vmem>>, vector<1x32xf32>
    tpu.vector_store %arg21[%c1_267, %c960_268], %347 {strides = array<i32>} : memref<2x2064xf32, #tpu.memory_space<vmem>>, vector<1x32xf32>,
    %349 = vector.extract_strided_slice %158 {offsets = [95, 0], sizes = [1, 32], strides = [1, 1]} : vector<128x32xf32> to vector<1x32xf32>
    %c1_269 = arith.constant 1 : index
    %c992_270 = arith.constant 992 : index
    %350 = vector.load %arg21[%c1_269, %c992_270] : memref<2x2064xf32, #tpu.memory_space<vmem>>, vector<1x32xf32>
    tpu.vector_store %arg21[%c1_269, %c992_270], %349 {strides = array<i32>} : memref<2x2064xf32, #tpu.memory_space<vmem>>, vector<1x32xf32>,
    %351 = vector.extract_strided_slice %158 {offsets = [96, 0], sizes = [1, 32], strides = [1, 1]} : vector<128x32xf32> to vector<1x32xf32>
    %c1_271 = arith.constant 1 : index
    %c1024_272 = arith.constant 1024 : index
    %352 = vector.load %arg21[%c1_271, %c1024_272] : memref<2x2064xf32, #tpu.memory_space<vmem>>, vector<1x32xf32>
    tpu.vector_store %arg21[%c1_271, %c1024_272], %351 {strides = array<i32>} : memref<2x2064xf32, #tpu.memory_space<vmem>>, vector<1x32xf32>,
    %353 = vector.extract_strided_slice %158 {offsets = [97, 0], sizes = [1, 32], strides = [1, 1]} : vector<128x32xf32> to vector<1x32xf32>
    %c1_273 = arith.constant 1 : index
    %c1056_274 = arith.constant 1056 : index
    %354 = vector.load %arg21[%c1_273, %c1056_274] : memref<2x2064xf32, #tpu.memory_space<vmem>>, vector<1x32xf32>
    tpu.vector_store %arg21[%c1_273, %c1056_274], %353 {strides = array<i32>} : memref<2x2064xf32, #tpu.memory_space<vmem>>, vector<1x32xf32>,
    %355 = vector.extract_strided_slice %158 {offsets = [98, 0], sizes = [1, 32], strides = [1, 1]} : vector<128x32xf32> to vector<1x32xf32>
    %c1_275 = arith.constant 1 : index
    %c1088_276 = arith.constant 1088 : index
    %356 = vector.load %arg21[%c1_275, %c1088_276] : memref<2x2064xf32, #tpu.memory_space<vmem>>, vector<1x32xf32>
    tpu.vector_store %arg21[%c1_275, %c1088_276], %355 {strides = array<i32>} : memref<2x2064xf32, #tpu.memory_space<vmem>>, vector<1x32xf32>,
    %357 = vector.extract_strided_slice %158 {offsets = [99, 0], sizes = [1, 32], strides = [1, 1]} : vector<128x32xf32> to vector<1x32xf32>
    %c1_277 = arith.constant 1 : index
    %c1120_278 = arith.constant 1120 : index
    %358 = vector.load %arg21[%c1_277, %c1120_278] : memref<2x2064xf32, #tpu.memory_space<vmem>>, vector<1x32xf32>
    tpu.vector_store %arg21[%c1_277, %c1120_278], %357 {strides = array<i32>} : memref<2x2064xf32, #tpu.memory_space<vmem>>, vector<1x32xf32>,
    %359 = vector.extract_strided_slice %158 {offsets = [100, 0], sizes = [1, 32], strides = [1, 1]} : vector<128x32xf32> to vector<1x32xf32>
    %c1_279 = arith.constant 1 : index
    %c1152_280 = arith.constant 1152 : index
    %360 = vector.load %arg21[%c1_279, %c1152_280] : memref<2x2064xf32, #tpu.memory_space<vmem>>, vector<1x32xf32>
    tpu.vector_store %arg21[%c1_279, %c1152_280], %359 {strides = array<i32>} : memref<2x2064xf32, #tpu.memory_space<vmem>>, vector<1x32xf32>,
    %361 = vector.extract_strided_slice %158 {offsets = [101, 0], sizes = [1, 32], strides = [1, 1]} : vector<128x32xf32> to vector<1x32xf32>
    %c1_281 = arith.constant 1 : index
    %c1184_282 = arith.constant 1184 : index
    %362 = vector.load %arg21[%c1_281, %c1184_282] : memref<2x2064xf32, #tpu.memory_space<vmem>>, vector<1x32xf32>
    tpu.vector_store %arg21[%c1_281, %c1184_282], %361 {strides = array<i32>} : memref<2x2064xf32, #tpu.memory_space<vmem>>, vector<1x32xf32>,
    %363 = vector.extract_strided_slice %158 {offsets = [102, 0], sizes = [1, 32], strides = [1, 1]} : vector<128x32xf32> to vector<1x32xf32>
    %c1_283 = arith.constant 1 : index
    %c1216_284 = arith.constant 1216 : index
    %364 = vector.load %arg21[%c1_283, %c1216_284] : memref<2x2064xf32, #tpu.memory_space<vmem>>, vector<1x32xf32>
    tpu.vector_store %arg21[%c1_283, %c1216_284], %363 {strides = array<i32>} : memref<2x2064xf32, #tpu.memory_space<vmem>>, vector<1x32xf32>,
    %365 = vector.extract_strided_slice %158 {offsets = [103, 0], sizes = [1, 32], strides = [1, 1]} : vector<128x32xf32> to vector<1x32xf32>
    %c1_285 = arith.constant 1 : index
    %c1248_286 = arith.constant 1248 : index
    %366 = vector.load %arg21[%c1_285, %c1248_286] : memref<2x2064xf32, #tpu.memory_space<vmem>>, vector<1x32xf32>
    tpu.vector_store %arg21[%c1_285, %c1248_286], %365 {strides = array<i32>} : memref<2x2064xf32, #tpu.memory_space<vmem>>, vector<1x32xf32>,
    %367 = vector.extract_strided_slice %158 {offsets = [104, 0], sizes = [1, 32], strides = [1, 1]} : vector<128x32xf32> to vector<1x32xf32>
    %c1_287 = arith.constant 1 : index
    %c1280_288 = arith.constant 1280 : index
    %368 = vector.load %arg21[%c1_287, %c1280_288] : memref<2x2064xf32, #tpu.memory_space<vmem>>, vector<1x32xf32>
    tpu.vector_store %arg21[%c1_287, %c1280_288], %367 {strides = array<i32>} : memref<2x2064xf32, #tpu.memory_space<vmem>>, vector<1x32xf32>,
    %369 = vector.extract_strided_slice %158 {offsets = [105, 0], sizes = [1, 32], strides = [1, 1]} : vector<128x32xf32> to vector<1x32xf32>
    %c1_289 = arith.constant 1 : index
    %c1312_290 = arith.constant 1312 : index
    %370 = vector.load %arg21[%c1_289, %c1312_290] : memref<2x2064xf32, #tpu.memory_space<vmem>>, vector<1x32xf32>
    tpu.vector_store %arg21[%c1_289, %c1312_290], %369 {strides = array<i32>} : memref<2x2064xf32, #tpu.memory_space<vmem>>, vector<1x32xf32>,
    %371 = vector.extract_strided_slice %158 {offsets = [106, 0], sizes = [1, 32], strides = [1, 1]} : vector<128x32xf32> to vector<1x32xf32>
    %c1_291 = arith.constant 1 : index
    %c1344_292 = arith.constant 1344 : index
    %372 = vector.load %arg21[%c1_291, %c1344_292] : memref<2x2064xf32, #tpu.memory_space<vmem>>, vector<1x32xf32>
    tpu.vector_store %arg21[%c1_291, %c1344_292], %371 {strides = array<i32>} : memref<2x2064xf32, #tpu.memory_space<vmem>>, vector<1x32xf32>,
    %373 = vector.extract_strided_slice %158 {offsets = [107, 0], sizes = [1, 32], strides = [1, 1]} : vector<128x32xf32> to vector<1x32xf32>
    %c1_293 = arith.constant 1 : index
    %c1376_294 = arith.constant 1376 : index
    %374 = vector.load %arg21[%c1_293, %c1376_294] : memref<2x2064xf32, #tpu.memory_space<vmem>>, vector<1x32xf32>
    tpu.vector_store %arg21[%c1_293, %c1376_294], %373 {strides = array<i32>} : memref<2x2064xf32, #tpu.memory_space<vmem>>, vector<1x32xf32>,
    %375 = vector.extract_strided_slice %158 {offsets = [108, 0], sizes = [1, 32], strides = [1, 1]} : vector<128x32xf32> to vector<1x32xf32>
    %c1_295 = arith.constant 1 : index
    %c1408_296 = arith.constant 1408 : index
    %376 = vector.load %arg21[%c1_295, %c1408_296] : memref<2x2064xf32, #tpu.memory_space<vmem>>, vector<1x32xf32>
    tpu.vector_store %arg21[%c1_295, %c1408_296], %375 {strides = array<i32>} : memref<2x2064xf32, #tpu.memory_space<vmem>>, vector<1x32xf32>,
    %377 = vector.extract_strided_slice %158 {offsets = [109, 0], sizes = [1, 32], strides = [1, 1]} : vector<128x32xf32> to vector<1x32xf32>
    %c1_297 = arith.constant 1 : index
    %c1440_298 = arith.constant 1440 : index
    %378 = vector.load %arg21[%c1_297, %c1440_298] : memref<2x2064xf32, #tpu.memory_space<vmem>>, vector<1x32xf32>
    tpu.vector_store %arg21[%c1_297, %c1440_298], %377 {strides = array<i32>} : memref<2x2064xf32, #tpu.memory_space<vmem>>, vector<1x32xf32>,
    %379 = vector.extract_strided_slice %158 {offsets = [110, 0], sizes = [1, 32], strides = [1, 1]} : vector<128x32xf32> to vector<1x32xf32>
    %c1_299 = arith.constant 1 : index
    %c1472_300 = arith.constant 1472 : index
    %380 = vector.load %arg21[%c1_299, %c1472_300] : memref<2x2064xf32, #tpu.memory_space<vmem>>, vector<1x32xf32>
    tpu.vector_store %arg21[%c1_299, %c1472_300], %379 {strides = array<i32>} : memref<2x2064xf32, #tpu.memory_space<vmem>>, vector<1x32xf32>,
    %381 = vector.extract_strided_slice %158 {offsets = [111, 0], sizes = [1, 32], strides = [1, 1]} : vector<128x32xf32> to vector<1x32xf32>
    %c1_301 = arith.constant 1 : index
    %c1504_302 = arith.constant 1504 : index
    %382 = vector.load %arg21[%c1_301, %c1504_302] : memref<2x2064xf32, #tpu.memory_space<vmem>>, vector<1x32xf32>
    tpu.vector_store %arg21[%c1_301, %c1504_302], %381 {strides = array<i32>} : memref<2x2064xf32, #tpu.memory_space<vmem>>, vector<1x32xf32>,
    %383 = vector.extract_strided_slice %158 {offsets = [112, 0], sizes = [1, 32], strides = [1, 1]} : vector<128x32xf32> to vector<1x32xf32>
    %c1_303 = arith.constant 1 : index
    %c1536_304 = arith.constant 1536 : index
    %384 = vector.load %arg21[%c1_303, %c1536_304] : memref<2x2064xf32, #tpu.memory_space<vmem>>, vector<1x32xf32>
    tpu.vector_store %arg21[%c1_303, %c1536_304], %383 {strides = array<i32>} : memref<2x2064xf32, #tpu.memory_space<vmem>>, vector<1x32xf32>,
    %385 = vector.extract_strided_slice %158 {offsets = [113, 0], sizes = [1, 32], strides = [1, 1]} : vector<128x32xf32> to vector<1x32xf32>
    %c1_305 = arith.constant 1 : index
    %c1568_306 = arith.constant 1568 : index
    %386 = vector.load %arg21[%c1_305, %c1568_306] : memref<2x2064xf32, #tpu.memory_space<vmem>>, vector<1x32xf32>
    tpu.vector_store %arg21[%c1_305, %c1568_306], %385 {strides = array<i32>} : memref<2x2064xf32, #tpu.memory_space<vmem>>, vector<1x32xf32>,
    %387 = vector.extract_strided_slice %158 {offsets = [114, 0], sizes = [1, 32], strides = [1, 1]} : vector<128x32xf32> to vector<1x32xf32>
    %c1_307 = arith.constant 1 : index
    %c1600_308 = arith.constant 1600 : index
    %388 = vector.load %arg21[%c1_307, %c1600_308] : memref<2x2064xf32, #tpu.memory_space<vmem>>, vector<1x32xf32>
    tpu.vector_store %arg21[%c1_307, %c1600_308], %387 {strides = array<i32>} : memref<2x2064xf32, #tpu.memory_space<vmem>>, vector<1x32xf32>,
    %389 = vector.extract_strided_slice %158 {offsets = [115, 0], sizes = [1, 32], strides = [1, 1]} : vector<128x32xf32> to vector<1x32xf32>
    %c1_309 = arith.constant 1 : index
    %c1632_310 = arith.constant 1632 : index
    %390 = vector.load %arg21[%c1_309, %c1632_310] : memref<2x2064xf32, #tpu.memory_space<vmem>>, vector<1x32xf32>
    tpu.vector_store %arg21[%c1_309, %c1632_310], %389 {strides = array<i32>} : memref<2x2064xf32, #tpu.memory_space<vmem>>, vector<1x32xf32>,
    %391 = vector.extract_strided_slice %158 {offsets = [116, 0], sizes = [1, 32], strides = [1, 1]} : vector<128x32xf32> to vector<1x32xf32>
    %c1_311 = arith.constant 1 : index
    %c1664_312 = arith.constant 1664 : index
    %392 = vector.load %arg21[%c1_311, %c1664_312] : memref<2x2064xf32, #tpu.memory_space<vmem>>, vector<1x32xf32>
    tpu.vector_store %arg21[%c1_311, %c1664_312], %391 {strides = array<i32>} : memref<2x2064xf32, #tpu.memory_space<vmem>>, vector<1x32xf32>,
    %393 = vector.extract_strided_slice %158 {offsets = [117, 0], sizes = [1, 32], strides = [1, 1]} : vector<128x32xf32> to vector<1x32xf32>
    %c1_313 = arith.constant 1 : index
    %c1696_314 = arith.constant 1696 : index
    %394 = vector.load %arg21[%c1_313, %c1696_314] : memref<2x2064xf32, #tpu.memory_space<vmem>>, vector<1x32xf32>
    tpu.vector_store %arg21[%c1_313, %c1696_314], %393 {strides = array<i32>} : memref<2x2064xf32, #tpu.memory_space<vmem>>, vector<1x32xf32>,
    %395 = vector.extract_strided_slice %158 {offsets = [118, 0], sizes = [1, 32], strides = [1, 1]} : vector<128x32xf32> to vector<1x32xf32>
    %c1_315 = arith.constant 1 : index
    %c1728_316 = arith.constant 1728 : index
    %396 = vector.load %arg21[%c1_315, %c1728_316] : memref<2x2064xf32, #tpu.memory_space<vmem>>, vector<1x32xf32>
    tpu.vector_store %arg21[%c1_315, %c1728_316], %395 {strides = array<i32>} : memref<2x2064xf32, #tpu.memory_space<vmem>>, vector<1x32xf32>,
    %397 = vector.extract_strided_slice %158 {offsets = [119, 0], sizes = [1, 32], strides = [1, 1]} : vector<128x32xf32> to vector<1x32xf32>
    %c1_317 = arith.constant 1 : index
    %c1760_318 = arith.constant 1760 : index
    %398 = vector.load %arg21[%c1_317, %c1760_318] : memref<2x2064xf32, #tpu.memory_space<vmem>>, vector<1x32xf32>
    tpu.vector_store %arg21[%c1_317, %c1760_318], %397 {strides = array<i32>} : memref<2x2064xf32, #tpu.memory_space<vmem>>, vector<1x32xf32>,
    %399 = vector.extract_strided_slice %158 {offsets = [120, 0], sizes = [1, 32], strides = [1, 1]} : vector<128x32xf32> to vector<1x32xf32>
    %c1_319 = arith.constant 1 : index
    %c1792_320 = arith.constant 1792 : index
    %400 = vector.load %arg21[%c1_319, %c1792_320] : memref<2x2064xf32, #tpu.memory_space<vmem>>, vector<1x32xf32>
    tpu.vector_store %arg21[%c1_319, %c1792_320], %399 {strides = array<i32>} : memref<2x2064xf32, #tpu.memory_space<vmem>>, vector<1x32xf32>,
    %401 = vector.extract_strided_slice %158 {offsets = [121, 0], sizes = [1, 32], strides = [1, 1]} : vector<128x32xf32> to vector<1x32xf32>
    %c1_321 = arith.constant 1 : index
    %c1824_322 = arith.constant 1824 : index
    %402 = vector.load %arg21[%c1_321, %c1824_322] : memref<2x2064xf32, #tpu.memory_space<vmem>>, vector<1x32xf32>
    tpu.vector_store %arg21[%c1_321, %c1824_322], %401 {strides = array<i32>} : memref<2x2064xf32, #tpu.memory_space<vmem>>, vector<1x32xf32>,
    %403 = vector.extract_strided_slice %158 {offsets = [122, 0], sizes = [1, 32], strides = [1, 1]} : vector<128x32xf32> to vector<1x32xf32>
    %c1_323 = arith.constant 1 : index
    %c1856_324 = arith.constant 1856 : index
    %404 = vector.load %arg21[%c1_323, %c1856_324] : memref<2x2064xf32, #tpu.memory_space<vmem>>, vector<1x32xf32>
    tpu.vector_store %arg21[%c1_323, %c1856_324], %403 {strides = array<i32>} : memref<2x2064xf32, #tpu.memory_space<vmem>>, vector<1x32xf32>,
    %405 = vector.extract_strided_slice %158 {offsets = [123, 0], sizes = [1, 32], strides = [1, 1]} : vector<128x32xf32> to vector<1x32xf32>
    %c1_325 = arith.constant 1 : index
    %c1888_326 = arith.constant 1888 : index
    %406 = vector.load %arg21[%c1_325, %c1888_326] : memref<2x2064xf32, #tpu.memory_space<vmem>>, vector<1x32xf32>
    tpu.vector_store %arg21[%c1_325, %c1888_326], %405 {strides = array<i32>} : memref<2x2064xf32, #tpu.memory_space<vmem>>, vector<1x32xf32>,
    %407 = vector.extract_strided_slice %158 {offsets = [124, 0], sizes = [1, 32], strides = [1, 1]} : vector<128x32xf32> to vector<1x32xf32>
    %c1_327 = arith.constant 1 : index
    %c1920_328 = arith.constant 1920 : index
    %408 = vector.load %arg21[%c1_327, %c1920_328] : memref<2x2064xf32, #tpu.memory_space<vmem>>, vector<1x32xf32>
    tpu.vector_store %arg21[%c1_327, %c1920_328], %407 {strides = array<i32>} : memref<2x2064xf32, #tpu.memory_space<vmem>>, vector<1x32xf32>,
    %409 = vector.extract_strided_slice %158 {offsets = [125, 0], sizes = [1, 32], strides = [1, 1]} : vector<128x32xf32> to vector<1x32xf32>
    %c1_329 = arith.constant 1 : index
    %c1952_330 = arith.constant 1952 : index
    %410 = vector.load %arg21[%c1_329, %c1952_330] : memref<2x2064xf32, #tpu.memory_space<vmem>>, vector<1x32xf32>
    tpu.vector_store %arg21[%c1_329, %c1952_330], %409 {strides = array<i32>} : memref<2x2064xf32, #tpu.memory_space<vmem>>, vector<1x32xf32>,
    %411 = vector.extract_strided_slice %158 {offsets = [126, 0], sizes = [1, 32], strides = [1, 1]} : vector<128x32xf32> to vector<1x32xf32>
    %c1_331 = arith.constant 1 : index
    %c1984_332 = arith.constant 1984 : index
    %412 = vector.load %arg21[%c1_331, %c1984_332] : memref<2x2064xf32, #tpu.memory_space<vmem>>, vector<1x32xf32>
    tpu.vector_store %arg21[%c1_331, %c1984_332], %411 {strides = array<i32>} : memref<2x2064xf32, #tpu.memory_space<vmem>>, vector<1x32xf32>,
    %413 = vector.extract_strided_slice %158 {offsets = [127, 0], sizes = [1, 32], strides = [1, 1]} : vector<128x32xf32> to vector<1x32xf32>
    %c1_333 = arith.constant 1 : index
    %c2016_334 = arith.constant 2016 : index
    %414 = vector.load %arg21[%c1_333, %c2016_334] : memref<2x2064xf32, #tpu.memory_space<vmem>>, vector<1x32xf32>
    tpu.vector_store %arg21[%c1_333, %c2016_334], %413 {strides = array<i32>} : memref<2x2064xf32, #tpu.memory_space<vmem>>, vector<1x32xf32>,
    %c0_335 = arith.constant 0 : index
    %c0_336 = arith.constant 0 : index
    %415 = vector.load %arg1[%c0_335, %c0_336] : memref<2x16xf32, #tpu.memory_space<vmem>>, vector<2x16xf32>
    %c0_337 = arith.constant 0 : index
    %c2048 = arith.constant 2048 : index
    %416 = vector.load %arg21[%c0_337, %c2048] : memref<2x2064xf32, #tpu.memory_space<vmem>>, vector<2x16xf32>
    tpu.vector_store %arg21[%c0_337, %c2048], %415 {strides = array<i32>} : memref<2x2064xf32, #tpu.memory_space<vmem>>, vector<2x16xf32>,
    %c0_338 = arith.constant 0 : index
    %c0_339 = arith.constant 0 : index
    %417 = vector.load %arg21[%c0_338, %c0_339] : memref<2x2064xf32, #tpu.memory_space<vmem>>, vector<2x2064xf32>
    %c0_340 = arith.constant 0 : index
    %c0_341 = arith.constant 0 : index
    %418 = vector.load %arg10[%c0_340, %c0_341] : memref<2064x64xf32, #tpu.memory_space<vmem>>, vector<2064x64xf32>
    %cst_342 = arith.constant dense<0.000000e+00> : vector<2x64xf32>
    %419 = tpu.matmul %417, %418, %cst_342 {dimension_numbers = #tpu.dot_dimension_numbers<[1], [0], [0], [1], [0, 0, 1, 1], [], []>} : vector<2x2064xf32>, vector<2064x64xf32>, vector<2x64xf32> -> vector<2x64xf32>
    %c0_343 = arith.constant 0 : index
    %c0_344 = arith.constant 0 : index
    %420 = vector.load %arg11[%c0_343, %c0_344] : memref<1x64xf32, #tpu.memory_space<vmem>>, vector<1x64xf32>
    %421 = vector.broadcast %420 : vector<1x64xf32> to vector<2x64xf32>
    %422 = arith.addf %419, %421 : vector<2x64xf32>
    %cst_345 = arith.constant 0.000000e+00 : f32
    %423 = vector.broadcast %cst_345 : f32 to vector<2x64xf32>
    %424 = arith.maximumf %422, %423 : vector<2x64xf32>
    %c0_346 = arith.constant 0 : index
    %c0_347 = arith.constant 0 : index
    %425 = vector.load %arg12[%c0_346, %c0_347] : memref<64x128xf32, #tpu.memory_space<vmem>>, vector<64x128xf32>
    %cst_348 = arith.constant dense<0.000000e+00> : vector<2x128xf32>
    %426 = tpu.matmul %424, %425, %cst_348 {dimension_numbers = #tpu.dot_dimension_numbers<[1], [0], [0], [1], [0, 0, 1, 1], [], []>} : vector<2x64xf32>, vector<64x128xf32>, vector<2x128xf32> -> vector<2x128xf32>
    %c0_349 = arith.constant 0 : index
    %c0_350 = arith.constant 0 : index
    %427 = vector.load %arg13[%c0_349, %c0_350] : memref<1x128xf32, #tpu.memory_space<vmem>>, vector<1x128xf32>
    %428 = vector.broadcast %427 : vector<1x128xf32> to vector<2x128xf32>
    %429 = arith.addf %426, %428 : vector<2x128xf32>
    %cst_351 = arith.constant 0.000000e+00 : f32
    %430 = vector.broadcast %cst_351 : f32 to vector<2x128xf32>
    %431 = arith.maximumf %429, %430 : vector<2x128xf32>
    %c0_352 = arith.constant 0 : index
    %c0_353 = arith.constant 0 : index
    %432 = vector.load %arg14[%c0_352, %c0_353] : memref<128x256xf32, #tpu.memory_space<vmem>>, vector<128x256xf32>
    %cst_354 = arith.constant dense<0.000000e+00> : vector<2x256xf32>
    %433 = tpu.matmul %431, %432, %cst_354 {dimension_numbers = #tpu.dot_dimension_numbers<[1], [0], [0], [1], [0, 0, 1, 1], [], []>} : vector<2x128xf32>, vector<128x256xf32>, vector<2x256xf32> -> vector<2x256xf32>
    %c0_355 = arith.constant 0 : index
    %c0_356 = arith.constant 0 : index
    %434 = vector.load %arg15[%c0_355, %c0_356] : memref<1x256xf32, #tpu.memory_space<vmem>>, vector<1x256xf32>
    %435 = vector.broadcast %434 : vector<1x256xf32> to vector<2x256xf32>
    %436 = arith.addf %433, %435 : vector<2x256xf32>
    %c0_357 = arith.constant 0 : index
    %c0_358 = arith.constant 0 : index
    %437 = vector.load %arg16[%c0_357, %c0_358] : memref<2x256xf32, #tpu.memory_space<vmem>>, vector<2x256xf32>
    tpu.vector_store %arg16[%c0_357, %c0_358], %436 {strides = array<i32>} : memref<2x256xf32, #tpu.memory_space<vmem>>, vector<2x256xf32>,
    return
  }
}

</mosaic_0001>

<llo_original>
// kernel: alpha_triangle_net_pallas.1
$region0: #{alpha_triangle_net_pallas.1}
  #allocation0 [shape = 'u32[]', space=smem, size = 0x4, offset = 0x4, fixed_abs, tag = 'smem constant byte address 0x4 - core index']
  #allocation1 [shape = 'u32[144,128]{1,0:T(1,128)}', space=vmem, size = 0x12000, scoped, tag = 'internal scratch']
  #allocation2 [shape = 'f32[2,10,10,4]{3,2,1,0:T(8,128)}', space=vmem, size = 0x28000, scoped, tag = 'scratch operand']
  #allocation3 [shape = 'f32[2,10,10,16]{3,2,1,0:T(8,128)}', space=vmem, size = 0x28000, scoped, tag = 'scratch operand']
  #allocation4 [shape = 'f32[2,10,10,32]{3,2,1,0:T(8,128)}', space=vmem, size = 0x28000, scoped, tag = 'scratch operand']
  #allocation5 [shape = 'f32[128,288]{1,0:T(8,128)}', space=vmem, size = 0x30000, scoped, tag = 'scratch operand']
  #allocation6 [shape = 'f32[2,2064]{1,0:T(2,128)}', space=vmem, size = 0x4400, scoped, tag = 'scratch operand']
  %s0 = inlined_call_operand.vmem [shape: f32[2,8,8,4], index: 0, kind: input, shape index: {}]
  %s1 = inlined_call_operand.vmem [shape: f32[2,16], index: 1, kind: input, shape index: {}]
  %s2 = inlined_call_operand.vmem [shape: f32[36,16], index: 2, kind: input, shape index: {}]
  %s3 = inlined_call_operand.vmem [shape: f32[1,16], index: 3, kind: input, shape index: {}]
  %s4 = inlined_call_operand.vmem [shape: f32[144,32], index: 4, kind: input, shape index: {}]
  %s5 = inlined_call_operand.vmem [shape: f32[1,32], index: 5, kind: input, shape index: {}]
  %s6 = inlined_call_operand.vmem [shape: f32[288,32], index: 6, kind: input, shape index: {}]
  %s7 = inlined_call_operand.vmem [shape: f32[1,32], index: 7, kind: input, shape index: {}]
  %s8 = inlined_call_operand.vmem [shape: f32[288,32], index: 8, kind: input, shape index: {}]
  %s9 = inlined_call_operand.vmem [shape: f32[1,32], index: 9, kind: input, shape index: {}]
  %s10 = inlined_call_operand.vmem [shape: f32[2064,64], index: 10, kind: input, shape index: {}]
  %s11 = inlined_call_operand.vmem [shape: f32[1,64], index: 11, kind: input, shape index: {}]
  %s12 = inlined_call_operand.vmem [shape: f32[64,128], index: 12, kind: input, shape index: {}]
  %s13 = inlined_call_operand.vmem [shape: f32[1,128], index: 13, kind: input, shape index: {}]
  %s14 = inlined_call_operand.vmem [shape: f32[128,256], index: 14, kind: input, shape index: {}]
  %s15 = inlined_call_operand.vmem [shape: f32[1,256], index: 15, kind: input, shape index: {}]
  %s16 = inlined_call_operand.vmem [shape: f32[2,256], index: 16, kind: output, shape index: {}]
  %s17 = sld [smem:[#allocation0]]
  $region74: #{alpha_triangle_net_pallas.1} parent=0
    _
  %s19 = ssub.s32 1, %s17
  %s20 = scalar_select 0, %s19, %s17
  // Predicated region
  $region2: #{alpha_triangle_net_pallas.1} parent=0 // pred_check
    _
  $region3: #{alpha_triangle_net_pallas.1} parent=0 // pred_check_branch
    %22 = sbr.rel (0) target = $region5
  $region4: #{alpha_triangle_net_pallas.1} parent=0 // pred_region
    _
  $region5: #{alpha_triangle_net_pallas.1} parent=0 // pred_fallthru
    _
  // Predicated region
  $region6: #{alpha_triangle_net_pallas.1} parent=0 // pred_check
    _
  $region7: #{alpha_triangle_net_pallas.1} parent=0 // pred_check_branch
    %24 = sbr.rel (0) target = $region9
  $region8: #{alpha_triangle_net_pallas.1} parent=0 // pred_region
    _
  $region9: #{alpha_triangle_net_pallas.1} parent=0 // pred_fallthru
    _
  // Predicated region
  $region10: #{alpha_triangle_net_pallas.1} parent=0 // pred_check
    _
  $region11: #{alpha_triangle_net_pallas.1} parent=0 // pred_check_branch
    %26 = sbr.rel (0) target = $region13
  $region12: #{alpha_triangle_net_pallas.1} parent=0 // pred_region
    _
  $region13: #{alpha_triangle_net_pallas.1} parent=0 // pred_fallthru
    _
  // Predicated region
  $region14: #{alpha_triangle_net_pallas.1} parent=0 // pred_check
    _
  $region15: #{alpha_triangle_net_pallas.1} parent=0 // pred_check_branch
    %28 = sbr.rel (0) target = $region17
  $region16: #{alpha_triangle_net_pallas.1} parent=0 // pred_region
    _
  $region17: #{alpha_triangle_net_pallas.1} parent=0 // pred_fallthru
    _
  // Predicated region
  $region18: #{alpha_triangle_net_pallas.1} parent=0 // pred_check
    _
  $region19: #{alpha_triangle_net_pallas.1} parent=0 // pred_check_branch
    %30 = sbr.rel (0) target = $region21
  $region20: #{alpha_triangle_net_pallas.1} parent=0 // pred_region
    _
  $region21: #{alpha_triangle_net_pallas.1} parent=0 // pred_fallthru
    _
  // Predicated region
  $region22: #{alpha_triangle_net_pallas.1} parent=0 // pred_check
    _
  $region23: #{alpha_triangle_net_pallas.1} parent=0 // pred_check_branch
    %32 = sbr.rel (0) target = $region25
  $region24: #{alpha_triangle_net_pallas.1} parent=0 // pred_region
    _
  $region25: #{alpha_triangle_net_pallas.1} parent=0 // pred_fallthru
    _
  // Predicated region
  $region26: #{alpha_triangle_net_pallas.1} parent=0 // pred_check
    _
  $region27: #{alpha_triangle_net_pallas.1} parent=0 // pred_check_branch
    %34 = sbr.rel (0) target = $region29
  $region28: #{alpha_triangle_net_pallas.1} parent=0 // pred_region
    _
  $region29: #{alpha_triangle_net_pallas.1} parent=0 // pred_fallthru
    _
  // Predicated region
  $region30: #{alpha_triangle_net_pallas.1} parent=0 // pred_check
    _
  $region31: #{alpha_triangle_net_pallas.1} parent=0 // pred_check_branch
    %36 = sbr.rel (0) target = $region33
  $region32: #{alpha_triangle_net_pallas.1} parent=0 // pred_region
    _
  $region33: #{alpha_triangle_net_pallas.1} parent=0 // pred_fallthru
    _
  // Predicated region
  $region34: #{alpha_triangle_net_pallas.1} parent=0 // pred_check
    _
  $region35: #{alpha_triangle_net_pallas.1} parent=0 // pred_check_branch
    %38 = sbr.rel (0) target = $region37
  $region36: #{alpha_triangle_net_pallas.1} parent=0 // pred_region
    _
  $region37: #{alpha_triangle_net_pallas.1} parent=0 // pred_fallthru
    _
  // Predicated region
  $region38: #{alpha_triangle_net_pallas.1} parent=0 // pred_check
    _
  $region39: #{alpha_triangle_net_pallas.1} parent=0 // pred_check_branch
    %40 = sbr.rel (0) target = $region41
  $region40: #{alpha_triangle_net_pallas.1} parent=0 // pred_region
    _
  $region41: #{alpha_triangle_net_pallas.1} parent=0 // pred_fallthru
    _
  // Predicated region
  $region42: #{alpha_triangle_net_pallas.1} parent=0 // pred_check
    _
  $region43: #{alpha_triangle_net_pallas.1} parent=0 // pred_check_branch
    %42 = sbr.rel (0) target = $region45
  $region44: #{alpha_triangle_net_pallas.1} parent=0 // pred_region
    _
  $region45: #{alpha_triangle_net_pallas.1} parent=0 // pred_fallthru
    _
  // Predicated region
  $region46: #{alpha_triangle_net_pallas.1} parent=0 // pred_check
    _
  $region47: #{alpha_triangle_net_pallas.1} parent=0 // pred_check_branch
    %44 = sbr.rel (0) target = $region49
  $region48: #{alpha_triangle_net_pallas.1} parent=0 // pred_region
    _
  $region49: #{alpha_triangle_net_pallas.1} parent=0 // pred_fallthru
    _
  // Predicated region
  $region50: #{alpha_triangle_net_pallas.1} parent=0 // pred_check
    _
  $region51: #{alpha_triangle_net_pallas.1} parent=0 // pred_check_branch
    %46 = sbr.rel (0) target = $region53
  $region52: #{alpha_triangle_net_pallas.1} parent=0 // pred_region
    _
  $region53: #{alpha_triangle_net_pallas.1} parent=0 // pred_fallthru
    _
  // Predicated region
  $region54: #{alpha_triangle_net_pallas.1} parent=0 // pred_check
    _
  $region55: #{alpha_triangle_net_pallas.1} parent=0 // pred_check_branch
    %48 = sbr.rel (0) target = $region57
  $region56: #{alpha_triangle_net_pallas.1} parent=0 // pred_region
    _
  $region57: #{alpha_triangle_net_pallas.1} parent=0 // pred_fallthru
    _
  // Predicated region
  $region58: #{alpha_triangle_net_pallas.1} parent=0 // pred_check
    _
  $region59: #{alpha_triangle_net_pallas.1} parent=0 // pred_check_branch
    %50 = sbr.rel (0) target = $region61
  $region60: #{alpha_triangle_net_pallas.1} parent=0 // pred_region
    _
  $region61: #{alpha_triangle_net_pallas.1} parent=0 // pred_fallthru
    _
  // Predicated region
  $region62: #{alpha_triangle_net_pallas.1} parent=0 // pred_check
    _
  $region63: #{alpha_triangle_net_pallas.1} parent=0 // pred_check_branch
    %52 = sbr.rel (0) target = $region65
  $region64: #{alpha_triangle_net_pallas.1} parent=0 // pred_region
    _
  $region65: #{alpha_triangle_net_pallas.1} parent=0 // pred_fallthru
    _
  %vm53 = vcmask 31744
  %54 = vst.msk [vmem:[#allocation2] sm:$0xff] %vm53, 0.0
  %vm55 = vcmask 25600
  %56 = vst.msk [vmem:[#allocation2 + $0x8] sm:$0x3] %vm55, 0.0
  %57 = vst.msk [vmem:[#allocation2 + $0x10] sm:$0xff] %vm53, 0.0
  %58 = vst.msk [vmem:[#allocation2 + $0x18] sm:$0x3] %vm55, 0.0
  %59 = vst.msk [vmem:[#allocation2 + $0x20] sm:$0xff] %vm53, 0.0
  %60 = vst.msk [vmem:[#allocation2 + $0x28] sm:$0x3] %vm55, 0.0
  %61 = vst.msk [vmem:[#allocation2 + $0x30] sm:$0xff] %vm53, 0.0
  %62 = vst.msk [vmem:[#allocation2 + $0x38] sm:$0x3] %vm55, 0.0
  %63 = vst.msk [vmem:[#allocation2 + $0x40] sm:$0xff] %vm53, 0.0
  %64 = vst.msk [vmem:[#allocation2 + $0x48] sm:$0x3] %vm55, 0.0
  %65 = vst.msk [vmem:[#allocation2 + $0x50] sm:$0xff] %vm53, 0.0
  %66 = vst.msk [vmem:[#allocation2 + $0x58] sm:$0x3] %vm55, 0.0
  %67 = vst.msk [vmem:[#allocation2 + $0x60] sm:$0xff] %vm53, 0.0
  %68 = vst.msk [vmem:[#allocation2 + $0x68] sm:$0x3] %vm55, 0.0
  %69 = vst.msk [vmem:[#allocation2 + $0x70] sm:$0xff] %vm53, 0.0
  %70 = vst.msk [vmem:[#allocation2 + $0x78] sm:$0x3] %vm55, 0.0
  %71 = vst.msk [vmem:[#allocation2 + $0x80] sm:$0xff] %vm53, 0.0
  %72 = vst.msk [vmem:[#allocation2 + $0x88] sm:$0x3] %vm55, 0.0
  %73 = vst.msk [vmem:[#allocation2 + $0x90] sm:$0xff] %vm53, 0.0
  %74 = vst.msk [vmem:[#allocation2 + $0x98] sm:$0x3] %vm55, 0.0
  %75 = vst.msk [vmem:[#allocation2 + $0xa0] sm:$0xff] %vm53, 0.0
  %76 = vst.msk [vmem:[#allocation2 + $0xa8] sm:$0x3] %vm55, 0.0
  %77 = vst.msk [vmem:[#allocation2 + $0xb0] sm:$0xff] %vm53, 0.0
  %78 = vst.msk [vmem:[#allocation2 + $0xb8] sm:$0x3] %vm55, 0.0
  %79 = vst.msk [vmem:[#allocation2 + $0xc0] sm:$0xff] %vm53, 0.0
  %80 = vst.msk [vmem:[#allocation2 + $0xc8] sm:$0x3] %vm55, 0.0
  %81 = vst.msk [vmem:[#allocation2 + $0xd0] sm:$0xff] %vm53, 0.0
  %82 = vst.msk [vmem:[#allocation2 + $0xd8] sm:$0x3] %vm55, 0.0
  %83 = vst.msk [vmem:[#allocation2 + $0xe0] sm:$0xff] %vm53, 0.0
  %84 = vst.msk [vmem:[#allocation2 + $0xe8] sm:$0x3] %vm55, 0.0
  %85 = vst.msk [vmem:[#allocation2 + $0xf0] sm:$0xff] %vm53, 0.0
  %86 = vst.msk [vmem:[#allocation2 + $0xf8] sm:$0x3] %vm55, 0.0
  %87 = vst.msk [vmem:[#allocation2 + $0x100] sm:$0xff] %vm53, 0.0
  %88 = vst.msk [vmem:[#allocation2 + $0x108] sm:$0x3] %vm55, 0.0
  %89 = vst.msk [vmem:[#allocation2 + $0x110] sm:$0xff] %vm53, 0.0
  %90 = vst.msk [vmem:[#allocation2 + $0x118] sm:$0x3] %vm55, 0.0
  %91 = vst.msk [vmem:[#allocation2 + $0x120] sm:$0xff] %vm53, 0.0
  %92 = vst.msk [vmem:[#allocation2 + $0x128] sm:$0x3] %vm55, 0.0
  %93 = vst.msk [vmem:[#allocation2 + $0x130] sm:$0xff] %vm53, 0.0
  %94 = vst.msk [vmem:[#allocation2 + $0x138] sm:$0x3] %vm55, 0.0
  %vm95 = vcmask 130048
  %96 = vst.msk [vmem:[#allocation3] sm:$0xff] %vm95, 0.0
  %vm97 = vcmask 123904
  %98 = vst.msk [vmem:[#allocation3 + $0x8] sm:$0x3] %vm97, 0.0
  %99 = vst.msk [vmem:[#allocation3 + $0x10] sm:$0xff] %vm95, 0.0
  %100 = vst.msk [vmem:[#allocation3 + $0x18] sm:$0x3] %vm97, 0.0
  %101 = vst.msk [vmem:[#allocation3 + $0x20] sm:$0xff] %vm95, 0.0
  %102 = vst.msk [vmem:[#allocation3 + $0x28] sm:$0x3] %vm97, 0.0
  %103 = vst.msk [vmem:[#allocation3 + $0x30] sm:$0xff] %vm95, 0.0
  %104 = vst.msk [vmem:[#allocation3 + $0x38] sm:$0x3] %vm97, 0.0
  %105 = vst.msk [vmem:[#allocation3 + $0x40] sm:$0xff] %vm95, 0.0
  %106 = vst.msk [vmem:[#allocation3 + $0x48] sm:$0x3] %vm97, 0.0
  %107 = vst.msk [vmem:[#allocation3 + $0x50] sm:$0xff] %vm95, 0.0
  %108 = vst.msk [vmem:[#allocation3 + $0x58] sm:$0x3] %vm97, 0.0
  %109 = vst.msk [vmem:[#allocation3 + $0x60] sm:$0xff] %vm95, 0.0
  %110 = vst.msk [vmem:[#allocation3 + $0x68] sm:$0x3] %vm97, 0.0
  %111 = vst.msk [vmem:[#allocation3 + $0x70] sm:$0xff] %vm95, 0.0
  %112 = vst.msk [vmem:[#allocation3 + $0x78] sm:$0x3] %vm97, 0.0
  %113 = vst.msk [vmem:[#allocation3 + $0x80] sm:$0xff] %vm95, 0.0
  %114 = vst.msk [vmem:[#allocation3 + $0x88] sm:$0x3] %vm97, 0.0
  %115 = vst.msk [vmem:[#allocation3 + $0x90] sm:$0xff] %vm95, 0.0
  %116 = vst.msk [vmem:[#allocation3 + $0x98] sm:$0x3] %vm97, 0.0
  %117 = vst.msk [vmem:[#allocation3 + $0xa0] sm:$0xff] %vm95, 0.0
  %118 = vst.msk [vmem:[#allocation3 + $0xa8] sm:$0x3] %vm97, 0.0
  %119 = vst.msk [vmem:[#allocation3 + $0xb0] sm:$0xff] %vm95, 0.0
  %120 = vst.msk [vmem:[#allocation3 + $0xb8] sm:$0x3] %vm97, 0.0
  %121 = vst.msk [vmem:[#allocation3 + $0xc0] sm:$0xff] %vm95, 0.0
  %122 = vst.msk [vmem:[#allocation3 + $0xc8] sm:$0x3] %vm97, 0.0
  %123 = vst.msk [vmem:[#allocation3 + $0xd0] sm:$0xff] %vm95, 0.0
  %124 = vst.msk [vmem:[#allocation3 + $0xd8] sm:$0x3] %vm97, 0.0
  %125 = vst.msk [vmem:[#allocation3 + $0xe0] sm:$0xff] %vm95, 0.0
  %126 = vst.msk [vmem:[#allocation3 + $0xe8] sm:$0x3] %vm97, 0.0
  %127 = vst.msk [vmem:[#allocation3 + $0xf0] sm:$0xff] %vm95, 0.0
  %128 = vst.msk [vmem:[#allocation3 + $0xf8] sm:$0x3] %vm97, 0.0
  %129 = vst.msk [vmem:[#allocation3 + $0x100] sm:$0xff] %vm95, 0.0
  %130 = vst.msk [vmem:[#allocation3 + $0x108] sm:$0x3] %vm97, 0.0
  %131 = vst.msk [vmem:[#allocation3 + $0x110] sm:$0xff] %vm95, 0.0
  %132 = vst.msk [vmem:[#allocation3 + $0x118] sm:$0x3] %vm97, 0.0
  %133 = vst.msk [vmem:[#allocation3 + $0x120] sm:$0xff] %vm95, 0.0
  %134 = vst.msk [vmem:[#allocation3 + $0x128] sm:$0x3] %vm97, 0.0
  %135 = vst.msk [vmem:[#allocation3 + $0x130] sm:$0xff] %vm95, 0.0
  %136 = vst.msk [vmem:[#allocation3 + $0x138] sm:$0x3] %vm97, 0.0
  %vm137 = vcmask 261120
  %138 = vst.msk [vmem:[#allocation4] sm:$0xff] %vm137, 0.0
  %vm139 = vcmask 254976
  %140 = vst.msk [vmem:[#allocation4 + $0x8] sm:$0x3] %vm139, 0.0
  %141 = vst.msk [vmem:[#allocation4 + $0x10] sm:$0xff] %vm137, 0.0
  %142 = vst.msk [vmem:[#allocation4 + $0x18] sm:$0x3] %vm139, 0.0
  %143 = vst.msk [vmem:[#allocation4 + $0x20] sm:$0xff] %vm137, 0.0
  %144 = vst.msk [vmem:[#allocation4 + $0x28] sm:$0x3] %vm139, 0.0
  %145 = vst.msk [vmem:[#allocation4 + $0x30] sm:$0xff] %vm137, 0.0
  %146 = vst.msk [vmem:[#allocation4 + $0x38] sm:$0x3] %vm139, 0.0
  %147 = vst.msk [vmem:[#allocation4 + $0x40] sm:$0xff] %vm137, 0.0
  %148 = vst.msk [vmem:[#allocation4 + $0x48] sm:$0x3] %vm139, 0.0
  %149 = vst.msk [vmem:[#allocation4 + $0x50] sm:$0xff] %vm137, 0.0
  %150 = vst.msk [vmem:[#allocation4 + $0x58] sm:$0x3] %vm139, 0.0
  %151 = vst.msk [vmem:[#allocation4 + $0x60] sm:$0xff] %vm137, 0.0
  %152 = vst.msk [vmem:[#allocation4 + $0x68] sm:$0x3] %vm139, 0.0
  %153 = vst.msk [vmem:[#allocation4 + $0x70] sm:$0xff] %vm137, 0.0
  %154 = vst.msk [vmem:[#allocation4 + $0x78] sm:$0x3] %vm139, 0.0
  %155 = vst.msk [vmem:[#allocation4 + $0x80] sm:$0xff] %vm137, 0.0
  %156 = vst.msk [vmem:[#allocation4 + $0x88] sm:$0x3] %vm139, 0.0
  %157 = vst.msk [vmem:[#allocation4 + $0x90] sm:$0xff] %vm137, 0.0
  %158 = vst.msk [vmem:[#allocation4 + $0x98] sm:$0x3] %vm139, 0.0
  %159 = vst.msk [vmem:[#allocation4 + $0xa0] sm:$0xff] %vm137, 0.0
  %160 = vst.msk [vmem:[#allocation4 + $0xa8] sm:$0x3] %vm139, 0.0
  %161 = vst.msk [vmem:[#allocation4 + $0xb0] sm:$0xff] %vm137, 0.0
  %162 = vst.msk [vmem:[#allocation4 + $0xb8] sm:$0x3] %vm139, 0.0
  %163 = vst.msk [vmem:[#allocation4 + $0xc0] sm:$0xff] %vm137, 0.0
  %164 = vst.msk [vmem:[#allocation4 + $0xc8] sm:$0x3] %vm139, 0.0
  %165 = vst.msk [vmem:[#allocation4 + $0xd0] sm:$0xff] %vm137, 0.0
  %166 = vst.msk [vmem:[#allocation4 + $0xd8] sm:$0x3] %vm139, 0.0
  %167 = vst.msk [vmem:[#allocation4 + $0xe0] sm:$0xff] %vm137, 0.0
  %168 = vst.msk [vmem:[#allocation4 + $0xe8] sm:$0x3] %vm139, 0.0
  %169 = vst.msk [vmem:[#allocation4 + $0xf0] sm:$0xff] %vm137, 0.0
  %170 = vst.msk [vmem:[#allocation4 + $0xf8] sm:$0x3] %vm139, 0.0
  %171 = vst.msk [vmem:[#allocation4 + $0x100] sm:$0xff] %vm137, 0.0
  %172 = vst.msk [vmem:[#allocation4 + $0x108] sm:$0x3] %vm139, 0.0
  %173 = vst.msk [vmem:[#allocation4 + $0x110] sm:$0xff] %vm137, 0.0
  %174 = vst.msk [vmem:[#allocation4 + $0x118] sm:$0x3] %vm139, 0.0
  %175 = vst.msk [vmem:[#allocation4 + $0x120] sm:$0xff] %vm137, 0.0
  %176 = vst.msk [vmem:[#allocation4 + $0x128] sm:$0x3] %vm139, 0.0
  %177 = vst.msk [vmem:[#allocation4 + $0x130] sm:$0xff] %vm137, 0.0
  %178 = vst.msk [vmem:[#allocation4 + $0x138] sm:$0x3] %vm139, 0.0
  %v179 = vld [vmem:[%s0] sm:$0xff]
  %v180 = vld [vmem:[%s0 + $0x8] sm:$0xff]
  %v181 = vld [vmem:[%s0 + $0x10] sm:$0xff]
  %v182 = vld [vmem:[%s0 + $0x18] sm:$0xff]
  %v183 = vld [vmem:[%s0 + $0x20] sm:$0xff]
  %v184 = vld [vmem:[%s0 + $0x28] sm:$0xff]
  %v185 = vld [vmem:[%s0 + $0x30] sm:$0xff]
  %v186 = vld [vmem:[%s0 + $0x38] sm:$0xff]
  %v187 = vld [vmem:[%s0 + $0x40] sm:$0xff]
  %v188 = vld [vmem:[%s0 + $0x48] sm:$0xff]
  %v189 = vld [vmem:[%s0 + $0x50] sm:$0xff]
  %v190 = vld [vmem:[%s0 + $0x58] sm:$0xff]
  %v191 = vld [vmem:[%s0 + $0x60] sm:$0xff]
  %v192 = vld [vmem:[%s0 + $0x68] sm:$0xff]
  %v193 = vld [vmem:[%s0 + $0x70] sm:$0xff]
  %v194 = vld [vmem:[%s0 + $0x78] sm:$0xff]
  %s195 = scalar_lea.vmem [#allocation2], 16
  %196 = vst.msk [vmem:[%s195 + $0x1] sm:$0xff] %vm53, %v179
  %197 = vst.msk [vmem:[%s195 + $0x11] sm:$0xff] %vm53, %v180
  %198 = vst.msk [vmem:[%s195 + $0x21] sm:$0xff] %vm53, %v181
  %199 = vst.msk [vmem:[%s195 + $0x31] sm:$0xff] %vm53, %v182
  %200 = vst.msk [vmem:[%s195 + $0x41] sm:$0xff] %vm53, %v183
  %201 = vst.msk [vmem:[%s195 + $0x51] sm:$0xff] %vm53, %v184
  %202 = vst.msk [vmem:[%s195 + $0x61] sm:$0xff] %vm53, %v185
  %203 = vst.msk [vmem:[%s195 + $0x71] sm:$0xff] %vm53, %v186
  %204 = vst.msk [vmem:[%s195 + $0xa1] sm:$0xff] %vm53, %v187
  %205 = vst.msk [vmem:[%s195 + $0xb1] sm:$0xff] %vm53, %v188
  %206 = vst.msk [vmem:[%s195 + $0xc1] sm:$0xff] %vm53, %v189
  %207 = vst.msk [vmem:[%s195 + $0xd1] sm:$0xff] %vm53, %v190
  %208 = vst.msk [vmem:[%s195 + $0xe1] sm:$0xff] %vm53, %v191
  %209 = vst.msk [vmem:[%s195 + $0xf1] sm:$0xff] %vm53, %v192
  %210 = vst.msk [vmem:[%s195 + $0x101] sm:$0xff] %vm53, %v193
  %211 = vst.msk [vmem:[%s195 + $0x111] sm:$0xff] %vm53, %v194
  %v212 = vld [vmem:[#allocation2] sm:$0xff]
  %v213 = vld [vmem:[#allocation2 + $0x8] sm:$0x3]
  %v214 = vld [vmem:[#allocation2 + $0x10] sm:$0xff]
  %v215 = vld [vmem:[#allocation2 + $0x18] sm:$0x3]
  %v216 = vld [vmem:[#allocation2 + $0x20] sm:$0xff]
  %v217 = vld [vmem:[#allocation2 + $0x28] sm:$0x3]
  %v218 = vld [vmem:[#allocation2 + $0x30] sm:$0xff]
  %v219 = vld [vmem:[#allocation2 + $0x38] sm:$0x3]
  %v220 = vld [vmem:[#allocation2 + $0x40] sm:$0xff]
  %v221 = vld [vmem:[#allocation2 + $0x48] sm:$0x3]
  %v222 = vld [vmem:[#allocation2 + $0x50] sm:$0xff]
  %v223 = vld [vmem:[#allocation2 + $0x58] sm:$0x3]
  %v224 = vld [vmem:[#allocation2 + $0x60] sm:$0xff]
  %v225 = vld [vmem:[#allocation2 + $0x68] sm:$0x3]
  %v226 = vld [vmem:[#allocation2 + $0x70] sm:$0xff]
  %v227 = vld [vmem:[#allocation2 + $0x78] sm:$0x3]
  %v228 = vld [vmem:[#allocation2 + $0x80] sm:$0xff]
  %v229 = vld [vmem:[#allocation2 + $0x88] sm:$0x3]
  %v230 = vld [vmem:[#allocation2 + $0x90] sm:$0xff]
  %v231 = vld [vmem:[#allocation2 + $0x98] sm:$0x3]
  %v232 = vld [vmem:[#allocation2 + $0xa0] sm:$0xff]
  %v233 = vld [vmem:[#allocation2 + $0xa8] sm:$0x3]
  %v234 = vld [vmem:[#allocation2 + $0xb0] sm:$0xff]
  %v235 = vld [vmem:[#allocation2 + $0xb8] sm:$0x3]
  %v236 = vld [vmem:[#allocation2 + $0xc0] sm:$0xff]
  %v237 = vld [vmem:[#allocation2 + $0xc8] sm:$0x3]
  %v238 = vld [vmem:[#allocation2 + $0xd0] sm:$0xff]
  %v239 = vld [vmem:[#allocation2 + $0xd8] sm:$0x3]
  %v240 = vld [vmem:[#allocation2 + $0xe0] sm:$0xff]
  %v241 = vld [vmem:[#allocation2 + $0xe8] sm:$0x3]
  %v242 = vld [vmem:[#allocation2 + $0xf0] sm:$0xff]
  %v243 = vld [vmem:[#allocation2 + $0xf8] sm:$0x3]
  %v244 = vld [vmem:[#allocation2 + $0x100] sm:$0xff]
  %v245 = vld [vmem:[#allocation2 + $0x108] sm:$0x3]
  %v246 = vld [vmem:[#allocation2 + $0x110] sm:$0xff]
  %v247 = vld [vmem:[#allocation2 + $0x118] sm:$0x3]
  %v248 = vld [vmem:[#allocation2 + $0x120] sm:$0xff]
  %v249 = vld [vmem:[#allocation2 + $0x128] sm:$0x3]
  %v250 = vld [vmem:[#allocation2 + $0x130] sm:$0xff]
  %v251 = vld [vmem:[#allocation2 + $0x138] sm:$0x3]
  %252 = vst.msk [vmem:[#allocation5] sm:$0xff] %vm53, %v212
  %253 = vst.msk [vmem:[#allocation5 + $0x18] sm:$0xff] %vm53, %v214
  %254 = vst.msk [vmem:[#allocation5 + $0x30] sm:$0xff] %vm53, %v216
  %255 = vst.msk [vmem:[#allocation5 + $0x48] sm:$0xff] %vm53, %v218
  %256 = vst.msk [vmem:[#allocation5 + $0x60] sm:$0xff] %vm53, %v220
  %257 = vst.msk [vmem:[#allocation5 + $0x78] sm:$0xff] %vm53, %v222
  %258 = vst.msk [vmem:[#allocation5 + $0x90] sm:$0xff] %vm53, %v224
  %259 = vst.msk [vmem:[#allocation5 + $0xa8] sm:$0xff] %vm53, %v226
  %260 = vst.msk [vmem:[#allocation5 + $0xc0] sm:$0xff] %vm53, %v232
  %261 = vst.msk [vmem:[#allocation5 + $0xd8] sm:$0xff] %vm53, %v234
  %262 = vst.msk [vmem:[#allocation5 + $0xf0] sm:$0xff] %vm53, %v236
  %263 = vst.msk [vmem:[#allocation5 + $0x108] sm:$0xff] %vm53, %v238
  %264 = vst.msk [vmem:[#allocation5 + $0x120] sm:$0xff] %vm53, %v240
  %265 = vst.msk [vmem:[#allocation5 + $0x138] sm:$0xff] %vm53, %v242
  %266 = vst.msk [vmem:[#allocation5 + $0x150] sm:$0xff] %vm53, %v244
  %267 = vst.msk [vmem:[#allocation5 + $0x168] sm:$0xff] %vm53, %v246
  %vm300 = vcmask 1046528
  %v301 = vrot.slane %v212, 1
  %v302 = vrot.slane %v213, 1
  %v303 = vsel %vm300, %v301, %v302
  %v304 = vrot.slane %v214, 1
  %v305 = vrot.slane %v215, 1
  %v306 = vsel %vm300, %v304, %v305
  %v307 = vrot.slane %v216, 1
  %v308 = vrot.slane %v217, 1
  %v309 = vsel %vm300, %v307, %v308
  %v310 = vrot.slane %v218, 1
  %v311 = vrot.slane %v219, 1
  %v312 = vsel %vm300, %v310, %v311
  %v313 = vrot.slane %v220, 1
  %v314 = vrot.slane %v221, 1
  %v315 = vsel %vm300, %v313, %v314
  %v316 = vrot.slane %v222, 1
  %v317 = vrot.slane %v223, 1
  %v318 = vsel %vm300, %v316, %v317
  %v319 = vrot.slane %v224, 1
  %v320 = vrot.slane %v225, 1
  %v321 = vsel %vm300, %v319, %v320
  %v322 = vrot.slane %v226, 1
  %v323 = vrot.slane %v227, 1
  %v324 = vsel %vm300, %v322, %v323
  %v325 = vrot.slane %v232, 1
  %v326 = vrot.slane %v233, 1
  %v327 = vsel %vm300, %v325, %v326
  %v328 = vrot.slane %v234, 1
  %v329 = vrot.slane %v235, 1
  %v330 = vsel %vm300, %v328, %v329
  %v331 = vrot.slane %v236, 1
  %v332 = vrot.slane %v237, 1
  %v333 = vsel %vm300, %v331, %v332
  %v334 = vrot.slane %v238, 1
  %v335 = vrot.slane %v239, 1
  %v336 = vsel %vm300, %v334, %v335
  %v337 = vrot.slane %v240, 1
  %v338 = vrot.slane %v241, 1
  %v339 = vsel %vm300, %v337, %v338
  %v340 = vrot.slane %v242, 1
  %v341 = vrot.slane %v243, 1
  %v342 = vsel %vm300, %v340, %v341
  %v343 = vrot.slane %v244, 1
  %v344 = vrot.slane %v245, 1
  %v345 = vsel %vm300, %v343, %v344
  %v346 = vrot.slane %v246, 1
  %v347 = vrot.slane %v247, 1
  %v348 = vsel %vm300, %v346, %v347
  %349 = vrot.lane.b32.xlu0 %v303, 4
  %v350 = vpop.permute.xlu0 %349
  %351 = vrot.lane.b32.xlu0 %v306, 4
  %v352 = vpop.permute.xlu0 %351
  %353 = vrot.lane.b32.xlu0 %v309, 4
  %v354 = vpop.permute.xlu0 %353
  %355 = vrot.lane.b32.xlu0 %v312, 4
  %v356 = vpop.permute.xlu0 %355
  %357 = vrot.lane.b32.xlu0 %v315, 4
  %v358 = vpop.permute.xlu0 %357
  %359 = vrot.lane.b32.xlu0 %v318, 4
  %v360 = vpop.permute.xlu0 %359
  %361 = vrot.lane.b32.xlu0 %v321, 4
  %v362 = vpop.permute.xlu0 %361
  %363 = vrot.lane.b32.xlu0 %v324, 4
  %v364 = vpop.permute.xlu0 %363
  %365 = vrot.lane.b32.xlu0 %v327, 4
  %v366 = vpop.permute.xlu0 %365
  %367 = vrot.lane.b32.xlu0 %v330, 4
  %v368 = vpop.permute.xlu0 %367
  %369 = vrot.lane.b32.xlu0 %v333, 4
  %v370 = vpop.permute.xlu0 %369
  %371 = vrot.lane.b32.xlu0 %v336, 4
  %v372 = vpop.permute.xlu0 %371
  %373 = vrot.lane.b32.xlu0 %v339, 4
  %v374 = vpop.permute.xlu0 %373
  %375 = vrot.lane.b32.xlu0 %v342, 4
  %v376 = vpop.permute.xlu0 %375
  %377 = vrot.lane.b32.xlu0 %v345, 4
  %v378 = vpop.permute.xlu0 %377
  %379 = vrot.lane.b32.xlu0 %v348, 4
  %v380 = vpop.permute.xlu0 %379
  %vm397 = vcmask 64544
  %398 = vst.msk [vmem:[#allocation5] sm:$0xff] %vm397, %v350
  %399 = vst.msk [vmem:[#allocation5 + $0x18] sm:$0xff] %vm397, %v352
  %400 = vst.msk [vmem:[#allocation5 + $0x30] sm:$0xff] %vm397, %v354
  %401 = vst.msk [vmem:[#allocation5 + $0x48] sm:$0xff] %vm397, %v356
  %402 = vst.msk [vmem:[#allocation5 + $0x60] sm:$0xff] %vm397, %v358
  %403 = vst.msk [vmem:[#allocation5 + $0x78] sm:$0xff] %vm397, %v360
  %404 = vst.msk [vmem:[#allocation5 + $0x90] sm:$0xff] %vm397, %v362
  %405 = vst.msk [vmem:[#allocation5 + $0xa8] sm:$0xff] %vm397, %v364
  %406 = vst.msk [vmem:[#allocation5 + $0xc0] sm:$0xff] %vm397, %v366
  %407 = vst.msk [vmem:[#allocation5 + $0xd8] sm:$0xff] %vm397, %v368
  %408 = vst.msk [vmem:[#allocation5 + $0xf0] sm:$0xff] %vm397, %v370
  %409 = vst.msk [vmem:[#allocation5 + $0x108] sm:$0xff] %vm397, %v372
  %410 = vst.msk [vmem:[#allocation5 + $0x120] sm:$0xff] %vm397, %v374
  %411 = vst.msk [vmem:[#allocation5 + $0x138] sm:$0xff] %vm397, %v376
  %412 = vst.msk [vmem:[#allocation5 + $0x150] sm:$0xff] %vm397, %v378
  %413 = vst.msk [vmem:[#allocation5 + $0x168] sm:$0xff] %vm397, %v380
  %vm414 = vcmask 1045504
  %v415 = vrot.slane %v212, 2
  %v416 = vrot.slane %v213, 2
  %v417 = vsel %vm414, %v415, %v416
  %v418 = vrot.slane %v214, 2
  %v419 = vrot.slane %v215, 2
  %v420 = vsel %vm414, %v418, %v419
  %v421 = vrot.slane %v216, 2
  %v422 = vrot.slane %v217, 2
  %v423 = vsel %vm414, %v421, %v422
  %v424 = vrot.slane %v218, 2
  %v425 = vrot.slane %v219, 2
  %v426 = vsel %vm414, %v424, %v425
  %v427 = vrot.slane %v220, 2
  %v428 = vrot.slane %v221, 2
  %v429 = vsel %vm414, %v427, %v428
  %v430 = vrot.slane %v222, 2
  %v431 = vrot.slane %v223, 2
  %v432 = vsel %vm414, %v430, %v431
  %v433 = vrot.slane %v224, 2
  %v434 = vrot.slane %v225, 2
  %v435 = vsel %vm414, %v433, %v434
  %v436 = vrot.slane %v226, 2
  %v437 = vrot.slane %v227, 2
  %v438 = vsel %vm414, %v436, %v437
  %v439 = vrot.slane %v232, 2
  %v440 = vrot.slane %v233, 2
  %v441 = vsel %vm414, %v439, %v440
  %v442 = vrot.slane %v234, 2
  %v443 = vrot.slane %v235, 2
  %v444 = vsel %vm414, %v442, %v443
  %v445 = vrot.slane %v236, 2
  %v446 = vrot.slane %v237, 2
  %v447 = vsel %vm414, %v445, %v446
  %v448 = vrot.slane %v238, 2
  %v449 = vrot.slane %v239, 2
  %v450 = vsel %vm414, %v448, %v449
  %v451 = vrot.slane %v240, 2
  %v452 = vrot.slane %v241, 2
  %v453 = vsel %vm414, %v451, %v452
  %v454 = vrot.slane %v242, 2
  %v455 = vrot.slane %v243, 2
  %v456 = vsel %vm414, %v454, %v455
  %v457 = vrot.slane %v244, 2
  %v458 = vrot.slane %v245, 2
  %v459 = vsel %vm414, %v457, %v458
  %v460 = vrot.slane %v246, 2
  %v461 = vrot.slane %v247, 2
  %v462 = vsel %vm414, %v460, %v461
  %463 = vrot.lane.b32.xlu0 %v417, 8
  %v464 = vpop.permute.xlu0 %463
  %465 = vrot.lane.b32.xlu0 %v420, 8
  %v466 = vpop.permute.xlu0 %465
  %467 = vrot.lane.b32.xlu0 %v423, 8
  %v468 = vpop.permute.xlu0 %467
  %469 = vrot.lane.b32.xlu0 %v426, 8
  %v470 = vpop.permute.xlu0 %469
  %471 = vrot.lane.b32.xlu0 %v429, 8
  %v472 = vpop.permute.xlu0 %471
  %473 = vrot.lane.b32.xlu0 %v432, 8
  %v474 = vpop.permute.xlu0 %473
  %475 = vrot.lane.b32.xlu0 %v435, 8
  %v476 = vpop.permute.xlu0 %475
  %477 = vrot.lane.b32.xlu0 %v438, 8
  %v478 = vpop.permute.xlu0 %477
  %479 = vrot.lane.b32.xlu0 %v441, 8
  %v480 = vpop.permute.xlu0 %479
  %481 = vrot.lane.b32.xlu0 %v444, 8
  %v482 = vpop.permute.xlu0 %481
  %483 = vrot.lane.b32.xlu0 %v447, 8
  %v484 = vpop.permute.xlu0 %483
  %485 = vrot.lane.b32.xlu0 %v450, 8
  %v486 = vpop.permute.xlu0 %485
  %487 = vrot.lane.b32.xlu0 %v453, 8
  %v488 = vpop.permute.xlu0 %487
  %489 = vrot.lane.b32.xlu0 %v456, 8
  %v490 = vpop.permute.xlu0 %489
  %491 = vrot.lane.b32.xlu0 %v459, 8
  %v492 = vpop.permute.xlu0 %491
  %493 = vrot.lane.b32.xlu0 %v462, 8
  %v494 = vpop.permute.xlu0 %493
  %vm511 = vcmask 97344
  %512 = vst.msk [vmem:[#allocation5] sm:$0xff] %vm511, %v464
  %513 = vst.msk [vmem:[#allocation5 + $0x18] sm:$0xff] %vm511, %v466
  %514 = vst.msk [vmem:[#allocation5 + $0x30] sm:$0xff] %vm511, %v468
  %515 = vst.msk [vmem:[#allocation5 + $0x48] sm:$0xff] %vm511, %v470
  %516 = vst.msk [vmem:[#allocation5 + $0x60] sm:$0xff] %vm511, %v472
  %517 = vst.msk [vmem:[#allocation5 + $0x78] sm:$0xff] %vm511, %v474
  %518 = vst.msk [vmem:[#allocation5 + $0x90] sm:$0xff] %vm511, %v476
  %519 = vst.msk [vmem:[#allocation5 + $0xa8] sm:$0xff] %vm511, %v478
  %520 = vst.msk [vmem:[#allocation5 + $0xc0] sm:$0xff] %vm511, %v480
  %521 = vst.msk [vmem:[#allocation5 + $0xd8] sm:$0xff] %vm511, %v482
  %522 = vst.msk [vmem:[#allocation5 + $0xf0] sm:$0xff] %vm511, %v484
  %523 = vst.msk [vmem:[#allocation5 + $0x108] sm:$0xff] %vm511, %v486
  %524 = vst.msk [vmem:[#allocation5 + $0x120] sm:$0xff] %vm511, %v488
  %525 = vst.msk [vmem:[#allocation5 + $0x138] sm:$0xff] %vm511, %v490
  %526 = vst.msk [vmem:[#allocation5 + $0x150] sm:$0xff] %vm511, %v492
  %527 = vst.msk [vmem:[#allocation5 + $0x168] sm:$0xff] %vm511, %v494
  %530 = vrot.lane.b32.xlu0 %v214, 12
  %v531 = vpop.permute.xlu0 %530
  %532 = vrot.lane.b32.xlu0 %v216, 12
  %v533 = vpop.permute.xlu0 %532
  %534 = vrot.lane.b32.xlu0 %v218, 12
  %v535 = vpop.permute.xlu0 %534
  %536 = vrot.lane.b32.xlu0 %v220, 12
  %v537 = vpop.permute.xlu0 %536
  %538 = vrot.lane.b32.xlu0 %v222, 12
  %v539 = vpop.permute.xlu0 %538
  %540 = vrot.lane.b32.xlu0 %v224, 12
  %v541 = vpop.permute.xlu0 %540
  %542 = vrot.lane.b32.xlu0 %v226, 12
  %v543 = vpop.permute.xlu0 %542
  %544 = vrot.lane.b32.xlu0 %v228, 12
  %v545 = vpop.permute.xlu0 %544
  %546 = vrot.lane.b32.xlu0 %v234, 12
  %v547 = vpop.permute.xlu0 %546
  %548 = vrot.lane.b32.xlu0 %v236, 12
  %v549 = vpop.permute.xlu0 %548
  %550 = vrot.lane.b32.xlu0 %v238, 12
  %v551 = vpop.permute.xlu0 %550
  %552 = vrot.lane.b32.xlu0 %v240, 12
  %v553 = vpop.permute.xlu0 %552
  %554 = vrot.lane.b32.xlu0 %v242, 12
  %v555 = vpop.permute.xlu0 %554
  %556 = vrot.lane.b32.xlu0 %v244, 12
  %v557 = vpop.permute.xlu0 %556
  %558 = vrot.lane.b32.xlu0 %v246, 12
  %v559 = vpop.permute.xlu0 %558
  %560 = vrot.lane.b32.xlu0 %v248, 12
  %v561 = vpop.permute.xlu0 %560
  %vm578 = vcmask 130144
  %579 = vst.msk [vmem:[#allocation5] sm:$0xff] %vm578, %v531
  %580 = vst.msk [vmem:[#allocation5 + $0x18] sm:$0xff] %vm578, %v533
  %581 = vst.msk [vmem:[#allocation5 + $0x30] sm:$0xff] %vm578, %v535
  %582 = vst.msk [vmem:[#allocation5 + $0x48] sm:$0xff] %vm578, %v537
  %583 = vst.msk [vmem:[#allocation5 + $0x60] sm:$0xff] %vm578, %v539
  %584 = vst.msk [vmem:[#allocation5 + $0x78] sm:$0xff] %vm578, %v541
  %585 = vst.msk [vmem:[#allocation5 + $0x90] sm:$0xff] %vm578, %v543
  %586 = vst.msk [vmem:[#allocation5 + $0xa8] sm:$0xff] %vm578, %v545
  %587 = vst.msk [vmem:[#allocation5 + $0xc0] sm:$0xff] %vm578, %v547
  %588 = vst.msk [vmem:[#allocation5 + $0xd8] sm:$0xff] %vm578, %v549
  %589 = vst.msk [vmem:[#allocation5 + $0xf0] sm:$0xff] %vm578, %v551
  %590 = vst.msk [vmem:[#allocation5 + $0x108] sm:$0xff] %vm578, %v553
  %591 = vst.msk [vmem:[#allocation5 + $0x120] sm:$0xff] %vm578, %v555
  %592 = vst.msk [vmem:[#allocation5 + $0x138] sm:$0xff] %vm578, %v557
  %593 = vst.msk [vmem:[#allocation5 + $0x150] sm:$0xff] %vm578, %v559
  %594 = vst.msk [vmem:[#allocation5 + $0x168] sm:$0xff] %vm578, %v561
  %v597 = vrot.slane %v228, 1
  %v598 = vrot.slane %v229, 1
  %v599 = vsel %vm300, %v597, %v598
  %v600 = vrot.slane %v248, 1
  %v601 = vrot.slane %v249, 1
  %v602 = vsel %vm300, %v600, %v601
  %603 = vrot.lane.b32.xlu0 %v306, 16
  %v604 = vpop.permute.xlu0 %603
  %605 = vrot.lane.b32.xlu0 %v309, 16
  %v606 = vpop.permute.xlu0 %605
  %607 = vrot.lane.b32.xlu0 %v312, 16
  %v608 = vpop.permute.xlu0 %607
  %609 = vrot.lane.b32.xlu0 %v315, 16
  %v610 = vpop.permute.xlu0 %609
  %611 = vrot.lane.b32.xlu0 %v318, 16
  %v612 = vpop.permute.xlu0 %611
  %613 = vrot.lane.b32.xlu0 %v321, 16
  %v614 = vpop.permute.xlu0 %613
  %615 = vrot.lane.b32.xlu0 %v324, 16
  %v616 = vpop.permute.xlu0 %615
  %617 = vrot.lane.b32.xlu0 %v599, 16
  %v618 = vpop.permute.xlu0 %617
  %619 = vrot.lane.b32.xlu0 %v330, 16
  %v620 = vpop.permute.xlu0 %619
  %621 = vrot.lane.b32.xlu0 %v333, 16
  %v622 = vpop.permute.xlu0 %621
  %623 = vrot.lane.b32.xlu0 %v336, 16
  %v624 = vpop.permute.xlu0 %623
  %625 = vrot.lane.b32.xlu0 %v339, 16
  %v626 = vpop.permute.xlu0 %625
  %627 = vrot.lane.b32.xlu0 %v342, 16
  %v628 = vpop.permute.xlu0 %627
  %629 = vrot.lane.b32.xlu0 %v345, 16
  %v630 = vpop.permute.xlu0 %629
  %631 = vrot.lane.b32.xlu0 %v348, 16
  %v632 = vpop.permute.xlu0 %631
  %633 = vrot.lane.b32.xlu0 %v602, 16
  %v634 = vpop.permute.xlu0 %633
  %vm651 = vcmask 162944
  %652 = vst.msk [vmem:[#allocation5] sm:$0xff] %vm651, %v604
  %653 = vst.msk [vmem:[#allocation5 + $0x18] sm:$0xff] %vm651, %v606
  %654 = vst.msk [vmem:[#allocation5 + $0x30] sm:$0xff] %vm651, %v608
  %655 = vst.msk [vmem:[#allocation5 + $0x48] sm:$0xff] %vm651, %v610
  %656 = vst.msk [vmem:[#allocation5 + $0x60] sm:$0xff] %vm651, %v612
  %657 = vst.msk [vmem:[#allocation5 + $0x78] sm:$0xff] %vm651, %v614
  %658 = vst.msk [vmem:[#allocation5 + $0x90] sm:$0xff] %vm651, %v616
  %659 = vst.msk [vmem:[#allocation5 + $0xa8] sm:$0xff] %vm651, %v618
  %660 = vst.msk [vmem:[#allocation5 + $0xc0] sm:$0xff] %vm651, %v620
  %661 = vst.msk [vmem:[#allocation5 + $0xd8] sm:$0xff] %vm651, %v622
  %662 = vst.msk [vmem:[#allocation5 + $0xf0] sm:$0xff] %vm651, %v624
  %663 = vst.msk [vmem:[#allocation5 + $0x108] sm:$0xff] %vm651, %v626
  %664 = vst.msk [vmem:[#allocation5 + $0x120] sm:$0xff] %vm651, %v628
  %665 = vst.msk [vmem:[#allocation5 + $0x138] sm:$0xff] %vm651, %v630
  %666 = vst.msk [vmem:[#allocation5 + $0x150] sm:$0xff] %vm651, %v632
  %667 = vst.msk [vmem:[#allocation5 + $0x168] sm:$0xff] %vm651, %v634
  %v668 = vrot.slane %v228, 2
  %v669 = vrot.slane %v229, 2
  %v670 = vsel %vm414, %v668, %v669
  %v671 = vrot.slane %v248, 2
  %v672 = vrot.slane %v249, 2
  %v673 = vsel %vm414, %v671, %v672
  %674 = vrot.lane.b32.xlu0 %v420, 20
  %v675 = vpop.permute.xlu0 %674
  %676 = vrot.lane.b32.xlu0 %v423, 20
  %v677 = vpop.permute.xlu0 %676
  %678 = vrot.lane.b32.xlu0 %v426, 20
  %v679 = vpop.permute.xlu0 %678
  %680 = vrot.lane.b32.xlu0 %v429, 20
  %v681 = vpop.permute.xlu0 %680
  %682 = vrot.lane.b32.xlu0 %v432, 20
  %v683 = vpop.permute.xlu0 %682
  %684 = vrot.lane.b32.xlu0 %v435, 20
  %v685 = vpop.permute.xlu0 %684
  %686 = vrot.lane.b32.xlu0 %v438, 20
  %v687 = vpop.permute.xlu0 %686
  %688 = vrot.lane.b32.xlu0 %v670, 20
  %v689 = vpop.permute.xlu0 %688
  %690 = vrot.lane.b32.xlu0 %v444, 20
  %v691 = vpop.permute.xlu0 %690
  %692 = vrot.lane.b32.xlu0 %v447, 20
  %v693 = vpop.permute.xlu0 %692
  %694 = vrot.lane.b32.xlu0 %v450, 20
  %v695 = vpop.permute.xlu0 %694
  %696 = vrot.lane.b32.xlu0 %v453, 20
  %v697 = vpop.permute.xlu0 %696
  %698 = vrot.lane.b32.xlu0 %v456, 20
  %v699 = vpop.permute.xlu0 %698
  %700 = vrot.lane.b32.xlu0 %v459, 20
  %v701 = vpop.permute.xlu0 %700
  %702 = vrot.lane.b32.xlu0 %v462, 20
  %v703 = vpop.permute.xlu0 %702
  %704 = vrot.lane.b32.xlu0 %v673, 20
  %v705 = vpop.permute.xlu0 %704
  %vm722 = vcmask 195744
  %723 = vst.msk [vmem:[#allocation5] sm:$0xff] %vm722, %v675
  %724 = vst.msk [vmem:[#allocation5 + $0x18] sm:$0xff] %vm722, %v677
  %725 = vst.msk [vmem:[#allocation5 + $0x30] sm:$0xff] %vm722, %v679
  %726 = vst.msk [vmem:[#allocation5 + $0x48] sm:$0xff] %vm722, %v681
  %727 = vst.msk [vmem:[#allocation5 + $0x60] sm:$0xff] %vm722, %v683
  %728 = vst.msk [vmem:[#allocation5 + $0x78] sm:$0xff] %vm722, %v685
  %729 = vst.msk [vmem:[#allocation5 + $0x90] sm:$0xff] %vm722, %v687
  %730 = vst.msk [vmem:[#allocation5 + $0xa8] sm:$0xff] %vm722, %v689
  %731 = vst.msk [vmem:[#allocation5 + $0xc0] sm:$0xff] %vm722, %v691
  %732 = vst.msk [vmem:[#allocation5 + $0xd8] sm:$0xff] %vm722, %v693
  %733 = vst.msk [vmem:[#allocation5 + $0xf0] sm:$0xff] %vm722, %v695
  %734 = vst.msk [vmem:[#allocation5 + $0x108] sm:$0xff] %vm722, %v697
  %735 = vst.msk [vmem:[#allocation5 + $0x120] sm:$0xff] %vm722, %v699
  %736 = vst.msk [vmem:[#allocation5 + $0x138] sm:$0xff] %vm722, %v701
  %737 = vst.msk [vmem:[#allocation5 + $0x150] sm:$0xff] %vm722, %v703
  %738 = vst.msk [vmem:[#allocation5 + $0x168] sm:$0xff] %vm722, %v705
  %741 = vrot.lane.b32.xlu0 %v216, 24
  %v742 = vpop.permute.xlu0 %741
  %743 = vrot.lane.b32.xlu0 %v218, 24
  %v744 = vpop.permute.xlu0 %743
  %745 = vrot.lane.b32.xlu0 %v220, 24
  %v746 = vpop.permute.xlu0 %745
  %747 = vrot.lane.b32.xlu0 %v222, 24
  %v748 = vpop.permute.xlu0 %747
  %749 = vrot.lane.b32.xlu0 %v224, 24
  %v750 = vpop.permute.xlu0 %749
  %751 = vrot.lane.b32.xlu0 %v226, 24
  %v752 = vpop.permute.xlu0 %751
  %753 = vrot.lane.b32.xlu0 %v228, 24
  %v754 = vpop.permute.xlu0 %753
  %755 = vrot.lane.b32.xlu0 %v230, 24
  %v756 = vpop.permute.xlu0 %755
  %757 = vrot.lane.b32.xlu0 %v236, 24
  %v758 = vpop.permute.xlu0 %757
  %759 = vrot.lane.b32.xlu0 %v238, 24
  %v760 = vpop.permute.xlu0 %759
  %761 = vrot.lane.b32.xlu0 %v240, 24
  %v762 = vpop.permute.xlu0 %761
  %763 = vrot.lane.b32.xlu0 %v242, 24
  %v764 = vpop.permute.xlu0 %763
  %765 = vrot.lane.b32.xlu0 %v244, 24
  %v766 = vpop.permute.xlu0 %765
  %767 = vrot.lane.b32.xlu0 %v246, 24
  %v768 = vpop.permute.xlu0 %767
  %769 = vrot.lane.b32.xlu0 %v248, 24
  %v770 = vpop.permute.xlu0 %769
  %771 = vrot.lane.b32.xlu0 %v250, 24
  %v772 = vpop.permute.xlu0 %771
  %vm789 = vcmask 228544
  %790 = vst.msk [vmem:[#allocation5] sm:$0xff] %vm789, %v742
  %791 = vst.msk [vmem:[#allocation5 + $0x18] sm:$0xff] %vm789, %v744
  %792 = vst.msk [vmem:[#allocation5 + $0x30] sm:$0xff] %vm789, %v746
  %793 = vst.msk [vmem:[#allocation5 + $0x48] sm:$0xff] %vm789, %v748
  %794 = vst.msk [vmem:[#allocation5 + $0x60] sm:$0xff] %vm789, %v750
  %795 = vst.msk [vmem:[#allocation5 + $0x78] sm:$0xff] %vm789, %v752
  %796 = vst.msk [vmem:[#allocation5 + $0x90] sm:$0xff] %vm789, %v754
  %797 = vst.msk [vmem:[#allocation5 + $0xa8] sm:$0xff] %vm789, %v756
  %798 = vst.msk [vmem:[#allocation5 + $0xc0] sm:$0xff] %vm789, %v758
  %799 = vst.msk [vmem:[#allocation5 + $0xd8] sm:$0xff] %vm789, %v760
  %800 = vst.msk [vmem:[#allocation5 + $0xf0] sm:$0xff] %vm789, %v762
  %801 = vst.msk [vmem:[#allocation5 + $0x108] sm:$0xff] %vm789, %v764
  %802 = vst.msk [vmem:[#allocation5 + $0x120] sm:$0xff] %vm789, %v766
  %803 = vst.msk [vmem:[#allocation5 + $0x138] sm:$0xff] %vm789, %v768
  %804 = vst.msk [vmem:[#allocation5 + $0x150] sm:$0xff] %vm789, %v770
  %805 = vst.msk [vmem:[#allocation5 + $0x168] sm:$0xff] %vm789, %v772
  %v808 = vrot.slane %v230, 1
  %v809 = vrot.slane %v231, 1
  %v810 = vsel %vm300, %v808, %v809
  %v811 = vrot.slane %v250, 1
  %v812 = vrot.slane %v251, 1
  %v813 = vsel %vm300, %v811, %v812
  %814 = vrot.lane.b32.xlu0 %v309, 28
  %v815 = vpop.permute.xlu0 %814
  %816 = vrot.lane.b32.xlu0 %v312, 28
  %v817 = vpop.permute.xlu0 %816
  %818 = vrot.lane.b32.xlu0 %v315, 28
  %v819 = vpop.permute.xlu0 %818
  %820 = vrot.lane.b32.xlu0 %v318, 28
  %v821 = vpop.permute.xlu0 %820
  %822 = vrot.lane.b32.xlu0 %v321, 28
  %v823 = vpop.permute.xlu0 %822
  %824 = vrot.lane.b32.xlu0 %v324, 28
  %v825 = vpop.permute.xlu0 %824
  %826 = vrot.lane.b32.xlu0 %v599, 28
  %v827 = vpop.permute.xlu0 %826
  %828 = vrot.lane.b32.xlu0 %v810, 28
  %v829 = vpop.permute.xlu0 %828
  %830 = vrot.lane.b32.xlu0 %v333, 28
  %v831 = vpop.permute.xlu0 %830
  %832 = vrot.lane.b32.xlu0 %v336, 28
  %v833 = vpop.permute.xlu0 %832
  %834 = vrot.lane.b32.xlu0 %v339, 28
  %v835 = vpop.permute.xlu0 %834
  %836 = vrot.lane.b32.xlu0 %v342, 28
  %v837 = vpop.permute.xlu0 %836
  %838 = vrot.lane.b32.xlu0 %v345, 28
  %v839 = vpop.permute.xlu0 %838
  %840 = vrot.lane.b32.xlu0 %v348, 28
  %v841 = vpop.permute.xlu0 %840
  %842 = vrot.lane.b32.xlu0 %v602, 28
  %v843 = vpop.permute.xlu0 %842
  %844 = vrot.lane.b32.xlu0 %v813, 28
  %v845 = vpop.permute.xlu0 %844
  %vm862 = vcmask 261344
  %863 = vst.msk [vmem:[#allocation5] sm:$0xff] %vm862, %v815
  %864 = vst.msk [vmem:[#allocation5 + $0x18] sm:$0xff] %vm862, %v817
  %865 = vst.msk [vmem:[#allocation5 + $0x30] sm:$0xff] %vm862, %v819
  %866 = vst.msk [vmem:[#allocation5 + $0x48] sm:$0xff] %vm862, %v821
  %867 = vst.msk [vmem:[#allocation5 + $0x60] sm:$0xff] %vm862, %v823
  %868 = vst.msk [vmem:[#allocation5 + $0x78] sm:$0xff] %vm862, %v825
  %869 = vst.msk [vmem:[#allocation5 + $0x90] sm:$0xff] %vm862, %v827
  %870 = vst.msk [vmem:[#allocation5 + $0xa8] sm:$0xff] %vm862, %v829
  %871 = vst.msk [vmem:[#allocation5 + $0xc0] sm:$0xff] %vm862, %v831
  %872 = vst.msk [vmem:[#allocation5 + $0xd8] sm:$0xff] %vm862, %v833
  %873 = vst.msk [vmem:[#allocation5 + $0xf0] sm:$0xff] %vm862, %v835
  %874 = vst.msk [vmem:[#allocation5 + $0x108] sm:$0xff] %vm862, %v837
  %875 = vst.msk [vmem:[#allocation5 + $0x120] sm:$0xff] %vm862, %v839
  %876 = vst.msk [vmem:[#allocation5 + $0x138] sm:$0xff] %vm862, %v841
  %877 = vst.msk [vmem:[#allocation5 + $0x150] sm:$0xff] %vm862, %v843
  %878 = vst.msk [vmem:[#allocation5 + $0x168] sm:$0xff] %vm862, %v845
  %v879 = vrot.slane %v230, 2
  %v880 = vrot.slane %v231, 2
  %v881 = vsel %vm414, %v879, %v880
  %v882 = vrot.slane %v250, 2
  %v883 = vrot.slane %v251, 2
  %v884 = vsel %vm414, %v882, %v883
  %885 = vrot.lane.b32.xlu0 %v423, 32
  %v886 = vpop.permute.xlu0 %885
  %887 = vrot.lane.b32.xlu0 %v426, 32
  %v888 = vpop.permute.xlu0 %887
  %889 = vrot.lane.b32.xlu0 %v429, 32
  %v890 = vpop.permute.xlu0 %889
  %891 = vrot.lane.b32.xlu0 %v432, 32
  %v892 = vpop.permute.xlu0 %891
  %893 = vrot.lane.b32.xlu0 %v435, 32
  %v894 = vpop.permute.xlu0 %893
  %895 = vrot.lane.b32.xlu0 %v438, 32
  %v896 = vpop.permute.xlu0 %895
  %897 = vrot.lane.b32.xlu0 %v670, 32
  %v898 = vpop.permute.xlu0 %897
  %899 = vrot.lane.b32.xlu0 %v881, 32
  %v900 = vpop.permute.xlu0 %899
  %901 = vrot.lane.b32.xlu0 %v447, 32
  %v902 = vpop.permute.xlu0 %901
  %903 = vrot.lane.b32.xlu0 %v450, 32
  %v904 = vpop.permute.xlu0 %903
  %905 = vrot.lane.b32.xlu0 %v453, 32
  %v906 = vpop.permute.xlu0 %905
  %907 = vrot.lane.b32.xlu0 %v456, 32
  %v908 = vpop.permute.xlu0 %907
  %909 = vrot.lane.b32.xlu0 %v459, 32
  %v910 = vpop.permute.xlu0 %909
  %911 = vrot.lane.b32.xlu0 %v462, 32
  %v912 = vpop.permute.xlu0 %911
  %913 = vrot.lane.b32.xlu0 %v673, 32
  %v914 = vpop.permute.xlu0 %913
  %915 = vrot.lane.b32.xlu0 %v884, 32
  %v916 = vpop.permute.xlu0 %915
  %vm933 = vcmask 294144
  %934 = vst.msk [vmem:[#allocation5] sm:$0xff] %vm933, %v886
  %935 = vst.msk [vmem:[#allocation5 + $0x18] sm:$0xff] %vm933, %v888
  %936 = vst.msk [vmem:[#allocation5 + $0x30] sm:$0xff] %vm933, %v890
  %937 = vst.msk [vmem:[#allocation5 + $0x48] sm:$0xff] %vm933, %v892
  %938 = vst.msk [vmem:[#allocation5 + $0x60] sm:$0xff] %vm933, %v894
  %939 = vst.msk [vmem:[#allocation5 + $0x78] sm:$0xff] %vm933, %v896
  %940 = vst.msk [vmem:[#allocation5 + $0x90] sm:$0xff] %vm933, %v898
  %941 = vst.msk [vmem:[#allocation5 + $0xa8] sm:$0xff] %vm933, %v900
  %942 = vst.msk [vmem:[#allocation5 + $0xc0] sm:$0xff] %vm933, %v902
  %943 = vst.msk [vmem:[#allocation5 + $0xd8] sm:$0xff] %vm933, %v904
  %944 = vst.msk [vmem:[#allocation5 + $0xf0] sm:$0xff] %vm933, %v906
  %945 = vst.msk [vmem:[#allocation5 + $0x108] sm:$0xff] %vm933, %v908
  %946 = vst.msk [vmem:[#allocation5 + $0x120] sm:$0xff] %vm933, %v910
  %947 = vst.msk [vmem:[#allocation5 + $0x138] sm:$0xff] %vm933, %v912
  %948 = vst.msk [vmem:[#allocation5 + $0x150] sm:$0xff] %vm933, %v914
  %949 = vst.msk [vmem:[#allocation5 + $0x168] sm:$0xff] %vm933, %v916
  %v950 = vld [vmem:[#allocation5] sm:$0xff]
  %v951 = vld [vmem:[#allocation5 + $0x18] sm:$0xff]
  %v952 = vld [vmem:[#allocation5 + $0x30] sm:$0xff]
  %v953 = vld [vmem:[#allocation5 + $0x48] sm:$0xff]
  %v954 = vld [vmem:[#allocation5 + $0x60] sm:$0xff]
  %v955 = vld [vmem:[#allocation5 + $0x78] sm:$0xff]
  %v956 = vld [vmem:[#allocation5 + $0x90] sm:$0xff]
  %v957 = vld [vmem:[#allocation5 + $0xa8] sm:$0xff]
  %v958 = vld [vmem:[#allocation5 + $0xc0] sm:$0xff]
  %v959 = vld [vmem:[#allocation5 + $0xd8] sm:$0xff]
  %v960 = vld [vmem:[#allocation5 + $0xf0] sm:$0xff]
  %v961 = vld [vmem:[#allocation5 + $0x108] sm:$0xff]
  %v962 = vld [vmem:[#allocation5 + $0x120] sm:$0xff]
  %v963 = vld [vmem:[#allocation5 + $0x138] sm:$0xff]
  %v964 = vld [vmem:[#allocation5 + $0x150] sm:$0xff]
  %v965 = vld [vmem:[#allocation5 + $0x168] sm:$0xff]
  %v966 = vld [vmem:[%s2] sm:$0xff]
  %v967 = vld [vmem:[%s2 + $0x8] sm:$0xff]
  %v968 = vld [vmem:[%s2 + $0x10] sm:$0xff]
  %v969 = vld [vmem:[%s2 + $0x18] sm:$0xff]
  %v970 = vld [vmem:[%s2 + $0x20] sm:$0xf]
  %v971 = vld [vmem:[%s3] sm:$0x1]
  %v973 = vlaneseq
  %v974 = vshrl.u32 %v973, 7
  %v975 = vsub.s32 0, %v974
  %v976 = vrot.slane %v971, %v975
  %vm978 = vcmask 293888
  %v980 = vsel %vm978, %v950, 0
  %v983 = vsel %vm978, %v951, 0
  %v986 = vsel %vm978, %v952, 0
  %v989 = vsel %vm978, %v953, 0
  %v992 = vsel %vm978, %v954, 0
  %v995 = vsel %vm978, %v955, 0
  %v998 = vsel %vm978, %v956, 0
  %v1001 = vsel %vm978, %v957, 0
  %v1004 = vsel %vm978, %v958, 0
  %v1007 = vsel %vm978, %v959, 0
  %v1010 = vsel %vm978, %v960, 0
  %v1013 = vsel %vm978, %v961, 0
  %v1016 = vsel %vm978, %v962, 0
  %v1019 = vsel %vm978, %v963, 0
  %v1022 = vsel %vm978, %v964, 0
  %v1025 = vsel %vm978, %v965, 0
  %vm1027 = vcmask 1043456
  %v1029 = vsel %vm1027, %v970, 0
  %1031 = vmatprep.subr.mxu0 0.0
  %1032 = vmatpush1.msra.mxu0 %v966
  %1033 = vmatprep.subr.mxu0 0.0
  %1034 = vmatpush1.msra.mxu0 %v967
  %1035 = vmatprep.subr.mxu0 0.0
  %1036 = vmatpush1.msra.mxu0 %v968
  %1037 = vmatprep.subr.mxu0 0.0
  %1038 = vmatpush1.msra.mxu0 %v969
  %1039 = vmatprep.subr.mxu0 0.0
  %1040 = vmatpush1.msra.mxu0 %v1029
  %1041 = vmatprep.subr.mxu0 0.0
  %1042 = vmatpush1.msra.mxu0 0.0
  %1043 = vmatprep.subr.mxu0 0.0
  %1044 = vmatpush1.msra.mxu0 0.0
  %1045 = vmatprep.subr.mxu0 0.0
  %1046 = vmatpush1.msra.mxu0 0.0
  %1047 = vmatprep.subr.mxu0 0.0
  %1048 = vmatpush1.msra.mxu0 0.0
  %1049 = vmatprep.subr.mxu0 0.0
  %1050 = vmatpush1.msra.mxu0 0.0
  %1051 = vmatprep.subr.mxu0 0.0
  %1052 = vmatpush1.msra.mxu0 0.0
  %1053 = vmatprep.subr.mxu0 0.0
  %1054 = vmatpush1.msra.mxu0 0.0
  %1055 = vmatprep.subr.mxu0 0.0
  %1056 = vmatpush1.msra.mxu0 0.0
  %1057 = vmatprep.subr.mxu0 0.0
  %1058 = vmatpush1.msra.mxu0 0.0
  %1059 = vmatprep.subr.mxu0 0.0
  %1060 = vmatpush1.msra.mxu0 0.0
  %1061 = vmatprep.subr.mxu0 0.0
  %1062 = vmatpush1.msra.mxu0 0.0
  %1063 = vmatprep.subr.mxu0 0.0
  %1064 = vmatpush1.msra.mxu0 0.0
  %1065 = vmatprep.subr.mxu0 0.0
  %1066 = vmatpush1.msra.mxu0 0.0
  %1067 = vmatprep.subr.mxu0 0.0
  %1068 = vmatpush1.msra.mxu0 0.0
  %1069 = vmatprep.subr.mxu0 0.0
  %1070 = vmatpush1.msra.mxu0 0.0
  %1071 = vmatprep.subr.mxu0 0.0
  %1072 = vmatpush1.msra.mxu0 0.0
  %1073 = vmatprep.subr.mxu0 0.0
  %1074 = vmatpush1.msra.mxu0 0.0
  %1075 = vmatprep.subr.mxu0 0.0
  %1076 = vmatpush1.msra.mxu0 0.0
  %1077 = vmatprep.subr.mxu0 0.0
  %1078 = vmatpush1.msra.mxu0 0.0
  %1079 = vmatprep.subr.mxu0 0.0
  %1080 = vmatpush1.msra.mxu0 0.0
  %1081 = vmatprep.subr.mxu0 0.0
  %1082 = vmatpush1.msra.mxu0 0.0
  %1083 = vmatprep.subr.mxu0 0.0
  %1084 = vmatpush1.msra.mxu0 0.0
  %1085 = vmatprep.subr.mxu0 0.0
  %1086 = vmatpush1.msra.mxu0 0.0
  %1087 = vmatprep.subr.mxu0 0.0
  %1088 = vmatpush1.msra.mxu0 0.0
  %1089 = vmatprep.subr.mxu0 0.0
  %1090 = vmatpush1.msra.mxu0 0.0
  %1091 = vmatprep.subr.mxu0 0.0
  %1092 = vmatpush1.msra.mxu0 0.0
  %1093 = vmatprep.subr.mxu0 0.0
  %1094 = vmatpush1.msra.mxu0 0.0
  %1095 = vmatprep.mubr.f32.mxu0 0.0
  %1096 = vmatmul.mubr.f32.gmra.mrb[0].mxu0 %v980
  %v1097 = vpop.f32.mrb[0].mxu0
  %v1098 = vadd.f32 %v976, %v1097
  %v1099 = vpop.f32.mrb[0].mxu0
  %1100 = vmatprep.mubr.f32.mxu0 0.0
  %1101 = vmatmul.mubr.f32.gmra.mrb[0].mxu0 %v983
  %v1102 = vpop.f32.mrb[0].mxu0
  %v1103 = vadd.f32 %v976, %v1102
  %v1104 = vpop.f32.mrb[0].mxu0
  %1105 = vmatprep.mubr.f32.mxu0 0.0
  %1106 = vmatmul.mubr.f32.gmra.mrb[0].mxu0 %v986
  %v1107 = vpop.f32.mrb[0].mxu0
  %v1108 = vadd.f32 %v976, %v1107
  %v1109 = vpop.f32.mrb[0].mxu0
  %1110 = vmatprep.mubr.f32.mxu0 0.0
  %1111 = vmatmul.mubr.f32.gmra.mrb[0].mxu0 %v989
  %v1112 = vpop.f32.mrb[0].mxu0
  %v1113 = vadd.f32 %v976, %v1112
  %v1114 = vpop.f32.mrb[0].mxu0
  %1115 = vmatprep.mubr.f32.mxu0 0.0
  %1116 = vmatmul.mubr.f32.gmra.mrb[0].mxu0 %v992
  %v1117 = vpop.f32.mrb[0].mxu0
  %v1118 = vadd.f32 %v976, %v1117
  %v1119 = vpop.f32.mrb[0].mxu0
  %1120 = vmatprep.mubr.f32.mxu0 0.0
  %1121 = vmatmul.mubr.f32.gmra.mrb[0].mxu0 %v995
  %v1122 = vpop.f32.mrb[0].mxu0
  %v1123 = vadd.f32 %v976, %v1122
  %v1124 = vpop.f32.mrb[0].mxu0
  %1125 = vmatprep.mubr.f32.mxu0 0.0
  %1126 = vmatmul.mubr.f32.gmra.mrb[0].mxu0 %v998
  %v1127 = vpop.f32.mrb[0].mxu0
  %v1128 = vadd.f32 %v976, %v1127
  %v1129 = vpop.f32.mrb[0].mxu0
  %1130 = vmatprep.mubr.f32.mxu0 0.0
  %1131 = vmatmul.mubr.f32.gmra.mrb[0].mxu0 %v1001
  %v1132 = vpop.f32.mrb[0].mxu0
  %v1133 = vadd.f32 %v976, %v1132
  %v1134 = vpop.f32.mrb[0].mxu0
  %1135 = vmatprep.mubr.f32.mxu0 0.0
  %1136 = vmatmul.mubr.f32.gmra.mrb[0].mxu0 %v1004
  %v1137 = vpop.f32.mrb[0].mxu0
  %v1138 = vadd.f32 %v976, %v1137
  %v1139 = vpop.f32.mrb[0].mxu0
  %1140 = vmatprep.mubr.f32.mxu0 0.0
  %1141 = vmatmul.mubr.f32.gmra.mrb[0].mxu0 %v1007
  %v1142 = vpop.f32.mrb[0].mxu0
  %v1143 = vadd.f32 %v976, %v1142
  %v1144 = vpop.f32.mrb[0].mxu0
  %1145 = vmatprep.mubr.f32.mxu0 0.0
  %1146 = vmatmul.mubr.f32.gmra.mrb[0].mxu0 %v1010
  %v1147 = vpop.f32.mrb[0].mxu0
  %v1148 = vadd.f32 %v976, %v1147
  %v1149 = vpop.f32.mrb[0].mxu0
  %1150 = vmatprep.mubr.f32.mxu0 0.0
  %1151 = vmatmul.mubr.f32.gmra.mrb[0].mxu0 %v1013
  %v1152 = vpop.f32.mrb[0].mxu0
  %v1153 = vadd.f32 %v976, %v1152
  %v1154 = vpop.f32.mrb[0].mxu0
  %1155 = vmatprep.mubr.f32.mxu0 0.0
  %1156 = vmatmul.mubr.f32.gmra.mrb[0].mxu0 %v1016
  %v1157 = vpop.f32.mrb[0].mxu0
  %v1158 = vadd.f32 %v976, %v1157
  %v1159 = vpop.f32.mrb[0].mxu0
  %1160 = vmatprep.mubr.f32.mxu0 0.0
  %1161 = vmatmul.mubr.f32.gmra.mrb[0].mxu0 %v1019
  %v1162 = vpop.f32.mrb[0].mxu0
  %v1163 = vadd.f32 %v976, %v1162
  %v1164 = vpop.f32.mrb[0].mxu0
  %1165 = vmatprep.mubr.f32.mxu0 0.0
  %1166 = vmatmul.mubr.f32.gmra.mrb[0].mxu0 %v1022
  %v1167 = vpop.f32.mrb[0].mxu0
  %v1168 = vadd.f32 %v976, %v1167
  %v1169 = vpop.f32.mrb[0].mxu0
  %1170 = vmatprep.mubr.f32.mxu0 0.0
  %1171 = vmatmul.mubr.f32.gmra.mrb[0].mxu0 %v1025
  %v1172 = vpop.f32.mrb[0].mxu0
  %v1173 = vadd.f32 %v976, %v1172
  %v1174 = vpop.f32.mrb[0].mxu0
  %1175 = vdwg.mxu0
  %v1176 = vmax.f32 %v1098, 0.0
  %v1177 = vmax.f32 %v1103, 0.0
  %v1178 = vmax.f32 %v1108, 0.0
  %v1179 = vmax.f32 %v1113, 0.0
  %v1180 = vmax.f32 %v1118, 0.0
  %v1181 = vmax.f32 %v1123, 0.0
  %v1182 = vmax.f32 %v1128, 0.0
  %v1183 = vmax.f32 %v1133, 0.0
  %v1184 = vmax.f32 %v1138, 0.0
  %v1185 = vmax.f32 %v1143, 0.0
  %v1186 = vmax.f32 %v1148, 0.0
  %v1187 = vmax.f32 %v1153, 0.0
  %v1188 = vmax.f32 %v1158, 0.0
  %v1189 = vmax.f32 %v1163, 0.0
  %v1190 = vmax.f32 %v1168, 0.0
  %v1191 = vmax.f32 %v1173, 0.0
  %s1192 = scalar_lea.vmem [#allocation3], 16
  %1193 = vst.msk [vmem:[%s1192 + $0x1] sm:$0xff] %vm95, %v1176
  %1194 = vst.msk [vmem:[%s1192 + $0x11] sm:$0xff] %vm95, %v1177
  %1195 = vst.msk [vmem:[%s1192 + $0x21] sm:$0xff] %vm95, %v1178
  %1196 = vst.msk [vmem:[%s1192 + $0x31] sm:$0xff] %vm95, %v1179
  %1197 = vst.msk [vmem:[%s1192 + $0x41] sm:$0xff] %vm95, %v1180
  %1198 = vst.msk [vmem:[%s1192 + $0x51] sm:$0xff] %vm95, %v1181
  %1199 = vst.msk [vmem:[%s1192 + $0x61] sm:$0xff] %vm95, %v1182
  %1200 = vst.msk [vmem:[%s1192 + $0x71] sm:$0xff] %vm95, %v1183
  %1201 = vst.msk [vmem:[%s1192 + $0xa1] sm:$0xff] %vm95, %v1184
  %1202 = vst.msk [vmem:[%s1192 + $0xb1] sm:$0xff] %vm95, %v1185
  %1203 = vst.msk [vmem:[%s1192 + $0xc1] sm:$0xff] %vm95, %v1186
  %1204 = vst.msk [vmem:[%s1192 + $0xd1] sm:$0xff] %vm95, %v1187
  %1205 = vst.msk [vmem:[%s1192 + $0xe1] sm:$0xff] %vm95, %v1188
  %1206 = vst.msk [vmem:[%s1192 + $0xf1] sm:$0xff] %vm95, %v1189
  %1207 = vst.msk [vmem:[%s1192 + $0x101] sm:$0xff] %vm95, %v1190
  %1208 = vst.msk [vmem:[%s1192 + $0x111] sm:$0xff] %vm95, %v1191
  %v1209 = vld [vmem:[#allocation3] sm:$0xff]
  %v1210 = vld [vmem:[#allocation3 + $0x8] sm:$0x3]
  %v1211 = vld [vmem:[#allocation3 + $0x10] sm:$0xff]
  %v1212 = vld [vmem:[#allocation3 + $0x18] sm:$0x3]
  %v1213 = vld [vmem:[#allocation3 + $0x20] sm:$0xff]
  %v1214 = vld [vmem:[#allocation3 + $0x28] sm:$0x3]
  %v1215 = vld [vmem:[#allocation3 + $0x30] sm:$0xff]
  %v1216 = vld [vmem:[#allocation3 + $0x38] sm:$0x3]
  %v1217 = vld [vmem:[#allocation3 + $0x40] sm:$0xff]
  %v1218 = vld [vmem:[#allocation3 + $0x48] sm:$0x3]
  %v1219 = vld [vmem:[#allocation3 + $0x50] sm:$0xff]
  %v1220 = vld [vmem:[#allocation3 + $0x58] sm:$0x3]
  %v1221 = vld [vmem:[#allocation3 + $0x60] sm:$0xff]
  %v1222 = vld [vmem:[#allocation3 + $0x68] sm:$0x3]
  %v1223 = vld [vmem:[#allocation3 + $0x70] sm:$0xff]
  %v1224 = vld [vmem:[#allocation3 + $0x78] sm:$0x3]
  %v1225 = vld [vmem:[#allocation3 + $0x80] sm:$0xff]
  %v1226 = vld [vmem:[#allocation3 + $0x88] sm:$0x3]
  %v1227 = vld [vmem:[#allocation3 + $0x90] sm:$0xff]
  %v1228 = vld [vmem:[#allocation3 + $0x98] sm:$0x3]
  %v1229 = vld [vmem:[#allocation3 + $0xa0] sm:$0xff]
  %v1230 = vld [vmem:[#allocation3 + $0xa8] sm:$0x3]
  %v1231 = vld [vmem:[#allocation3 + $0xb0] sm:$0xff]
  %v1232 = vld [vmem:[#allocation3 + $0xb8] sm:$0x3]
  %v1233 = vld [vmem:[#allocation3 + $0xc0] sm:$0xff]
  %v1234 = vld [vmem:[#allocation3 + $0xc8] sm:$0x3]
  %v1235 = vld [vmem:[#allocation3 + $0xd0] sm:$0xff]
  %v1236 = vld [vmem:[#allocation3 + $0xd8] sm:$0x3]
  %v1237 = vld [vmem:[#allocation3 + $0xe0] sm:$0xff]
  %v1238 = vld [vmem:[#allocation3 + $0xe8] sm:$0x3]
  %v1239 = vld [vmem:[#allocation3 + $0xf0] sm:$0xff]
  %v1240 = vld [vmem:[#allocation3 + $0xf8] sm:$0x3]
  %v1241 = vld [vmem:[#allocation3 + $0x100] sm:$0xff]
  %v1242 = vld [vmem:[#allocation3 + $0x108] sm:$0x3]
  %v1243 = vld [vmem:[#allocation3 + $0x110] sm:$0xff]
  %v1244 = vld [vmem:[#allocation3 + $0x118] sm:$0x3]
  %v1245 = vld [vmem:[#allocation3 + $0x120] sm:$0xff]
  %v1246 = vld [vmem:[#allocation3 + $0x128] sm:$0x3]
  %v1247 = vld [vmem:[#allocation3 + $0x130] sm:$0xff]
  %v1248 = vld [vmem:[#allocation3 + $0x138] sm:$0x3]
  %1249 = vst.msk [vmem:[#allocation5] sm:$0xff] %vm95, %v1209
  %1250 = vst.msk [vmem:[#allocation5 + $0x18] sm:$0xff] %vm95, %v1211
  %1251 = vst.msk [vmem:[#allocation5 + $0x30] sm:$0xff] %vm95, %v1213
  %1252 = vst.msk [vmem:[#allocation5 + $0x48] sm:$0xff] %vm95, %v1215
  %1253 = vst.msk [vmem:[#allocation5 + $0x60] sm:$0xff] %vm95, %v1217
  %1254 = vst.msk [vmem:[#allocation5 + $0x78] sm:$0xff] %vm95, %v1219
  %1255 = vst.msk [vmem:[#allocation5 + $0x90] sm:$0xff] %vm95, %v1221
  %1256 = vst.msk [vmem:[#allocation5 + $0xa8] sm:$0xff] %vm95, %v1223
  %1257 = vst.msk [vmem:[#allocation5 + $0xc0] sm:$0xff] %vm95, %v1229
  %1258 = vst.msk [vmem:[#allocation5 + $0xd8] sm:$0xff] %vm95, %v1231
  %1259 = vst.msk [vmem:[#allocation5 + $0xf0] sm:$0xff] %vm95, %v1233
  %1260 = vst.msk [vmem:[#allocation5 + $0x108] sm:$0xff] %vm95, %v1235
  %1261 = vst.msk [vmem:[#allocation5 + $0x120] sm:$0xff] %vm95, %v1237
  %1262 = vst.msk [vmem:[#allocation5 + $0x138] sm:$0xff] %vm95, %v1239
  %1263 = vst.msk [vmem:[#allocation5 + $0x150] sm:$0xff] %vm95, %v1241
  %1264 = vst.msk [vmem:[#allocation5 + $0x168] sm:$0xff] %vm95, %v1243
  %v1297 = vrot.slane %v1209, 1
  %v1298 = vrot.slane %v1210, 1
  %v1299 = vsel %vm300, %v1297, %v1298
  %v1300 = vrot.slane %v1211, 1
  %v1301 = vrot.slane %v1212, 1
  %v1302 = vsel %vm300, %v1300, %v1301
  %v1303 = vrot.slane %v1213, 1
  %v1304 = vrot.slane %v1214, 1
  %v1305 = vsel %vm300, %v1303, %v1304
  %v1306 = vrot.slane %v1215, 1
  %v1307 = vrot.slane %v1216, 1
  %v1308 = vsel %vm300, %v1306, %v1307
  %v1309 = vrot.slane %v1217, 1
  %v1310 = vrot.slane %v1218, 1
  %v1311 = vsel %vm300, %v1309, %v1310
  %v1312 = vrot.slane %v1219, 1
  %v1313 = vrot.slane %v1220, 1
  %v1314 = vsel %vm300, %v1312, %v1313
  %v1315 = vrot.slane %v1221, 1
  %v1316 = vrot.slane %v1222, 1
  %v1317 = vsel %vm300, %v1315, %v1316
  %v1318 = vrot.slane %v1223, 1
  %v1319 = vrot.slane %v1224, 1
  %v1320 = vsel %vm300, %v1318, %v1319
  %v1321 = vrot.slane %v1229, 1
  %v1322 = vrot.slane %v1230, 1
  %v1323 = vsel %vm300, %v1321, %v1322
  %v1324 = vrot.slane %v1231, 1
  %v1325 = vrot.slane %v1232, 1
  %v1326 = vsel %vm300, %v1324, %v1325
  %v1327 = vrot.slane %v1233, 1
  %v1328 = vrot.slane %v1234, 1
  %v1329 = vsel %vm300, %v1327, %v1328
  %v1330 = vrot.slane %v1235, 1
  %v1331 = vrot.slane %v1236, 1
  %v1332 = vsel %vm300, %v1330, %v1331
  %v1333 = vrot.slane %v1237, 1
  %v1334 = vrot.slane %v1238, 1
  %v1335 = vsel %vm300, %v1333, %v1334
  %v1336 = vrot.slane %v1239, 1
  %v1337 = vrot.slane %v1240, 1
  %v1338 = vsel %vm300, %v1336, %v1337
  %v1339 = vrot.slane %v1241, 1
  %v1340 = vrot.slane %v1242, 1
  %v1341 = vsel %vm300, %v1339, %v1340
  %v1342 = vrot.slane %v1243, 1
  %v1343 = vrot.slane %v1244, 1
  %v1344 = vsel %vm300, %v1342, %v1343
  %1345 = vrot.lane.b32.xlu0 %v1299, 16
  %v1346 = vpop.permute.xlu0 %1345
  %1347 = vrot.lane.b32.xlu0 %v1302, 16
  %v1348 = vpop.permute.xlu0 %1347
  %1349 = vrot.lane.b32.xlu0 %v1305, 16
  %v1350 = vpop.permute.xlu0 %1349
  %1351 = vrot.lane.b32.xlu0 %v1308, 16
  %v1352 = vpop.permute.xlu0 %1351
  %1353 = vrot.lane.b32.xlu0 %v1311, 16
  %v1354 = vpop.permute.xlu0 %1353
  %1355 = vrot.lane.b32.xlu0 %v1314, 16
  %v1356 = vpop.permute.xlu0 %1355
  %1357 = vrot.lane.b32.xlu0 %v1317, 16
  %v1358 = vpop.permute.xlu0 %1357
  %1359 = vrot.lane.b32.xlu0 %v1320, 16
  %v1360 = vpop.permute.xlu0 %1359
  %1361 = vrot.lane.b32.xlu0 %v1323, 16
  %v1362 = vpop.permute.xlu0 %1361
  %1363 = vrot.lane.b32.xlu0 %v1326, 16
  %v1364 = vpop.permute.xlu0 %1363
  %1365 = vrot.lane.b32.xlu0 %v1329, 16
  %v1366 = vpop.permute.xlu0 %1365
  %1367 = vrot.lane.b32.xlu0 %v1332, 16
  %v1368 = vpop.permute.xlu0 %1367
  %1369 = vrot.lane.b32.xlu0 %v1335, 16
  %v1370 = vpop.permute.xlu0 %1369
  %1371 = vrot.lane.b32.xlu0 %v1338, 16
  %v1372 = vpop.permute.xlu0 %1371
  %1373 = vrot.lane.b32.xlu0 %v1341, 16
  %v1374 = vpop.permute.xlu0 %1373
  %1375 = vrot.lane.b32.xlu0 %v1344, 16
  %v1376 = vpop.permute.xlu0 %1375
  %vm1393 = vcmask 261248
  %1394 = vst.msk [vmem:[#allocation5] sm:$0xff] %vm1393, %v1346
  %1395 = vst.msk [vmem:[#allocation5 + $0x18] sm:$0xff] %vm1393, %v1348
  %1396 = vst.msk [vmem:[#allocation5 + $0x30] sm:$0xff] %vm1393, %v1350
  %1397 = vst.msk [vmem:[#allocation5 + $0x48] sm:$0xff] %vm1393, %v1352
  %1398 = vst.msk [vmem:[#allocation5 + $0x60] sm:$0xff] %vm1393, %v1354
  %1399 = vst.msk [vmem:[#allocation5 + $0x78] sm:$0xff] %vm1393, %v1356
  %1400 = vst.msk [vmem:[#allocation5 + $0x90] sm:$0xff] %vm1393, %v1358
  %1401 = vst.msk [vmem:[#allocation5 + $0xa8] sm:$0xff] %vm1393, %v1360
  %1402 = vst.msk [vmem:[#allocation5 + $0xc0] sm:$0xff] %vm1393, %v1362
  %1403 = vst.msk [vmem:[#allocation5 + $0xd8] sm:$0xff] %vm1393, %v1364
  %1404 = vst.msk [vmem:[#allocation5 + $0xf0] sm:$0xff] %vm1393, %v1366
  %1405 = vst.msk [vmem:[#allocation5 + $0x108] sm:$0xff] %vm1393, %v1368
  %1406 = vst.msk [vmem:[#allocation5 + $0x120] sm:$0xff] %vm1393, %v1370
  %1407 = vst.msk [vmem:[#allocation5 + $0x138] sm:$0xff] %vm1393, %v1372
  %1408 = vst.msk [vmem:[#allocation5 + $0x150] sm:$0xff] %vm1393, %v1374
  %1409 = vst.msk [vmem:[#allocation5 + $0x168] sm:$0xff] %vm1393, %v1376
  %v1410 = vrot.slane %v1209, 2
  %v1411 = vrot.slane %v1210, 2
  %v1412 = vsel %vm414, %v1410, %v1411
  %v1413 = vrot.slane %v1211, 2
  %v1414 = vrot.slane %v1212, 2
  %v1415 = vsel %vm414, %v1413, %v1414
  %v1416 = vrot.slane %v1213, 2
  %v1417 = vrot.slane %v1214, 2
  %v1418 = vsel %vm414, %v1416, %v1417
  %v1419 = vrot.slane %v1215, 2
  %v1420 = vrot.slane %v1216, 2
  %v1421 = vsel %vm414, %v1419, %v1420
  %v1422 = vrot.slane %v1217, 2
  %v1423 = vrot.slane %v1218, 2
  %v1424 = vsel %vm414, %v1422, %v1423
  %v1425 = vrot.slane %v1219, 2
  %v1426 = vrot.slane %v1220, 2
  %v1427 = vsel %vm414, %v1425, %v1426
  %v1428 = vrot.slane %v1221, 2
  %v1429 = vrot.slane %v1222, 2
  %v1430 = vsel %vm414, %v1428, %v1429
  %v1431 = vrot.slane %v1223, 2
  %v1432 = vrot.slane %v1224, 2
  %v1433 = vsel %vm414, %v1431, %v1432
  %v1434 = vrot.slane %v1229, 2
  %v1435 = vrot.slane %v1230, 2
  %v1436 = vsel %vm414, %v1434, %v1435
  %v1437 = vrot.slane %v1231, 2
  %v1438 = vrot.slane %v1232, 2
  %v1439 = vsel %vm414, %v1437, %v1438
  %v1440 = vrot.slane %v1233, 2
  %v1441 = vrot.slane %v1234, 2
  %v1442 = vsel %vm414, %v1440, %v1441
  %v1443 = vrot.slane %v1235, 2
  %v1444 = vrot.slane %v1236, 2
  %v1445 = vsel %vm414, %v1443, %v1444
  %v1446 = vrot.slane %v1237, 2
  %v1447 = vrot.slane %v1238, 2
  %v1448 = vsel %vm414, %v1446, %v1447
  %v1449 = vrot.slane %v1239, 2
  %v1450 = vrot.slane %v1240, 2
  %v1451 = vsel %vm414, %v1449, %v1450
  %v1452 = vrot.slane %v1241, 2
  %v1453 = vrot.slane %v1242, 2
  %v1454 = vsel %vm414, %v1452, %v1453
  %v1455 = vrot.slane %v1243, 2
  %v1456 = vrot.slane %v1244, 2
  %v1457 = vsel %vm414, %v1455, %v1456
  %1458 = vrot.lane.b32.xlu0 %v1412, 32
  %v1459 = vpop.permute.xlu0 %1458
  %1460 = vrot.lane.b32.xlu0 %v1415, 32
  %v1461 = vpop.permute.xlu0 %1460
  %1462 = vrot.lane.b32.xlu0 %v1418, 32
  %v1463 = vpop.permute.xlu0 %1462
  %1464 = vrot.lane.b32.xlu0 %v1421, 32
  %v1465 = vpop.permute.xlu0 %1464
  %1466 = vrot.lane.b32.xlu0 %v1424, 32
  %v1467 = vpop.permute.xlu0 %1466
  %1468 = vrot.lane.b32.xlu0 %v1427, 32
  %v1469 = vpop.permute.xlu0 %1468
  %1470 = vrot.lane.b32.xlu0 %v1430, 32
  %v1471 = vpop.permute.xlu0 %1470
  %1472 = vrot.lane.b32.xlu0 %v1433, 32
  %v1473 = vpop.permute.xlu0 %1472
  %1474 = vrot.lane.b32.xlu0 %v1436, 32
  %v1475 = vpop.permute.xlu0 %1474
  %1476 = vrot.lane.b32.xlu0 %v1439, 32
  %v1477 = vpop.permute.xlu0 %1476
  %1478 = vrot.lane.b32.xlu0 %v1442, 32
  %v1479 = vpop.permute.xlu0 %1478
  %1480 = vrot.lane.b32.xlu0 %v1445, 32
  %v1481 = vpop.permute.xlu0 %1480
  %1482 = vrot.lane.b32.xlu0 %v1448, 32
  %v1483 = vpop.permute.xlu0 %1482
  %1484 = vrot.lane.b32.xlu0 %v1451, 32
  %v1485 = vpop.permute.xlu0 %1484
  %1486 = vrot.lane.b32.xlu0 %v1454, 32
  %v1487 = vpop.permute.xlu0 %1486
  %1488 = vrot.lane.b32.xlu0 %v1457, 32
  %v1489 = vpop.permute.xlu0 %1488
  %vm1506 = vcmask 392448
  %1507 = vst.msk [vmem:[#allocation5] sm:$0xff] %vm1506, %v1459
  %1508 = vst.msk [vmem:[#allocation5 + $0x18] sm:$0xff] %vm1506, %v1461
  %1509 = vst.msk [vmem:[#allocation5 + $0x30] sm:$0xff] %vm1506, %v1463
  %1510 = vst.msk [vmem:[#allocation5 + $0x48] sm:$0xff] %vm1506, %v1465
  %1511 = vst.msk [vmem:[#allocation5 + $0x60] sm:$0xff] %vm1506, %v1467
  %1512 = vst.msk [vmem:[#allocation5 + $0x78] sm:$0xff] %vm1506, %v1469
  %1513 = vst.msk [vmem:[#allocation5 + $0x90] sm:$0xff] %vm1506, %v1471
  %1514 = vst.msk [vmem:[#allocation5 + $0xa8] sm:$0xff] %vm1506, %v1473
  %1515 = vst.msk [vmem:[#allocation5 + $0xc0] sm:$0xff] %vm1506, %v1475
  %1516 = vst.msk [vmem:[#allocation5 + $0xd8] sm:$0xff] %vm1506, %v1477
  %1517 = vst.msk [vmem:[#allocation5 + $0xf0] sm:$0xff] %vm1506, %v1479
  %1518 = vst.msk [vmem:[#allocation5 + $0x108] sm:$0xff] %vm1506, %v1481
  %1519 = vst.msk [vmem:[#allocation5 + $0x120] sm:$0xff] %vm1506, %v1483
  %1520 = vst.msk [vmem:[#allocation5 + $0x138] sm:$0xff] %vm1506, %v1485
  %1521 = vst.msk [vmem:[#allocation5 + $0x150] sm:$0xff] %vm1506, %v1487
  %1522 = vst.msk [vmem:[#allocation5 + $0x168] sm:$0xff] %vm1506, %v1489
  %1525 = vrot.lane.b32.xlu0 %v1211, 48
  %v1526 = vpop.permute.xlu0 %1525
  %1527 = vrot.lane.b32.xlu0 %v1213, 48
  %v1528 = vpop.permute.xlu0 %1527
  %1529 = vrot.lane.b32.xlu0 %v1215, 48
  %v1530 = vpop.permute.xlu0 %1529
  %1531 = vrot.lane.b32.xlu0 %v1217, 48
  %v1532 = vpop.permute.xlu0 %1531
  %1533 = vrot.lane.b32.xlu0 %v1219, 48
  %v1534 = vpop.permute.xlu0 %1533
  %1535 = vrot.lane.b32.xlu0 %v1221, 48
  %v1536 = vpop.permute.xlu0 %1535
  %1537 = vrot.lane.b32.xlu0 %v1223, 48
  %v1538 = vpop.permute.xlu0 %1537
  %1539 = vrot.lane.b32.xlu0 %v1225, 48
  %v1540 = vpop.permute.xlu0 %1539
  %1541 = vrot.lane.b32.xlu0 %v1231, 48
  %v1542 = vpop.permute.xlu0 %1541
  %1543 = vrot.lane.b32.xlu0 %v1233, 48
  %v1544 = vpop.permute.xlu0 %1543
  %1545 = vrot.lane.b32.xlu0 %v1235, 48
  %v1546 = vpop.permute.xlu0 %1545
  %1547 = vrot.lane.b32.xlu0 %v1237, 48
  %v1548 = vpop.permute.xlu0 %1547
  %1549 = vrot.lane.b32.xlu0 %v1239, 48
  %v1550 = vpop.permute.xlu0 %1549
  %1551 = vrot.lane.b32.xlu0 %v1241, 48
  %v1552 = vpop.permute.xlu0 %1551
  %1553 = vrot.lane.b32.xlu0 %v1243, 48
  %v1554 = vpop.permute.xlu0 %1553
  %1555 = vrot.lane.b32.xlu0 %v1245, 48
  %v1556 = vpop.permute.xlu0 %1555
  %vm1573 = vcmask 523648
  %1574 = vst.msk [vmem:[#allocation5] sm:$0xff] %vm1573, %v1526
  %1575 = vst.msk [vmem:[#allocation5 + $0x18] sm:$0xff] %vm1573, %v1528
  %1576 = vst.msk [vmem:[#allocation5 + $0x30] sm:$0xff] %vm1573, %v1530
  %1577 = vst.msk [vmem:[#allocation5 + $0x48] sm:$0xff] %vm1573, %v1532
  %1578 = vst.msk [vmem:[#allocation5 + $0x60] sm:$0xff] %vm1573, %v1534
  %1579 = vst.msk [vmem:[#allocation5 + $0x78] sm:$0xff] %vm1573, %v1536
  %1580 = vst.msk [vmem:[#allocation5 + $0x90] sm:$0xff] %vm1573, %v1538
  %1581 = vst.msk [vmem:[#allocation5 + $0xa8] sm:$0xff] %vm1573, %v1540
  %1582 = vst.msk [vmem:[#allocation5 + $0xc0] sm:$0xff] %vm1573, %v1542
  %1583 = vst.msk [vmem:[#allocation5 + $0xd8] sm:$0xff] %vm1573, %v1544
  %1584 = vst.msk [vmem:[#allocation5 + $0xf0] sm:$0xff] %vm1573, %v1546
  %1585 = vst.msk [vmem:[#allocation5 + $0x108] sm:$0xff] %vm1573, %v1548
  %1586 = vst.msk [vmem:[#allocation5 + $0x120] sm:$0xff] %vm1573, %v1550
  %1587 = vst.msk [vmem:[#allocation5 + $0x138] sm:$0xff] %vm1573, %v1552
  %1588 = vst.msk [vmem:[#allocation5 + $0x150] sm:$0xff] %vm1573, %v1554
  %1589 = vst.msk [vmem:[#allocation5 + $0x168] sm:$0xff] %vm1573, %v1556
  %v1592 = vrot.slane %v1225, 1
  %v1593 = vrot.slane %v1226, 1
  %v1594 = vsel %vm300, %v1592, %v1593
  %v1595 = vrot.slane %v1245, 1
  %v1596 = vrot.slane %v1246, 1
  %v1597 = vsel %vm300, %v1595, %v1596
  %1598 = vrot.lane.b32.xlu0 %v1302, 64
  %v1599 = vpop.permute.xlu0 %1598
  %1600 = vrot.lane.b32.xlu0 %v1305, 64
  %v1601 = vpop.permute.xlu0 %1600
  %1602 = vrot.lane.b32.xlu0 %v1308, 64
  %v1603 = vpop.permute.xlu0 %1602
  %1604 = vrot.lane.b32.xlu0 %v1311, 64
  %v1605 = vpop.permute.xlu0 %1604
  %1606 = vrot.lane.b32.xlu0 %v1314, 64
  %v1607 = vpop.permute.xlu0 %1606
  %1608 = vrot.lane.b32.xlu0 %v1317, 64
  %v1609 = vpop.permute.xlu0 %1608
  %1610 = vrot.lane.b32.xlu0 %v1320, 64
  %v1611 = vpop.permute.xlu0 %1610
  %1612 = vrot.lane.b32.xlu0 %v1594, 64
  %v1613 = vpop.permute.xlu0 %1612
  %1614 = vrot.lane.b32.xlu0 %v1326, 64
  %v1615 = vpop.permute.xlu0 %1614
  %1616 = vrot.lane.b32.xlu0 %v1329, 64
  %v1617 = vpop.permute.xlu0 %1616
  %1618 = vrot.lane.b32.xlu0 %v1332, 64
  %v1619 = vpop.permute.xlu0 %1618
  %1620 = vrot.lane.b32.xlu0 %v1335, 64
  %v1621 = vpop.permute.xlu0 %1620
  %1622 = vrot.lane.b32.xlu0 %v1338, 64
  %v1623 = vpop.permute.xlu0 %1622
  %1624 = vrot.lane.b32.xlu0 %v1341, 64
  %v1625 = vpop.permute.xlu0 %1624
  %1626 = vrot.lane.b32.xlu0 %v1344, 64
  %v1627 = vpop.permute.xlu0 %1626
  %1628 = vrot.lane.b32.xlu0 %v1597, 64
  %v1629 = vpop.permute.xlu0 %1628
  %vm1646 = vcmask 654848
  %1647 = vst.msk [vmem:[#allocation5] sm:$0xff] %vm1646, %v1599
  %1648 = vst.msk [vmem:[#allocation5 + $0x18] sm:$0xff] %vm1646, %v1601
  %1649 = vst.msk [vmem:[#allocation5 + $0x30] sm:$0xff] %vm1646, %v1603
  %1650 = vst.msk [vmem:[#allocation5 + $0x48] sm:$0xff] %vm1646, %v1605
  %1651 = vst.msk [vmem:[#allocation5 + $0x60] sm:$0xff] %vm1646, %v1607
  %1652 = vst.msk [vmem:[#allocation5 + $0x78] sm:$0xff] %vm1646, %v1609
  %1653 = vst.msk [vmem:[#allocation5 + $0x90] sm:$0xff] %vm1646, %v1611
  %1654 = vst.msk [vmem:[#allocation5 + $0xa8] sm:$0xff] %vm1646, %v1613
  %1655 = vst.msk [vmem:[#allocation5 + $0xc0] sm:$0xff] %vm1646, %v1615
  %1656 = vst.msk [vmem:[#allocation5 + $0xd8] sm:$0xff] %vm1646, %v1617
  %1657 = vst.msk [vmem:[#allocation5 + $0xf0] sm:$0xff] %vm1646, %v1619
  %1658 = vst.msk [vmem:[#allocation5 + $0x108] sm:$0xff] %vm1646, %v1621
  %1659 = vst.msk [vmem:[#allocation5 + $0x120] sm:$0xff] %vm1646, %v1623
  %1660 = vst.msk [vmem:[#allocation5 + $0x138] sm:$0xff] %vm1646, %v1625
  %1661 = vst.msk [vmem:[#allocation5 + $0x150] sm:$0xff] %vm1646, %v1627
  %1662 = vst.msk [vmem:[#allocation5 + $0x168] sm:$0xff] %vm1646, %v1629
  %v1663 = vrot.slane %v1225, 2
  %v1664 = vrot.slane %v1226, 2
  %v1665 = vsel %vm414, %v1663, %v1664
  %v1666 = vrot.slane %v1245, 2
  %v1667 = vrot.slane %v1246, 2
  %v1668 = vsel %vm414, %v1666, %v1667
  %1669 = vrot.lane.b32.xlu0 %v1415, 80
  %v1670 = vpop.permute.xlu0 %1669
  %1671 = vrot.lane.b32.xlu0 %v1418, 80
  %v1672 = vpop.permute.xlu0 %1671
  %1673 = vrot.lane.b32.xlu0 %v1421, 80
  %v1674 = vpop.permute.xlu0 %1673
  %1675 = vrot.lane.b32.xlu0 %v1424, 80
  %v1676 = vpop.permute.xlu0 %1675
  %1677 = vrot.lane.b32.xlu0 %v1427, 80
  %v1678 = vpop.permute.xlu0 %1677
  %1679 = vrot.lane.b32.xlu0 %v1430, 80
  %v1680 = vpop.permute.xlu0 %1679
  %1681 = vrot.lane.b32.xlu0 %v1433, 80
  %v1682 = vpop.permute.xlu0 %1681
  %1683 = vrot.lane.b32.xlu0 %v1665, 80
  %v1684 = vpop.permute.xlu0 %1683
  %1685 = vrot.lane.b32.xlu0 %v1439, 80
  %v1686 = vpop.permute.xlu0 %1685
  %1687 = vrot.lane.b32.xlu0 %v1442, 80
  %v1688 = vpop.permute.xlu0 %1687
  %1689 = vrot.lane.b32.xlu0 %v1445, 80
  %v1690 = vpop.permute.xlu0 %1689
  %1691 = vrot.lane.b32.xlu0 %v1448, 80
  %v1692 = vpop.permute.xlu0 %1691
  %1693 = vrot.lane.b32.xlu0 %v1451, 80
  %v1694 = vpop.permute.xlu0 %1693
  %1695 = vrot.lane.b32.xlu0 %v1454, 80
  %v1696 = vpop.permute.xlu0 %1695
  %1697 = vrot.lane.b32.xlu0 %v1457, 80
  %v1698 = vpop.permute.xlu0 %1697
  %1699 = vrot.lane.b32.xlu0 %v1668, 80
  %v1700 = vpop.permute.xlu0 %1699
  %vm1717 = vcmask 786048
  %1718 = vst.msk [vmem:[#allocation5] sm:$0xff] %vm1717, %v1670
  %1719 = vst.msk [vmem:[#allocation5 + $0x18] sm:$0xff] %vm1717, %v1672
  %1720 = vst.msk [vmem:[#allocation5 + $0x30] sm:$0xff] %vm1717, %v1674
  %1721 = vst.msk [vmem:[#allocation5 + $0x48] sm:$0xff] %vm1717, %v1676
  %1722 = vst.msk [vmem:[#allocation5 + $0x60] sm:$0xff] %vm1717, %v1678
  %1723 = vst.msk [vmem:[#allocation5 + $0x78] sm:$0xff] %vm1717, %v1680
  %1724 = vst.msk [vmem:[#allocation5 + $0x90] sm:$0xff] %vm1717, %v1682
  %1725 = vst.msk [vmem:[#allocation5 + $0xa8] sm:$0xff] %vm1717, %v1684
  %1726 = vst.msk [vmem:[#allocation5 + $0xc0] sm:$0xff] %vm1717, %v1686
  %1727 = vst.msk [vmem:[#allocation5 + $0xd8] sm:$0xff] %vm1717, %v1688
  %1728 = vst.msk [vmem:[#allocation5 + $0xf0] sm:$0xff] %vm1717, %v1690
  %1729 = vst.msk [vmem:[#allocation5 + $0x108] sm:$0xff] %vm1717, %v1692
  %1730 = vst.msk [vmem:[#allocation5 + $0x120] sm:$0xff] %vm1717, %v1694
  %1731 = vst.msk [vmem:[#allocation5 + $0x138] sm:$0xff] %vm1717, %v1696
  %1732 = vst.msk [vmem:[#allocation5 + $0x150] sm:$0xff] %vm1717, %v1698
  %1733 = vst.msk [vmem:[#allocation5 + $0x168] sm:$0xff] %vm1717, %v1700
  %1736 = vrot.lane.b32.xlu0 %v1213, 96
  %v1737 = vpop.permute.xlu0 %1736
  %1738 = vrot.lane.b32.xlu0 %v1215, 96
  %v1739 = vpop.permute.xlu0 %1738
  %1740 = vrot.lane.b32.xlu0 %v1217, 96
  %v1741 = vpop.permute.xlu0 %1740
  %1742 = vrot.lane.b32.xlu0 %v1219, 96
  %v1743 = vpop.permute.xlu0 %1742
  %1744 = vrot.lane.b32.xlu0 %v1221, 96
  %v1745 = vpop.permute.xlu0 %1744
  %1746 = vrot.lane.b32.xlu0 %v1223, 96
  %v1747 = vpop.permute.xlu0 %1746
  %1748 = vrot.lane.b32.xlu0 %v1225, 96
  %v1749 = vpop.permute.xlu0 %1748
  %1750 = vrot.lane.b32.xlu0 %v1227, 96
  %v1751 = vpop.permute.xlu0 %1750
  %1752 = vrot.lane.b32.xlu0 %v1233, 96
  %v1753 = vpop.permute.xlu0 %1752
  %1754 = vrot.lane.b32.xlu0 %v1235, 96
  %v1755 = vpop.permute.xlu0 %1754
  %1756 = vrot.lane.b32.xlu0 %v1237, 96
  %v1757 = vpop.permute.xlu0 %1756
  %1758 = vrot.lane.b32.xlu0 %v1239, 96
  %v1759 = vpop.permute.xlu0 %1758
  %1760 = vrot.lane.b32.xlu0 %v1241, 96
  %v1761 = vpop.permute.xlu0 %1760
  %1762 = vrot.lane.b32.xlu0 %v1243, 96
  %v1763 = vpop.permute.xlu0 %1762
  %1764 = vrot.lane.b32.xlu0 %v1245, 96
  %v1765 = vpop.permute.xlu0 %1764
  %1766 = vrot.lane.b32.xlu0 %v1247, 96
  %v1767 = vpop.permute.xlu0 %1766
  %vm1784 = vcmask 917248
  %1785 = vst.msk [vmem:[#allocation5] sm:$0xff] %vm1784, %v1737
  %1786 = vst.msk [vmem:[#allocation5 + $0x18] sm:$0xff] %vm1784, %v1739
  %1787 = vst.msk [vmem:[#allocation5 + $0x30] sm:$0xff] %vm1784, %v1741
  %1788 = vst.msk [vmem:[#allocation5 + $0x48] sm:$0xff] %vm1784, %v1743
  %1789 = vst.msk [vmem:[#allocation5 + $0x60] sm:$0xff] %vm1784, %v1745
  %1790 = vst.msk [vmem:[#allocation5 + $0x78] sm:$0xff] %vm1784, %v1747
  %1791 = vst.msk [vmem:[#allocation5 + $0x90] sm:$0xff] %vm1784, %v1749
  %1792 = vst.msk [vmem:[#allocation5 + $0xa8] sm:$0xff] %vm1784, %v1751
  %1793 = vst.msk [vmem:[#allocation5 + $0xc0] sm:$0xff] %vm1784, %v1753
  %1794 = vst.msk [vmem:[#allocation5 + $0xd8] sm:$0xff] %vm1784, %v1755
  %1795 = vst.msk [vmem:[#allocation5 + $0xf0] sm:$0xff] %vm1784, %v1757
  %1796 = vst.msk [vmem:[#allocation5 + $0x108] sm:$0xff] %vm1784, %v1759
  %1797 = vst.msk [vmem:[#allocation5 + $0x120] sm:$0xff] %vm1784, %v1761
  %1798 = vst.msk [vmem:[#allocation5 + $0x138] sm:$0xff] %vm1784, %v1763
  %1799 = vst.msk [vmem:[#allocation5 + $0x150] sm:$0xff] %vm1784, %v1765
  %1800 = vst.msk [vmem:[#allocation5 + $0x168] sm:$0xff] %vm1784, %v1767
  %v1803 = vrot.slane %v1227, 1
  %v1804 = vrot.slane %v1228, 1
  %v1805 = vsel %vm300, %v1803, %v1804
  %v1806 = vrot.slane %v1247, 1
  %v1807 = vrot.slane %v1248, 1
  %v1808 = vsel %vm300, %v1806, %v1807
  %1809 = vrot.lane.b32.xlu0 %v1305, 112
  %v1810 = vpop.permute.xlu0 %1809
  %1811 = vrot.lane.b32.xlu0 %v1308, 112
  %v1812 = vpop.permute.xlu0 %1811
  %1813 = vrot.lane.b32.xlu0 %v1311, 112
  %v1814 = vpop.permute.xlu0 %1813
  %1815 = vrot.lane.b32.xlu0 %v1314, 112
  %v1816 = vpop.permute.xlu0 %1815
  %1817 = vrot.lane.b32.xlu0 %v1317, 112
  %v1818 = vpop.permute.xlu0 %1817
  %1819 = vrot.lane.b32.xlu0 %v1320, 112
  %v1820 = vpop.permute.xlu0 %1819
  %1821 = vrot.lane.b32.xlu0 %v1594, 112
  %v1822 = vpop.permute.xlu0 %1821
  %1823 = vrot.lane.b32.xlu0 %v1805, 112
  %v1824 = vpop.permute.xlu0 %1823
  %1825 = vrot.lane.b32.xlu0 %v1329, 112
  %v1826 = vpop.permute.xlu0 %1825
  %1827 = vrot.lane.b32.xlu0 %v1332, 112
  %v1828 = vpop.permute.xlu0 %1827
  %1829 = vrot.lane.b32.xlu0 %v1335, 112
  %v1830 = vpop.permute.xlu0 %1829
  %1831 = vrot.lane.b32.xlu0 %v1338, 112
  %v1832 = vpop.permute.xlu0 %1831
  %1833 = vrot.lane.b32.xlu0 %v1341, 112
  %v1834 = vpop.permute.xlu0 %1833
  %1835 = vrot.lane.b32.xlu0 %v1344, 112
  %v1836 = vpop.permute.xlu0 %1835
  %1837 = vrot.lane.b32.xlu0 %v1597, 112
  %v1838 = vpop.permute.xlu0 %1837
  %1839 = vrot.lane.b32.xlu0 %v1808, 112
  %v1840 = vpop.permute.xlu0 %1839
  %vm1857 = vcmask 1048448
  %1858 = vst.msk [vmem:[#allocation5] sm:$0xff] %vm1857, %v1810
  %1859 = vst.msk [vmem:[#allocation5 + $0x18] sm:$0xff] %vm1857, %v1812
  %1860 = vst.msk [vmem:[#allocation5 + $0x30] sm:$0xff] %vm1857, %v1814
  %1861 = vst.msk [vmem:[#allocation5 + $0x48] sm:$0xff] %vm1857, %v1816
  %1862 = vst.msk [vmem:[#allocation5 + $0x60] sm:$0xff] %vm1857, %v1818
  %1863 = vst.msk [vmem:[#allocation5 + $0x78] sm:$0xff] %vm1857, %v1820
  %1864 = vst.msk [vmem:[#allocation5 + $0x90] sm:$0xff] %vm1857, %v1822
  %1865 = vst.msk [vmem:[#allocation5 + $0xa8] sm:$0xff] %vm1857, %v1824
  %1866 = vst.msk [vmem:[#allocation5 + $0xc0] sm:$0xff] %vm1857, %v1826
  %1867 = vst.msk [vmem:[#allocation5 + $0xd8] sm:$0xff] %vm1857, %v1828
  %1868 = vst.msk [vmem:[#allocation5 + $0xf0] sm:$0xff] %vm1857, %v1830
  %1869 = vst.msk [vmem:[#allocation5 + $0x108] sm:$0xff] %vm1857, %v1832
  %1870 = vst.msk [vmem:[#allocation5 + $0x120] sm:$0xff] %vm1857, %v1834
  %1871 = vst.msk [vmem:[#allocation5 + $0x138] sm:$0xff] %vm1857, %v1836
  %1872 = vst.msk [vmem:[#allocation5 + $0x150] sm:$0xff] %vm1857, %v1838
  %1873 = vst.msk [vmem:[#allocation5 + $0x168] sm:$0xff] %vm1857, %v1840
  %v1874 = vrot.slane %v1227, 2
  %v1875 = vrot.slane %v1228, 2
  %v1876 = vsel %vm414, %v1874, %v1875
  %v1877 = vrot.slane %v1247, 2
  %v1878 = vrot.slane %v1248, 2
  %v1879 = vsel %vm414, %v1877, %v1878
  %1896 = vst.msk [vmem:[#allocation5 + $0x8] sm:$0xff] %vm95, %v1418
  %1897 = vst.msk [vmem:[#allocation5 + $0x20] sm:$0xff] %vm95, %v1421
  %1898 = vst.msk [vmem:[#allocation5 + $0x38] sm:$0xff] %vm95, %v1424
  %1899 = vst.msk [vmem:[#allocation5 + $0x50] sm:$0xff] %vm95, %v1427
  %1900 = vst.msk [vmem:[#allocation5 + $0x68] sm:$0xff] %vm95, %v1430
  %1901 = vst.msk [vmem:[#allocation5 + $0x80] sm:$0xff] %vm95, %v1433
  %1902 = vst.msk [vmem:[#allocation5 + $0x98] sm:$0xff] %vm95, %v1665
  %1903 = vst.msk [vmem:[#allocation5 + $0xb0] sm:$0xff] %vm95, %v1876
  %1904 = vst.msk [vmem:[#allocation5 + $0xc8] sm:$0xff] %vm95, %v1442
  %1905 = vst.msk [vmem:[#allocation5 + $0xe0] sm:$0xff] %vm95, %v1445
  %1906 = vst.msk [vmem:[#allocation5 + $0xf8] sm:$0xff] %vm95, %v1448
  %1907 = vst.msk [vmem:[#allocation5 + $0x110] sm:$0xff] %vm95, %v1451
  %1908 = vst.msk [vmem:[#allocation5 + $0x128] sm:$0xff] %vm95, %v1454
  %1909 = vst.msk [vmem:[#allocation5 + $0x140] sm:$0xff] %vm95, %v1457
  %1910 = vst.msk [vmem:[#allocation5 + $0x158] sm:$0xff] %vm95, %v1668
  %1911 = vst.msk [vmem:[#allocation5 + $0x170] sm:$0xff] %vm95, %v1879
  %v1912 = vld [vmem:[#allocation5] sm:$0xff]
  %v1913 = vld [vmem:[#allocation5 + $0x8] sm:$0xff]
  %v1914 = vld [vmem:[#allocation5 + $0x18] sm:$0xff]
  %v1915 = vld [vmem:[#allocation5 + $0x20] sm:$0xff]
  %v1916 = vld [vmem:[#allocation5 + $0x30] sm:$0xff]
  %v1917 = vld [vmem:[#allocation5 + $0x38] sm:$0xff]
  %v1918 = vld [vmem:[#allocation5 + $0x48] sm:$0xff]
  %v1919 = vld [vmem:[#allocation5 + $0x50] sm:$0xff]
  %v1920 = vld [vmem:[#allocation5 + $0x60] sm:$0xff]
  %v1921 = vld [vmem:[#allocation5 + $0x68] sm:$0xff]
  %v1922 = vld [vmem:[#allocation5 + $0x78] sm:$0xff]
  %v1923 = vld [vmem:[#allocation5 + $0x80] sm:$0xff]
  %v1924 = vld [vmem:[#allocation5 + $0x90] sm:$0xff]
  %v1925 = vld [vmem:[#allocation5 + $0x98] sm:$0xff]
  %v1926 = vld [vmem:[#allocation5 + $0xa8] sm:$0xff]
  %v1927 = vld [vmem:[#allocation5 + $0xb0] sm:$0xff]
  %v1928 = vld [vmem:[#allocation5 + $0xc0] sm:$0xff]
  %v1929 = vld [vmem:[#allocation5 + $0xc8] sm:$0xff]
  %v1930 = vld [vmem:[#allocation5 + $0xd8] sm:$0xff]
  %v1931 = vld [vmem:[#allocation5 + $0xe0] sm:$0xff]
  %v1932 = vld [vmem:[#allocation5 + $0xf0] sm:$0xff]
  %v1933 = vld [vmem:[#allocation5 + $0xf8] sm:$0xff]
  %v1934 = vld [vmem:[#allocation5 + $0x108] sm:$0xff]
  %v1935 = vld [vmem:[#allocation5 + $0x110] sm:$0xff]
  %v1936 = vld [vmem:[#allocation5 + $0x120] sm:$0xff]
  %v1937 = vld [vmem:[#allocation5 + $0x128] sm:$0xff]
  %v1938 = vld [vmem:[#allocation5 + $0x138] sm:$0xff]
  %v1939 = vld [vmem:[#allocation5 + $0x140] sm:$0xff]
  %v1940 = vld [vmem:[#allocation5 + $0x150] sm:$0xff]
  %v1941 = vld [vmem:[#allocation5 + $0x158] sm:$0xff]
  %v1942 = vld [vmem:[#allocation5 + $0x168] sm:$0xff]
  %v1943 = vld [vmem:[#allocation5 + $0x170] sm:$0xff]
  %v1944 = vld [vmem:[%s4] sm:$0xff]
  %v1945 = vld [vmem:[%s4 + $0x8] sm:$0xff]
  %v1946 = vld [vmem:[%s4 + $0x10] sm:$0xff]
  %v1947 = vld [vmem:[%s4 + $0x18] sm:$0xff]
  %v1948 = vld [vmem:[%s4 + $0x20] sm:$0xff]
  %v1949 = vld [vmem:[%s4 + $0x28] sm:$0xff]
  %v1950 = vld [vmem:[%s4 + $0x30] sm:$0xff]
  %v1951 = vld [vmem:[%s4 + $0x38] sm:$0xff]
  %v1952 = vld [vmem:[%s4 + $0x40] sm:$0xff]
  %v1953 = vld [vmem:[%s4 + $0x48] sm:$0xff]
  %v1954 = vld [vmem:[%s4 + $0x50] sm:$0xff]
  %v1955 = vld [vmem:[%s4 + $0x58] sm:$0xff]
  %v1956 = vld [vmem:[%s4 + $0x60] sm:$0xff]
  %v1957 = vld [vmem:[%s4 + $0x68] sm:$0xff]
  %v1958 = vld [vmem:[%s4 + $0x70] sm:$0xff]
  %v1959 = vld [vmem:[%s4 + $0x78] sm:$0xff]
  %v1960 = vld [vmem:[%s4 + $0x80] sm:$0xff]
  %v1961 = vld [vmem:[%s4 + $0x88] sm:$0xff]
  %v1962 = vld [vmem:[%s5] sm:$0x1]
  %v1964 = vlaneseq
  %v1965 = vshrl.u32 %v1964, 7
  %v1966 = vsub.s32 0, %v1965
  %v1967 = vrot.slane %v1962, %v1966
  %v1970 = vsel %vm95, %v1913, 0
  %v1973 = vsel %vm95, %v1915, 0
  %v1976 = vsel %vm95, %v1917, 0
  %v1979 = vsel %vm95, %v1919, 0
  %v1982 = vsel %vm95, %v1921, 0
  %v1985 = vsel %vm95, %v1923, 0
  %v1988 = vsel %vm95, %v1925, 0
  %v1991 = vsel %vm95, %v1927, 0
  %v1994 = vsel %vm95, %v1929, 0
  %v1997 = vsel %vm95, %v1931, 0
  %v2000 = vsel %vm95, %v1933, 0
  %v2003 = vsel %vm95, %v1935, 0
  %v2006 = vsel %vm95, %v1937, 0
  %v2009 = vsel %vm95, %v1939, 0
  %v2012 = vsel %vm95, %v1941, 0
  %v2015 = vsel %vm95, %v1943, 0
  %2017 = vmatprep.subr.mxu0 0.0
  %2018 = vmatpush1.msra.mxu0 %v1944
  %2019 = vmatprep.subr.mxu0 0.0
  %2020 = vmatpush1.msra.mxu0 %v1945
  %2021 = vmatprep.subr.mxu0 0.0
  %2022 = vmatpush1.msra.mxu0 %v1946
  %2023 = vmatprep.subr.mxu0 0.0
  %2024 = vmatpush1.msra.mxu0 %v1947
  %2025 = vmatprep.subr.mxu0 0.0
  %2026 = vmatpush1.msra.mxu0 %v1948
  %2027 = vmatprep.subr.mxu0 0.0
  %2028 = vmatpush1.msra.mxu0 %v1949
  %2029 = vmatprep.subr.mxu0 0.0
  %2030 = vmatpush1.msra.mxu0 %v1950
  %2031 = vmatprep.subr.mxu0 0.0
  %2032 = vmatpush1.msra.mxu0 %v1951
  %2033 = vmatprep.subr.mxu0 0.0
  %2034 = vmatpush1.msra.mxu0 %v1952
  %2035 = vmatprep.subr.mxu0 0.0
  %2036 = vmatpush1.msra.mxu0 %v1953
  %2037 = vmatprep.subr.mxu0 0.0
  %2038 = vmatpush1.msra.mxu0 %v1954
  %2039 = vmatprep.subr.mxu0 0.0
  %2040 = vmatpush1.msra.mxu0 %v1955
  %2041 = vmatprep.subr.mxu0 0.0
  %2042 = vmatpush1.msra.mxu0 %v1956
  %2043 = vmatprep.subr.mxu0 0.0
  %2044 = vmatpush1.msra.mxu0 %v1957
  %2045 = vmatprep.subr.mxu0 0.0
  %2046 = vmatpush1.msra.mxu0 %v1958
  %2047 = vmatprep.subr.mxu0 0.0
  %2048 = vmatpush1.msra.mxu0 %v1959
  %2049 = vmatprep.subr.mxu0 0.0
  %2050 = vmatpush1.msra.mxu0 %v1960
  %2051 = vmatprep.subr.mxu0 0.0
  %2052 = vmatpush1.msra.mxu0 %v1961
  %2053 = vmatprep.subr.mxu0 0.0
  %2054 = vmatpush1.msra.mxu0 0.0
  %2055 = vmatprep.subr.mxu0 0.0
  %2056 = vmatpush1.msra.mxu0 0.0
  %2057 = vmatprep.subr.mxu0 0.0
  %2058 = vmatpush1.msra.mxu0 0.0
  %2059 = vmatprep.subr.mxu0 0.0
  %2060 = vmatpush1.msra.mxu0 0.0
  %2061 = vmatprep.subr.mxu0 0.0
  %2062 = vmatpush1.msra.mxu0 0.0
  %2063 = vmatprep.subr.mxu0 0.0
  %2064 = vmatpush1.msra.mxu0 0.0
  %2065 = vmatprep.subr.mxu0 0.0
  %2066 = vmatpush1.msra.mxu0 0.0
  %2067 = vmatprep.subr.mxu0 0.0
  %2068 = vmatpush1.msra.mxu0 0.0
  %2069 = vmatprep.subr.mxu0 0.0
  %2070 = vmatpush1.msra.mxu0 0.0
  %2071 = vmatprep.subr.mxu0 0.0
  %2072 = vmatpush1.msra.mxu0 0.0
  %2073 = vmatprep.subr.mxu0 0.0
  %2074 = vmatpush1.msra.mxu0 0.0
  %2075 = vmatprep.subr.mxu0 0.0
  %2076 = vmatpush1.msra.mxu0 0.0
  %2077 = vmatprep.subr.mxu0 0.0
  %2078 = vmatpush1.msra.mxu0 0.0
  %2079 = vmatprep.subr.mxu0 0.0
  %2080 = vmatpush1.msra.mxu0 0.0
  %2081 = vmatprep.mubr.f32.mxu0 %v1970
  %2082 = vmatmul.mubr.f32.gmra.mrb[0].mxu0 %v1912
  %v2083 = vpop.f32.mrb[0].mxu0
  %v2084 = vadd.f32 %v1967, %v2083
  %v2085 = vpop.f32.mrb[0].mxu0
  %2086 = vmatprep.mubr.f32.mxu0 %v1973
  %2087 = vmatmul.mubr.f32.gmra.mrb[0].mxu0 %v1914
  %v2088 = vpop.f32.mrb[0].mxu0
  %v2089 = vadd.f32 %v1967, %v2088
  %v2090 = vpop.f32.mrb[0].mxu0
  %2091 = vmatprep.mubr.f32.mxu0 %v1976
  %2092 = vmatmul.mubr.f32.gmra.mrb[0].mxu0 %v1916
  %v2093 = vpop.f32.mrb[0].mxu0
  %v2094 = vadd.f32 %v1967, %v2093
  %v2095 = vpop.f32.mrb[0].mxu0
  %2096 = vmatprep.mubr.f32.mxu0 %v1979
  %2097 = vmatmul.mubr.f32.gmra.mrb[0].mxu0 %v1918
  %v2098 = vpop.f32.mrb[0].mxu0
  %v2099 = vadd.f32 %v1967, %v2098
  %v2100 = vpop.f32.mrb[0].mxu0
  %2101 = vmatprep.mubr.f32.mxu0 %v1982
  %2102 = vmatmul.mubr.f32.gmra.mrb[0].mxu0 %v1920
  %v2103 = vpop.f32.mrb[0].mxu0
  %v2104 = vadd.f32 %v1967, %v2103
  %v2105 = vpop.f32.mrb[0].mxu0
  %2106 = vmatprep.mubr.f32.mxu0 %v1985
  %2107 = vmatmul.mubr.f32.gmra.mrb[0].mxu0 %v1922
  %v2108 = vpop.f32.mrb[0].mxu0
  %v2109 = vadd.f32 %v1967, %v2108
  %v2110 = vpop.f32.mrb[0].mxu0
  %2111 = vmatprep.mubr.f32.mxu0 %v1988
  %2112 = vmatmul.mubr.f32.gmra.mrb[0].mxu0 %v1924
  %v2113 = vpop.f32.mrb[0].mxu0
  %v2114 = vadd.f32 %v1967, %v2113
  %v2115 = vpop.f32.mrb[0].mxu0
  %2116 = vmatprep.mubr.f32.mxu0 %v1991
  %2117 = vmatmul.mubr.f32.gmra.mrb[0].mxu0 %v1926
  %v2118 = vpop.f32.mrb[0].mxu0
  %v2119 = vadd.f32 %v1967, %v2118
  %v2120 = vpop.f32.mrb[0].mxu0
  %2121 = vmatprep.mubr.f32.mxu0 %v1994
  %2122 = vmatmul.mubr.f32.gmra.mrb[0].mxu0 %v1928
  %v2123 = vpop.f32.mrb[0].mxu0
  %v2124 = vadd.f32 %v1967, %v2123
  %v2125 = vpop.f32.mrb[0].mxu0
  %2126 = vmatprep.mubr.f32.mxu0 %v1997
  %2127 = vmatmul.mubr.f32.gmra.mrb[0].mxu0 %v1930
  %v2128 = vpop.f32.mrb[0].mxu0
  %v2129 = vadd.f32 %v1967, %v2128
  %v2130 = vpop.f32.mrb[0].mxu0
  %2131 = vmatprep.mubr.f32.mxu0 %v2000
  %2132 = vmatmul.mubr.f32.gmra.mrb[0].mxu0 %v1932
  %v2133 = vpop.f32.mrb[0].mxu0
  %v2134 = vadd.f32 %v1967, %v2133
  %v2135 = vpop.f32.mrb[0].mxu0
  %2136 = vmatprep.mubr.f32.mxu0 %v2003
  %2137 = vmatmul.mubr.f32.gmra.mrb[0].mxu0 %v1934
  %v2138 = vpop.f32.mrb[0].mxu0
  %v2139 = vadd.f32 %v1967, %v2138
  %v2140 = vpop.f32.mrb[0].mxu0
  %2141 = vmatprep.mubr.f32.mxu0 %v2006
  %2142 = vmatmul.mubr.f32.gmra.mrb[0].mxu0 %v1936
  %v2143 = vpop.f32.mrb[0].mxu0
  %v2144 = vadd.f32 %v1967, %v2143
  %v2145 = vpop.f32.mrb[0].mxu0
  %2146 = vmatprep.mubr.f32.mxu0 %v2009
  %2147 = vmatmul.mubr.f32.gmra.mrb[0].mxu0 %v1938
  %v2148 = vpop.f32.mrb[0].mxu0
  %v2149 = vadd.f32 %v1967, %v2148
  %v2150 = vpop.f32.mrb[0].mxu0
  %2151 = vmatprep.mubr.f32.mxu0 %v2012
  %2152 = vmatmul.mubr.f32.gmra.mrb[0].mxu0 %v1940
  %v2153 = vpop.f32.mrb[0].mxu0
  %v2154 = vadd.f32 %v1967, %v2153
  %v2155 = vpop.f32.mrb[0].mxu0
  %2156 = vmatprep.mubr.f32.mxu0 %v2015
  %2157 = vmatmul.mubr.f32.gmra.mrb[0].mxu0 %v1942
  %v2158 = vpop.f32.mrb[0].mxu0
  %v2159 = vadd.f32 %v1967, %v2158
  %v2160 = vpop.f32.mrb[0].mxu0
  %2161 = vdwg.mxu0
  %v2162 = vmax.f32 %v2084, 0.0
  %v2163 = vmax.f32 %v2089, 0.0
  %v2164 = vmax.f32 %v2094, 0.0
  %v2165 = vmax.f32 %v2099, 0.0
  %v2166 = vmax.f32 %v2104, 0.0
  %v2167 = vmax.f32 %v2109, 0.0
  %v2168 = vmax.f32 %v2114, 0.0
  %v2169 = vmax.f32 %v2119, 0.0
  %v2170 = vmax.f32 %v2124, 0.0
  %v2171 = vmax.f32 %v2129, 0.0
  %v2172 = vmax.f32 %v2134, 0.0
  %v2173 = vmax.f32 %v2139, 0.0
  %v2174 = vmax.f32 %v2144, 0.0
  %v2175 = vmax.f32 %v2149, 0.0
  %v2176 = vmax.f32 %v2154, 0.0
  %v2177 = vmax.f32 %v2159, 0.0
  %s2178 = scalar_lea.vmem [#allocation4], 16
  %2179 = vst.msk [vmem:[%s2178 + $0x1] sm:$0xff] %vm137, %v2162
  %2180 = vst.msk [vmem:[%s2178 + $0x11] sm:$0xff] %vm137, %v2163
  %2181 = vst.msk [vmem:[%s2178 + $0x21] sm:$0xff] %vm137, %v2164
  %2182 = vst.msk [vmem:[%s2178 + $0x31] sm:$0xff] %vm137, %v2165
  %2183 = vst.msk [vmem:[%s2178 + $0x41] sm:$0xff] %vm137, %v2166
  %2184 = vst.msk [vmem:[%s2178 + $0x51] sm:$0xff] %vm137, %v2167
  %2185 = vst.msk [vmem:[%s2178 + $0x61] sm:$0xff] %vm137, %v2168
  %2186 = vst.msk [vmem:[%s2178 + $0x71] sm:$0xff] %vm137, %v2169
  %2187 = vst.msk [vmem:[%s2178 + $0xa1] sm:$0xff] %vm137, %v2170
  %2188 = vst.msk [vmem:[%s2178 + $0xb1] sm:$0xff] %vm137, %v2171
  %2189 = vst.msk [vmem:[%s2178 + $0xc1] sm:$0xff] %vm137, %v2172
  %2190 = vst.msk [vmem:[%s2178 + $0xd1] sm:$0xff] %vm137, %v2173
  %2191 = vst.msk [vmem:[%s2178 + $0xe1] sm:$0xff] %vm137, %v2174
  %2192 = vst.msk [vmem:[%s2178 + $0xf1] sm:$0xff] %vm137, %v2175
  %2193 = vst.msk [vmem:[%s2178 + $0x101] sm:$0xff] %vm137, %v2176
  %2194 = vst.msk [vmem:[%s2178 + $0x111] sm:$0xff] %vm137, %v2177
  %v2195 = vld [vmem:[#allocation4] sm:$0xff]
  %v2196 = vld [vmem:[#allocation4 + $0x8] sm:$0x3]
  %v2197 = vld [vmem:[#allocation4 + $0x10] sm:$0xff]
  %v2198 = vld [vmem:[#allocation4 + $0x18] sm:$0x3]
  %v2199 = vld [vmem:[#allocation4 + $0x20] sm:$0xff]
  %v2200 = vld [vmem:[#allocation4 + $0x28] sm:$0x3]
  %v2201 = vld [vmem:[#allocation4 + $0x30] sm:$0xff]
  %v2202 = vld [vmem:[#allocation4 + $0x38] sm:$0x3]
  %v2203 = vld [vmem:[#allocation4 + $0x40] sm:$0xff]
  %v2204 = vld [vmem:[#allocation4 + $0x48] sm:$0x3]
  %v2205 = vld [vmem:[#allocation4 + $0x50] sm:$0xff]
  %v2206 = vld [vmem:[#allocation4 + $0x58] sm:$0x3]
  %v2207 = vld [vmem:[#allocation4 + $0x60] sm:$0xff]
  %v2208 = vld [vmem:[#allocation4 + $0x68] sm:$0x3]
  %v2209 = vld [vmem:[#allocation4 + $0x70] sm:$0xff]
  %v2210 = vld [vmem:[#allocation4 + $0x78] sm:$0x3]
  %v2211 = vld [vmem:[#allocation4 + $0x80] sm:$0xff]
  %v2212 = vld [vmem:[#allocation4 + $0x88] sm:$0x3]
  %v2213 = vld [vmem:[#allocation4 + $0x90] sm:$0xff]
  %v2214 = vld [vmem:[#allocation4 + $0x98] sm:$0x3]
  %v2215 = vld [vmem:[#allocation4 + $0xa0] sm:$0xff]
  %v2216 = vld [vmem:[#allocation4 + $0xa8] sm:$0x3]
  %v2217 = vld [vmem:[#allocation4 + $0xb0] sm:$0xff]
  %v2218 = vld [vmem:[#allocation4 + $0xb8] sm:$0x3]
  %v2219 = vld [vmem:[#allocation4 + $0xc0] sm:$0xff]
  %v2220 = vld [vmem:[#allocation4 + $0xc8] sm:$0x3]
  %v2221 = vld [vmem:[#allocation4 + $0xd0] sm:$0xff]
  %v2222 = vld [vmem:[#allocation4 + $0xd8] sm:$0x3]
  %v2223 = vld [vmem:[#allocation4 + $0xe0] sm:$0xff]
  %v2224 = vld [vmem:[#allocation4 + $0xe8] sm:$0x3]
  %v2225 = vld [vmem:[#allocation4 + $0xf0] sm:$0xff]
  %v2226 = vld [vmem:[#allocation4 + $0xf8] sm:$0x3]
  %v2227 = vld [vmem:[#allocation4 + $0x100] sm:$0xff]
  %v2228 = vld [vmem:[#allocation4 + $0x108] sm:$0x3]
  %v2229 = vld [vmem:[#allocation4 + $0x110] sm:$0xff]
  %v2230 = vld [vmem:[#allocation4 + $0x118] sm:$0x3]
  %v2231 = vld [vmem:[#allocation4 + $0x120] sm:$0xff]
  %v2232 = vld [vmem:[#allocation4 + $0x128] sm:$0x3]
  %v2233 = vld [vmem:[#allocation4 + $0x130] sm:$0xff]
  %v2234 = vld [vmem:[#allocation4 + $0x138] sm:$0x3]
  %2235 = vst.msk [vmem:[#allocation5] sm:$0xff] %vm137, %v2195
  %2236 = vst.msk [vmem:[#allocation5 + $0x18] sm:$0xff] %vm137, %v2197
  %2237 = vst.msk [vmem:[#allocation5 + $0x30] sm:$0xff] %vm137, %v2199
  %2238 = vst.msk [vmem:[#allocation5 + $0x48] sm:$0xff] %vm137, %v2201
  %2239 = vst.msk [vmem:[#allocation5 + $0x60] sm:$0xff] %vm137, %v2203
  %2240 = vst.msk [vmem:[#allocation5 + $0x78] sm:$0xff] %vm137, %v2205
  %2241 = vst.msk [vmem:[#allocation5 + $0x90] sm:$0xff] %vm137, %v2207
  %2242 = vst.msk [vmem:[#allocation5 + $0xa8] sm:$0xff] %vm137, %v2209
  %2243 = vst.msk [vmem:[#allocation5 + $0xc0] sm:$0xff] %vm137, %v2215
  %2244 = vst.msk [vmem:[#allocation5 + $0xd8] sm:$0xff] %vm137, %v2217
  %2245 = vst.msk [vmem:[#allocation5 + $0xf0] sm:$0xff] %vm137, %v2219
  %2246 = vst.msk [vmem:[#allocation5 + $0x108] sm:$0xff] %vm137, %v2221
  %2247 = vst.msk [vmem:[#allocation5 + $0x120] sm:$0xff] %vm137, %v2223
  %2248 = vst.msk [vmem:[#allocation5 + $0x138] sm:$0xff] %vm137, %v2225
  %2249 = vst.msk [vmem:[#allocation5 + $0x150] sm:$0xff] %vm137, %v2227
  %2250 = vst.msk [vmem:[#allocation5 + $0x168] sm:$0xff] %vm137, %v2229
  %v2283 = vrot.slane %v2195, 1
  %v2284 = vrot.slane %v2196, 1
  %v2285 = vsel %vm300, %v2283, %v2284
  %v2286 = vrot.slane %v2197, 1
  %v2287 = vrot.slane %v2198, 1
  %v2288 = vsel %vm300, %v2286, %v2287
  %v2289 = vrot.slane %v2199, 1
  %v2290 = vrot.slane %v2200, 1
  %v2291 = vsel %vm300, %v2289, %v2290
  %v2292 = vrot.slane %v2201, 1
  %v2293 = vrot.slane %v2202, 1
  %v2294 = vsel %vm300, %v2292, %v2293
  %v2295 = vrot.slane %v2203, 1
  %v2296 = vrot.slane %v2204, 1
  %v2297 = vsel %vm300, %v2295, %v2296
  %v2298 = vrot.slane %v2205, 1
  %v2299 = vrot.slane %v2206, 1
  %v2300 = vsel %vm300, %v2298, %v2299
  %v2301 = vrot.slane %v2207, 1
  %v2302 = vrot.slane %v2208, 1
  %v2303 = vsel %vm300, %v2301, %v2302
  %v2304 = vrot.slane %v2209, 1
  %v2305 = vrot.slane %v2210, 1
  %v2306 = vsel %vm300, %v2304, %v2305
  %v2307 = vrot.slane %v2215, 1
  %v2308 = vrot.slane %v2216, 1
  %v2309 = vsel %vm300, %v2307, %v2308
  %v2310 = vrot.slane %v2217, 1
  %v2311 = vrot.slane %v2218, 1
  %v2312 = vsel %vm300, %v2310, %v2311
  %v2313 = vrot.slane %v2219, 1
  %v2314 = vrot.slane %v2220, 1
  %v2315 = vsel %vm300, %v2313, %v2314
  %v2316 = vrot.slane %v2221, 1
  %v2317 = vrot.slane %v2222, 1
  %v2318 = vsel %vm300, %v2316, %v2317
  %v2319 = vrot.slane %v2223, 1
  %v2320 = vrot.slane %v2224, 1
  %v2321 = vsel %vm300, %v2319, %v2320
  %v2322 = vrot.slane %v2225, 1
  %v2323 = vrot.slane %v2226, 1
  %v2324 = vsel %vm300, %v2322, %v2323
  %v2325 = vrot.slane %v2227, 1
  %v2326 = vrot.slane %v2228, 1
  %v2327 = vsel %vm300, %v2325, %v2326
  %v2328 = vrot.slane %v2229, 1
  %v2329 = vrot.slane %v2230, 1
  %v2330 = vsel %vm300, %v2328, %v2329
  %2331 = vrot.lane.b32.xlu0 %v2285, 32
  %v2332 = vpop.permute.xlu0 %2331
  %2333 = vrot.lane.b32.xlu0 %v2288, 32
  %v2334 = vpop.permute.xlu0 %2333
  %2335 = vrot.lane.b32.xlu0 %v2291, 32
  %v2336 = vpop.permute.xlu0 %2335
  %2337 = vrot.lane.b32.xlu0 %v2294, 32
  %v2338 = vpop.permute.xlu0 %2337
  %2339 = vrot.lane.b32.xlu0 %v2297, 32
  %v2340 = vpop.permute.xlu0 %2339
  %2341 = vrot.lane.b32.xlu0 %v2300, 32
  %v2342 = vpop.permute.xlu0 %2341
  %2343 = vrot.lane.b32.xlu0 %v2303, 32
  %v2344 = vpop.permute.xlu0 %2343
  %2345 = vrot.lane.b32.xlu0 %v2306, 32
  %v2346 = vpop.permute.xlu0 %2345
  %2347 = vrot.lane.b32.xlu0 %v2309, 32
  %v2348 = vpop.permute.xlu0 %2347
  %2349 = vrot.lane.b32.xlu0 %v2312, 32
  %v2350 = vpop.permute.xlu0 %2349
  %2351 = vrot.lane.b32.xlu0 %v2315, 32
  %v2352 = vpop.permute.xlu0 %2351
  %2353 = vrot.lane.b32.xlu0 %v2318, 32
  %v2354 = vpop.permute.xlu0 %2353
  %2355 = vrot.lane.b32.xlu0 %v2321, 32
  %v2356 = vpop.permute.xlu0 %2355
  %2357 = vrot.lane.b32.xlu0 %v2324, 32
  %v2358 = vpop.permute.xlu0 %2357
  %2359 = vrot.lane.b32.xlu0 %v2327, 32
  %v2360 = vpop.permute.xlu0 %2359
  %2361 = vrot.lane.b32.xlu0 %v2330, 32
  %v2362 = vpop.permute.xlu0 %2361
  %vm2379 = vcmask 523520
  %2380 = vst.msk [vmem:[#allocation5] sm:$0xff] %vm2379, %v2332
  %2381 = vst.msk [vmem:[#allocation5 + $0x18] sm:$0xff] %vm2379, %v2334
  %2382 = vst.msk [vmem:[#allocation5 + $0x30] sm:$0xff] %vm2379, %v2336
  %2383 = vst.msk [vmem:[#allocation5 + $0x48] sm:$0xff] %vm2379, %v2338
  %2384 = vst.msk [vmem:[#allocation5 + $0x60] sm:$0xff] %vm2379, %v2340
  %2385 = vst.msk [vmem:[#allocation5 + $0x78] sm:$0xff] %vm2379, %v2342
  %2386 = vst.msk [vmem:[#allocation5 + $0x90] sm:$0xff] %vm2379, %v2344
  %2387 = vst.msk [vmem:[#allocation5 + $0xa8] sm:$0xff] %vm2379, %v2346
  %2388 = vst.msk [vmem:[#allocation5 + $0xc0] sm:$0xff] %vm2379, %v2348
  %2389 = vst.msk [vmem:[#allocation5 + $0xd8] sm:$0xff] %vm2379, %v2350
  %2390 = vst.msk [vmem:[#allocation5 + $0xf0] sm:$0xff] %vm2379, %v2352
  %2391 = vst.msk [vmem:[#allocation5 + $0x108] sm:$0xff] %vm2379, %v2354
  %2392 = vst.msk [vmem:[#allocation5 + $0x120] sm:$0xff] %vm2379, %v2356
  %2393 = vst.msk [vmem:[#allocation5 + $0x138] sm:$0xff] %vm2379, %v2358
  %2394 = vst.msk [vmem:[#allocation5 + $0x150] sm:$0xff] %vm2379, %v2360
  %2395 = vst.msk [vmem:[#allocation5 + $0x168] sm:$0xff] %vm2379, %v2362
  %v2396 = vrot.slane %v2195, 2
  %v2397 = vrot.slane %v2196, 2
  %v2398 = vsel %vm414, %v2396, %v2397
  %v2399 = vrot.slane %v2197, 2
  %v2400 = vrot.slane %v2198, 2
  %v2401 = vsel %vm414, %v2399, %v2400
  %v2402 = vrot.slane %v2199, 2
  %v2403 = vrot.slane %v2200, 2
  %v2404 = vsel %vm414, %v2402, %v2403
  %v2405 = vrot.slane %v2201, 2
  %v2406 = vrot.slane %v2202, 2
  %v2407 = vsel %vm414, %v2405, %v2406
  %v2408 = vrot.slane %v2203, 2
  %v2409 = vrot.slane %v2204, 2
  %v2410 = vsel %vm414, %v2408, %v2409
  %v2411 = vrot.slane %v2205, 2
  %v2412 = vrot.slane %v2206, 2
  %v2413 = vsel %vm414, %v2411, %v2412
  %v2414 = vrot.slane %v2207, 2
  %v2415 = vrot.slane %v2208, 2
  %v2416 = vsel %vm414, %v2414, %v2415
  %v2417 = vrot.slane %v2209, 2
  %v2418 = vrot.slane %v2210, 2
  %v2419 = vsel %vm414, %v2417, %v2418
  %v2420 = vrot.slane %v2215, 2
  %v2421 = vrot.slane %v2216, 2
  %v2422 = vsel %vm414, %v2420, %v2421
  %v2423 = vrot.slane %v2217, 2
  %v2424 = vrot.slane %v2218, 2
  %v2425 = vsel %vm414, %v2423, %v2424
  %v2426 = vrot.slane %v2219, 2
  %v2427 = vrot.slane %v2220, 2
  %v2428 = vsel %vm414, %v2426, %v2427
  %v2429 = vrot.slane %v2221, 2
  %v2430 = vrot.slane %v2222, 2
  %v2431 = vsel %vm414, %v2429, %v2430
  %v2432 = vrot.slane %v2223, 2
  %v2433 = vrot.slane %v2224, 2
  %v2434 = vsel %vm414, %v2432, %v2433
  %v2435 = vrot.slane %v2225, 2
  %v2436 = vrot.slane %v2226, 2
  %v2437 = vsel %vm414, %v2435, %v2436
  %v2438 = vrot.slane %v2227, 2
  %v2439 = vrot.slane %v2228, 2
  %v2440 = vsel %vm414, %v2438, %v2439
  %v2441 = vrot.slane %v2229, 2
  %v2442 = vrot.slane %v2230, 2
  %v2443 = vsel %vm414, %v2441, %v2442
  %2444 = vrot.lane.b32.xlu0 %v2398, 64
  %v2445 = vpop.permute.xlu0 %2444
  %2446 = vrot.lane.b32.xlu0 %v2401, 64
  %v2447 = vpop.permute.xlu0 %2446
  %2448 = vrot.lane.b32.xlu0 %v2404, 64
  %v2449 = vpop.permute.xlu0 %2448
  %2450 = vrot.lane.b32.xlu0 %v2407, 64
  %v2451 = vpop.permute.xlu0 %2450
  %2452 = vrot.lane.b32.xlu0 %v2410, 64
  %v2453 = vpop.permute.xlu0 %2452
  %2454 = vrot.lane.b32.xlu0 %v2413, 64
  %v2455 = vpop.permute.xlu0 %2454
  %2456 = vrot.lane.b32.xlu0 %v2416, 64
  %v2457 = vpop.permute.xlu0 %2456
  %2458 = vrot.lane.b32.xlu0 %v2419, 64
  %v2459 = vpop.permute.xlu0 %2458
  %2460 = vrot.lane.b32.xlu0 %v2422, 64
  %v2461 = vpop.permute.xlu0 %2460
  %2462 = vrot.lane.b32.xlu0 %v2425, 64
  %v2463 = vpop.permute.xlu0 %2462
  %2464 = vrot.lane.b32.xlu0 %v2428, 64
  %v2465 = vpop.permute.xlu0 %2464
  %2466 = vrot.lane.b32.xlu0 %v2431, 64
  %v2467 = vpop.permute.xlu0 %2466
  %2468 = vrot.lane.b32.xlu0 %v2434, 64
  %v2469 = vpop.permute.xlu0 %2468
  %2470 = vrot.lane.b32.xlu0 %v2437, 64
  %v2471 = vpop.permute.xlu0 %2470
  %2472 = vrot.lane.b32.xlu0 %v2440, 64
  %v2473 = vpop.permute.xlu0 %2472
  %2474 = vrot.lane.b32.xlu0 %v2443, 64
  %v2475 = vpop.permute.xlu0 %2474
  %vm2492 = vcmask 785920
  %2493 = vst.msk [vmem:[#allocation5] sm:$0xff] %vm2492, %v2445
  %2494 = vst.msk [vmem:[#allocation5 + $0x18] sm:$0xff] %vm2492, %v2447
  %2495 = vst.msk [vmem:[#allocation5 + $0x30] sm:$0xff] %vm2492, %v2449
  %2496 = vst.msk [vmem:[#allocation5 + $0x48] sm:$0xff] %vm2492, %v2451
  %2497 = vst.msk [vmem:[#allocation5 + $0x60] sm:$0xff] %vm2492, %v2453
  %2498 = vst.msk [vmem:[#allocation5 + $0x78] sm:$0xff] %vm2492, %v2455
  %2499 = vst.msk [vmem:[#allocation5 + $0x90] sm:$0xff] %vm2492, %v2457
  %2500 = vst.msk [vmem:[#allocation5 + $0xa8] sm:$0xff] %vm2492, %v2459
  %2501 = vst.msk [vmem:[#allocation5 + $0xc0] sm:$0xff] %vm2492, %v2461
  %2502 = vst.msk [vmem:[#allocation5 + $0xd8] sm:$0xff] %vm2492, %v2463
  %2503 = vst.msk [vmem:[#allocation5 + $0xf0] sm:$0xff] %vm2492, %v2465
  %2504 = vst.msk [vmem:[#allocation5 + $0x108] sm:$0xff] %vm2492, %v2467
  %2505 = vst.msk [vmem:[#allocation5 + $0x120] sm:$0xff] %vm2492, %v2469
  %2506 = vst.msk [vmem:[#allocation5 + $0x138] sm:$0xff] %vm2492, %v2471
  %2507 = vst.msk [vmem:[#allocation5 + $0x150] sm:$0xff] %vm2492, %v2473
  %2508 = vst.msk [vmem:[#allocation5 + $0x168] sm:$0xff] %vm2492, %v2475
  %2511 = vrot.lane.b32.xlu0 %v2197, 96
  %v2512 = vpop.permute.xlu0 %2511
  %2513 = vrot.lane.b32.xlu0 %v2199, 96
  %v2514 = vpop.permute.xlu0 %2513
  %2515 = vrot.lane.b32.xlu0 %v2201, 96
  %v2516 = vpop.permute.xlu0 %2515
  %2517 = vrot.lane.b32.xlu0 %v2203, 96
  %v2518 = vpop.permute.xlu0 %2517
  %2519 = vrot.lane.b32.xlu0 %v2205, 96
  %v2520 = vpop.permute.xlu0 %2519
  %2521 = vrot.lane.b32.xlu0 %v2207, 96
  %v2522 = vpop.permute.xlu0 %2521
  %2523 = vrot.lane.b32.xlu0 %v2209, 96
  %v2524 = vpop.permute.xlu0 %2523
  %2525 = vrot.lane.b32.xlu0 %v2211, 96
  %v2526 = vpop.permute.xlu0 %2525
  %2527 = vrot.lane.b32.xlu0 %v2217, 96
  %v2528 = vpop.permute.xlu0 %2527
  %2529 = vrot.lane.b32.xlu0 %v2219, 96
  %v2530 = vpop.permute.xlu0 %2529
  %2531 = vrot.lane.b32.xlu0 %v2221, 96
  %v2532 = vpop.permute.xlu0 %2531
  %2533 = vrot.lane.b32.xlu0 %v2223, 96
  %v2534 = vpop.permute.xlu0 %2533
  %2535 = vrot.lane.b32.xlu0 %v2225, 96
  %v2536 = vpop.permute.xlu0 %2535
  %2537 = vrot.lane.b32.xlu0 %v2227, 96
  %v2538 = vpop.permute.xlu0 %2537
  %2539 = vrot.lane.b32.xlu0 %v2229, 96
  %v2540 = vpop.permute.xlu0 %2539
  %2541 = vrot.lane.b32.xlu0 %v2231, 96
  %v2542 = vpop.permute.xlu0 %2541
  %vm2559 = vcmask 1048320
  %2560 = vst.msk [vmem:[#allocation5] sm:$0xff] %vm2559, %v2512
  %2561 = vst.msk [vmem:[#allocation5 + $0x18] sm:$0xff] %vm2559, %v2514
  %2562 = vst.msk [vmem:[#allocation5 + $0x30] sm:$0xff] %vm2559, %v2516
  %2563 = vst.msk [vmem:[#allocation5 + $0x48] sm:$0xff] %vm2559, %v2518
  %2564 = vst.msk [vmem:[#allocation5 + $0x60] sm:$0xff] %vm2559, %v2520
  %2565 = vst.msk [vmem:[#allocation5 + $0x78] sm:$0xff] %vm2559, %v2522
  %2566 = vst.msk [vmem:[#allocation5 + $0x90] sm:$0xff] %vm2559, %v2524
  %2567 = vst.msk [vmem:[#allocation5 + $0xa8] sm:$0xff] %vm2559, %v2526
  %2568 = vst.msk [vmem:[#allocation5 + $0xc0] sm:$0xff] %vm2559, %v2528
  %2569 = vst.msk [vmem:[#allocation5 + $0xd8] sm:$0xff] %vm2559, %v2530
  %2570 = vst.msk [vmem:[#allocation5 + $0xf0] sm:$0xff] %vm2559, %v2532
  %2571 = vst.msk [vmem:[#allocation5 + $0x108] sm:$0xff] %vm2559, %v2534
  %2572 = vst.msk [vmem:[#allocation5 + $0x120] sm:$0xff] %vm2559, %v2536
  %2573 = vst.msk [vmem:[#allocation5 + $0x138] sm:$0xff] %vm2559, %v2538
  %2574 = vst.msk [vmem:[#allocation5 + $0x150] sm:$0xff] %vm2559, %v2540
  %2575 = vst.msk [vmem:[#allocation5 + $0x168] sm:$0xff] %vm2559, %v2542
  %v2578 = vrot.slane %v2211, 1
  %v2579 = vrot.slane %v2212, 1
  %v2580 = vsel %vm300, %v2578, %v2579
  %v2581 = vrot.slane %v2231, 1
  %v2582 = vrot.slane %v2232, 1
  %v2583 = vsel %vm300, %v2581, %v2582
  %2600 = vst.msk [vmem:[#allocation5 + $0x8] sm:$0xff] %vm137, %v2288
  %2601 = vst.msk [vmem:[#allocation5 + $0x20] sm:$0xff] %vm137, %v2291
  %2602 = vst.msk [vmem:[#allocation5 + $0x38] sm:$0xff] %vm137, %v2294
  %2603 = vst.msk [vmem:[#allocation5 + $0x50] sm:$0xff] %vm137, %v2297
  %2604 = vst.msk [vmem:[#allocation5 + $0x68] sm:$0xff] %vm137, %v2300
  %2605 = vst.msk [vmem:[#allocation5 + $0x80] sm:$0xff] %vm137, %v2303
  %2606 = vst.msk [vmem:[#allocation5 + $0x98] sm:$0xff] %vm137, %v2306
  %2607 = vst.msk [vmem:[#allocation5 + $0xb0] sm:$0xff] %vm137, %v2580
  %2608 = vst.msk [vmem:[#allocation5 + $0xc8] sm:$0xff] %vm137, %v2312
  %2609 = vst.msk [vmem:[#allocation5 + $0xe0] sm:$0xff] %vm137, %v2315
  %2610 = vst.msk [vmem:[#allocation5 + $0xf8] sm:$0xff] %vm137, %v2318
  %2611 = vst.msk [vmem:[#allocation5 + $0x110] sm:$0xff] %vm137, %v2321
  %2612 = vst.msk [vmem:[#allocation5 + $0x128] sm:$0xff] %vm137, %v2324
  %2613 = vst.msk [vmem:[#allocation5 + $0x140] sm:$0xff] %vm137, %v2327
  %2614 = vst.msk [vmem:[#allocation5 + $0x158] sm:$0xff] %vm137, %v2330
  %2615 = vst.msk [vmem:[#allocation5 + $0x170] sm:$0xff] %vm137, %v2583
  %v2616 = vrot.slane %v2211, 2
  %v2617 = vrot.slane %v2212, 2
  %v2618 = vsel %vm414, %v2616, %v2617
  %v2619 = vrot.slane %v2231, 2
  %v2620 = vrot.slane %v2232, 2
  %v2621 = vsel %vm414, %v2619, %v2620
  %2622 = vrot.lane.b32.xlu0 %v2401, 32
  %v2623 = vpop.permute.xlu0 %2622
  %2624 = vrot.lane.b32.xlu0 %v2404, 32
  %v2625 = vpop.permute.xlu0 %2624
  %2626 = vrot.lane.b32.xlu0 %v2407, 32
  %v2627 = vpop.permute.xlu0 %2626
  %2628 = vrot.lane.b32.xlu0 %v2410, 32
  %v2629 = vpop.permute.xlu0 %2628
  %2630 = vrot.lane.b32.xlu0 %v2413, 32
  %v2631 = vpop.permute.xlu0 %2630
  %2632 = vrot.lane.b32.xlu0 %v2416, 32
  %v2633 = vpop.permute.xlu0 %2632
  %2634 = vrot.lane.b32.xlu0 %v2419, 32
  %v2635 = vpop.permute.xlu0 %2634
  %2636 = vrot.lane.b32.xlu0 %v2618, 32
  %v2637 = vpop.permute.xlu0 %2636
  %2638 = vrot.lane.b32.xlu0 %v2425, 32
  %v2639 = vpop.permute.xlu0 %2638
  %2640 = vrot.lane.b32.xlu0 %v2428, 32
  %v2641 = vpop.permute.xlu0 %2640
  %2642 = vrot.lane.b32.xlu0 %v2431, 32
  %v2643 = vpop.permute.xlu0 %2642
  %2644 = vrot.lane.b32.xlu0 %v2434, 32
  %v2645 = vpop.permute.xlu0 %2644
  %2646 = vrot.lane.b32.xlu0 %v2437, 32
  %v2647 = vpop.permute.xlu0 %2646
  %2648 = vrot.lane.b32.xlu0 %v2440, 32
  %v2649 = vpop.permute.xlu0 %2648
  %2650 = vrot.lane.b32.xlu0 %v2443, 32
  %v2651 = vpop.permute.xlu0 %2650
  %2652 = vrot.lane.b32.xlu0 %v2621, 32
  %v2653 = vpop.permute.xlu0 %2652
  %2670 = vst.msk [vmem:[#allocation5 + $0x8] sm:$0xff] %vm2379, %v2623
  %2671 = vst.msk [vmem:[#allocation5 + $0x20] sm:$0xff] %vm2379, %v2625
  %2672 = vst.msk [vmem:[#allocation5 + $0x38] sm:$0xff] %vm2379, %v2627
  %2673 = vst.msk [vmem:[#allocation5 + $0x50] sm:$0xff] %vm2379, %v2629
  %2674 = vst.msk [vmem:[#allocation5 + $0x68] sm:$0xff] %vm2379, %v2631
  %2675 = vst.msk [vmem:[#allocation5 + $0x80] sm:$0xff] %vm2379, %v2633
  %2676 = vst.msk [vmem:[#allocation5 + $0x98] sm:$0xff] %vm2379, %v2635
  %2677 = vst.msk [vmem:[#allocation5 + $0xb0] sm:$0xff] %vm2379, %v2637
  %2678 = vst.msk [vmem:[#allocation5 + $0xc8] sm:$0xff] %vm2379, %v2639
  %2679 = vst.msk [vmem:[#allocation5 + $0xe0] sm:$0xff] %vm2379, %v2641
  %2680 = vst.msk [vmem:[#allocation5 + $0xf8] sm:$0xff] %vm2379, %v2643
  %2681 = vst.msk [vmem:[#allocation5 + $0x110] sm:$0xff] %vm2379, %v2645
  %2682 = vst.msk [vmem:[#allocation5 + $0x128] sm:$0xff] %vm2379, %v2647
  %2683 = vst.msk [vmem:[#allocation5 + $0x140] sm:$0xff] %vm2379, %v2649
  %2684 = vst.msk [vmem:[#allocation5 + $0x158] sm:$0xff] %vm2379, %v2651
  %2685 = vst.msk [vmem:[#allocation5 + $0x170] sm:$0xff] %vm2379, %v2653
  %2688 = vrot.lane.b32.xlu0 %v2199, 64
  %v2689 = vpop.permute.xlu0 %2688
  %2690 = vrot.lane.b32.xlu0 %v2201, 64
  %v2691 = vpop.permute.xlu0 %2690
  %2692 = vrot.lane.b32.xlu0 %v2203, 64
  %v2693 = vpop.permute.xlu0 %2692
  %2694 = vrot.lane.b32.xlu0 %v2205, 64
  %v2695 = vpop.permute.xlu0 %2694
  %2696 = vrot.lane.b32.xlu0 %v2207, 64
  %v2697 = vpop.permute.xlu0 %2696
  %2698 = vrot.lane.b32.xlu0 %v2209, 64
  %v2699 = vpop.permute.xlu0 %2698
  %2700 = vrot.lane.b32.xlu0 %v2211, 64
  %v2701 = vpop.permute.xlu0 %2700
  %2702 = vrot.lane.b32.xlu0 %v2213, 64
  %v2703 = vpop.permute.xlu0 %2702
  %2704 = vrot.lane.b32.xlu0 %v2219, 64
  %v2705 = vpop.permute.xlu0 %2704
  %2706 = vrot.lane.b32.xlu0 %v2221, 64
  %v2707 = vpop.permute.xlu0 %2706
  %2708 = vrot.lane.b32.xlu0 %v2223, 64
  %v2709 = vpop.permute.xlu0 %2708
  %2710 = vrot.lane.b32.xlu0 %v2225, 64
  %v2711 = vpop.permute.xlu0 %2710
  %2712 = vrot.lane.b32.xlu0 %v2227, 64
  %v2713 = vpop.permute.xlu0 %2712
  %2714 = vrot.lane.b32.xlu0 %v2229, 64
  %v2715 = vpop.permute.xlu0 %2714
  %2716 = vrot.lane.b32.xlu0 %v2231, 64
  %v2717 = vpop.permute.xlu0 %2716
  %2718 = vrot.lane.b32.xlu0 %v2233, 64
  %v2719 = vpop.permute.xlu0 %2718
  %2736 = vst.msk [vmem:[#allocation5 + $0x8] sm:$0xff] %vm2492, %v2689
  %2737 = vst.msk [vmem:[#allocation5 + $0x20] sm:$0xff] %vm2492, %v2691
  %2738 = vst.msk [vmem:[#allocation5 + $0x38] sm:$0xff] %vm2492, %v2693
  %2739 = vst.msk [vmem:[#allocation5 + $0x50] sm:$0xff] %vm2492, %v2695
  %2740 = vst.msk [vmem:[#allocation5 + $0x68] sm:$0xff] %vm2492, %v2697
  %2741 = vst.msk [vmem:[#allocation5 + $0x80] sm:$0xff] %vm2492, %v2699
  %2742 = vst.msk [vmem:[#allocation5 + $0x98] sm:$0xff] %vm2492, %v2701
  %2743 = vst.msk [vmem:[#allocation5 + $0xb0] sm:$0xff] %vm2492, %v2703
  %2744 = vst.msk [vmem:[#allocation5 + $0xc8] sm:$0xff] %vm2492, %v2705
  %2745 = vst.msk [vmem:[#allocation5 + $0xe0] sm:$0xff] %vm2492, %v2707
  %2746 = vst.msk [vmem:[#allocation5 + $0xf8] sm:$0xff] %vm2492, %v2709
  %2747 = vst.msk [vmem:[#allocation5 + $0x110] sm:$0xff] %vm2492, %v2711
  %2748 = vst.msk [vmem:[#allocation5 + $0x128] sm:$0xff] %vm2492, %v2713
  %2749 = vst.msk [vmem:[#allocation5 + $0x140] sm:$0xff] %vm2492, %v2715
  %2750 = vst.msk [vmem:[#allocation5 + $0x158] sm:$0xff] %vm2492, %v2717
  %2751 = vst.msk [vmem:[#allocation5 + $0x170] sm:$0xff] %vm2492, %v2719
  %v2754 = vrot.slane %v2213, 1
  %v2755 = vrot.slane %v2214, 1
  %v2756 = vsel %vm300, %v2754, %v2755
  %v2757 = vrot.slane %v2233, 1
  %v2758 = vrot.slane %v2234, 1
  %v2759 = vsel %vm300, %v2757, %v2758
  %2760 = vrot.lane.b32.xlu0 %v2291, 96
  %v2761 = vpop.permute.xlu0 %2760
  %2762 = vrot.lane.b32.xlu0 %v2294, 96
  %v2763 = vpop.permute.xlu0 %2762
  %2764 = vrot.lane.b32.xlu0 %v2297, 96
  %v2765 = vpop.permute.xlu0 %2764
  %2766 = vrot.lane.b32.xlu0 %v2300, 96
  %v2767 = vpop.permute.xlu0 %2766
  %2768 = vrot.lane.b32.xlu0 %v2303, 96
  %v2769 = vpop.permute.xlu0 %2768
  %2770 = vrot.lane.b32.xlu0 %v2306, 96
  %v2771 = vpop.permute.xlu0 %2770
  %2772 = vrot.lane.b32.xlu0 %v2580, 96
  %v2773 = vpop.permute.xlu0 %2772
  %2774 = vrot.lane.b32.xlu0 %v2756, 96
  %v2775 = vpop.permute.xlu0 %2774
  %2776 = vrot.lane.b32.xlu0 %v2315, 96
  %v2777 = vpop.permute.xlu0 %2776
  %2778 = vrot.lane.b32.xlu0 %v2318, 96
  %v2779 = vpop.permute.xlu0 %2778
  %2780 = vrot.lane.b32.xlu0 %v2321, 96
  %v2781 = vpop.permute.xlu0 %2780
  %2782 = vrot.lane.b32.xlu0 %v2324, 96
  %v2783 = vpop.permute.xlu0 %2782
  %2784 = vrot.lane.b32.xlu0 %v2327, 96
  %v2785 = vpop.permute.xlu0 %2784
  %2786 = vrot.lane.b32.xlu0 %v2330, 96
  %v2787 = vpop.permute.xlu0 %2786
  %2788 = vrot.lane.b32.xlu0 %v2583, 96
  %v2789 = vpop.permute.xlu0 %2788
  %2790 = vrot.lane.b32.xlu0 %v2759, 96
  %v2791 = vpop.permute.xlu0 %2790
  %2808 = vst.msk [vmem:[#allocation5 + $0x8] sm:$0xff] %vm2559, %v2761
  %2809 = vst.msk [vmem:[#allocation5 + $0x20] sm:$0xff] %vm2559, %v2763
  %2810 = vst.msk [vmem:[#allocation5 + $0x38] sm:$0xff] %vm2559, %v2765
  %2811 = vst.msk [vmem:[#allocation5 + $0x50] sm:$0xff] %vm2559, %v2767
  %2812 = vst.msk [vmem:[#allocation5 + $0x68] sm:$0xff] %vm2559, %v2769
  %2813 = vst.msk [vmem:[#allocation5 + $0x80] sm:$0xff] %vm2559, %v2771
  %2814 = vst.msk [vmem:[#allocation5 + $0x98] sm:$0xff] %vm2559, %v2773
  %2815 = vst.msk [vmem:[#allocation5 + $0xb0] sm:$0xff] %vm2559, %v2775
  %2816 = vst.msk [vmem:[#allocation5 + $0xc8] sm:$0xff] %vm2559, %v2777
  %2817 = vst.msk [vmem:[#allocation5 + $0xe0] sm:$0xff] %vm2559, %v2779
  %2818 = vst.msk [vmem:[#allocation5 + $0xf8] sm:$0xff] %vm2559, %v2781
  %2819 = vst.msk [vmem:[#allocation5 + $0x110] sm:$0xff] %vm2559, %v2783
  %2820 = vst.msk [vmem:[#allocation5 + $0x128] sm:$0xff] %vm2559, %v2785
  %2821 = vst.msk [vmem:[#allocation5 + $0x140] sm:$0xff] %vm2559, %v2787
  %2822 = vst.msk [vmem:[#allocation5 + $0x158] sm:$0xff] %vm2559, %v2789
  %2823 = vst.msk [vmem:[#allocation5 + $0x170] sm:$0xff] %vm2559, %v2791
  %v2824 = vrot.slane %v2213, 2
  %v2825 = vrot.slane %v2214, 2
  %v2826 = vsel %vm414, %v2824, %v2825
  %v2827 = vrot.slane %v2233, 2
  %v2828 = vrot.slane %v2234, 2
  %v2829 = vsel %vm414, %v2827, %v2828
  %2846 = vst.msk [vmem:[#allocation5 + $0x10] sm:$0xff] %vm137, %v2404
  %2847 = vst.msk [vmem:[#allocation5 + $0x28] sm:$0xff] %vm137, %v2407
  %2848 = vst.msk [vmem:[#allocation5 + $0x40] sm:$0xff] %vm137, %v2410
  %2849 = vst.msk [vmem:[#allocation5 + $0x58] sm:$0xff] %vm137, %v2413
  %2850 = vst.msk [vmem:[#allocation5 + $0x70] sm:$0xff] %vm137, %v2416
  %2851 = vst.msk [vmem:[#allocation5 + $0x88] sm:$0xff] %vm137, %v2419
  %2852 = vst.msk [vmem:[#allocation5 + $0xa0] sm:$0xff] %vm137, %v2618
  %2853 = vst.msk [vmem:[#allocation5 + $0xb8] sm:$0xff] %vm137, %v2826
  %2854 = vst.msk [vmem:[#allocation5 + $0xd0] sm:$0xff] %vm137, %v2428
  %2855 = vst.msk [vmem:[#allocation5 + $0xe8] sm:$0xff] %vm137, %v2431
  %2856 = vst.msk [vmem:[#allocation5 + $0x100] sm:$0xff] %vm137, %v2434
  %2857 = vst.msk [vmem:[#allocation5 + $0x118] sm:$0xff] %vm137, %v2437
  %2858 = vst.msk [vmem:[#allocation5 + $0x130] sm:$0xff] %vm137, %v2440
  %2859 = vst.msk [vmem:[#allocation5 + $0x148] sm:$0xff] %vm137, %v2443
  %2860 = vst.msk [vmem:[#allocation5 + $0x160] sm:$0xff] %vm137, %v2621
  %2861 = vst.msk [vmem:[#allocation5 + $0x178] sm:$0xff] %vm137, %v2829
  %v2862 = vld [vmem:[#allocation5] sm:$0xff]
  %v2863 = vld [vmem:[#allocation5 + $0x8] sm:$0xff]
  %v2864 = vld [vmem:[#allocation5 + $0x10] sm:$0xff]
  %v2865 = vld [vmem:[#allocation5 + $0x18] sm:$0xff]
  %v2866 = vld [vmem:[#allocation5 + $0x20] sm:$0xff]
  %v2867 = vld [vmem:[#allocation5 + $0x28] sm:$0xff]
  %v2868 = vld [vmem:[#allocation5 + $0x30] sm:$0xff]
  %v2869 = vld [vmem:[#allocation5 + $0x38] sm:$0xff]
  %v2870 = vld [vmem:[#allocation5 + $0x40] sm:$0xff]
  %v2871 = vld [vmem:[#allocation5 + $0x48] sm:$0xff]
  %v2872 = vld [vmem:[#allocation5 + $0x50] sm:$0xff]
  %v2873 = vld [vmem:[#allocation5 + $0x58] sm:$0xff]
  %v2874 = vld [vmem:[#allocation5 + $0x60] sm:$0xff]
  %v2875 = vld [vmem:[#allocation5 + $0x68] sm:$0xff]
  %v2876 = vld [vmem:[#allocation5 + $0x70] sm:$0xff]
  %v2877 = vld [vmem:[#allocation5 + $0x78] sm:$0xff]
  %v2878 = vld [vmem:[#allocation5 + $0x80] sm:$0xff]
  %v2879 = vld [vmem:[#allocation5 + $0x88] sm:$0xff]
  %v2880 = vld [vmem:[#allocation5 + $0x90] sm:$0xff]
  %v2881 = vld [vmem:[#allocation5 + $0x98] sm:$0xff]
  %v2882 = vld [vmem:[#allocation5 + $0xa0] sm:$0xff]
  %v2883 = vld [vmem:[#allocation5 + $0xa8] sm:$0xff]
  %v2884 = vld [vmem:[#allocation5 + $0xb0] sm:$0xff]
  %v2885 = vld [vmem:[#allocation5 + $0xb8] sm:$0xff]
  %v2886 = vld [vmem:[#allocation5 + $0xc0] sm:$0xff]
  %v2887 = vld [vmem:[#allocation5 + $0xc8] sm:$0xff]
  %v2888 = vld [vmem:[#allocation5 + $0xd0] sm:$0xff]
  %v2889 = vld [vmem:[#allocation5 + $0xd8] sm:$0xff]
  %v2890 = vld [vmem:[#allocation5 + $0xe0] sm:$0xff]
  %v2891 = vld [vmem:[#allocation5 + $0xe8] sm:$0xff]
  %v2892 = vld [vmem:[#allocation5 + $0xf0] sm:$0xff]
  %v2893 = vld [vmem:[#allocation5 + $0xf8] sm:$0xff]
  %v2894 = vld [vmem:[#allocation5 + $0x100] sm:$0xff]
  %v2895 = vld [vmem:[#allocation5 + $0x108] sm:$0xff]
  %v2896 = vld [vmem:[#allocation5 + $0x110] sm:$0xff]
  %v2897 = vld [vmem:[#allocation5 + $0x118] sm:$0xff]
  %v2898 = vld [vmem:[#allocation5 + $0x120] sm:$0xff]
  %v2899 = vld [vmem:[#allocation5 + $0x128] sm:$0xff]
  %v2900 = vld [vmem:[#allocation5 + $0x130] sm:$0xff]
  %v2901 = vld [vmem:[#allocation5 + $0x138] sm:$0xff]
  %v2902 = vld [vmem:[#allocation5 + $0x140] sm:$0xff]
  %v2903 = vld [vmem:[#allocation5 + $0x148] sm:$0xff]
  %v2904 = vld [vmem:[#allocation5 + $0x150] sm:$0xff]
  %v2905 = vld [vmem:[#allocation5 + $0x158] sm:$0xff]
  %v2906 = vld [vmem:[#allocation5 + $0x160] sm:$0xff]
  %v2907 = vld [vmem:[#allocation5 + $0x168] sm:$0xff]
  %v2908 = vld [vmem:[#allocation5 + $0x170] sm:$0xff]
  %v2909 = vld [vmem:[#allocation5 + $0x178] sm:$0xff]
  %v2910 = vld [vmem:[%s6] sm:$0xff]
  %v2911 = vld [vmem:[%s6 + $0x8] sm:$0xff]
  %v2912 = vld [vmem:[%s6 + $0x10] sm:$0xff]
  %v2913 = vld [vmem:[%s6 + $0x18] sm:$0xff]
  %v2914 = vld [vmem:[%s6 + $0x20] sm:$0xff]
  %v2915 = vld [vmem:[%s6 + $0x28] sm:$0xff]
  %v2916 = vld [vmem:[%s6 + $0x30] sm:$0xff]
  %v2917 = vld [vmem:[%s6 + $0x38] sm:$0xff]
  %v2918 = vld [vmem:[%s6 + $0x40] sm:$0xff]
  %v2919 = vld [vmem:[%s6 + $0x48] sm:$0xff]
  %v2920 = vld [vmem:[%s6 + $0x50] sm:$0xff]
  %v2921 = vld [vmem:[%s6 + $0x58] sm:$0xff]
  %v2922 = vld [vmem:[%s6 + $0x60] sm:$0xff]
  %v2923 = vld [vmem:[%s6 + $0x68] sm:$0xff]
  %v2924 = vld [vmem:[%s6 + $0x70] sm:$0xff]
  %v2925 = vld [vmem:[%s6 + $0x78] sm:$0xff]
  %v2926 = vld [vmem:[%s6 + $0x80] sm:$0xff]
  %v2927 = vld [vmem:[%s6 + $0x88] sm:$0xff]
  %v2928 = vld [vmem:[%s6 + $0x90] sm:$0xff]
  %v2929 = vld [vmem:[%s6 + $0x98] sm:$0xff]
  %v2930 = vld [vmem:[%s6 + $0xa0] sm:$0xff]
  %v2931 = vld [vmem:[%s6 + $0xa8] sm:$0xff]
  %v2932 = vld [vmem:[%s6 + $0xb0] sm:$0xff]
  %v2933 = vld [vmem:[%s6 + $0xb8] sm:$0xff]
  %v2934 = vld [vmem:[%s6 + $0xc0] sm:$0xff]
  %v2935 = vld [vmem:[%s6 + $0xc8] sm:$0xff]
  %v2936 = vld [vmem:[%s6 + $0xd0] sm:$0xff]
  %v2937 = vld [vmem:[%s6 + $0xd8] sm:$0xff]
  %v2938 = vld [vmem:[%s6 + $0xe0] sm:$0xff]
  %v2939 = vld [vmem:[%s6 + $0xe8] sm:$0xff]
  %v2940 = vld [vmem:[%s6 + $0xf0] sm:$0xff]
  %v2941 = vld [vmem:[%s6 + $0xf8] sm:$0xff]
  %v2942 = vld [vmem:[%s6 + $0x100] sm:$0xff]
  %v2943 = vld [vmem:[%s6 + $0x108] sm:$0xff]
  %v2944 = vld [vmem:[%s6 + $0x110] sm:$0xff]
  %v2945 = vld [vmem:[%s6 + $0x118] sm:$0xff]
  %v2946 = vld [vmem:[%s7] sm:$0x1]
  %v2948 = vlaneseq
  %v2949 = vshrl.u32 %v2948, 7
  %v2950 = vsub.s32 0, %v2949
  %v2951 = vrot.slane %v2946, %v2950
  %v2954 = vsel %vm137, %v2864, 0
  %v2957 = vsel %vm137, %v2867, 0
  %v2960 = vsel %vm137, %v2870, 0
  %v2963 = vsel %vm137, %v2873, 0
  %v2966 = vsel %vm137, %v2876, 0
  %v2969 = vsel %vm137, %v2879, 0
  %v2972 = vsel %vm137, %v2882, 0
  %v2975 = vsel %vm137, %v2885, 0
  %v2978 = vsel %vm137, %v2888, 0
  %v2981 = vsel %vm137, %v2891, 0
  %v2984 = vsel %vm137, %v2894, 0
  %v2987 = vsel %vm137, %v2897, 0
  %v2990 = vsel %vm137, %v2900, 0
  %v2993 = vsel %vm137, %v2903, 0
  %v2996 = vsel %vm137, %v2906, 0
  %v2999 = vsel %vm137, %v2909, 0
  %3001 = vmatprep.subr.mxu0 0.0
  %3002 = vmatpush1.msra.mxu0 %v2910
  %3003 = vmatprep.subr.mxu0 0.0
  %3004 = vmatpush1.msra.mxu0 %v2911
  %3005 = vmatprep.subr.mxu0 0.0
  %3006 = vmatpush1.msra.mxu0 %v2912
  %3007 = vmatprep.subr.mxu0 0.0
  %3008 = vmatpush1.msra.mxu0 %v2913
  %3009 = vmatprep.subr.mxu0 0.0
  %3010 = vmatpush1.msra.mxu0 %v2914
  %3011 = vmatprep.subr.mxu0 0.0
  %3012 = vmatpush1.msra.mxu0 %v2915
  %3013 = vmatprep.subr.mxu0 0.0
  %3014 = vmatpush1.msra.mxu0 %v2916
  %3015 = vmatprep.subr.mxu0 0.0
  %3016 = vmatpush1.msra.mxu0 %v2917
  %3017 = vmatprep.subr.mxu0 0.0
  %3018 = vmatpush1.msra.mxu0 %v2918
  %3019 = vmatprep.subr.mxu0 0.0
  %3020 = vmatpush1.msra.mxu0 %v2919
  %3021 = vmatprep.subr.mxu0 0.0
  %3022 = vmatpush1.msra.mxu0 %v2920
  %3023 = vmatprep.subr.mxu0 0.0
  %3024 = vmatpush1.msra.mxu0 %v2921
  %3025 = vmatprep.subr.mxu0 0.0
  %3026 = vmatpush1.msra.mxu0 %v2922
  %3027 = vmatprep.subr.mxu0 0.0
  %3028 = vmatpush1.msra.mxu0 %v2923
  %3029 = vmatprep.subr.mxu0 0.0
  %3030 = vmatpush1.msra.mxu0 %v2924
  %3031 = vmatprep.subr.mxu0 0.0
  %3032 = vmatpush1.msra.mxu0 %v2925
  %3033 = vmatprep.subr.mxu0 0.0
  %3034 = vmatpush1.msra.mxu0 %v2926
  %3035 = vmatprep.subr.mxu0 0.0
  %3036 = vmatpush1.msra.mxu0 %v2927
  %3037 = vmatprep.subr.mxu0 0.0
  %3038 = vmatpush1.msra.mxu0 %v2928
  %3039 = vmatprep.subr.mxu0 0.0
  %3040 = vmatpush1.msra.mxu0 %v2929
  %3041 = vmatprep.subr.mxu0 0.0
  %3042 = vmatpush1.msra.mxu0 %v2930
  %3043 = vmatprep.subr.mxu0 0.0
  %3044 = vmatpush1.msra.mxu0 %v2931
  %3045 = vmatprep.subr.mxu0 0.0
  %3046 = vmatpush1.msra.mxu0 %v2932
  %3047 = vmatprep.subr.mxu0 0.0
  %3048 = vmatpush1.msra.mxu0 %v2933
  %3049 = vmatprep.subr.mxu0 0.0
  %3050 = vmatpush1.msra.mxu0 %v2934
  %3051 = vmatprep.subr.mxu0 0.0
  %3052 = vmatpush1.msra.mxu0 %v2935
  %3053 = vmatprep.subr.mxu0 0.0
  %3054 = vmatpush1.msra.mxu0 %v2936
  %3055 = vmatprep.subr.mxu0 0.0
  %3056 = vmatpush1.msra.mxu0 %v2937
  %3057 = vmatprep.subr.mxu0 0.0
  %3058 = vmatpush1.msra.mxu0 %v2938
  %3059 = vmatprep.subr.mxu0 0.0
  %3060 = vmatpush1.msra.mxu0 %v2939
  %3061 = vmatprep.subr.mxu0 0.0
  %3062 = vmatpush1.msra.mxu0 %v2940
  %3063 = vmatprep.subr.mxu0 0.0
  %3064 = vmatpush1.msra.mxu0 %v2941
  %3065 = vmatprep.mubr.f32.mxu0 %v2863
  %3066 = vmatmul.mubr.f32.gmra.mrb[0].mxu0 %v2862
  %v3067 = vpop.f32.mrb[0].mxu0
  %v3068 = vadd.f32 %v2951, %v3067
  %v3069 = vpop.f32.mrb[0].mxu0
  %3070 = vmatprep.mubr.f32.mxu0 %v2866
  %3071 = vmatmul.mubr.f32.gmra.mrb[0].mxu0 %v2865
  %v3072 = vpop.f32.mrb[0].mxu0
  %v3073 = vadd.f32 %v2951, %v3072
  %v3074 = vpop.f32.mrb[0].mxu0
  %3075 = vmatprep.mubr.f32.mxu0 %v2869
  %3076 = vmatmul.mubr.f32.gmra.mrb[0].mxu0 %v2868
  %v3077 = vpop.f32.mrb[0].mxu0
  %v3078 = vadd.f32 %v2951, %v3077
  %v3079 = vpop.f32.mrb[0].mxu0
  %3080 = vmatprep.mubr.f32.mxu0 %v2872
  %3081 = vmatmul.mubr.f32.gmra.mrb[0].mxu0 %v2871
  %v3082 = vpop.f32.mrb[0].mxu0
  %v3083 = vadd.f32 %v2951, %v3082
  %v3084 = vpop.f32.mrb[0].mxu0
  %3085 = vmatprep.mubr.f32.mxu0 %v2875
  %3086 = vmatmul.mubr.f32.gmra.mrb[0].mxu0 %v2874
  %v3087 = vpop.f32.mrb[0].mxu0
  %v3088 = vadd.f32 %v2951, %v3087
  %v3089 = vpop.f32.mrb[0].mxu0
  %3090 = vmatprep.mubr.f32.mxu0 %v2878
  %3091 = vmatmul.mubr.f32.gmra.mrb[0].mxu0 %v2877
  %v3092 = vpop.f32.mrb[0].mxu0
  %v3093 = vadd.f32 %v2951, %v3092
  %v3094 = vpop.f32.mrb[0].mxu0
  %3095 = vmatprep.mubr.f32.mxu0 %v2881
  %3096 = vmatmul.mubr.f32.gmra.mrb[0].mxu0 %v2880
  %v3097 = vpop.f32.mrb[0].mxu0
  %v3098 = vadd.f32 %v2951, %v3097
  %v3099 = vpop.f32.mrb[0].mxu0
  %3100 = vmatprep.mubr.f32.mxu0 %v2884
  %3101 = vmatmul.mubr.f32.gmra.mrb[0].mxu0 %v2883
  %v3102 = vpop.f32.mrb[0].mxu0
  %v3103 = vadd.f32 %v2951, %v3102
  %v3104 = vpop.f32.mrb[0].mxu0
  %3105 = vmatprep.mubr.f32.mxu0 %v2887
  %3106 = vmatmul.mubr.f32.gmra.mrb[0].mxu0 %v2886
  %v3107 = vpop.f32.mrb[0].mxu0
  %v3108 = vadd.f32 %v2951, %v3107
  %v3109 = vpop.f32.mrb[0].mxu0
  %3110 = vmatprep.mubr.f32.mxu0 %v2890
  %3111 = vmatmul.mubr.f32.gmra.mrb[0].mxu0 %v2889
  %v3112 = vpop.f32.mrb[0].mxu0
  %v3113 = vadd.f32 %v2951, %v3112
  %v3114 = vpop.f32.mrb[0].mxu0
  %3115 = vmatprep.mubr.f32.mxu0 %v2893
  %3116 = vmatmul.mubr.f32.gmra.mrb[0].mxu0 %v2892
  %v3117 = vpop.f32.mrb[0].mxu0
  %v3118 = vadd.f32 %v2951, %v3117
  %v3119 = vpop.f32.mrb[0].mxu0
  %3120 = vmatprep.mubr.f32.mxu0 %v2896
  %3121 = vmatmul.mubr.f32.gmra.mrb[0].mxu0 %v2895
  %v3122 = vpop.f32.mrb[0].mxu0
  %v3123 = vadd.f32 %v2951, %v3122
  %v3124 = vpop.f32.mrb[0].mxu0
  %3125 = vmatprep.mubr.f32.mxu0 %v2899
  %3126 = vmatmul.mubr.f32.gmra.mrb[0].mxu0 %v2898
  %v3127 = vpop.f32.mrb[0].mxu0
  %v3128 = vadd.f32 %v2951, %v3127
  %v3129 = vpop.f32.mrb[0].mxu0
  %3130 = vmatprep.mubr.f32.mxu0 %v2902
  %3131 = vmatmul.mubr.f32.gmra.mrb[0].mxu0 %v2901
  %v3132 = vpop.f32.mrb[0].mxu0
  %v3133 = vadd.f32 %v2951, %v3132
  %v3134 = vpop.f32.mrb[0].mxu0
  %3135 = vmatprep.mubr.f32.mxu0 %v2905
  %3136 = vmatmul.mubr.f32.gmra.mrb[0].mxu0 %v2904
  %v3137 = vpop.f32.mrb[0].mxu0
  %v3138 = vadd.f32 %v2951, %v3137
  %v3139 = vpop.f32.mrb[0].mxu0
  %3140 = vmatprep.mubr.f32.mxu0 %v2908
  %3141 = vmatmul.mubr.f32.gmra.mrb[0].mxu0 %v2907
  %v3142 = vpop.f32.mrb[0].mxu0
  %v3143 = vadd.f32 %v2951, %v3142
  %v3144 = vpop.f32.mrb[0].mxu0
  %3145 = vdwg.mxu0
  %3146 = vmatprep.subr.mxu0 0.0
  %3147 = vmatpush1.msra.mxu0 %v2942
  %3148 = vmatprep.subr.mxu0 0.0
  %3149 = vmatpush1.msra.mxu0 %v2943
  %3150 = vmatprep.subr.mxu0 0.0
  %3151 = vmatpush1.msra.mxu0 %v2944
  %3152 = vmatprep.subr.mxu0 0.0
  %3153 = vmatpush1.msra.mxu0 %v2945
  %3154 = vmatprep.subr.mxu0 0.0
  %3155 = vmatpush1.msra.mxu0 0.0
  %3156 = vmatprep.subr.mxu0 0.0
  %3157 = vmatpush1.msra.mxu0 0.0
  %3158 = vmatprep.subr.mxu0 0.0
  %3159 = vmatpush1.msra.mxu0 0.0
  %3160 = vmatprep.subr.mxu0 0.0
  %3161 = vmatpush1.msra.mxu0 0.0
  %3162 = vmatprep.subr.mxu0 0.0
  %3163 = vmatpush1.msra.mxu0 0.0
  %3164 = vmatprep.subr.mxu0 0.0
  %3165 = vmatpush1.msra.mxu0 0.0
  %3166 = vmatprep.subr.mxu0 0.0
  %3167 = vmatpush1.msra.mxu0 0.0
  %3168 = vmatprep.subr.mxu0 0.0
  %3169 = vmatpush1.msra.mxu0 0.0
  %3170 = vmatprep.subr.mxu0 0.0
  %3171 = vmatpush1.msra.mxu0 0.0
  %3172 = vmatprep.subr.mxu0 0.0
  %3173 = vmatpush1.msra.mxu0 0.0
  %3174 = vmatprep.subr.mxu0 0.0
  %3175 = vmatpush1.msra.mxu0 0.0
  %3176 = vmatprep.subr.mxu0 0.0
  %3177 = vmatpush1.msra.mxu0 0.0
  %3178 = vmatprep.subr.mxu0 0.0
  %3179 = vmatpush1.msra.mxu0 0.0
  %3180 = vmatprep.subr.mxu0 0.0
  %3181 = vmatpush1.msra.mxu0 0.0
  %3182 = vmatprep.subr.mxu0 0.0
  %3183 = vmatpush1.msra.mxu0 0.0
  %3184 = vmatprep.subr.mxu0 0.0
  %3185 = vmatpush1.msra.mxu0 0.0
  %3186 = vmatprep.subr.mxu0 0.0
  %3187 = vmatpush1.msra.mxu0 0.0
  %3188 = vmatprep.subr.mxu0 0.0
  %3189 = vmatpush1.msra.mxu0 0.0
  %3190 = vmatprep.subr.mxu0 0.0
  %3191 = vmatpush1.msra.mxu0 0.0
  %3192 = vmatprep.subr.mxu0 0.0
  %3193 = vmatpush1.msra.mxu0 0.0
  %3194 = vmatprep.subr.mxu0 0.0
  %3195 = vmatpush1.msra.mxu0 0.0
  %3196 = vmatprep.subr.mxu0 0.0
  %3197 = vmatpush1.msra.mxu0 0.0
  %3198 = vmatprep.subr.mxu0 0.0
  %3199 = vmatpush1.msra.mxu0 0.0
  %3200 = vmatprep.subr.mxu0 0.0
  %3201 = vmatpush1.msra.mxu0 0.0
  %3202 = vmatprep.subr.mxu0 0.0
  %3203 = vmatpush1.msra.mxu0 0.0
  %3204 = vmatprep.subr.mxu0 0.0
  %3205 = vmatpush1.msra.mxu0 0.0
  %3206 = vmatprep.subr.mxu0 0.0
  %3207 = vmatpush1.msra.mxu0 0.0
  %3208 = vmatprep.subr.mxu0 0.0
  %3209 = vmatpush1.msra.mxu0 0.0
  %3210 = vmatprep.mubr.f32.mxu0 0.0
  %3211 = vmatmul.mubr.f32.gmra.mrb[0].mxu0 %v2954
  %v3212 = vpop.f32.mrb[0].mxu0
  %v3213 = vadd.f32 %v3068, %v3212
  %v3214 = vpop.f32.mrb[0].mxu0
  %3215 = vmatprep.mubr.f32.mxu0 0.0
  %3216 = vmatmul.mubr.f32.gmra.mrb[0].mxu0 %v2957
  %v3217 = vpop.f32.mrb[0].mxu0
  %v3218 = vadd.f32 %v3073, %v3217
  %v3219 = vpop.f32.mrb[0].mxu0
  %3220 = vmatprep.mubr.f32.mxu0 0.0
  %3221 = vmatmul.mubr.f32.gmra.mrb[0].mxu0 %v2960
  %v3222 = vpop.f32.mrb[0].mxu0
  %v3223 = vadd.f32 %v3078, %v3222
  %v3224 = vpop.f32.mrb[0].mxu0
  %3225 = vmatprep.mubr.f32.mxu0 0.0
  %3226 = vmatmul.mubr.f32.gmra.mrb[0].mxu0 %v2963
  %v3227 = vpop.f32.mrb[0].mxu0
  %v3228 = vadd.f32 %v3083, %v3227
  %v3229 = vpop.f32.mrb[0].mxu0
  %3230 = vmatprep.mubr.f32.mxu0 0.0
  %3231 = vmatmul.mubr.f32.gmra.mrb[0].mxu0 %v2966
  %v3232 = vpop.f32.mrb[0].mxu0
  %v3233 = vadd.f32 %v3088, %v3232
  %v3234 = vpop.f32.mrb[0].mxu0
  %3235 = vmatprep.mubr.f32.mxu0 0.0
  %3236 = vmatmul.mubr.f32.gmra.mrb[0].mxu0 %v2969
  %v3237 = vpop.f32.mrb[0].mxu0
  %v3238 = vadd.f32 %v3093, %v3237
  %v3239 = vpop.f32.mrb[0].mxu0
  %3240 = vmatprep.mubr.f32.mxu0 0.0
  %3241 = vmatmul.mubr.f32.gmra.mrb[0].mxu0 %v2972
  %v3242 = vpop.f32.mrb[0].mxu0
  %v3243 = vadd.f32 %v3098, %v3242
  %v3244 = vpop.f32.mrb[0].mxu0
  %3245 = vmatprep.mubr.f32.mxu0 0.0
  %3246 = vmatmul.mubr.f32.gmra.mrb[0].mxu0 %v2975
  %v3247 = vpop.f32.mrb[0].mxu0
  %v3248 = vadd.f32 %v3103, %v3247
  %v3249 = vpop.f32.mrb[0].mxu0
  %3250 = vmatprep.mubr.f32.mxu0 0.0
  %3251 = vmatmul.mubr.f32.gmra.mrb[0].mxu0 %v2978
  %v3252 = vpop.f32.mrb[0].mxu0
  %v3253 = vadd.f32 %v3108, %v3252
  %v3254 = vpop.f32.mrb[0].mxu0
  %3255 = vmatprep.mubr.f32.mxu0 0.0
  %3256 = vmatmul.mubr.f32.gmra.mrb[0].mxu0 %v2981
  %v3257 = vpop.f32.mrb[0].mxu0
  %v3258 = vadd.f32 %v3113, %v3257
  %v3259 = vpop.f32.mrb[0].mxu0
  %3260 = vmatprep.mubr.f32.mxu0 0.0
  %3261 = vmatmul.mubr.f32.gmra.mrb[0].mxu0 %v2984
  %v3262 = vpop.f32.mrb[0].mxu0
  %v3263 = vadd.f32 %v3118, %v3262
  %v3264 = vpop.f32.mrb[0].mxu0
  %3265 = vmatprep.mubr.f32.mxu0 0.0
  %3266 = vmatmul.mubr.f32.gmra.mrb[0].mxu0 %v2987
  %v3267 = vpop.f32.mrb[0].mxu0
  %v3268 = vadd.f32 %v3123, %v3267
  %v3269 = vpop.f32.mrb[0].mxu0
  %3270 = vmatprep.mubr.f32.mxu0 0.0
  %3271 = vmatmul.mubr.f32.gmra.mrb[0].mxu0 %v2990
  %v3272 = vpop.f32.mrb[0].mxu0
  %v3273 = vadd.f32 %v3128, %v3272
  %v3274 = vpop.f32.mrb[0].mxu0
  %3275 = vmatprep.mubr.f32.mxu0 0.0
  %3276 = vmatmul.mubr.f32.gmra.mrb[0].mxu0 %v2993
  %v3277 = vpop.f32.mrb[0].mxu0
  %v3278 = vadd.f32 %v3133, %v3277
  %v3279 = vpop.f32.mrb[0].mxu0
  %3280 = vmatprep.mubr.f32.mxu0 0.0
  %3281 = vmatmul.mubr.f32.gmra.mrb[0].mxu0 %v2996
  %v3282 = vpop.f32.mrb[0].mxu0
  %v3283 = vadd.f32 %v3138, %v3282
  %v3284 = vpop.f32.mrb[0].mxu0
  %3285 = vmatprep.mubr.f32.mxu0 0.0
  %3286 = vmatmul.mubr.f32.gmra.mrb[0].mxu0 %v2999
  %v3287 = vpop.f32.mrb[0].mxu0
  %v3288 = vadd.f32 %v3143, %v3287
  %v3289 = vpop.f32.mrb[0].mxu0
  %3290 = vdwg.mxu0
  %v3291 = vmax.f32 %v3213, 0.0
  %v3292 = vmax.f32 %v3218, 0.0
  %v3293 = vmax.f32 %v3223, 0.0
  %v3294 = vmax.f32 %v3228, 0.0
  %v3295 = vmax.f32 %v3233, 0.0
  %v3296 = vmax.f32 %v3238, 0.0
  %v3297 = vmax.f32 %v3243, 0.0
  %v3298 = vmax.f32 %v3248, 0.0
  %v3299 = vmax.f32 %v3253, 0.0
  %v3300 = vmax.f32 %v3258, 0.0
  %v3301 = vmax.f32 %v3263, 0.0
  %v3302 = vmax.f32 %v3268, 0.0
  %v3303 = vmax.f32 %v3273, 0.0
  %v3304 = vmax.f32 %v3278, 0.0
  %v3305 = vmax.f32 %v3283, 0.0
  %v3306 = vmax.f32 %v3288, 0.0
  %3307 = vst.msk [vmem:[%s2178 + $0x1] sm:$0xff] %vm137, %v3291
  %3308 = vst.msk [vmem:[%s2178 + $0x11] sm:$0xff] %vm137, %v3292
  %3309 = vst.msk [vmem:[%s2178 + $0x21] sm:$0xff] %vm137, %v3293
  %3310 = vst.msk [vmem:[%s2178 + $0x31] sm:$0xff] %vm137, %v3294
  %3311 = vst.msk [vmem:[%s2178 + $0x41] sm:$0xff] %vm137, %v3295
  %3312 = vst.msk [vmem:[%s2178 + $0x51] sm:$0xff] %vm137, %v3296
  %3313 = vst.msk [vmem:[%s2178 + $0x61] sm:$0xff] %vm137, %v3297
  %3314 = vst.msk [vmem:[%s2178 + $0x71] sm:$0xff] %vm137, %v3298
  %3315 = vst.msk [vmem:[%s2178 + $0xa1] sm:$0xff] %vm137, %v3299
  %3316 = vst.msk [vmem:[%s2178 + $0xb1] sm:$0xff] %vm137, %v3300
  %3317 = vst.msk [vmem:[%s2178 + $0xc1] sm:$0xff] %vm137, %v3301
  %3318 = vst.msk [vmem:[%s2178 + $0xd1] sm:$0xff] %vm137, %v3302
  %3319 = vst.msk [vmem:[%s2178 + $0xe1] sm:$0xff] %vm137, %v3303
  %3320 = vst.msk [vmem:[%s2178 + $0xf1] sm:$0xff] %vm137, %v3304
  %3321 = vst.msk [vmem:[%s2178 + $0x101] sm:$0xff] %vm137, %v3305
  %3322 = vst.msk [vmem:[%s2178 + $0x111] sm:$0xff] %vm137, %v3306
  %v3323 = vld [vmem:[#allocation4] sm:$0xff]
  %v3324 = vld [vmem:[#allocation4 + $0x8] sm:$0x3]
  %v3325 = vld [vmem:[#allocation4 + $0x10] sm:$0xff]
  %v3326 = vld [vmem:[#allocation4 + $0x18] sm:$0x3]
  %v3327 = vld [vmem:[#allocation4 + $0x20] sm:$0xff]
  %v3328 = vld [vmem:[#allocation4 + $0x28] sm:$0x3]
  %v3329 = vld [vmem:[#allocation4 + $0x30] sm:$0xff]
  %v3330 = vld [vmem:[#allocation4 + $0x38] sm:$0x3]
  %v3331 = vld [vmem:[#allocation4 + $0x40] sm:$0xff]
  %v3332 = vld [vmem:[#allocation4 + $0x48] sm:$0x3]
  %v3333 = vld [vmem:[#allocation4 + $0x50] sm:$0xff]
  %v3334 = vld [vmem:[#allocation4 + $0x58] sm:$0x3]
  %v3335 = vld [vmem:[#allocation4 + $0x60] sm:$0xff]
  %v3336 = vld [vmem:[#allocation4 + $0x68] sm:$0x3]
  %v3337 = vld [vmem:[#allocation4 + $0x70] sm:$0xff]
  %v3338 = vld [vmem:[#allocation4 + $0x78] sm:$0x3]
  %v3339 = vld [vmem:[#allocation4 + $0x80] sm:$0xff]
  %v3340 = vld [vmem:[#allocation4 + $0x88] sm:$0x3]
  %v3341 = vld [vmem:[#allocation4 + $0x90] sm:$0xff]
  %v3342 = vld [vmem:[#allocation4 + $0x98] sm:$0x3]
  %v3343 = vld [vmem:[#allocation4 + $0xa0] sm:$0xff]
  %v3344 = vld [vmem:[#allocation4 + $0xa8] sm:$0x3]
  %v3345 = vld [vmem:[#allocation4 + $0xb0] sm:$0xff]
  %v3346 = vld [vmem:[#allocation4 + $0xb8] sm:$0x3]
  %v3347 = vld [vmem:[#allocation4 + $0xc0] sm:$0xff]
  %v3348 = vld [vmem:[#allocation4 + $0xc8] sm:$0x3]
  %v3349 = vld [vmem:[#allocation4 + $0xd0] sm:$0xff]
  %v3350 = vld [vmem:[#allocation4 + $0xd8] sm:$0x3]
  %v3351 = vld [vmem:[#allocation4 + $0xe0] sm:$0xff]
  %v3352 = vld [vmem:[#allocation4 + $0xe8] sm:$0x3]
  %v3353 = vld [vmem:[#allocation4 + $0xf0] sm:$0xff]
  %v3354 = vld [vmem:[#allocation4 + $0xf8] sm:$0x3]
  %v3355 = vld [vmem:[#allocation4 + $0x100] sm:$0xff]
  %v3356 = vld [vmem:[#allocation4 + $0x108] sm:$0x3]
  %v3357 = vld [vmem:[#allocation4 + $0x110] sm:$0xff]
  %v3358 = vld [vmem:[#allocation4 + $0x118] sm:$0x3]
  %v3359 = vld [vmem:[#allocation4 + $0x120] sm:$0xff]
  %v3360 = vld [vmem:[#allocation4 + $0x128] sm:$0x3]
  %v3361 = vld [vmem:[#allocation4 + $0x130] sm:$0xff]
  %v3362 = vld [vmem:[#allocation4 + $0x138] sm:$0x3]
  %3363 = vst.msk [vmem:[#allocation5] sm:$0xff] %vm137, %v3323
  %3364 = vst.msk [vmem:[#allocation5 + $0x18] sm:$0xff] %vm137, %v3325
  %3365 = vst.msk [vmem:[#allocation5 + $0x30] sm:$0xff] %vm137, %v3327
  %3366 = vst.msk [vmem:[#allocation5 + $0x48] sm:$0xff] %vm137, %v3329
  %3367 = vst.msk [vmem:[#allocation5 + $0x60] sm:$0xff] %vm137, %v3331
  %3368 = vst.msk [vmem:[#allocation5 + $0x78] sm:$0xff] %vm137, %v3333
  %3369 = vst.msk [vmem:[#allocation5 + $0x90] sm:$0xff] %vm137, %v3335
  %3370 = vst.msk [vmem:[#allocation5 + $0xa8] sm:$0xff] %vm137, %v3337
  %3371 = vst.msk [vmem:[#allocation5 + $0xc0] sm:$0xff] %vm137, %v3343
  %3372 = vst.msk [vmem:[#allocation5 + $0xd8] sm:$0xff] %vm137, %v3345
  %3373 = vst.msk [vmem:[#allocation5 + $0xf0] sm:$0xff] %vm137, %v3347
  %3374 = vst.msk [vmem:[#allocation5 + $0x108] sm:$0xff] %vm137, %v3349
  %3375 = vst.msk [vmem:[#allocation5 + $0x120] sm:$0xff] %vm137, %v3351
  %3376 = vst.msk [vmem:[#allocation5 + $0x138] sm:$0xff] %vm137, %v3353
  %3377 = vst.msk [vmem:[#allocation5 + $0x150] sm:$0xff] %vm137, %v3355
  %3378 = vst.msk [vmem:[#allocation5 + $0x168] sm:$0xff] %vm137, %v3357
  %v3411 = vrot.slane %v3323, 1
  %v3412 = vrot.slane %v3324, 1
  %v3413 = vsel %vm300, %v3411, %v3412
  %v3414 = vrot.slane %v3325, 1
  %v3415 = vrot.slane %v3326, 1
  %v3416 = vsel %vm300, %v3414, %v3415
  %v3417 = vrot.slane %v3327, 1
  %v3418 = vrot.slane %v3328, 1
  %v3419 = vsel %vm300, %v3417, %v3418
  %v3420 = vrot.slane %v3329, 1
  %v3421 = vrot.slane %v3330, 1
  %v3422 = vsel %vm300, %v3420, %v3421
  %v3423 = vrot.slane %v3331, 1
  %v3424 = vrot.slane %v3332, 1
  %v3425 = vsel %vm300, %v3423, %v3424
  %v3426 = vrot.slane %v3333, 1
  %v3427 = vrot.slane %v3334, 1
  %v3428 = vsel %vm300, %v3426, %v3427
  %v3429 = vrot.slane %v3335, 1
  %v3430 = vrot.slane %v3336, 1
  %v3431 = vsel %vm300, %v3429, %v3430
  %v3432 = vrot.slane %v3337, 1
  %v3433 = vrot.slane %v3338, 1
  %v3434 = vsel %vm300, %v3432, %v3433
  %v3435 = vrot.slane %v3343, 1
  %v3436 = vrot.slane %v3344, 1
  %v3437 = vsel %vm300, %v3435, %v3436
  %v3438 = vrot.slane %v3345, 1
  %v3439 = vrot.slane %v3346, 1
  %v3440 = vsel %vm300, %v3438, %v3439
  %v3441 = vrot.slane %v3347, 1
  %v3442 = vrot.slane %v3348, 1
  %v3443 = vsel %vm300, %v3441, %v3442
  %v3444 = vrot.slane %v3349, 1
  %v3445 = vrot.slane %v3350, 1
  %v3446 = vsel %vm300, %v3444, %v3445
  %v3447 = vrot.slane %v3351, 1
  %v3448 = vrot.slane %v3352, 1
  %v3449 = vsel %vm300, %v3447, %v3448
  %v3450 = vrot.slane %v3353, 1
  %v3451 = vrot.slane %v3354, 1
  %v3452 = vsel %vm300, %v3450, %v3451
  %v3453 = vrot.slane %v3355, 1
  %v3454 = vrot.slane %v3356, 1
  %v3455 = vsel %vm300, %v3453, %v3454
  %v3456 = vrot.slane %v3357, 1
  %v3457 = vrot.slane %v3358, 1
  %v3458 = vsel %vm300, %v3456, %v3457
  %3459 = vrot.lane.b32.xlu0 %v3413, 32
  %v3460 = vpop.permute.xlu0 %3459
  %3461 = vrot.lane.b32.xlu0 %v3416, 32
  %v3462 = vpop.permute.xlu0 %3461
  %3463 = vrot.lane.b32.xlu0 %v3419, 32
  %v3464 = vpop.permute.xlu0 %3463
  %3465 = vrot.lane.b32.xlu0 %v3422, 32
  %v3466 = vpop.permute.xlu0 %3465
  %3467 = vrot.lane.b32.xlu0 %v3425, 32
  %v3468 = vpop.permute.xlu0 %3467
  %3469 = vrot.lane.b32.xlu0 %v3428, 32
  %v3470 = vpop.permute.xlu0 %3469
  %3471 = vrot.lane.b32.xlu0 %v3431, 32
  %v3472 = vpop.permute.xlu0 %3471
  %3473 = vrot.lane.b32.xlu0 %v3434, 32
  %v3474 = vpop.permute.xlu0 %3473
  %3475 = vrot.lane.b32.xlu0 %v3437, 32
  %v3476 = vpop.permute.xlu0 %3475
  %3477 = vrot.lane.b32.xlu0 %v3440, 32
  %v3478 = vpop.permute.xlu0 %3477
  %3479 = vrot.lane.b32.xlu0 %v3443, 32
  %v3480 = vpop.permute.xlu0 %3479
  %3481 = vrot.lane.b32.xlu0 %v3446, 32
  %v3482 = vpop.permute.xlu0 %3481
  %3483 = vrot.lane.b32.xlu0 %v3449, 32
  %v3484 = vpop.permute.xlu0 %3483
  %3485 = vrot.lane.b32.xlu0 %v3452, 32
  %v3486 = vpop.permute.xlu0 %3485
  %3487 = vrot.lane.b32.xlu0 %v3455, 32
  %v3488 = vpop.permute.xlu0 %3487
  %3489 = vrot.lane.b32.xlu0 %v3458, 32
  %v3490 = vpop.permute.xlu0 %3489
  %3507 = vst.msk [vmem:[#allocation5] sm:$0xff] %vm2379, %v3460
  %3508 = vst.msk [vmem:[#allocation5 + $0x18] sm:$0xff] %vm2379, %v3462
  %3509 = vst.msk [vmem:[#allocation5 + $0x30] sm:$0xff] %vm2379, %v3464
  %3510 = vst.msk [vmem:[#allocation5 + $0x48] sm:$0xff] %vm2379, %v3466
  %3511 = vst.msk [vmem:[#allocation5 + $0x60] sm:$0xff] %vm2379, %v3468
  %3512 = vst.msk [vmem:[#allocation5 + $0x78] sm:$0xff] %vm2379, %v3470
  %3513 = vst.msk [vmem:[#allocation5 + $0x90] sm:$0xff] %vm2379, %v3472
  %3514 = vst.msk [vmem:[#allocation5 + $0xa8] sm:$0xff] %vm2379, %v3474
  %3515 = vst.msk [vmem:[#allocation5 + $0xc0] sm:$0xff] %vm2379, %v3476
  %3516 = vst.msk [vmem:[#allocation5 + $0xd8] sm:$0xff] %vm2379, %v3478
  %3517 = vst.msk [vmem:[#allocation5 + $0xf0] sm:$0xff] %vm2379, %v3480
  %3518 = vst.msk [vmem:[#allocation5 + $0x108] sm:$0xff] %vm2379, %v3482
  %3519 = vst.msk [vmem:[#allocation5 + $0x120] sm:$0xff] %vm2379, %v3484
  %3520 = vst.msk [vmem:[#allocation5 + $0x138] sm:$0xff] %vm2379, %v3486
  %3521 = vst.msk [vmem:[#allocation5 + $0x150] sm:$0xff] %vm2379, %v3488
  %3522 = vst.msk [vmem:[#allocation5 + $0x168] sm:$0xff] %vm2379, %v3490
  %v3523 = vrot.slane %v3323, 2
  %v3524 = vrot.slane %v3324, 2
  %v3525 = vsel %vm414, %v3523, %v3524
  %v3526 = vrot.slane %v3325, 2
  %v3527 = vrot.slane %v3326, 2
  %v3528 = vsel %vm414, %v3526, %v3527
  %v3529 = vrot.slane %v3327, 2
  %v3530 = vrot.slane %v3328, 2
  %v3531 = vsel %vm414, %v3529, %v3530
  %v3532 = vrot.slane %v3329, 2
  %v3533 = vrot.slane %v3330, 2
  %v3534 = vsel %vm414, %v3532, %v3533
  %v3535 = vrot.slane %v3331, 2
  %v3536 = vrot.slane %v3332, 2
  %v3537 = vsel %vm414, %v3535, %v3536
  %v3538 = vrot.slane %v3333, 2
  %v3539 = vrot.slane %v3334, 2
  %v3540 = vsel %vm414, %v3538, %v3539
  %v3541 = vrot.slane %v3335, 2
  %v3542 = vrot.slane %v3336, 2
  %v3543 = vsel %vm414, %v3541, %v3542
  %v3544 = vrot.slane %v3337, 2
  %v3545 = vrot.slane %v3338, 2
  %v3546 = vsel %vm414, %v3544, %v3545
  %v3547 = vrot.slane %v3343, 2
  %v3548 = vrot.slane %v3344, 2
  %v3549 = vsel %vm414, %v3547, %v3548
  %v3550 = vrot.slane %v3345, 2
  %v3551 = vrot.slane %v3346, 2
  %v3552 = vsel %vm414, %v3550, %v3551
  %v3553 = vrot.slane %v3347, 2
  %v3554 = vrot.slane %v3348, 2
  %v3555 = vsel %vm414, %v3553, %v3554
  %v3556 = vrot.slane %v3349, 2
  %v3557 = vrot.slane %v3350, 2
  %v3558 = vsel %vm414, %v3556, %v3557
  %v3559 = vrot.slane %v3351, 2
  %v3560 = vrot.slane %v3352, 2
  %v3561 = vsel %vm414, %v3559, %v3560
  %v3562 = vrot.slane %v3353, 2
  %v3563 = vrot.slane %v3354, 2
  %v3564 = vsel %vm414, %v3562, %v3563
  %v3565 = vrot.slane %v3355, 2
  %v3566 = vrot.slane %v3356, 2
  %v3567 = vsel %vm414, %v3565, %v3566
  %v3568 = vrot.slane %v3357, 2
  %v3569 = vrot.slane %v3358, 2
  %v3570 = vsel %vm414, %v3568, %v3569
  %3571 = vrot.lane.b32.xlu0 %v3525, 64
  %v3572 = vpop.permute.xlu0 %3571
  %3573 = vrot.lane.b32.xlu0 %v3528, 64
  %v3574 = vpop.permute.xlu0 %3573
  %3575 = vrot.lane.b32.xlu0 %v3531, 64
  %v3576 = vpop.permute.xlu0 %3575
  %3577 = vrot.lane.b32.xlu0 %v3534, 64
  %v3578 = vpop.permute.xlu0 %3577
  %3579 = vrot.lane.b32.xlu0 %v3537, 64
  %v3580 = vpop.permute.xlu0 %3579
  %3581 = vrot.lane.b32.xlu0 %v3540, 64
  %v3582 = vpop.permute.xlu0 %3581
  %3583 = vrot.lane.b32.xlu0 %v3543, 64
  %v3584 = vpop.permute.xlu0 %3583
  %3585 = vrot.lane.b32.xlu0 %v3546, 64
  %v3586 = vpop.permute.xlu0 %3585
  %3587 = vrot.lane.b32.xlu0 %v3549, 64
  %v3588 = vpop.permute.xlu0 %3587
  %3589 = vrot.lane.b32.xlu0 %v3552, 64
  %v3590 = vpop.permute.xlu0 %3589
  %3591 = vrot.lane.b32.xlu0 %v3555, 64
  %v3592 = vpop.permute.xlu0 %3591
  %3593 = vrot.lane.b32.xlu0 %v3558, 64
  %v3594 = vpop.permute.xlu0 %3593
  %3595 = vrot.lane.b32.xlu0 %v3561, 64
  %v3596 = vpop.permute.xlu0 %3595
  %3597 = vrot.lane.b32.xlu0 %v3564, 64
  %v3598 = vpop.permute.xlu0 %3597
  %3599 = vrot.lane.b32.xlu0 %v3567, 64
  %v3600 = vpop.permute.xlu0 %3599
  %3601 = vrot.lane.b32.xlu0 %v3570, 64
  %v3602 = vpop.permute.xlu0 %3601
  %3619 = vst.msk [vmem:[#allocation5] sm:$0xff] %vm2492, %v3572
  %3620 = vst.msk [vmem:[#allocation5 + $0x18] sm:$0xff] %vm2492, %v3574
  %3621 = vst.msk [vmem:[#allocation5 + $0x30] sm:$0xff] %vm2492, %v3576
  %3622 = vst.msk [vmem:[#allocation5 + $0x48] sm:$0xff] %vm2492, %v3578
  %3623 = vst.msk [vmem:[#allocation5 + $0x60] sm:$0xff] %vm2492, %v3580
  %3624 = vst.msk [vmem:[#allocation5 + $0x78] sm:$0xff] %vm2492, %v3582
  %3625 = vst.msk [vmem:[#allocation5 + $0x90] sm:$0xff] %vm2492, %v3584
  %3626 = vst.msk [vmem:[#allocation5 + $0xa8] sm:$0xff] %vm2492, %v3586
  %3627 = vst.msk [vmem:[#allocation5 + $0xc0] sm:$0xff] %vm2492, %v3588
  %3628 = vst.msk [vmem:[#allocation5 + $0xd8] sm:$0xff] %vm2492, %v3590
  %3629 = vst.msk [vmem:[#allocation5 + $0xf0] sm:$0xff] %vm2492, %v3592
  %3630 = vst.msk [vmem:[#allocation5 + $0x108] sm:$0xff] %vm2492, %v3594
  %3631 = vst.msk [vmem:[#allocation5 + $0x120] sm:$0xff] %vm2492, %v3596
  %3632 = vst.msk [vmem:[#allocation5 + $0x138] sm:$0xff] %vm2492, %v3598
  %3633 = vst.msk [vmem:[#allocation5 + $0x150] sm:$0xff] %vm2492, %v3600
  %3634 = vst.msk [vmem:[#allocation5 + $0x168] sm:$0xff] %vm2492, %v3602
  %3637 = vrot.lane.b32.xlu0 %v3325, 96
  %v3638 = vpop.permute.xlu0 %3637
  %3639 = vrot.lane.b32.xlu0 %v3327, 96
  %v3640 = vpop.permute.xlu0 %3639
  %3641 = vrot.lane.b32.xlu0 %v3329, 96
  %v3642 = vpop.permute.xlu0 %3641
  %3643 = vrot.lane.b32.xlu0 %v3331, 96
  %v3644 = vpop.permute.xlu0 %3643
  %3645 = vrot.lane.b32.xlu0 %v3333, 96
  %v3646 = vpop.permute.xlu0 %3645
  %3647 = vrot.lane.b32.xlu0 %v3335, 96
  %v3648 = vpop.permute.xlu0 %3647
  %3649 = vrot.lane.b32.xlu0 %v3337, 96
  %v3650 = vpop.permute.xlu0 %3649
  %3651 = vrot.lane.b32.xlu0 %v3339, 96
  %v3652 = vpop.permute.xlu0 %3651
  %3653 = vrot.lane.b32.xlu0 %v3345, 96
  %v3654 = vpop.permute.xlu0 %3653
  %3655 = vrot.lane.b32.xlu0 %v3347, 96
  %v3656 = vpop.permute.xlu0 %3655
  %3657 = vrot.lane.b32.xlu0 %v3349, 96
  %v3658 = vpop.permute.xlu0 %3657
  %3659 = vrot.lane.b32.xlu0 %v3351, 96
  %v3660 = vpop.permute.xlu0 %3659
  %3661 = vrot.lane.b32.xlu0 %v3353, 96
  %v3662 = vpop.permute.xlu0 %3661
  %3663 = vrot.lane.b32.xlu0 %v3355, 96
  %v3664 = vpop.permute.xlu0 %3663
  %3665 = vrot.lane.b32.xlu0 %v3357, 96
  %v3666 = vpop.permute.xlu0 %3665
  %3667 = vrot.lane.b32.xlu0 %v3359, 96
  %v3668 = vpop.permute.xlu0 %3667
  %3685 = vst.msk [vmem:[#allocation5] sm:$0xff] %vm2559, %v3638
  %3686 = vst.msk [vmem:[#allocation5 + $0x18] sm:$0xff] %vm2559, %v3640
  %3687 = vst.msk [vmem:[#allocation5 + $0x30] sm:$0xff] %vm2559, %v3642
  %3688 = vst.msk [vmem:[#allocation5 + $0x48] sm:$0xff] %vm2559, %v3644
  %3689 = vst.msk [vmem:[#allocation5 + $0x60] sm:$0xff] %vm2559, %v3646
  %3690 = vst.msk [vmem:[#allocation5 + $0x78] sm:$0xff] %vm2559, %v3648
  %3691 = vst.msk [vmem:[#allocation5 + $0x90] sm:$0xff] %vm2559, %v3650
  %3692 = vst.msk [vmem:[#allocation5 + $0xa8] sm:$0xff] %vm2559, %v3652
  %3693 = vst.msk [vmem:[#allocation5 + $0xc0] sm:$0xff] %vm2559, %v3654
  %3694 = vst.msk [vmem:[#allocation5 + $0xd8] sm:$0xff] %vm2559, %v3656
  %3695 = vst.msk [vmem:[#allocation5 + $0xf0] sm:$0xff] %vm2559, %v3658
  %3696 = vst.msk [vmem:[#allocation5 + $0x108] sm:$0xff] %vm2559, %v3660
  %3697 = vst.msk [vmem:[#allocation5 + $0x120] sm:$0xff] %vm2559, %v3662
  %3698 = vst.msk [vmem:[#allocation5 + $0x138] sm:$0xff] %vm2559, %v3664
  %3699 = vst.msk [vmem:[#allocation5 + $0x150] sm:$0xff] %vm2559, %v3666
  %3700 = vst.msk [vmem:[#allocation5 + $0x168] sm:$0xff] %vm2559, %v3668
  %v3703 = vrot.slane %v3339, 1
  %v3704 = vrot.slane %v3340, 1
  %v3705 = vsel %vm300, %v3703, %v3704
  %v3706 = vrot.slane %v3359, 1
  %v3707 = vrot.slane %v3360, 1
  %v3708 = vsel %vm300, %v3706, %v3707
  %3725 = vst.msk [vmem:[#allocation5 + $0x8] sm:$0xff] %vm137, %v3416
  %3726 = vst.msk [vmem:[#allocation5 + $0x20] sm:$0xff] %vm137, %v3419
  %3727 = vst.msk [vmem:[#allocation5 + $0x38] sm:$0xff] %vm137, %v3422
  %3728 = vst.msk [vmem:[#allocation5 + $0x50] sm:$0xff] %vm137, %v3425
  %3729 = vst.msk [vmem:[#allocation5 + $0x68] sm:$0xff] %vm137, %v3428
  %3730 = vst.msk [vmem:[#allocation5 + $0x80] sm:$0xff] %vm137, %v3431
  %3731 = vst.msk [vmem:[#allocation5 + $0x98] sm:$0xff] %vm137, %v3434
  %3732 = vst.msk [vmem:[#allocation5 + $0xb0] sm:$0xff] %vm137, %v3705
  %3733 = vst.msk [vmem:[#allocation5 + $0xc8] sm:$0xff] %vm137, %v3440
  %3734 = vst.msk [vmem:[#allocation5 + $0xe0] sm:$0xff] %vm137, %v3443
  %3735 = vst.msk [vmem:[#allocation5 + $0xf8] sm:$0xff] %vm137, %v3446
  %3736 = vst.msk [vmem:[#allocation5 + $0x110] sm:$0xff] %vm137, %v3449
  %3737 = vst.msk [vmem:[#allocation5 + $0x128] sm:$0xff] %vm137, %v3452
  %3738 = vst.msk [vmem:[#allocation5 + $0x140] sm:$0xff] %vm137, %v3455
  %3739 = vst.msk [vmem:[#allocation5 + $0x158] sm:$0xff] %vm137, %v3458
  %3740 = vst.msk [vmem:[#allocation5 + $0x170] sm:$0xff] %vm137, %v3708
  %v3741 = vrot.slane %v3339, 2
  %v3742 = vrot.slane %v3340, 2
  %v3743 = vsel %vm414, %v3741, %v3742
  %v3744 = vrot.slane %v3359, 2
  %v3745 = vrot.slane %v3360, 2
  %v3746 = vsel %vm414, %v3744, %v3745
  %3747 = vrot.lane.b32.xlu0 %v3528, 32
  %v3748 = vpop.permute.xlu0 %3747
  %3749 = vrot.lane.b32.xlu0 %v3531, 32
  %v3750 = vpop.permute.xlu0 %3749
  %3751 = vrot.lane.b32.xlu0 %v3534, 32
  %v3752 = vpop.permute.xlu0 %3751
  %3753 = vrot.lane.b32.xlu0 %v3537, 32
  %v3754 = vpop.permute.xlu0 %3753
  %3755 = vrot.lane.b32.xlu0 %v3540, 32
  %v3756 = vpop.permute.xlu0 %3755
  %3757 = vrot.lane.b32.xlu0 %v3543, 32
  %v3758 = vpop.permute.xlu0 %3757
  %3759 = vrot.lane.b32.xlu0 %v3546, 32
  %v3760 = vpop.permute.xlu0 %3759
  %3761 = vrot.lane.b32.xlu0 %v3743, 32
  %v3762 = vpop.permute.xlu0 %3761
  %3763 = vrot.lane.b32.xlu0 %v3552, 32
  %v3764 = vpop.permute.xlu0 %3763
  %3765 = vrot.lane.b32.xlu0 %v3555, 32
  %v3766 = vpop.permute.xlu0 %3765
  %3767 = vrot.lane.b32.xlu0 %v3558, 32
  %v3768 = vpop.permute.xlu0 %3767
  %3769 = vrot.lane.b32.xlu0 %v3561, 32
  %v3770 = vpop.permute.xlu0 %3769
  %3771 = vrot.lane.b32.xlu0 %v3564, 32
  %v3772 = vpop.permute.xlu0 %3771
  %3773 = vrot.lane.b32.xlu0 %v3567, 32
  %v3774 = vpop.permute.xlu0 %3773
  %3775 = vrot.lane.b32.xlu0 %v3570, 32
  %v3776 = vpop.permute.xlu0 %3775
  %3777 = vrot.lane.b32.xlu0 %v3746, 32
  %v3778 = vpop.permute.xlu0 %3777
  %3795 = vst.msk [vmem:[#allocation5 + $0x8] sm:$0xff] %vm2379, %v3748
  %3796 = vst.msk [vmem:[#allocation5 + $0x20] sm:$0xff] %vm2379, %v3750
  %3797 = vst.msk [vmem:[#allocation5 + $0x38] sm:$0xff] %vm2379, %v3752
  %3798 = vst.msk [vmem:[#allocation5 + $0x50] sm:$0xff] %vm2379, %v3754
  %3799 = vst.msk [vmem:[#allocation5 + $0x68] sm:$0xff] %vm2379, %v3756
  %3800 = vst.msk [vmem:[#allocation5 + $0x80] sm:$0xff] %vm2379, %v3758
  %3801 = vst.msk [vmem:[#allocation5 + $0x98] sm:$0xff] %vm2379, %v3760
  %3802 = vst.msk [vmem:[#allocation5 + $0xb0] sm:$0xff] %vm2379, %v3762
  %3803 = vst.msk [vmem:[#allocation5 + $0xc8] sm:$0xff] %vm2379, %v3764
  %3804 = vst.msk [vmem:[#allocation5 + $0xe0] sm:$0xff] %vm2379, %v3766
  %3805 = vst.msk [vmem:[#allocation5 + $0xf8] sm:$0xff] %vm2379, %v3768
  %3806 = vst.msk [vmem:[#allocation5 + $0x110] sm:$0xff] %vm2379, %v3770
  %3807 = vst.msk [vmem:[#allocation5 + $0x128] sm:$0xff] %vm2379, %v3772
  %3808 = vst.msk [vmem:[#allocation5 + $0x140] sm:$0xff] %vm2379, %v3774
  %3809 = vst.msk [vmem:[#allocation5 + $0x158] sm:$0xff] %vm2379, %v3776
  %3810 = vst.msk [vmem:[#allocation5 + $0x170] sm:$0xff] %vm2379, %v3778
  %3813 = vrot.lane.b32.xlu0 %v3327, 64
  %v3814 = vpop.permute.xlu0 %3813
  %3815 = vrot.lane.b32.xlu0 %v3329, 64
  %v3816 = vpop.permute.xlu0 %3815
  %3817 = vrot.lane.b32.xlu0 %v3331, 64
  %v3818 = vpop.permute.xlu0 %3817
  %3819 = vrot.lane.b32.xlu0 %v3333, 64
  %v3820 = vpop.permute.xlu0 %3819
  %3821 = vrot.lane.b32.xlu0 %v3335, 64
  %v3822 = vpop.permute.xlu0 %3821
  %3823 = vrot.lane.b32.xlu0 %v3337, 64
  %v3824 = vpop.permute.xlu0 %3823
  %3825 = vrot.lane.b32.xlu0 %v3339, 64
  %v3826 = vpop.permute.xlu0 %3825
  %3827 = vrot.lane.b32.xlu0 %v3341, 64
  %v3828 = vpop.permute.xlu0 %3827
  %3829 = vrot.lane.b32.xlu0 %v3347, 64
  %v3830 = vpop.permute.xlu0 %3829
  %3831 = vrot.lane.b32.xlu0 %v3349, 64
  %v3832 = vpop.permute.xlu0 %3831
  %3833 = vrot.lane.b32.xlu0 %v3351, 64
  %v3834 = vpop.permute.xlu0 %3833
  %3835 = vrot.lane.b32.xlu0 %v3353, 64
  %v3836 = vpop.permute.xlu0 %3835
  %3837 = vrot.lane.b32.xlu0 %v3355, 64
  %v3838 = vpop.permute.xlu0 %3837
  %3839 = vrot.lane.b32.xlu0 %v3357, 64
  %v3840 = vpop.permute.xlu0 %3839
  %3841 = vrot.lane.b32.xlu0 %v3359, 64
  %v3842 = vpop.permute.xlu0 %3841
  %3843 = vrot.lane.b32.xlu0 %v3361, 64
  %v3844 = vpop.permute.xlu0 %3843
  %3861 = vst.msk [vmem:[#allocation5 + $0x8] sm:$0xff] %vm2492, %v3814
  %3862 = vst.msk [vmem:[#allocation5 + $0x20] sm:$0xff] %vm2492, %v3816
  %3863 = vst.msk [vmem:[#allocation5 + $0x38] sm:$0xff] %vm2492, %v3818
  %3864 = vst.msk [vmem:[#allocation5 + $0x50] sm:$0xff] %vm2492, %v3820
  %3865 = vst.msk [vmem:[#allocation5 + $0x68] sm:$0xff] %vm2492, %v3822
  %3866 = vst.msk [vmem:[#allocation5 + $0x80] sm:$0xff] %vm2492, %v3824
  %3867 = vst.msk [vmem:[#allocation5 + $0x98] sm:$0xff] %vm2492, %v3826
  %3868 = vst.msk [vmem:[#allocation5 + $0xb0] sm:$0xff] %vm2492, %v3828
  %3869 = vst.msk [vmem:[#allocation5 + $0xc8] sm:$0xff] %vm2492, %v3830
  %3870 = vst.msk [vmem:[#allocation5 + $0xe0] sm:$0xff] %vm2492, %v3832
  %3871 = vst.msk [vmem:[#allocation5 + $0xf8] sm:$0xff] %vm2492, %v3834
  %3872 = vst.msk [vmem:[#allocation5 + $0x110] sm:$0xff] %vm2492, %v3836
  %3873 = vst.msk [vmem:[#allocation5 + $0x128] sm:$0xff] %vm2492, %v3838
  %3874 = vst.msk [vmem:[#allocation5 + $0x140] sm:$0xff] %vm2492, %v3840
  %3875 = vst.msk [vmem:[#allocation5 + $0x158] sm:$0xff] %vm2492, %v3842
  %3876 = vst.msk [vmem:[#allocation5 + $0x170] sm:$0xff] %vm2492, %v3844
  %v3879 = vrot.slane %v3341, 1
  %v3880 = vrot.slane %v3342, 1
  %v3881 = vsel %vm300, %v3879, %v3880
  %v3882 = vrot.slane %v3361, 1
  %v3883 = vrot.slane %v3362, 1
  %v3884 = vsel %vm300, %v3882, %v3883
  %3885 = vrot.lane.b32.xlu0 %v3419, 96
  %v3886 = vpop.permute.xlu0 %3885
  %3887 = vrot.lane.b32.xlu0 %v3422, 96
  %v3888 = vpop.permute.xlu0 %3887
  %3889 = vrot.lane.b32.xlu0 %v3425, 96
  %v3890 = vpop.permute.xlu0 %3889
  %3891 = vrot.lane.b32.xlu0 %v3428, 96
  %v3892 = vpop.permute.xlu0 %3891
  %3893 = vrot.lane.b32.xlu0 %v3431, 96
  %v3894 = vpop.permute.xlu0 %3893
  %3895 = vrot.lane.b32.xlu0 %v3434, 96
  %v3896 = vpop.permute.xlu0 %3895
  %3897 = vrot.lane.b32.xlu0 %v3705, 96
  %v3898 = vpop.permute.xlu0 %3897
  %3899 = vrot.lane.b32.xlu0 %v3881, 96
  %v3900 = vpop.permute.xlu0 %3899
  %3901 = vrot.lane.b32.xlu0 %v3443, 96
  %v3902 = vpop.permute.xlu0 %3901
  %3903 = vrot.lane.b32.xlu0 %v3446, 96
  %v3904 = vpop.permute.xlu0 %3903
  %3905 = vrot.lane.b32.xlu0 %v3449, 96
  %v3906 = vpop.permute.xlu0 %3905
  %3907 = vrot.lane.b32.xlu0 %v3452, 96
  %v3908 = vpop.permute.xlu0 %3907
  %3909 = vrot.lane.b32.xlu0 %v3455, 96
  %v3910 = vpop.permute.xlu0 %3909
  %3911 = vrot.lane.b32.xlu0 %v3458, 96
  %v3912 = vpop.permute.xlu0 %3911
  %3913 = vrot.lane.b32.xlu0 %v3708, 96
  %v3914 = vpop.permute.xlu0 %3913
  %3915 = vrot.lane.b32.xlu0 %v3884, 96
  %v3916 = vpop.permute.xlu0 %3915
  %3933 = vst.msk [vmem:[#allocation5 + $0x8] sm:$0xff] %vm2559, %v3886
  %3934 = vst.msk [vmem:[#allocation5 + $0x20] sm:$0xff] %vm2559, %v3888
  %3935 = vst.msk [vmem:[#allocation5 + $0x38] sm:$0xff] %vm2559, %v3890
  %3936 = vst.msk [vmem:[#allocation5 + $0x50] sm:$0xff] %vm2559, %v3892
  %3937 = vst.msk [vmem:[#allocation5 + $0x68] sm:$0xff] %vm2559, %v3894
  %3938 = vst.msk [vmem:[#allocation5 + $0x80] sm:$0xff] %vm2559, %v3896
  %3939 = vst.msk [vmem:[#allocation5 + $0x98] sm:$0xff] %vm2559, %v3898
  %3940 = vst.msk [vmem:[#allocation5 + $0xb0] sm:$0xff] %vm2559, %v3900
  %3941 = vst.msk [vmem:[#allocation5 + $0xc8] sm:$0xff] %vm2559, %v3902
  %3942 = vst.msk [vmem:[#allocation5 + $0xe0] sm:$0xff] %vm2559, %v3904
  %3943 = vst.msk [vmem:[#allocation5 + $0xf8] sm:$0xff] %vm2559, %v3906
  %3944 = vst.msk [vmem:[#allocation5 + $0x110] sm:$0xff] %vm2559, %v3908
  %3945 = vst.msk [vmem:[#allocation5 + $0x128] sm:$0xff] %vm2559, %v3910
  %3946 = vst.msk [vmem:[#allocation5 + $0x140] sm:$0xff] %vm2559, %v3912
  %3947 = vst.msk [vmem:[#allocation5 + $0x158] sm:$0xff] %vm2559, %v3914
  %3948 = vst.msk [vmem:[#allocation5 + $0x170] sm:$0xff] %vm2559, %v3916
  %v3949 = vrot.slane %v3341, 2
  %v3950 = vrot.slane %v3342, 2
  %v3951 = vsel %vm414, %v3949, %v3950
  %v3952 = vrot.slane %v3361, 2
  %v3953 = vrot.slane %v3362, 2
  %v3954 = vsel %vm414, %v3952, %v3953
  %3971 = vst.msk [vmem:[#allocation5 + $0x10] sm:$0xff] %vm137, %v3531
  %3972 = vst.msk [vmem:[#allocation5 + $0x28] sm:$0xff] %vm137, %v3534
  %3973 = vst.msk [vmem:[#allocation5 + $0x40] sm:$0xff] %vm137, %v3537
  %3974 = vst.msk [vmem:[#allocation5 + $0x58] sm:$0xff] %vm137, %v3540
  %3975 = vst.msk [vmem:[#allocation5 + $0x70] sm:$0xff] %vm137, %v3543
  %3976 = vst.msk [vmem:[#allocation5 + $0x88] sm:$0xff] %vm137, %v3546
  %3977 = vst.msk [vmem:[#allocation5 + $0xa0] sm:$0xff] %vm137, %v3743
  %3978 = vst.msk [vmem:[#allocation5 + $0xb8] sm:$0xff] %vm137, %v3951
  %3979 = vst.msk [vmem:[#allocation5 + $0xd0] sm:$0xff] %vm137, %v3555
  %3980 = vst.msk [vmem:[#allocation5 + $0xe8] sm:$0xff] %vm137, %v3558
  %3981 = vst.msk [vmem:[#allocation5 + $0x100] sm:$0xff] %vm137, %v3561
  %3982 = vst.msk [vmem:[#allocation5 + $0x118] sm:$0xff] %vm137, %v3564
  %3983 = vst.msk [vmem:[#allocation5 + $0x130] sm:$0xff] %vm137, %v3567
  %3984 = vst.msk [vmem:[#allocation5 + $0x148] sm:$0xff] %vm137, %v3570
  %3985 = vst.msk [vmem:[#allocation5 + $0x160] sm:$0xff] %vm137, %v3746
  %3986 = vst.msk [vmem:[#allocation5 + $0x178] sm:$0xff] %vm137, %v3954
  %v3987 = vld [vmem:[#allocation5] sm:$0xff]
  %v3988 = vld [vmem:[#allocation5 + $0x8] sm:$0xff]
  %v3989 = vld [vmem:[#allocation5 + $0x10] sm:$0xff]
  %v3990 = vld [vmem:[#allocation5 + $0x18] sm:$0xff]
  %v3991 = vld [vmem:[#allocation5 + $0x20] sm:$0xff]
  %v3992 = vld [vmem:[#allocation5 + $0x28] sm:$0xff]
  %v3993 = vld [vmem:[#allocation5 + $0x30] sm:$0xff]
  %v3994 = vld [vmem:[#allocation5 + $0x38] sm:$0xff]
  %v3995 = vld [vmem:[#allocation5 + $0x40] sm:$0xff]
  %v3996 = vld [vmem:[#allocation5 + $0x48] sm:$0xff]
  %v3997 = vld [vmem:[#allocation5 + $0x50] sm:$0xff]
  %v3998 = vld [vmem:[#allocation5 + $0x58] sm:$0xff]
  %v3999 = vld [vmem:[#allocation5 + $0x60] sm:$0xff]
  %v4000 = vld [vmem:[#allocation5 + $0x68] sm:$0xff]
  %v4001 = vld [vmem:[#allocation5 + $0x70] sm:$0xff]
  %v4002 = vld [vmem:[#allocation5 + $0x78] sm:$0xff]
  %v4003 = vld [vmem:[#allocation5 + $0x80] sm:$0xff]
  %v4004 = vld [vmem:[#allocation5 + $0x88] sm:$0xff]
  %v4005 = vld [vmem:[#allocation5 + $0x90] sm:$0xff]
  %v4006 = vld [vmem:[#allocation5 + $0x98] sm:$0xff]
  %v4007 = vld [vmem:[#allocation5 + $0xa0] sm:$0xff]
  %v4008 = vld [vmem:[#allocation5 + $0xa8] sm:$0xff]
  %v4009 = vld [vmem:[#allocation5 + $0xb0] sm:$0xff]
  %v4010 = vld [vmem:[#allocation5 + $0xb8] sm:$0xff]
  %v4011 = vld [vmem:[#allocation5 + $0xc0] sm:$0xff]
  %v4012 = vld [vmem:[#allocation5 + $0xc8] sm:$0xff]
  %v4013 = vld [vmem:[#allocation5 + $0xd0] sm:$0xff]
  %v4014 = vld [vmem:[#allocation5 + $0xd8] sm:$0xff]
  %v4015 = vld [vmem:[#allocation5 + $0xe0] sm:$0xff]
  %v4016 = vld [vmem:[#allocation5 + $0xe8] sm:$0xff]
  %v4017 = vld [vmem:[#allocation5 + $0xf0] sm:$0xff]
  %v4018 = vld [vmem:[#allocation5 + $0xf8] sm:$0xff]
  %v4019 = vld [vmem:[#allocation5 + $0x100] sm:$0xff]
  %v4020 = vld [vmem:[#allocation5 + $0x108] sm:$0xff]
  %v4021 = vld [vmem:[#allocation5 + $0x110] sm:$0xff]
  %v4022 = vld [vmem:[#allocation5 + $0x118] sm:$0xff]
  %v4023 = vld [vmem:[#allocation5 + $0x120] sm:$0xff]
  %v4024 = vld [vmem:[#allocation5 + $0x128] sm:$0xff]
  %v4025 = vld [vmem:[#allocation5 + $0x130] sm:$0xff]
  %v4026 = vld [vmem:[#allocation5 + $0x138] sm:$0xff]
  %v4027 = vld [vmem:[#allocation5 + $0x140] sm:$0xff]
  %v4028 = vld [vmem:[#allocation5 + $0x148] sm:$0xff]
  %v4029 = vld [vmem:[#allocation5 + $0x150] sm:$0xff]
  %v4030 = vld [vmem:[#allocation5 + $0x158] sm:$0xff]
  %v4031 = vld [vmem:[#allocation5 + $0x160] sm:$0xff]
  %v4032 = vld [vmem:[#allocation5 + $0x168] sm:$0xff]
  %v4033 = vld [vmem:[#allocation5 + $0x170] sm:$0xff]
  %v4034 = vld [vmem:[#allocation5 + $0x178] sm:$0xff]
  %v4035 = vld [vmem:[%s8] sm:$0xff]
  %v4036 = vld [vmem:[%s8 + $0x8] sm:$0xff]
  %v4037 = vld [vmem:[%s8 + $0x10] sm:$0xff]
  %v4038 = vld [vmem:[%s8 + $0x18] sm:$0xff]
  %v4039 = vld [vmem:[%s8 + $0x20] sm:$0xff]
  %v4040 = vld [vmem:[%s8 + $0x28] sm:$0xff]
  %v4041 = vld [vmem:[%s8 + $0x30] sm:$0xff]
  %v4042 = vld [vmem:[%s8 + $0x38] sm:$0xff]
  %v4043 = vld [vmem:[%s8 + $0x40] sm:$0xff]
  %v4044 = vld [vmem:[%s8 + $0x48] sm:$0xff]
  %v4045 = vld [vmem:[%s8 + $0x50] sm:$0xff]
  %v4046 = vld [vmem:[%s8 + $0x58] sm:$0xff]
  %v4047 = vld [vmem:[%s8 + $0x60] sm:$0xff]
  %v4048 = vld [vmem:[%s8 + $0x68] sm:$0xff]
  %v4049 = vld [vmem:[%s8 + $0x70] sm:$0xff]
  %v4050 = vld [vmem:[%s8 + $0x78] sm:$0xff]
  %v4051 = vld [vmem:[%s8 + $0x80] sm:$0xff]
  %v4052 = vld [vmem:[%s8 + $0x88] sm:$0xff]
  %v4053 = vld [vmem:[%s8 + $0x90] sm:$0xff]
  %v4054 = vld [vmem:[%s8 + $0x98] sm:$0xff]
  %v4055 = vld [vmem:[%s8 + $0xa0] sm:$0xff]
  %v4056 = vld [vmem:[%s8 + $0xa8] sm:$0xff]
  %v4057 = vld [vmem:[%s8 + $0xb0] sm:$0xff]
  %v4058 = vld [vmem:[%s8 + $0xb8] sm:$0xff]
  %v4059 = vld [vmem:[%s8 + $0xc0] sm:$0xff]
  %v4060 = vld [vmem:[%s8 + $0xc8] sm:$0xff]
  %v4061 = vld [vmem:[%s8 + $0xd0] sm:$0xff]
  %v4062 = vld [vmem:[%s8 + $0xd8] sm:$0xff]
  %v4063 = vld [vmem:[%s8 + $0xe0] sm:$0xff]
  %v4064 = vld [vmem:[%s8 + $0xe8] sm:$0xff]
  %v4065 = vld [vmem:[%s8 + $0xf0] sm:$0xff]
  %v4066 = vld [vmem:[%s8 + $0xf8] sm:$0xff]
  %v4067 = vld [vmem:[%s8 + $0x100] sm:$0xff]
  %v4068 = vld [vmem:[%s8 + $0x108] sm:$0xff]
  %v4069 = vld [vmem:[%s8 + $0x110] sm:$0xff]
  %v4070 = vld [vmem:[%s8 + $0x118] sm:$0xff]
  %v4071 = vld [vmem:[%s9] sm:$0x1]
  %v4073 = vlaneseq
  %v4074 = vshrl.u32 %v4073, 7
  %v4075 = vsub.s32 0, %v4074
  %v4076 = vrot.slane %v4071, %v4075
  %v4079 = vsel %vm137, %v3989, 0
  %v4082 = vsel %vm137, %v3992, 0
  %v4085 = vsel %vm137, %v3995, 0
  %v4088 = vsel %vm137, %v3998, 0
  %v4091 = vsel %vm137, %v4001, 0
  %v4094 = vsel %vm137, %v4004, 0
  %v4097 = vsel %vm137, %v4007, 0
  %v4100 = vsel %vm137, %v4010, 0
  %v4103 = vsel %vm137, %v4013, 0
  %v4106 = vsel %vm137, %v4016, 0
  %v4109 = vsel %vm137, %v4019, 0
  %v4112 = vsel %vm137, %v4022, 0
  %v4115 = vsel %vm137, %v4025, 0
  %v4118 = vsel %vm137, %v4028, 0
  %v4121 = vsel %vm137, %v4031, 0
  %v4124 = vsel %vm137, %v4034, 0
  %4126 = vmatprep.subr.mxu0 0.0
  %4127 = vmatpush1.msra.mxu0 %v4035
  %4128 = vmatprep.subr.mxu0 0.0
  %4129 = vmatpush1.msra.mxu0 %v4036
  %4130 = vmatprep.subr.mxu0 0.0
  %4131 = vmatpush1.msra.mxu0 %v4037
  %4132 = vmatprep.subr.mxu0 0.0
  %4133 = vmatpush1.msra.mxu0 %v4038
  %4134 = vmatprep.subr.mxu0 0.0
  %4135 = vmatpush1.msra.mxu0 %v4039
  %4136 = vmatprep.subr.mxu0 0.0
  %4137 = vmatpush1.msra.mxu0 %v4040
  %4138 = vmatprep.subr.mxu0 0.0
  %4139 = vmatpush1.msra.mxu0 %v4041
  %4140 = vmatprep.subr.mxu0 0.0
  %4141 = vmatpush1.msra.mxu0 %v4042
  %4142 = vmatprep.subr.mxu0 0.0
  %4143 = vmatpush1.msra.mxu0 %v4043
  %4144 = vmatprep.subr.mxu0 0.0
  %4145 = vmatpush1.msra.mxu0 %v4044
  %4146 = vmatprep.subr.mxu0 0.0
  %4147 = vmatpush1.msra.mxu0 %v4045
  %4148 = vmatprep.subr.mxu0 0.0
  %4149 = vmatpush1.msra.mxu0 %v4046
  %4150 = vmatprep.subr.mxu0 0.0
  %4151 = vmatpush1.msra.mxu0 %v4047
  %4152 = vmatprep.subr.mxu0 0.0
  %4153 = vmatpush1.msra.mxu0 %v4048
  %4154 = vmatprep.subr.mxu0 0.0
  %4155 = vmatpush1.msra.mxu0 %v4049
  %4156 = vmatprep.subr.mxu0 0.0
  %4157 = vmatpush1.msra.mxu0 %v4050
  %4158 = vmatprep.subr.mxu0 0.0
  %4159 = vmatpush1.msra.mxu0 %v4051
  %4160 = vmatprep.subr.mxu0 0.0
  %4161 = vmatpush1.msra.mxu0 %v4052
  %4162 = vmatprep.subr.mxu0 0.0
  %4163 = vmatpush1.msra.mxu0 %v4053
  %4164 = vmatprep.subr.mxu0 0.0
  %4165 = vmatpush1.msra.mxu0 %v4054
  %4166 = vmatprep.subr.mxu0 0.0
  %4167 = vmatpush1.msra.mxu0 %v4055
  %4168 = vmatprep.subr.mxu0 0.0
  %4169 = vmatpush1.msra.mxu0 %v4056
  %4170 = vmatprep.subr.mxu0 0.0
  %4171 = vmatpush1.msra.mxu0 %v4057
  %4172 = vmatprep.subr.mxu0 0.0
  %4173 = vmatpush1.msra.mxu0 %v4058
  %4174 = vmatprep.subr.mxu0 0.0
  %4175 = vmatpush1.msra.mxu0 %v4059
  %4176 = vmatprep.subr.mxu0 0.0
  %4177 = vmatpush1.msra.mxu0 %v4060
  %4178 = vmatprep.subr.mxu0 0.0
  %4179 = vmatpush1.msra.mxu0 %v4061
  %4180 = vmatprep.subr.mxu0 0.0
  %4181 = vmatpush1.msra.mxu0 %v4062
  %4182 = vmatprep.subr.mxu0 0.0
  %4183 = vmatpush1.msra.mxu0 %v4063
  %4184 = vmatprep.subr.mxu0 0.0
  %4185 = vmatpush1.msra.mxu0 %v4064
  %4186 = vmatprep.subr.mxu0 0.0
  %4187 = vmatpush1.msra.mxu0 %v4065
  %4188 = vmatprep.subr.mxu0 0.0
  %4189 = vmatpush1.msra.mxu0 %v4066
  %4190 = vmatprep.mubr.f32.mxu0 %v3988
  %4191 = vmatmul.mubr.f32.gmra.mrb[0].mxu0 %v3987
  %v4192 = vpop.f32.mrb[0].mxu0
  %v4193 = vadd.f32 %v4076, %v4192
  %v4194 = vpop.f32.mrb[0].mxu0
  %4195 = vmatprep.mubr.f32.mxu0 %v3991
  %4196 = vmatmul.mubr.f32.gmra.mrb[0].mxu0 %v3990
  %v4197 = vpop.f32.mrb[0].mxu0
  %v4198 = vadd.f32 %v4076, %v4197
  %v4199 = vpop.f32.mrb[0].mxu0
  %4200 = vmatprep.mubr.f32.mxu0 %v3994
  %4201 = vmatmul.mubr.f32.gmra.mrb[0].mxu0 %v3993
  %v4202 = vpop.f32.mrb[0].mxu0
  %v4203 = vadd.f32 %v4076, %v4202
  %v4204 = vpop.f32.mrb[0].mxu0
  %4205 = vmatprep.mubr.f32.mxu0 %v3997
  %4206 = vmatmul.mubr.f32.gmra.mrb[0].mxu0 %v3996
  %v4207 = vpop.f32.mrb[0].mxu0
  %v4208 = vadd.f32 %v4076, %v4207
  %v4209 = vpop.f32.mrb[0].mxu0
  %4210 = vmatprep.mubr.f32.mxu0 %v4000
  %4211 = vmatmul.mubr.f32.gmra.mrb[0].mxu0 %v3999
  %v4212 = vpop.f32.mrb[0].mxu0
  %v4213 = vadd.f32 %v4076, %v4212
  %v4214 = vpop.f32.mrb[0].mxu0
  %4215 = vmatprep.mubr.f32.mxu0 %v4003
  %4216 = vmatmul.mubr.f32.gmra.mrb[0].mxu0 %v4002
  %v4217 = vpop.f32.mrb[0].mxu0
  %v4218 = vadd.f32 %v4076, %v4217
  %v4219 = vpop.f32.mrb[0].mxu0
  %4220 = vmatprep.mubr.f32.mxu0 %v4006
  %4221 = vmatmul.mubr.f32.gmra.mrb[0].mxu0 %v4005
  %v4222 = vpop.f32.mrb[0].mxu0
  %v4223 = vadd.f32 %v4076, %v4222
  %v4224 = vpop.f32.mrb[0].mxu0
  %4225 = vmatprep.mubr.f32.mxu0 %v4009
  %4226 = vmatmul.mubr.f32.gmra.mrb[0].mxu0 %v4008
  %v4227 = vpop.f32.mrb[0].mxu0
  %v4228 = vadd.f32 %v4076, %v4227
  %v4229 = vpop.f32.mrb[0].mxu0
  %4230 = vmatprep.mubr.f32.mxu0 %v4012
  %4231 = vmatmul.mubr.f32.gmra.mrb[0].mxu0 %v4011
  %v4232 = vpop.f32.mrb[0].mxu0
  %v4233 = vadd.f32 %v4076, %v4232
  %v4234 = vpop.f32.mrb[0].mxu0
  %4235 = vmatprep.mubr.f32.mxu0 %v4015
  %4236 = vmatmul.mubr.f32.gmra.mrb[0].mxu0 %v4014
  %v4237 = vpop.f32.mrb[0].mxu0
  %v4238 = vadd.f32 %v4076, %v4237
  %v4239 = vpop.f32.mrb[0].mxu0
  %4240 = vmatprep.mubr.f32.mxu0 %v4018
  %4241 = vmatmul.mubr.f32.gmra.mrb[0].mxu0 %v4017
  %v4242 = vpop.f32.mrb[0].mxu0
  %v4243 = vadd.f32 %v4076, %v4242
  %v4244 = vpop.f32.mrb[0].mxu0
  %4245 = vmatprep.mubr.f32.mxu0 %v4021
  %4246 = vmatmul.mubr.f32.gmra.mrb[0].mxu0 %v4020
  %v4247 = vpop.f32.mrb[0].mxu0
  %v4248 = vadd.f32 %v4076, %v4247
  %v4249 = vpop.f32.mrb[0].mxu0
  %4250 = vmatprep.mubr.f32.mxu0 %v4024
  %4251 = vmatmul.mubr.f32.gmra.mrb[0].mxu0 %v4023
  %v4252 = vpop.f32.mrb[0].mxu0
  %v4253 = vadd.f32 %v4076, %v4252
  %v4254 = vpop.f32.mrb[0].mxu0
  %4255 = vmatprep.mubr.f32.mxu0 %v4027
  %4256 = vmatmul.mubr.f32.gmra.mrb[0].mxu0 %v4026
  %v4257 = vpop.f32.mrb[0].mxu0
  %v4258 = vadd.f32 %v4076, %v4257
  %v4259 = vpop.f32.mrb[0].mxu0
  %4260 = vmatprep.mubr.f32.mxu0 %v4030
  %4261 = vmatmul.mubr.f32.gmra.mrb[0].mxu0 %v4029
  %v4262 = vpop.f32.mrb[0].mxu0
  %v4263 = vadd.f32 %v4076, %v4262
  %v4264 = vpop.f32.mrb[0].mxu0
  %4265 = vmatprep.mubr.f32.mxu0 %v4033
  %4266 = vmatmul.mubr.f32.gmra.mrb[0].mxu0 %v4032
  %v4267 = vpop.f32.mrb[0].mxu0
  %v4268 = vadd.f32 %v4076, %v4267
  %v4269 = vpop.f32.mrb[0].mxu0
  %4270 = vdwg.mxu0
  %4271 = vmatprep.subr.mxu0 0.0
  %4272 = vmatpush1.msra.mxu0 %v4067
  %4273 = vmatprep.subr.mxu0 0.0
  %4274 = vmatpush1.msra.mxu0 %v4068
  %4275 = vmatprep.subr.mxu0 0.0
  %4276 = vmatpush1.msra.mxu0 %v4069
  %4277 = vmatprep.subr.mxu0 0.0
  %4278 = vmatpush1.msra.mxu0 %v4070
  %4279 = vmatprep.subr.mxu0 0.0
  %4280 = vmatpush1.msra.mxu0 0.0
  %4281 = vmatprep.subr.mxu0 0.0
  %4282 = vmatpush1.msra.mxu0 0.0
  %4283 = vmatprep.subr.mxu0 0.0
  %4284 = vmatpush1.msra.mxu0 0.0
  %4285 = vmatprep.subr.mxu0 0.0
  %4286 = vmatpush1.msra.mxu0 0.0
  %4287 = vmatprep.subr.mxu0 0.0
  %4288 = vmatpush1.msra.mxu0 0.0
  %4289 = vmatprep.subr.mxu0 0.0
  %4290 = vmatpush1.msra.mxu0 0.0
  %4291 = vmatprep.subr.mxu0 0.0
  %4292 = vmatpush1.msra.mxu0 0.0
  %4293 = vmatprep.subr.mxu0 0.0
  %4294 = vmatpush1.msra.mxu0 0.0
  %4295 = vmatprep.subr.mxu0 0.0
  %4296 = vmatpush1.msra.mxu0 0.0
  %4297 = vmatprep.subr.mxu0 0.0
  %4298 = vmatpush1.msra.mxu0 0.0
  %4299 = vmatprep.subr.mxu0 0.0
  %4300 = vmatpush1.msra.mxu0 0.0
  %4301 = vmatprep.subr.mxu0 0.0
  %4302 = vmatpush1.msra.mxu0 0.0
  %4303 = vmatprep.subr.mxu0 0.0
  %4304 = vmatpush1.msra.mxu0 0.0
  %4305 = vmatprep.subr.mxu0 0.0
  %4306 = vmatpush1.msra.mxu0 0.0
  %4307 = vmatprep.subr.mxu0 0.0
  %4308 = vmatpush1.msra.mxu0 0.0
  %4309 = vmatprep.subr.mxu0 0.0
  %4310 = vmatpush1.msra.mxu0 0.0
  %4311 = vmatprep.subr.mxu0 0.0
  %4312 = vmatpush1.msra.mxu0 0.0
  %4313 = vmatprep.subr.mxu0 0.0
  %4314 = vmatpush1.msra.mxu0 0.0
  %4315 = vmatprep.subr.mxu0 0.0
  %4316 = vmatpush1.msra.mxu0 0.0
  %4317 = vmatprep.subr.mxu0 0.0
  %4318 = vmatpush1.msra.mxu0 0.0
  %4319 = vmatprep.subr.mxu0 0.0
  %4320 = vmatpush1.msra.mxu0 0.0
  %4321 = vmatprep.subr.mxu0 0.0
  %4322 = vmatpush1.msra.mxu0 0.0
  %4323 = vmatprep.subr.mxu0 0.0
  %4324 = vmatpush1.msra.mxu0 0.0
  %4325 = vmatprep.subr.mxu0 0.0
  %4326 = vmatpush1.msra.mxu0 0.0
  %4327 = vmatprep.subr.mxu0 0.0
  %4328 = vmatpush1.msra.mxu0 0.0
  %4329 = vmatprep.subr.mxu0 0.0
  %4330 = vmatpush1.msra.mxu0 0.0
  %4331 = vmatprep.subr.mxu0 0.0
  %4332 = vmatpush1.msra.mxu0 0.0
  %4333 = vmatprep.subr.mxu0 0.0
  %4334 = vmatpush1.msra.mxu0 0.0
  %4335 = vmatprep.mubr.f32.mxu0 0.0
  %4336 = vmatmul.mubr.f32.gmra.mrb[0].mxu0 %v4079
  %v4337 = vpop.f32.mrb[0].mxu0
  %v4338 = vadd.f32 %v4193, %v4337
  %v4339 = vpop.f32.mrb[0].mxu0
  %4340 = vmatprep.mubr.f32.mxu0 0.0
  %4341 = vmatmul.mubr.f32.gmra.mrb[0].mxu0 %v4082
  %v4342 = vpop.f32.mrb[0].mxu0
  %v4343 = vadd.f32 %v4198, %v4342
  %v4344 = vpop.f32.mrb[0].mxu0
  %4345 = vmatprep.mubr.f32.mxu0 0.0
  %4346 = vmatmul.mubr.f32.gmra.mrb[0].mxu0 %v4085
  %v4347 = vpop.f32.mrb[0].mxu0
  %v4348 = vadd.f32 %v4203, %v4347
  %v4349 = vpop.f32.mrb[0].mxu0
  %4350 = vmatprep.mubr.f32.mxu0 0.0
  %4351 = vmatmul.mubr.f32.gmra.mrb[0].mxu0 %v4088
  %v4352 = vpop.f32.mrb[0].mxu0
  %v4353 = vadd.f32 %v4208, %v4352
  %v4354 = vpop.f32.mrb[0].mxu0
  %4355 = vmatprep.mubr.f32.mxu0 0.0
  %4356 = vmatmul.mubr.f32.gmra.mrb[0].mxu0 %v4091
  %v4357 = vpop.f32.mrb[0].mxu0
  %v4358 = vadd.f32 %v4213, %v4357
  %v4359 = vpop.f32.mrb[0].mxu0
  %4360 = vmatprep.mubr.f32.mxu0 0.0
  %4361 = vmatmul.mubr.f32.gmra.mrb[0].mxu0 %v4094
  %v4362 = vpop.f32.mrb[0].mxu0
  %v4363 = vadd.f32 %v4218, %v4362
  %v4364 = vpop.f32.mrb[0].mxu0
  %4365 = vmatprep.mubr.f32.mxu0 0.0
  %4366 = vmatmul.mubr.f32.gmra.mrb[0].mxu0 %v4097
  %v4367 = vpop.f32.mrb[0].mxu0
  %v4368 = vadd.f32 %v4223, %v4367
  %v4369 = vpop.f32.mrb[0].mxu0
  %4370 = vmatprep.mubr.f32.mxu0 0.0
  %4371 = vmatmul.mubr.f32.gmra.mrb[0].mxu0 %v4100
  %v4372 = vpop.f32.mrb[0].mxu0
  %v4373 = vadd.f32 %v4228, %v4372
  %v4374 = vpop.f32.mrb[0].mxu0
  %4375 = vmatprep.mubr.f32.mxu0 0.0
  %4376 = vmatmul.mubr.f32.gmra.mrb[0].mxu0 %v4103
  %v4377 = vpop.f32.mrb[0].mxu0
  %v4378 = vadd.f32 %v4233, %v4377
  %v4379 = vpop.f32.mrb[0].mxu0
  %4380 = vmatprep.mubr.f32.mxu0 0.0
  %4381 = vmatmul.mubr.f32.gmra.mrb[0].mxu0 %v4106
  %v4382 = vpop.f32.mrb[0].mxu0
  %v4383 = vadd.f32 %v4238, %v4382
  %v4384 = vpop.f32.mrb[0].mxu0
  %4385 = vmatprep.mubr.f32.mxu0 0.0
  %4386 = vmatmul.mubr.f32.gmra.mrb[0].mxu0 %v4109
  %v4387 = vpop.f32.mrb[0].mxu0
  %v4388 = vadd.f32 %v4243, %v4387
  %v4389 = vpop.f32.mrb[0].mxu0
  %4390 = vmatprep.mubr.f32.mxu0 0.0
  %4391 = vmatmul.mubr.f32.gmra.mrb[0].mxu0 %v4112
  %v4392 = vpop.f32.mrb[0].mxu0
  %v4393 = vadd.f32 %v4248, %v4392
  %v4394 = vpop.f32.mrb[0].mxu0
  %4395 = vmatprep.mubr.f32.mxu0 0.0
  %4396 = vmatmul.mubr.f32.gmra.mrb[0].mxu0 %v4115
  %v4397 = vpop.f32.mrb[0].mxu0
  %v4398 = vadd.f32 %v4253, %v4397
  %v4399 = vpop.f32.mrb[0].mxu0
  %4400 = vmatprep.mubr.f32.mxu0 0.0
  %4401 = vmatmul.mubr.f32.gmra.mrb[0].mxu0 %v4118
  %v4402 = vpop.f32.mrb[0].mxu0
  %v4403 = vadd.f32 %v4258, %v4402
  %v4404 = vpop.f32.mrb[0].mxu0
  %4405 = vmatprep.mubr.f32.mxu0 0.0
  %4406 = vmatmul.mubr.f32.gmra.mrb[0].mxu0 %v4121
  %v4407 = vpop.f32.mrb[0].mxu0
  %v4408 = vadd.f32 %v4263, %v4407
  %v4409 = vpop.f32.mrb[0].mxu0
  %4410 = vmatprep.mubr.f32.mxu0 0.0
  %4411 = vmatmul.mubr.f32.gmra.mrb[0].mxu0 %v4124
  %v4412 = vpop.f32.mrb[0].mxu0
  %v4413 = vadd.f32 %v4268, %v4412
  %v4414 = vpop.f32.mrb[0].mxu0
  %4415 = vdwg.mxu0
  %v4416 = vadd.f32 %v4338, %v2162
  %v4417 = vadd.f32 %v4343, %v2163
  %v4418 = vadd.f32 %v4348, %v2164
  %v4419 = vadd.f32 %v4353, %v2165
  %v4420 = vadd.f32 %v4358, %v2166
  %v4421 = vadd.f32 %v4363, %v2167
  %v4422 = vadd.f32 %v4368, %v2168
  %v4423 = vadd.f32 %v4373, %v2169
  %v4424 = vadd.f32 %v4378, %v2170
  %v4425 = vadd.f32 %v4383, %v2171
  %v4426 = vadd.f32 %v4388, %v2172
  %v4427 = vadd.f32 %v4393, %v2173
  %v4428 = vadd.f32 %v4398, %v2174
  %v4429 = vadd.f32 %v4403, %v2175
  %v4430 = vadd.f32 %v4408, %v2176
  %v4431 = vadd.f32 %v4413, %v2177
  %v4432 = vmax.f32 %v4416, 0.0
  %v4433 = vmax.f32 %v4417, 0.0
  %v4434 = vmax.f32 %v4418, 0.0
  %v4435 = vmax.f32 %v4419, 0.0
  %v4436 = vmax.f32 %v4420, 0.0
  %v4437 = vmax.f32 %v4421, 0.0
  %v4438 = vmax.f32 %v4422, 0.0
  %v4439 = vmax.f32 %v4423, 0.0
  %v4440 = vmax.f32 %v4424, 0.0
  %v4441 = vmax.f32 %v4425, 0.0
  %v4442 = vmax.f32 %v4426, 0.0
  %v4443 = vmax.f32 %v4427, 0.0
  %v4444 = vmax.f32 %v4428, 0.0
  %v4445 = vmax.f32 %v4429, 0.0
  %v4446 = vmax.f32 %v4430, 0.0
  %v4447 = vmax.f32 %v4431, 0.0
  %vm4448 = vcmask 253952
  %4449 = vst.msk [vmem:[#allocation6] sm:$0x1] %vm4448, %v4432
  %v4452 = vunpack.c.l.s4 1983009808
  %v4453 = vunpack.c.0.s8 %v4452
  %v4454 = vlaneseq
  %v4455 = vshrl.u32 %v4454, 7
  %v4456 = vsub.s32 %v4453, %v4455
  %v4457 = vrot.slane %v4432, %v4456
  %v4458 = vrot.slane %v4457, 7
  %v4459 = vrot.slane %v4458, 2
  %4460 = vrot.lane.b32.xlu0 %v4459, 32
  %v4461 = vpop.permute.xlu0 %4460
  %vm4463 = vcmask 516352
  %4464 = vst.msk [vmem:[#allocation6] sm:$0x1] %vm4463, %v4461
  %v4465 = vcombine.high %v4457, %v4457
  %4466 = vrot.lane.b32.xlu0 %v4465, 64
  %v4467 = vpop.permute.xlu0 %4466
  %vm4469 = vcmask 778752
  %4470 = vst.msk [vmem:[#allocation6] sm:$0x1] %vm4469, %v4467
  %v4471 = vrot.slane %v4465, 7
  %v4472 = vrot.slane %v4471, 2
  %4473 = vrot.lane.b32.xlu0 %v4472, 96
  %v4474 = vpop.permute.xlu0 %4473
  %vm4476 = vcmask 1041152
  %4477 = vst.msk [vmem:[#allocation6] sm:$0x1] %vm4476, %v4474
  %v4478 = vcombine.high %v4432, %v4432
  %v4480 = vunpack.c.l.s4 1983009808
  %v4481 = vunpack.c.0.s8 %v4480
  %v4482 = vlaneseq
  %v4483 = vshrl.u32 %v4482, 7
  %v4484 = vsub.s32 %v4481, %v4483
  %v4485 = vrot.slane %v4478, %v4484
  %4487 = vst.msk [vmem:[#allocation6 + $0x2] sm:$0x1] %vm4448, %v4485
  %v4488 = vrot.slane %v4485, 7
  %v4489 = vrot.slane %v4488, 2
  %4490 = vrot.lane.b32.xlu0 %v4489, 32
  %v4491 = vpop.permute.xlu0 %4490
  %4493 = vst.msk [vmem:[#allocation6 + $0x2] sm:$0x1] %vm4463, %v4491
  %v4494 = vcombine.high %v4485, %v4485
  %4495 = vrot.lane.b32.xlu0 %v4494, 64
  %v4496 = vpop.permute.xlu0 %4495
  %4498 = vst.msk [vmem:[#allocation6 + $0x2] sm:$0x1] %vm4469, %v4496
  %v4499 = vrot.slane %v4494, 7
  %v4500 = vrot.slane %v4499, 2
  %4501 = vrot.lane.b32.xlu0 %v4500, 96
  %v4502 = vpop.permute.xlu0 %4501
  %4504 = vst.msk [vmem:[#allocation6 + $0x2] sm:$0x1] %vm4476, %v4502
  %4505 = vst.msk [vmem:[#allocation6 + $0x4] sm:$0x1] %vm4448, %v4433
  %v4508 = vunpack.c.l.s4 1983009808
  %v4509 = vunpack.c.0.s8 %v4508
  %v4510 = vlaneseq
  %v4511 = vshrl.u32 %v4510, 7
  %v4512 = vsub.s32 %v4509, %v4511
  %v4513 = vrot.slane %v4433, %v4512
  %v4514 = vrot.slane %v4513, 7
  %v4515 = vrot.slane %v4514, 2
  %4516 = vrot.lane.b32.xlu0 %v4515, 32
  %v4517 = vpop.permute.xlu0 %4516
  %4519 = vst.msk [vmem:[#allocation6 + $0x4] sm:$0x1] %vm4463, %v4517
  %v4520 = vcombine.high %v4513, %v4513
  %4521 = vrot.lane.b32.xlu0 %v4520, 64
  %v4522 = vpop.permute.xlu0 %4521
  %4524 = vst.msk [vmem:[#allocation6 + $0x4] sm:$0x1] %vm4469, %v4522
  %v4525 = vrot.slane %v4520, 7
  %v4526 = vrot.slane %v4525, 2
  %4527 = vrot.lane.b32.xlu0 %v4526, 96
  %v4528 = vpop.permute.xlu0 %4527
  %4530 = vst.msk [vmem:[#allocation6 + $0x4] sm:$0x1] %vm4476, %v4528
  %v4531 = vcombine.high %v4433, %v4433
  %v4533 = vunpack.c.l.s4 1983009808
  %v4534 = vunpack.c.0.s8 %v4533
  %v4535 = vlaneseq
  %v4536 = vshrl.u32 %v4535, 7
  %v4537 = vsub.s32 %v4534, %v4536
  %v4538 = vrot.slane %v4531, %v4537
  %4540 = vst.msk [vmem:[#allocation6 + $0x6] sm:$0x1] %vm4448, %v4538
  %v4541 = vrot.slane %v4538, 7
  %v4542 = vrot.slane %v4541, 2
  %4543 = vrot.lane.b32.xlu0 %v4542, 32
  %v4544 = vpop.permute.xlu0 %4543
  %4546 = vst.msk [vmem:[#allocation6 + $0x6] sm:$0x1] %vm4463, %v4544
  %v4547 = vcombine.high %v4538, %v4538
  %4548 = vrot.lane.b32.xlu0 %v4547, 64
  %v4549 = vpop.permute.xlu0 %4548
  %4551 = vst.msk [vmem:[#allocation6 + $0x6] sm:$0x1] %vm4469, %v4549
  %v4552 = vrot.slane %v4547, 7
  %v4553 = vrot.slane %v4552, 2
  %4554 = vrot.lane.b32.xlu0 %v4553, 96
  %v4555 = vpop.permute.xlu0 %4554
  %4557 = vst.msk [vmem:[#allocation6 + $0x6] sm:$0x1] %vm4476, %v4555
  %4558 = vst.msk [vmem:[#allocation6 + $0x8] sm:$0x1] %vm4448, %v4434
  %v4561 = vunpack.c.l.s4 1983009808
  %v4562 = vunpack.c.0.s8 %v4561
  %v4563 = vlaneseq
  %v4564 = vshrl.u32 %v4563, 7
  %v4565 = vsub.s32 %v4562, %v4564
  %v4566 = vrot.slane %v4434, %v4565
  %v4567 = vrot.slane %v4566, 7
  %v4568 = vrot.slane %v4567, 2
  %4569 = vrot.lane.b32.xlu0 %v4568, 32
  %v4570 = vpop.permute.xlu0 %4569
  %4572 = vst.msk [vmem:[#allocation6 + $0x8] sm:$0x1] %vm4463, %v4570
  %v4573 = vcombine.high %v4566, %v4566
  %4574 = vrot.lane.b32.xlu0 %v4573, 64
  %v4575 = vpop.permute.xlu0 %4574
  %4577 = vst.msk [vmem:[#allocation6 + $0x8] sm:$0x1] %vm4469, %v4575
  %v4578 = vrot.slane %v4573, 7
  %v4579 = vrot.slane %v4578, 2
  %4580 = vrot.lane.b32.xlu0 %v4579, 96
  %v4581 = vpop.permute.xlu0 %4580
  %4583 = vst.msk [vmem:[#allocation6 + $0x8] sm:$0x1] %vm4476, %v4581
  %v4584 = vcombine.high %v4434, %v4434
  %v4586 = vunpack.c.l.s4 1983009808
  %v4587 = vunpack.c.0.s8 %v4586
  %v4588 = vlaneseq
  %v4589 = vshrl.u32 %v4588, 7
  %v4590 = vsub.s32 %v4587, %v4589
  %v4591 = vrot.slane %v4584, %v4590
  %4593 = vst.msk [vmem:[#allocation6 + $0xa] sm:$0x1] %vm4448, %v4591
  %v4594 = vrot.slane %v4591, 7
  %v4595 = vrot.slane %v4594, 2
  %4596 = vrot.lane.b32.xlu0 %v4595, 32
  %v4597 = vpop.permute.xlu0 %4596
  %4599 = vst.msk [vmem:[#allocation6 + $0xa] sm:$0x1] %vm4463, %v4597
  %v4600 = vcombine.high %v4591, %v4591
  %4601 = vrot.lane.b32.xlu0 %v4600, 64
  %v4602 = vpop.permute.xlu0 %4601
  %4604 = vst.msk [vmem:[#allocation6 + $0xa] sm:$0x1] %vm4469, %v4602
  %v4605 = vrot.slane %v4600, 7
  %v4606 = vrot.slane %v4605, 2
  %4607 = vrot.lane.b32.xlu0 %v4606, 96
  %v4608 = vpop.permute.xlu0 %4607
  %4610 = vst.msk [vmem:[#allocation6 + $0xa] sm:$0x1] %vm4476, %v4608
  %4611 = vst.msk [vmem:[#allocation6 + $0xc] sm:$0x1] %vm4448, %v4435
  %v4614 = vunpack.c.l.s4 1983009808
  %v4615 = vunpack.c.0.s8 %v4614
  %v4616 = vlaneseq
  %v4617 = vshrl.u32 %v4616, 7
  %v4618 = vsub.s32 %v4615, %v4617
  %v4619 = vrot.slane %v4435, %v4618
  %v4620 = vrot.slane %v4619, 7
  %v4621 = vrot.slane %v4620, 2
  %4622 = vrot.lane.b32.xlu0 %v4621, 32
  %v4623 = vpop.permute.xlu0 %4622
  %4625 = vst.msk [vmem:[#allocation6 + $0xc] sm:$0x1] %vm4463, %v4623
  %v4626 = vcombine.high %v4619, %v4619
  %4627 = vrot.lane.b32.xlu0 %v4626, 64
  %v4628 = vpop.permute.xlu0 %4627
  %4630 = vst.msk [vmem:[#allocation6 + $0xc] sm:$0x1] %vm4469, %v4628
  %v4631 = vrot.slane %v4626, 7
  %v4632 = vrot.slane %v4631, 2
  %4633 = vrot.lane.b32.xlu0 %v4632, 96
  %v4634 = vpop.permute.xlu0 %4633
  %4636 = vst.msk [vmem:[#allocation6 + $0xc] sm:$0x1] %vm4476, %v4634
  %v4637 = vcombine.high %v4435, %v4435
  %v4639 = vunpack.c.l.s4 1983009808
  %v4640 = vunpack.c.0.s8 %v4639
  %v4641 = vlaneseq
  %v4642 = vshrl.u32 %v4641, 7
  %v4643 = vsub.s32 %v4640, %v4642
  %v4644 = vrot.slane %v4637, %v4643
  %4646 = vst.msk [vmem:[#allocation6 + $0xe] sm:$0x1] %vm4448, %v4644
  %v4647 = vrot.slane %v4644, 7
  %v4648 = vrot.slane %v4647, 2
  %4649 = vrot.lane.b32.xlu0 %v4648, 32
  %v4650 = vpop.permute.xlu0 %4649
  %4652 = vst.msk [vmem:[#allocation6 + $0xe] sm:$0x1] %vm4463, %v4650
  %v4653 = vcombine.high %v4644, %v4644
  %4654 = vrot.lane.b32.xlu0 %v4653, 64
  %v4655 = vpop.permute.xlu0 %4654
  %4657 = vst.msk [vmem:[#allocation6 + $0xe] sm:$0x1] %vm4469, %v4655
  %v4658 = vrot.slane %v4653, 7
  %v4659 = vrot.slane %v4658, 2
  %4660 = vrot.lane.b32.xlu0 %v4659, 96
  %v4661 = vpop.permute.xlu0 %4660
  %4663 = vst.msk [vmem:[#allocation6 + $0xe] sm:$0x1] %vm4476, %v4661
  %4664 = vst.msk [vmem:[#allocation6 + $0x10] sm:$0x1] %vm4448, %v4436
  %v4667 = vunpack.c.l.s4 1983009808
  %v4668 = vunpack.c.0.s8 %v4667
  %v4669 = vlaneseq
  %v4670 = vshrl.u32 %v4669, 7
  %v4671 = vsub.s32 %v4668, %v4670
  %v4672 = vrot.slane %v4436, %v4671
  %v4673 = vrot.slane %v4672, 7
  %v4674 = vrot.slane %v4673, 2
  %4675 = vrot.lane.b32.xlu0 %v4674, 32
  %v4676 = vpop.permute.xlu0 %4675
  %4678 = vst.msk [vmem:[#allocation6 + $0x10] sm:$0x1] %vm4463, %v4676
  %v4679 = vcombine.high %v4672, %v4672
  %4680 = vrot.lane.b32.xlu0 %v4679, 64
  %v4681 = vpop.permute.xlu0 %4680
  %4683 = vst.msk [vmem:[#allocation6 + $0x10] sm:$0x1] %vm4469, %v4681
  %v4684 = vrot.slane %v4679, 7
  %v4685 = vrot.slane %v4684, 2
  %4686 = vrot.lane.b32.xlu0 %v4685, 96
  %v4687 = vpop.permute.xlu0 %4686
  %4689 = vst.msk [vmem:[#allocation6 + $0x10] sm:$0x1] %vm4476, %v4687
  %v4690 = vcombine.high %v4436, %v4436
  %v4692 = vunpack.c.l.s4 1983009808
  %v4693 = vunpack.c.0.s8 %v4692
  %v4694 = vlaneseq
  %v4695 = vshrl.u32 %v4694, 7
  %v4696 = vsub.s32 %v4693, %v4695
  %v4697 = vrot.slane %v4690, %v4696
  %4699 = vst.msk [vmem:[#allocation6 + $0x12] sm:$0x1] %vm4448, %v4697
  %v4700 = vrot.slane %v4697, 7
  %v4701 = vrot.slane %v4700, 2
  %4702 = vrot.lane.b32.xlu0 %v4701, 32
  %v4703 = vpop.permute.xlu0 %4702
  %4705 = vst.msk [vmem:[#allocation6 + $0x12] sm:$0x1] %vm4463, %v4703
  %v4706 = vcombine.high %v4697, %v4697
  %4707 = vrot.lane.b32.xlu0 %v4706, 64
  %v4708 = vpop.permute.xlu0 %4707
  %4710 = vst.msk [vmem:[#allocation6 + $0x12] sm:$0x1] %vm4469, %v4708
  %v4711 = vrot.slane %v4706, 7
  %v4712 = vrot.slane %v4711, 2
  %4713 = vrot.lane.b32.xlu0 %v4712, 96
  %v4714 = vpop.permute.xlu0 %4713
  %4716 = vst.msk [vmem:[#allocation6 + $0x12] sm:$0x1] %vm4476, %v4714
  %4717 = vst.msk [vmem:[#allocation6 + $0x14] sm:$0x1] %vm4448, %v4437
  %v4720 = vunpack.c.l.s4 1983009808
  %v4721 = vunpack.c.0.s8 %v4720
  %v4722 = vlaneseq
  %v4723 = vshrl.u32 %v4722, 7
  %v4724 = vsub.s32 %v4721, %v4723
  %v4725 = vrot.slane %v4437, %v4724
  %v4726 = vrot.slane %v4725, 7
  %v4727 = vrot.slane %v4726, 2
  %4728 = vrot.lane.b32.xlu0 %v4727, 32
  %v4729 = vpop.permute.xlu0 %4728
  %4731 = vst.msk [vmem:[#allocation6 + $0x14] sm:$0x1] %vm4463, %v4729
  %v4732 = vcombine.high %v4725, %v4725
  %4733 = vrot.lane.b32.xlu0 %v4732, 64
  %v4734 = vpop.permute.xlu0 %4733
  %4736 = vst.msk [vmem:[#allocation6 + $0x14] sm:$0x1] %vm4469, %v4734
  %v4737 = vrot.slane %v4732, 7
  %v4738 = vrot.slane %v4737, 2
  %4739 = vrot.lane.b32.xlu0 %v4738, 96
  %v4740 = vpop.permute.xlu0 %4739
  %4742 = vst.msk [vmem:[#allocation6 + $0x14] sm:$0x1] %vm4476, %v4740
  %v4743 = vcombine.high %v4437, %v4437
  %v4745 = vunpack.c.l.s4 1983009808
  %v4746 = vunpack.c.0.s8 %v4745
  %v4747 = vlaneseq
  %v4748 = vshrl.u32 %v4747, 7
  %v4749 = vsub.s32 %v4746, %v4748
  %v4750 = vrot.slane %v4743, %v4749
  %4752 = vst.msk [vmem:[#allocation6 + $0x16] sm:$0x1] %vm4448, %v4750
  %v4753 = vrot.slane %v4750, 7
  %v4754 = vrot.slane %v4753, 2
  %4755 = vrot.lane.b32.xlu0 %v4754, 32
  %v4756 = vpop.permute.xlu0 %4755
  %4758 = vst.msk [vmem:[#allocation6 + $0x16] sm:$0x1] %vm4463, %v4756
  %v4759 = vcombine.high %v4750, %v4750
  %4760 = vrot.lane.b32.xlu0 %v4759, 64
  %v4761 = vpop.permute.xlu0 %4760
  %4763 = vst.msk [vmem:[#allocation6 + $0x16] sm:$0x1] %vm4469, %v4761
  %v4764 = vrot.slane %v4759, 7
  %v4765 = vrot.slane %v4764, 2
  %4766 = vrot.lane.b32.xlu0 %v4765, 96
  %v4767 = vpop.permute.xlu0 %4766
  %4769 = vst.msk [vmem:[#allocation6 + $0x16] sm:$0x1] %vm4476, %v4767
  %4770 = vst.msk [vmem:[#allocation6 + $0x18] sm:$0x1] %vm4448, %v4438
  %v4773 = vunpack.c.l.s4 1983009808
  %v4774 = vunpack.c.0.s8 %v4773
  %v4775 = vlaneseq
  %v4776 = vshrl.u32 %v4775, 7
  %v4777 = vsub.s32 %v4774, %v4776
  %v4778 = vrot.slane %v4438, %v4777
  %v4779 = vrot.slane %v4778, 7
  %v4780 = vrot.slane %v4779, 2
  %4781 = vrot.lane.b32.xlu0 %v4780, 32
  %v4782 = vpop.permute.xlu0 %4781
  %4784 = vst.msk [vmem:[#allocation6 + $0x18] sm:$0x1] %vm4463, %v4782
  %v4785 = vcombine.high %v4778, %v4778
  %4786 = vrot.lane.b32.xlu0 %v4785, 64
  %v4787 = vpop.permute.xlu0 %4786
  %4789 = vst.msk [vmem:[#allocation6 + $0x18] sm:$0x1] %vm4469, %v4787
  %v4790 = vrot.slane %v4785, 7
  %v4791 = vrot.slane %v4790, 2
  %4792 = vrot.lane.b32.xlu0 %v4791, 96
  %v4793 = vpop.permute.xlu0 %4792
  %4795 = vst.msk [vmem:[#allocation6 + $0x18] sm:$0x1] %vm4476, %v4793
  %v4796 = vcombine.high %v4438, %v4438
  %v4798 = vunpack.c.l.s4 1983009808
  %v4799 = vunpack.c.0.s8 %v4798
  %v4800 = vlaneseq
  %v4801 = vshrl.u32 %v4800, 7
  %v4802 = vsub.s32 %v4799, %v4801
  %v4803 = vrot.slane %v4796, %v4802
  %4805 = vst.msk [vmem:[#allocation6 + $0x1a] sm:$0x1] %vm4448, %v4803
  %v4806 = vrot.slane %v4803, 7
  %v4807 = vrot.slane %v4806, 2
  %4808 = vrot.lane.b32.xlu0 %v4807, 32
  %v4809 = vpop.permute.xlu0 %4808
  %4811 = vst.msk [vmem:[#allocation6 + $0x1a] sm:$0x1] %vm4463, %v4809
  %v4812 = vcombine.high %v4803, %v4803
  %4813 = vrot.lane.b32.xlu0 %v4812, 64
  %v4814 = vpop.permute.xlu0 %4813
  %4816 = vst.msk [vmem:[#allocation6 + $0x1a] sm:$0x1] %vm4469, %v4814
  %v4817 = vrot.slane %v4812, 7
  %v4818 = vrot.slane %v4817, 2
  %4819 = vrot.lane.b32.xlu0 %v4818, 96
  %v4820 = vpop.permute.xlu0 %4819
  %4822 = vst.msk [vmem:[#allocation6 + $0x1a] sm:$0x1] %vm4476, %v4820
  %4823 = vst.msk [vmem:[#allocation6 + $0x1c] sm:$0x1] %vm4448, %v4439
  %v4826 = vunpack.c.l.s4 1983009808
  %v4827 = vunpack.c.0.s8 %v4826
  %v4828 = vlaneseq
  %v4829 = vshrl.u32 %v4828, 7
  %v4830 = vsub.s32 %v4827, %v4829
  %v4831 = vrot.slane %v4439, %v4830
  %v4832 = vrot.slane %v4831, 7
  %v4833 = vrot.slane %v4832, 2
  %4834 = vrot.lane.b32.xlu0 %v4833, 32
  %v4835 = vpop.permute.xlu0 %4834
  %4837 = vst.msk [vmem:[#allocation6 + $0x1c] sm:$0x1] %vm4463, %v4835
  %v4838 = vcombine.high %v4831, %v4831
  %4839 = vrot.lane.b32.xlu0 %v4838, 64
  %v4840 = vpop.permute.xlu0 %4839
  %4842 = vst.msk [vmem:[#allocation6 + $0x1c] sm:$0x1] %vm4469, %v4840
  %v4843 = vrot.slane %v4838, 7
  %v4844 = vrot.slane %v4843, 2
  %4845 = vrot.lane.b32.xlu0 %v4844, 96
  %v4846 = vpop.permute.xlu0 %4845
  %4848 = vst.msk [vmem:[#allocation6 + $0x1c] sm:$0x1] %vm4476, %v4846
  %v4849 = vcombine.high %v4439, %v4439
  %v4851 = vunpack.c.l.s4 1983009808
  %v4852 = vunpack.c.0.s8 %v4851
  %v4853 = vlaneseq
  %v4854 = vshrl.u32 %v4853, 7
  %v4855 = vsub.s32 %v4852, %v4854
  %v4856 = vrot.slane %v4849, %v4855
  %4858 = vst.msk [vmem:[#allocation6 + $0x1e] sm:$0x1] %vm4448, %v4856
  %v4859 = vrot.slane %v4856, 7
  %v4860 = vrot.slane %v4859, 2
  %4861 = vrot.lane.b32.xlu0 %v4860, 32
  %v4862 = vpop.permute.xlu0 %4861
  %4864 = vst.msk [vmem:[#allocation6 + $0x1e] sm:$0x1] %vm4463, %v4862
  %v4865 = vcombine.high %v4856, %v4856
  %4866 = vrot.lane.b32.xlu0 %v4865, 64
  %v4867 = vpop.permute.xlu0 %4866
  %4869 = vst.msk [vmem:[#allocation6 + $0x1e] sm:$0x1] %vm4469, %v4867
  %v4870 = vrot.slane %v4865, 7
  %v4871 = vrot.slane %v4870, 2
  %4872 = vrot.lane.b32.xlu0 %v4871, 96
  %v4873 = vpop.permute.xlu0 %4872
  %4875 = vst.msk [vmem:[#allocation6 + $0x1e] sm:$0x1] %vm4476, %v4873
  %4876 = vst.msk [vmem:[#allocation6 + $0x1] sm:$0x1] %vm4448, %v4440
  %v4879 = vunpack.c.l.s4 1983009808
  %v4880 = vunpack.c.0.s8 %v4879
  %v4881 = vlaneseq
  %v4882 = vshrl.u32 %v4881, 7
  %v4883 = vsub.s32 %v4880, %v4882
  %v4884 = vrot.slane %v4440, %v4883
  %v4885 = vrot.slane %v4884, 7
  %v4886 = vrot.slane %v4885, 2
  %4887 = vrot.lane.b32.xlu0 %v4886, 32
  %v4888 = vpop.permute.xlu0 %4887
  %4890 = vst.msk [vmem:[#allocation6 + $0x1] sm:$0x1] %vm4463, %v4888
  %v4891 = vcombine.high %v4884, %v4884
  %4892 = vrot.lane.b32.xlu0 %v4891, 64
  %v4893 = vpop.permute.xlu0 %4892
  %4895 = vst.msk [vmem:[#allocation6 + $0x1] sm:$0x1] %vm4469, %v4893
  %v4896 = vrot.slane %v4891, 7
  %v4897 = vrot.slane %v4896, 2
  %4898 = vrot.lane.b32.xlu0 %v4897, 96
  %v4899 = vpop.permute.xlu0 %4898
  %4901 = vst.msk [vmem:[#allocation6 + $0x1] sm:$0x1] %vm4476, %v4899
  %v4902 = vcombine.high %v4440, %v4440
  %v4904 = vunpack.c.l.s4 1983009808
  %v4905 = vunpack.c.0.s8 %v4904
  %v4906 = vlaneseq
  %v4907 = vshrl.u32 %v4906, 7
  %v4908 = vsub.s32 %v4905, %v4907
  %v4909 = vrot.slane %v4902, %v4908
  %4911 = vst.msk [vmem:[#allocation6 + $0x3] sm:$0x1] %vm4448, %v4909
  %v4912 = vrot.slane %v4909, 7
  %v4913 = vrot.slane %v4912, 2
  %4914 = vrot.lane.b32.xlu0 %v4913, 32
  %v4915 = vpop.permute.xlu0 %4914
  %4917 = vst.msk [vmem:[#allocation6 + $0x3] sm:$0x1] %vm4463, %v4915
  %v4918 = vcombine.high %v4909, %v4909
  %4919 = vrot.lane.b32.xlu0 %v4918, 64
  %v4920 = vpop.permute.xlu0 %4919
  %4922 = vst.msk [vmem:[#allocation6 + $0x3] sm:$0x1] %vm4469, %v4920
  %v4923 = vrot.slane %v4918, 7
  %v4924 = vrot.slane %v4923, 2
  %4925 = vrot.lane.b32.xlu0 %v4924, 96
  %v4926 = vpop.permute.xlu0 %4925
  %4928 = vst.msk [vmem:[#allocation6 + $0x3] sm:$0x1] %vm4476, %v4926
  %4929 = vst.msk [vmem:[#allocation6 + $0x5] sm:$0x1] %vm4448, %v4441
  %v4932 = vunpack.c.l.s4 1983009808
  %v4933 = vunpack.c.0.s8 %v4932
  %v4934 = vlaneseq
  %v4935 = vshrl.u32 %v4934, 7
  %v4936 = vsub.s32 %v4933, %v4935
  %v4937 = vrot.slane %v4441, %v4936
  %v4938 = vrot.slane %v4937, 7
  %v4939 = vrot.slane %v4938, 2
  %4940 = vrot.lane.b32.xlu0 %v4939, 32
  %v4941 = vpop.permute.xlu0 %4940
  %4943 = vst.msk [vmem:[#allocation6 + $0x5] sm:$0x1] %vm4463, %v4941
  %v4944 = vcombine.high %v4937, %v4937
  %4945 = vrot.lane.b32.xlu0 %v4944, 64
  %v4946 = vpop.permute.xlu0 %4945
  %4948 = vst.msk [vmem:[#allocation6 + $0x5] sm:$0x1] %vm4469, %v4946
  %v4949 = vrot.slane %v4944, 7
  %v4950 = vrot.slane %v4949, 2
  %4951 = vrot.lane.b32.xlu0 %v4950, 96
  %v4952 = vpop.permute.xlu0 %4951
  %4954 = vst.msk [vmem:[#allocation6 + $0x5] sm:$0x1] %vm4476, %v4952
  %v4955 = vcombine.high %v4441, %v4441
  %v4957 = vunpack.c.l.s4 1983009808
  %v4958 = vunpack.c.0.s8 %v4957
  %v4959 = vlaneseq
  %v4960 = vshrl.u32 %v4959, 7
  %v4961 = vsub.s32 %v4958, %v4960
  %v4962 = vrot.slane %v4955, %v4961
  %4964 = vst.msk [vmem:[#allocation6 + $0x7] sm:$0x1] %vm4448, %v4962
  %v4965 = vrot.slane %v4962, 7
  %v4966 = vrot.slane %v4965, 2
  %4967 = vrot.lane.b32.xlu0 %v4966, 32
  %v4968 = vpop.permute.xlu0 %4967
  %4970 = vst.msk [vmem:[#allocation6 + $0x7] sm:$0x1] %vm4463, %v4968
  %v4971 = vcombine.high %v4962, %v4962
  %4972 = vrot.lane.b32.xlu0 %v4971, 64
  %v4973 = vpop.permute.xlu0 %4972
  %4975 = vst.msk [vmem:[#allocation6 + $0x7] sm:$0x1] %vm4469, %v4973
  %v4976 = vrot.slane %v4971, 7
  %v4977 = vrot.slane %v4976, 2
  %4978 = vrot.lane.b32.xlu0 %v4977, 96
  %v4979 = vpop.permute.xlu0 %4978
  %4981 = vst.msk [vmem:[#allocation6 + $0x7] sm:$0x1] %vm4476, %v4979
  %4982 = vst.msk [vmem:[#allocation6 + $0x9] sm:$0x1] %vm4448, %v4442
  %v4985 = vunpack.c.l.s4 1983009808
  %v4986 = vunpack.c.0.s8 %v4985
  %v4987 = vlaneseq
  %v4988 = vshrl.u32 %v4987, 7
  %v4989 = vsub.s32 %v4986, %v4988
  %v4990 = vrot.slane %v4442, %v4989
  %v4991 = vrot.slane %v4990, 7
  %v4992 = vrot.slane %v4991, 2
  %4993 = vrot.lane.b32.xlu0 %v4992, 32
  %v4994 = vpop.permute.xlu0 %4993
  %4996 = vst.msk [vmem:[#allocation6 + $0x9] sm:$0x1] %vm4463, %v4994
  %v4997 = vcombine.high %v4990, %v4990
  %4998 = vrot.lane.b32.xlu0 %v4997, 64
  %v4999 = vpop.permute.xlu0 %4998
  %5001 = vst.msk [vmem:[#allocation6 + $0x9] sm:$0x1] %vm4469, %v4999
  %v5002 = vrot.slane %v4997, 7
  %v5003 = vrot.slane %v5002, 2
  %5004 = vrot.lane.b32.xlu0 %v5003, 96
  %v5005 = vpop.permute.xlu0 %5004
  %5007 = vst.msk [vmem:[#allocation6 + $0x9] sm:$0x1] %vm4476, %v5005
  %v5008 = vcombine.high %v4442, %v4442
  %v5010 = vunpack.c.l.s4 1983009808
  %v5011 = vunpack.c.0.s8 %v5010
  %v5012 = vlaneseq
  %v5013 = vshrl.u32 %v5012, 7
  %v5014 = vsub.s32 %v5011, %v5013
  %v5015 = vrot.slane %v5008, %v5014
  %5017 = vst.msk [vmem:[#allocation6 + $0xb] sm:$0x1] %vm4448, %v5015
  %v5018 = vrot.slane %v5015, 7
  %v5019 = vrot.slane %v5018, 2
  %5020 = vrot.lane.b32.xlu0 %v5019, 32
  %v5021 = vpop.permute.xlu0 %5020
  %5023 = vst.msk [vmem:[#allocation6 + $0xb] sm:$0x1] %vm4463, %v5021
  %v5024 = vcombine.high %v5015, %v5015
  %5025 = vrot.lane.b32.xlu0 %v5024, 64
  %v5026 = vpop.permute.xlu0 %5025
  %5028 = vst.msk [vmem:[#allocation6 + $0xb] sm:$0x1] %vm4469, %v5026
  %v5029 = vrot.slane %v5024, 7
  %v5030 = vrot.slane %v5029, 2
  %5031 = vrot.lane.b32.xlu0 %v5030, 96
  %v5032 = vpop.permute.xlu0 %5031
  %5034 = vst.msk [vmem:[#allocation6 + $0xb] sm:$0x1] %vm4476, %v5032
  %5035 = vst.msk [vmem:[#allocation6 + $0xd] sm:$0x1] %vm4448, %v4443
  %v5038 = vunpack.c.l.s4 1983009808
  %v5039 = vunpack.c.0.s8 %v5038
  %v5040 = vlaneseq
  %v5041 = vshrl.u32 %v5040, 7
  %v5042 = vsub.s32 %v5039, %v5041
  %v5043 = vrot.slane %v4443, %v5042
  %v5044 = vrot.slane %v5043, 7
  %v5045 = vrot.slane %v5044, 2
  %5046 = vrot.lane.b32.xlu0 %v5045, 32
  %v5047 = vpop.permute.xlu0 %5046
  %5049 = vst.msk [vmem:[#allocation6 + $0xd] sm:$0x1] %vm4463, %v5047
  %v5050 = vcombine.high %v5043, %v5043
  %5051 = vrot.lane.b32.xlu0 %v5050, 64
  %v5052 = vpop.permute.xlu0 %5051
  %5054 = vst.msk [vmem:[#allocation6 + $0xd] sm:$0x1] %vm4469, %v5052
  %v5055 = vrot.slane %v5050, 7
  %v5056 = vrot.slane %v5055, 2
  %5057 = vrot.lane.b32.xlu0 %v5056, 96
  %v5058 = vpop.permute.xlu0 %5057
  %5060 = vst.msk [vmem:[#allocation6 + $0xd] sm:$0x1] %vm4476, %v5058
  %v5061 = vcombine.high %v4443, %v4443
  %v5063 = vunpack.c.l.s4 1983009808
  %v5064 = vunpack.c.0.s8 %v5063
  %v5065 = vlaneseq
  %v5066 = vshrl.u32 %v5065, 7
  %v5067 = vsub.s32 %v5064, %v5066
  %v5068 = vrot.slane %v5061, %v5067
  %5070 = vst.msk [vmem:[#allocation6 + $0xf] sm:$0x1] %vm4448, %v5068
  %v5071 = vrot.slane %v5068, 7
  %v5072 = vrot.slane %v5071, 2
  %5073 = vrot.lane.b32.xlu0 %v5072, 32
  %v5074 = vpop.permute.xlu0 %5073
  %5076 = vst.msk [vmem:[#allocation6 + $0xf] sm:$0x1] %vm4463, %v5074
  %v5077 = vcombine.high %v5068, %v5068
  %5078 = vrot.lane.b32.xlu0 %v5077, 64
  %v5079 = vpop.permute.xlu0 %5078
  %5081 = vst.msk [vmem:[#allocation6 + $0xf] sm:$0x1] %vm4469, %v5079
  %v5082 = vrot.slane %v5077, 7
  %v5083 = vrot.slane %v5082, 2
  %5084 = vrot.lane.b32.xlu0 %v5083, 96
  %v5085 = vpop.permute.xlu0 %5084
  %5087 = vst.msk [vmem:[#allocation6 + $0xf] sm:$0x1] %vm4476, %v5085
  %5088 = vst.msk [vmem:[#allocation6 + $0x11] sm:$0x1] %vm4448, %v4444
  %v5091 = vunpack.c.l.s4 1983009808
  %v5092 = vunpack.c.0.s8 %v5091
  %v5093 = vlaneseq
  %v5094 = vshrl.u32 %v5093, 7
  %v5095 = vsub.s32 %v5092, %v5094
  %v5096 = vrot.slane %v4444, %v5095
  %v5097 = vrot.slane %v5096, 7
  %v5098 = vrot.slane %v5097, 2
  %5099 = vrot.lane.b32.xlu0 %v5098, 32
  %v5100 = vpop.permute.xlu0 %5099
  %5102 = vst.msk [vmem:[#allocation6 + $0x11] sm:$0x1] %vm4463, %v5100
  %v5103 = vcombine.high %v5096, %v5096
  %5104 = vrot.lane.b32.xlu0 %v5103, 64
  %v5105 = vpop.permute.xlu0 %5104
  %5107 = vst.msk [vmem:[#allocation6 + $0x11] sm:$0x1] %vm4469, %v5105
  %v5108 = vrot.slane %v5103, 7
  %v5109 = vrot.slane %v5108, 2
  %5110 = vrot.lane.b32.xlu0 %v5109, 96
  %v5111 = vpop.permute.xlu0 %5110
  %5113 = vst.msk [vmem:[#allocation6 + $0x11] sm:$0x1] %vm4476, %v5111
  %v5114 = vcombine.high %v4444, %v4444
  %v5116 = vunpack.c.l.s4 1983009808
  %v5117 = vunpack.c.0.s8 %v5116
  %v5118 = vlaneseq
  %v5119 = vshrl.u32 %v5118, 7
  %v5120 = vsub.s32 %v5117, %v5119
  %v5121 = vrot.slane %v5114, %v5120
  %5123 = vst.msk [vmem:[#allocation6 + $0x13] sm:$0x1] %vm4448, %v5121
  %v5124 = vrot.slane %v5121, 7
  %v5125 = vrot.slane %v5124, 2
  %5126 = vrot.lane.b32.xlu0 %v5125, 32
  %v5127 = vpop.permute.xlu0 %5126
  %5129 = vst.msk [vmem:[#allocation6 + $0x13] sm:$0x1] %vm4463, %v5127
  %v5130 = vcombine.high %v5121, %v5121
  %5131 = vrot.lane.b32.xlu0 %v5130, 64
  %v5132 = vpop.permute.xlu0 %5131
  %5134 = vst.msk [vmem:[#allocation6 + $0x13] sm:$0x1] %vm4469, %v5132
  %v5135 = vrot.slane %v5130, 7
  %v5136 = vrot.slane %v5135, 2
  %5137 = vrot.lane.b32.xlu0 %v5136, 96
  %v5138 = vpop.permute.xlu0 %5137
  %5140 = vst.msk [vmem:[#allocation6 + $0x13] sm:$0x1] %vm4476, %v5138
  %5141 = vst.msk [vmem:[#allocation6 + $0x15] sm:$0x1] %vm4448, %v4445
  %v5144 = vunpack.c.l.s4 1983009808
  %v5145 = vunpack.c.0.s8 %v5144
  %v5146 = vlaneseq
  %v5147 = vshrl.u32 %v5146, 7
  %v5148 = vsub.s32 %v5145, %v5147
  %v5149 = vrot.slane %v4445, %v5148
  %v5150 = vrot.slane %v5149, 7
  %v5151 = vrot.slane %v5150, 2
  %5152 = vrot.lane.b32.xlu0 %v5151, 32
  %v5153 = vpop.permute.xlu0 %5152
  %5155 = vst.msk [vmem:[#allocation6 + $0x15] sm:$0x1] %vm4463, %v5153
  %v5156 = vcombine.high %v5149, %v5149
  %5157 = vrot.lane.b32.xlu0 %v5156, 64
  %v5158 = vpop.permute.xlu0 %5157
  %5160 = vst.msk [vmem:[#allocation6 + $0x15] sm:$0x1] %vm4469, %v5158
  %v5161 = vrot.slane %v5156, 7
  %v5162 = vrot.slane %v5161, 2
  %5163 = vrot.lane.b32.xlu0 %v5162, 96
  %v5164 = vpop.permute.xlu0 %5163
  %5166 = vst.msk [vmem:[#allocation6 + $0x15] sm:$0x1] %vm4476, %v5164
  %v5167 = vcombine.high %v4445, %v4445
  %v5169 = vunpack.c.l.s4 1983009808
  %v5170 = vunpack.c.0.s8 %v5169
  %v5171 = vlaneseq
  %v5172 = vshrl.u32 %v5171, 7
  %v5173 = vsub.s32 %v5170, %v5172
  %v5174 = vrot.slane %v5167, %v5173
  %5176 = vst.msk [vmem:[#allocation6 + $0x17] sm:$0x1] %vm4448, %v5174
  %v5177 = vrot.slane %v5174, 7
  %v5178 = vrot.slane %v5177, 2
  %5179 = vrot.lane.b32.xlu0 %v5178, 32
  %v5180 = vpop.permute.xlu0 %5179
  %5182 = vst.msk [vmem:[#allocation6 + $0x17] sm:$0x1] %vm4463, %v5180
  %v5183 = vcombine.high %v5174, %v5174
  %5184 = vrot.lane.b32.xlu0 %v5183, 64
  %v5185 = vpop.permute.xlu0 %5184
  %5187 = vst.msk [vmem:[#allocation6 + $0x17] sm:$0x1] %vm4469, %v5185
  %v5188 = vrot.slane %v5183, 7
  %v5189 = vrot.slane %v5188, 2
  %5190 = vrot.lane.b32.xlu0 %v5189, 96
  %v5191 = vpop.permute.xlu0 %5190
  %5193 = vst.msk [vmem:[#allocation6 + $0x17] sm:$0x1] %vm4476, %v5191
  %5194 = vst.msk [vmem:[#allocation6 + $0x19] sm:$0x1] %vm4448, %v4446
  %v5197 = vunpack.c.l.s4 1983009808
  %v5198 = vunpack.c.0.s8 %v5197
  %v5199 = vlaneseq
  %v5200 = vshrl.u32 %v5199, 7
  %v5201 = vsub.s32 %v5198, %v5200
  %v5202 = vrot.slane %v4446, %v5201
  %v5203 = vrot.slane %v5202, 7
  %v5204 = vrot.slane %v5203, 2
  %5205 = vrot.lane.b32.xlu0 %v5204, 32
  %v5206 = vpop.permute.xlu0 %5205
  %5208 = vst.msk [vmem:[#allocation6 + $0x19] sm:$0x1] %vm4463, %v5206
  %v5209 = vcombine.high %v5202, %v5202
  %5210 = vrot.lane.b32.xlu0 %v5209, 64
  %v5211 = vpop.permute.xlu0 %5210
  %5213 = vst.msk [vmem:[#allocation6 + $0x19] sm:$0x1] %vm4469, %v5211
  %v5214 = vrot.slane %v5209, 7
  %v5215 = vrot.slane %v5214, 2
  %5216 = vrot.lane.b32.xlu0 %v5215, 96
  %v5217 = vpop.permute.xlu0 %5216
  %5219 = vst.msk [vmem:[#allocation6 + $0x19] sm:$0x1] %vm4476, %v5217
  %v5220 = vcombine.high %v4446, %v4446
  %v5222 = vunpack.c.l.s4 1983009808
  %v5223 = vunpack.c.0.s8 %v5222
  %v5224 = vlaneseq
  %v5225 = vshrl.u32 %v5224, 7
  %v5226 = vsub.s32 %v5223, %v5225
  %v5227 = vrot.slane %v5220, %v5226
  %5229 = vst.msk [vmem:[#allocation6 + $0x1b] sm:$0x1] %vm4448, %v5227
  %v5230 = vrot.slane %v5227, 7
  %v5231 = vrot.slane %v5230, 2
  %5232 = vrot.lane.b32.xlu0 %v5231, 32
  %v5233 = vpop.permute.xlu0 %5232
  %5235 = vst.msk [vmem:[#allocation6 + $0x1b] sm:$0x1] %vm4463, %v5233
  %v5236 = vcombine.high %v5227, %v5227
  %5237 = vrot.lane.b32.xlu0 %v5236, 64
  %v5238 = vpop.permute.xlu0 %5237
  %5240 = vst.msk [vmem:[#allocation6 + $0x1b] sm:$0x1] %vm4469, %v5238
  %v5241 = vrot.slane %v5236, 7
  %v5242 = vrot.slane %v5241, 2
  %5243 = vrot.lane.b32.xlu0 %v5242, 96
  %v5244 = vpop.permute.xlu0 %5243
  %5246 = vst.msk [vmem:[#allocation6 + $0x1b] sm:$0x1] %vm4476, %v5244
  %5247 = vst.msk [vmem:[#allocation6 + $0x1d] sm:$0x1] %vm4448, %v4447
  %v5250 = vunpack.c.l.s4 1983009808
  %v5251 = vunpack.c.0.s8 %v5250
  %v5252 = vlaneseq
  %v5253 = vshrl.u32 %v5252, 7
  %v5254 = vsub.s32 %v5251, %v5253
  %v5255 = vrot.slane %v4447, %v5254
  %v5256 = vrot.slane %v5255, 7
  %v5257 = vrot.slane %v5256, 2
  %5258 = vrot.lane.b32.xlu0 %v5257, 32
  %v5259 = vpop.permute.xlu0 %5258
  %5261 = vst.msk [vmem:[#allocation6 + $0x1d] sm:$0x1] %vm4463, %v5259
  %v5262 = vcombine.high %v5255, %v5255
  %5263 = vrot.lane.b32.xlu0 %v5262, 64
  %v5264 = vpop.permute.xlu0 %5263
  %5266 = vst.msk [vmem:[#allocation6 + $0x1d] sm:$0x1] %vm4469, %v5264
  %v5267 = vrot.slane %v5262, 7
  %v5268 = vrot.slane %v5267, 2
  %5269 = vrot.lane.b32.xlu0 %v5268, 96
  %v5270 = vpop.permute.xlu0 %5269
  %5272 = vst.msk [vmem:[#allocation6 + $0x1d] sm:$0x1] %vm4476, %v5270
  %v5273 = vcombine.high %v4447, %v4447
  %v5275 = vunpack.c.l.s4 1983009808
  %v5276 = vunpack.c.0.s8 %v5275
  %v5277 = vlaneseq
  %v5278 = vshrl.u32 %v5277, 7
  %v5279 = vsub.s32 %v5276, %v5278
  %v5280 = vrot.slane %v5273, %v5279
  %5282 = vst.msk [vmem:[#allocation6 + $0x1f] sm:$0x1] %vm4448, %v5280
  %v5283 = vrot.slane %v5280, 7
  %v5284 = vrot.slane %v5283, 2
  %5285 = vrot.lane.b32.xlu0 %v5284, 32
  %v5286 = vpop.permute.xlu0 %5285
  %5288 = vst.msk [vmem:[#allocation6 + $0x1f] sm:$0x1] %vm4463, %v5286
  %v5289 = vcombine.high %v5280, %v5280
  %5290 = vrot.lane.b32.xlu0 %v5289, 64
  %v5291 = vpop.permute.xlu0 %5290
  %5293 = vst.msk [vmem:[#allocation6 + $0x1f] sm:$0x1] %vm4469, %v5291
  %v5294 = vrot.slane %v5289, 7
  %v5295 = vrot.slane %v5294, 2
  %5296 = vrot.lane.b32.xlu0 %v5295, 96
  %v5297 = vpop.permute.xlu0 %5296
  %5299 = vst.msk [vmem:[#allocation6 + $0x1f] sm:$0x1] %vm4476, %v5297
  %v5300 = vld [vmem:[%s1] sm:$0x3]
  %5301 = vst.msk [vmem:[#allocation6 + $0x20] sm:$0x3] %vm97, %v5300
  %v5302 = vld [vmem:[#allocation6] sm:$0xff]
  %v5303 = vld [vmem:[#allocation6 + $0x8] sm:$0xff]
  %v5304 = vld [vmem:[#allocation6 + $0x10] sm:$0xff]
  %v5305 = vld [vmem:[#allocation6 + $0x18] sm:$0xff]
  %v5306 = vld [vmem:[#allocation6 + $0x20] sm:$0x3]
  %v5307 = vld [vmem:[%s10] sm:$0xff]
  %v5308 = vld [vmem:[%s10 + $0x8] sm:$0xff]
  %v5309 = vld [vmem:[%s10 + $0x10] sm:$0xff]
  %v5310 = vld [vmem:[%s10 + $0x18] sm:$0xff]
  %v5311 = vld [vmem:[%s10 + $0x20] sm:$0xff]
  %v5312 = vld [vmem:[%s10 + $0x28] sm:$0xff]
  %v5313 = vld [vmem:[%s10 + $0x30] sm:$0xff]
  %v5314 = vld [vmem:[%s10 + $0x38] sm:$0xff]
  %v5315 = vld [vmem:[%s10 + $0x40] sm:$0xff]
  %v5316 = vld [vmem:[%s10 + $0x48] sm:$0xff]
  %v5317 = vld [vmem:[%s10 + $0x50] sm:$0xff]
  %v5318 = vld [vmem:[%s10 + $0x58] sm:$0xff]
  %v5319 = vld [vmem:[%s10 + $0x60] sm:$0xff]
  %v5320 = vld [vmem:[%s10 + $0x68] sm:$0xff]
  %v5321 = vld [vmem:[%s10 + $0x70] sm:$0xff]
  %v5322 = vld [vmem:[%s10 + $0x78] sm:$0xff]
  %v5323 = vld [vmem:[%s10 + $0x80] sm:$0xff]
  %v5324 = vld [vmem:[%s10 + $0x88] sm:$0xff]
  %v5325 = vld [vmem:[%s10 + $0x90] sm:$0xff]
  %v5326 = vld [vmem:[%s10 + $0x98] sm:$0xff]
  %v5327 = vld [vmem:[%s10 + $0xa0] sm:$0xff]
  %v5328 = vld [vmem:[%s10 + $0xa8] sm:$0xff]
  %v5329 = vld [vmem:[%s10 + $0xb0] sm:$0xff]
  %v5330 = vld [vmem:[%s10 + $0xb8] sm:$0xff]
  %v5331 = vld [vmem:[%s10 + $0xc0] sm:$0xff]
  %v5332 = vld [vmem:[%s10 + $0xc8] sm:$0xff]
  %v5333 = vld [vmem:[%s10 + $0xd0] sm:$0xff]
  %v5334 = vld [vmem:[%s10 + $0xd8] sm:$0xff]
  %v5335 = vld [vmem:[%s10 + $0xe0] sm:$0xff]
  %v5336 = vld [vmem:[%s10 + $0xe8] sm:$0xff]
  %v5337 = vld [vmem:[%s10 + $0xf0] sm:$0xff]
  %v5338 = vld [vmem:[%s10 + $0xf8] sm:$0xff]
  %v5339 = vld [vmem:[%s10 + $0x100] sm:$0xff]
  %v5340 = vld [vmem:[%s10 + $0x108] sm:$0xff]
  %v5341 = vld [vmem:[%s10 + $0x110] sm:$0xff]
  %v5342 = vld [vmem:[%s10 + $0x118] sm:$0xff]
  %v5343 = vld [vmem:[%s10 + $0x120] sm:$0xff]
  %v5344 = vld [vmem:[%s10 + $0x128] sm:$0xff]
  %v5345 = vld [vmem:[%s10 + $0x130] sm:$0xff]
  %v5346 = vld [vmem:[%s10 + $0x138] sm:$0xff]
  %v5347 = vld [vmem:[%s10 + $0x140] sm:$0xff]
  %v5348 = vld [vmem:[%s10 + $0x148] sm:$0xff]
  %v5349 = vld [vmem:[%s10 + $0x150] sm:$0xff]
  %v5350 = vld [vmem:[%s10 + $0x158] sm:$0xff]
  %v5351 = vld [vmem:[%s10 + $0x160] sm:$0xff]
  %v5352 = vld [vmem:[%s10 + $0x168] sm:$0xff]
  %v5353 = vld [vmem:[%s10 + $0x170] sm:$0xff]
  %v5354 = vld [vmem:[%s10 + $0x178] sm:$0xff]
  %v5355 = vld [vmem:[%s10 + $0x180] sm:$0xff]
  %v5356 = vld [vmem:[%s10 + $0x188] sm:$0xff]
  %v5357 = vld [vmem:[%s10 + $0x190] sm:$0xff]
  %v5358 = vld [vmem:[%s10 + $0x198] sm:$0xff]
  %v5359 = vld [vmem:[%s10 + $0x1a0] sm:$0xff]
  %v5360 = vld [vmem:[%s10 + $0x1a8] sm:$0xff]
  %v5361 = vld [vmem:[%s10 + $0x1b0] sm:$0xff]
  %v5362 = vld [vmem:[%s10 + $0x1b8] sm:$0xff]
  %v5363 = vld [vmem:[%s10 + $0x1c0] sm:$0xff]
  %v5364 = vld [vmem:[%s10 + $0x1c8] sm:$0xff]
  %v5365 = vld [vmem:[%s10 + $0x1d0] sm:$0xff]
  %v5366 = vld [vmem:[%s10 + $0x1d8] sm:$0xff]
  %v5367 = vld [vmem:[%s10 + $0x1e0] sm:$0xff]
  %v5368 = vld [vmem:[%s10 + $0x1e8] sm:$0xff]
  %v5369 = vld [vmem:[%s10 + $0x1f0] sm:$0xff]
  %v5370 = vld [vmem:[%s10 + $0x1f8] sm:$0xff]
  %v5371 = vld [vmem:[%s10 + $0x200] sm:$0xff]
  %v5372 = vld [vmem:[%s10 + $0x208] sm:$0xff]
  %v5373 = vld [vmem:[%s10 + $0x210] sm:$0xff]
  %v5374 = vld [vmem:[%s10 + $0x218] sm:$0xff]
  %v5375 = vld [vmem:[%s10 + $0x220] sm:$0xff]
  %v5376 = vld [vmem:[%s10 + $0x228] sm:$0xff]
  %v5377 = vld [vmem:[%s10 + $0x230] sm:$0xff]
  %v5378 = vld [vmem:[%s10 + $0x238] sm:$0xff]
  %v5379 = vld [vmem:[%s10 + $0x240] sm:$0xff]
  %v5380 = vld [vmem:[%s10 + $0x248] sm:$0xff]
  %v5381 = vld [vmem:[%s10 + $0x250] sm:$0xff]
  %v5382 = vld [vmem:[%s10 + $0x258] sm:$0xff]
  %v5383 = vld [vmem:[%s10 + $0x260] sm:$0xff]
  %v5384 = vld [vmem:[%s10 + $0x268] sm:$0xff]
  %v5385 = vld [vmem:[%s10 + $0x270] sm:$0xff]
  %v5386 = vld [vmem:[%s10 + $0x278] sm:$0xff]
  %v5387 = vld [vmem:[%s10 + $0x280] sm:$0xff]
  %v5388 = vld [vmem:[%s10 + $0x288] sm:$0xff]
  %v5389 = vld [vmem:[%s10 + $0x290] sm:$0xff]
  %v5390 = vld [vmem:[%s10 + $0x298] sm:$0xff]
  %v5391 = vld [vmem:[%s10 + $0x2a0] sm:$0xff]
  %v5392 = vld [vmem:[%s10 + $0x2a8] sm:$0xff]
  %v5393 = vld [vmem:[%s10 + $0x2b0] sm:$0xff]
  %v5394 = vld [vmem:[%s10 + $0x2b8] sm:$0xff]
  %v5395 = vld [vmem:[%s10 + $0x2c0] sm:$0xff]
  %v5396 = vld [vmem:[%s10 + $0x2c8] sm:$0xff]
  %v5397 = vld [vmem:[%s10 + $0x2d0] sm:$0xff]
  %v5398 = vld [vmem:[%s10 + $0x2d8] sm:$0xff]
  %v5399 = vld [vmem:[%s10 + $0x2e0] sm:$0xff]
  %v5400 = vld [vmem:[%s10 + $0x2e8] sm:$0xff]
  %v5401 = vld [vmem:[%s10 + $0x2f0] sm:$0xff]
  %v5402 = vld [vmem:[%s10 + $0x2f8] sm:$0xff]
  %v5403 = vld [vmem:[%s10 + $0x300] sm:$0xff]
  %v5404 = vld [vmem:[%s10 + $0x308] sm:$0xff]
  %v5405 = vld [vmem:[%s10 + $0x310] sm:$0xff]
  %v5406 = vld [vmem:[%s10 + $0x318] sm:$0xff]
  %v5407 = vld [vmem:[%s10 + $0x320] sm:$0xff]
  %v5408 = vld [vmem:[%s10 + $0x328] sm:$0xff]
  %v5409 = vld [vmem:[%s10 + $0x330] sm:$0xff]
  %v5410 = vld [vmem:[%s10 + $0x338] sm:$0xff]
  %v5411 = vld [vmem:[%s10 + $0x340] sm:$0xff]
  %v5412 = vld [vmem:[%s10 + $0x348] sm:$0xff]
  %v5413 = vld [vmem:[%s10 + $0x350] sm:$0xff]
  %v5414 = vld [vmem:[%s10 + $0x358] sm:$0xff]
  %v5415 = vld [vmem:[%s10 + $0x360] sm:$0xff]
  %v5416 = vld [vmem:[%s10 + $0x368] sm:$0xff]
  %v5417 = vld [vmem:[%s10 + $0x370] sm:$0xff]
  %v5418 = vld [vmem:[%s10 + $0x378] sm:$0xff]
  %v5419 = vld [vmem:[%s10 + $0x380] sm:$0xff]
  %v5420 = vld [vmem:[%s10 + $0x388] sm:$0xff]
  %v5421 = vld [vmem:[%s10 + $0x390] sm:$0xff]
  %v5422 = vld [vmem:[%s10 + $0x398] sm:$0xff]
  %v5423 = vld [vmem:[%s10 + $0x3a0] sm:$0xff]
  %v5424 = vld [vmem:[%s10 + $0x3a8] sm:$0xff]
  %v5425 = vld [vmem:[%s10 + $0x3b0] sm:$0xff]
  %v5426 = vld [vmem:[%s10 + $0x3b8] sm:$0xff]
  %v5427 = vld [vmem:[%s10 + $0x3c0] sm:$0xff]
  %v5428 = vld [vmem:[%s10 + $0x3c8] sm:$0xff]
  %v5429 = vld [vmem:[%s10 + $0x3d0] sm:$0xff]
  %v5430 = vld [vmem:[%s10 + $0x3d8] sm:$0xff]
  %v5431 = vld [vmem:[%s10 + $0x3e0] sm:$0xff]
  %v5432 = vld [vmem:[%s10 + $0x3e8] sm:$0xff]
  %v5433 = vld [vmem:[%s10 + $0x3f0] sm:$0xff]
  %v5434 = vld [vmem:[%s10 + $0x3f8] sm:$0xff]
  %v5435 = vld [vmem:[%s10 + $0x400] sm:$0xff]
  %v5436 = vld [vmem:[%s10 + $0x408] sm:$0xff]
  %v5437 = vld [vmem:[%s10 + $0x410] sm:$0xff]
  %v5438 = vld [vmem:[%s10 + $0x418] sm:$0xff]
  %v5439 = vld [vmem:[%s10 + $0x420] sm:$0xff]
  %v5440 = vld [vmem:[%s10 + $0x428] sm:$0xff]
  %v5441 = vld [vmem:[%s10 + $0x430] sm:$0xff]
  %v5442 = vld [vmem:[%s10 + $0x438] sm:$0xff]
  %v5443 = vld [vmem:[%s10 + $0x440] sm:$0xff]
  %v5444 = vld [vmem:[%s10 + $0x448] sm:$0xff]
  %v5445 = vld [vmem:[%s10 + $0x450] sm:$0xff]
  %v5446 = vld [vmem:[%s10 + $0x458] sm:$0xff]
  %v5447 = vld [vmem:[%s10 + $0x460] sm:$0xff]
  %v5448 = vld [vmem:[%s10 + $0x468] sm:$0xff]
  %v5449 = vld [vmem:[%s10 + $0x470] sm:$0xff]
  %v5450 = vld [vmem:[%s10 + $0x478] sm:$0xff]
  %v5451 = vld [vmem:[%s10 + $0x480] sm:$0xff]
  %v5452 = vld [vmem:[%s10 + $0x488] sm:$0xff]
  %v5453 = vld [vmem:[%s10 + $0x490] sm:$0xff]
  %v5454 = vld [vmem:[%s10 + $0x498] sm:$0xff]
  %v5455 = vld [vmem:[%s10 + $0x4a0] sm:$0xff]
  %v5456 = vld [vmem:[%s10 + $0x4a8] sm:$0xff]
  %v5457 = vld [vmem:[%s10 + $0x4b0] sm:$0xff]
  %v5458 = vld [vmem:[%s10 + $0x4b8] sm:$0xff]
  %v5459 = vld [vmem:[%s10 + $0x4c0] sm:$0xff]
  %v5460 = vld [vmem:[%s10 + $0x4c8] sm:$0xff]
  %v5461 = vld [vmem:[%s10 + $0x4d0] sm:$0xff]
  %v5462 = vld [vmem:[%s10 + $0x4d8] sm:$0xff]
  %v5463 = vld [vmem:[%s10 + $0x4e0] sm:$0xff]
  %v5464 = vld [vmem:[%s10 + $0x4e8] sm:$0xff]
  %v5465 = vld [vmem:[%s10 + $0x4f0] sm:$0xff]
  %v5466 = vld [vmem:[%s10 + $0x4f8] sm:$0xff]
  %v5467 = vld [vmem:[%s10 + $0x500] sm:$0xff]
  %v5468 = vld [vmem:[%s10 + $0x508] sm:$0xff]
  %v5469 = vld [vmem:[%s10 + $0x510] sm:$0xff]
  %v5470 = vld [vmem:[%s10 + $0x518] sm:$0xff]
  %v5471 = vld [vmem:[%s10 + $0x520] sm:$0xff]
  %v5472 = vld [vmem:[%s10 + $0x528] sm:$0xff]
  %v5473 = vld [vmem:[%s10 + $0x530] sm:$0xff]
  %v5474 = vld [vmem:[%s10 + $0x538] sm:$0xff]
  %v5475 = vld [vmem:[%s10 + $0x540] sm:$0xff]
  %v5476 = vld [vmem:[%s10 + $0x548] sm:$0xff]
  %v5477 = vld [vmem:[%s10 + $0x550] sm:$0xff]
  %v5478 = vld [vmem:[%s10 + $0x558] sm:$0xff]
  %v5479 = vld [vmem:[%s10 + $0x560] sm:$0xff]
  %v5480 = vld [vmem:[%s10 + $0x568] sm:$0xff]
  %v5481 = vld [vmem:[%s10 + $0x570] sm:$0xff]
  %v5482 = vld [vmem:[%s10 + $0x578] sm:$0xff]
  %v5483 = vld [vmem:[%s10 + $0x580] sm:$0xff]
  %v5484 = vld [vmem:[%s10 + $0x588] sm:$0xff]
  %v5485 = vld [vmem:[%s10 + $0x590] sm:$0xff]
  %v5486 = vld [vmem:[%s10 + $0x598] sm:$0xff]
  %v5487 = vld [vmem:[%s10 + $0x5a0] sm:$0xff]
  %v5488 = vld [vmem:[%s10 + $0x5a8] sm:$0xff]
  %v5489 = vld [vmem:[%s10 + $0x5b0] sm:$0xff]
  %v5490 = vld [vmem:[%s10 + $0x5b8] sm:$0xff]
  %v5491 = vld [vmem:[%s10 + $0x5c0] sm:$0xff]
  %v5492 = vld [vmem:[%s10 + $0x5c8] sm:$0xff]
  %v5493 = vld [vmem:[%s10 + $0x5d0] sm:$0xff]
  %v5494 = vld [vmem:[%s10 + $0x5d8] sm:$0xff]
  %v5495 = vld [vmem:[%s10 + $0x5e0] sm:$0xff]
  %v5496 = vld [vmem:[%s10 + $0x5e8] sm:$0xff]
  %v5497 = vld [vmem:[%s10 + $0x5f0] sm:$0xff]
  %v5498 = vld [vmem:[%s10 + $0x5f8] sm:$0xff]
  %v5499 = vld [vmem:[%s10 + $0x600] sm:$0xff]
  %v5500 = vld [vmem:[%s10 + $0x608] sm:$0xff]
  %v5501 = vld [vmem:[%s10 + $0x610] sm:$0xff]
  %v5502 = vld [vmem:[%s10 + $0x618] sm:$0xff]
  %v5503 = vld [vmem:[%s10 + $0x620] sm:$0xff]
  %v5504 = vld [vmem:[%s10 + $0x628] sm:$0xff]
  %v5505 = vld [vmem:[%s10 + $0x630] sm:$0xff]
  %v5506 = vld [vmem:[%s10 + $0x638] sm:$0xff]
  %v5507 = vld [vmem:[%s10 + $0x640] sm:$0xff]
  %v5508 = vld [vmem:[%s10 + $0x648] sm:$0xff]
  %v5509 = vld [vmem:[%s10 + $0x650] sm:$0xff]
  %v5510 = vld [vmem:[%s10 + $0x658] sm:$0xff]
  %v5511 = vld [vmem:[%s10 + $0x660] sm:$0xff]
  %v5512 = vld [vmem:[%s10 + $0x668] sm:$0xff]
  %v5513 = vld [vmem:[%s10 + $0x670] sm:$0xff]
  %v5514 = vld [vmem:[%s10 + $0x678] sm:$0xff]
  %v5515 = vld [vmem:[%s10 + $0x680] sm:$0xff]
  %v5516 = vld [vmem:[%s10 + $0x688] sm:$0xff]
  %v5517 = vld [vmem:[%s10 + $0x690] sm:$0xff]
  %v5518 = vld [vmem:[%s10 + $0x698] sm:$0xff]
  %v5519 = vld [vmem:[%s10 + $0x6a0] sm:$0xff]
  %v5520 = vld [vmem:[%s10 + $0x6a8] sm:$0xff]
  %v5521 = vld [vmem:[%s10 + $0x6b0] sm:$0xff]
  %v5522 = vld [vmem:[%s10 + $0x6b8] sm:$0xff]
  %v5523 = vld [vmem:[%s10 + $0x6c0] sm:$0xff]
  %v5524 = vld [vmem:[%s10 + $0x6c8] sm:$0xff]
  %v5525 = vld [vmem:[%s10 + $0x6d0] sm:$0xff]
  %v5526 = vld [vmem:[%s10 + $0x6d8] sm:$0xff]
  %v5527 = vld [vmem:[%s10 + $0x6e0] sm:$0xff]
  %v5528 = vld [vmem:[%s10 + $0x6e8] sm:$0xff]
  %v5529 = vld [vmem:[%s10 + $0x6f0] sm:$0xff]
  %v5530 = vld [vmem:[%s10 + $0x6f8] sm:$0xff]
  %v5531 = vld [vmem:[%s10 + $0x700] sm:$0xff]
  %v5532 = vld [vmem:[%s10 + $0x708] sm:$0xff]
  %v5533 = vld [vmem:[%s10 + $0x710] sm:$0xff]
  %v5534 = vld [vmem:[%s10 + $0x718] sm:$0xff]
  %v5535 = vld [vmem:[%s10 + $0x720] sm:$0xff]
  %v5536 = vld [vmem:[%s10 + $0x728] sm:$0xff]
  %v5537 = vld [vmem:[%s10 + $0x730] sm:$0xff]
  %v5538 = vld [vmem:[%s10 + $0x738] sm:$0xff]
  %v5539 = vld [vmem:[%s10 + $0x740] sm:$0xff]
  %v5540 = vld [vmem:[%s10 + $0x748] sm:$0xff]
  %v5541 = vld [vmem:[%s10 + $0x750] sm:$0xff]
  %v5542 = vld [vmem:[%s10 + $0x758] sm:$0xff]
  %v5543 = vld [vmem:[%s10 + $0x760] sm:$0xff]
  %v5544 = vld [vmem:[%s10 + $0x768] sm:$0xff]
  %v5545 = vld [vmem:[%s10 + $0x770] sm:$0xff]
  %v5546 = vld [vmem:[%s10 + $0x778] sm:$0xff]
  %v5547 = vld [vmem:[%s10 + $0x780] sm:$0xff]
  %v5548 = vld [vmem:[%s10 + $0x788] sm:$0xff]
  %v5549 = vld [vmem:[%s10 + $0x790] sm:$0xff]
  %v5550 = vld [vmem:[%s10 + $0x798] sm:$0xff]
  %v5551 = vld [vmem:[%s10 + $0x7a0] sm:$0xff]
  %v5552 = vld [vmem:[%s10 + $0x7a8] sm:$0xff]
  %v5553 = vld [vmem:[%s10 + $0x7b0] sm:$0xff]
  %v5554 = vld [vmem:[%s10 + $0x7b8] sm:$0xff]
  %v5555 = vld [vmem:[%s10 + $0x7c0] sm:$0xff]
  %v5556 = vld [vmem:[%s10 + $0x7c8] sm:$0xff]
  %v5557 = vld [vmem:[%s10 + $0x7d0] sm:$0xff]
  %v5558 = vld [vmem:[%s10 + $0x7d8] sm:$0xff]
  %v5559 = vld [vmem:[%s10 + $0x7e0] sm:$0xff]
  %v5560 = vld [vmem:[%s10 + $0x7e8] sm:$0xff]
  %v5561 = vld [vmem:[%s10 + $0x7f0] sm:$0xff]
  %v5562 = vld [vmem:[%s10 + $0x7f8] sm:$0xff]
  %v5563 = vld [vmem:[%s10 + $0x800] sm:$0xff]
  %v5564 = vld [vmem:[%s10 + $0x808] sm:$0xff]
  %v5565 = vld [vmem:[%s11] sm:$0x1]
  %v5567 = vlaneseq
  %v5568 = vshrl.u32 %v5567, 7
  %v5569 = vsub.s32 0, %v5568
  %v5570 = vrot.slane %v5565, %v5569
  %v5577 = vcombine.high %v5302, %v5302
  %v5579 = vunpack.c.l.s4 1983009808
  %v5580 = vunpack.c.0.s8 %v5579
  %v5581 = vlaneseq
  %v5582 = vshrl.u32 %v5581, 7
  %v5583 = vsub.s32 %v5580, %v5582
  %v5584 = vrot.slane %v5302, %v5583
  %v5586 = vunpack.c.l.s4 1983009808
  %v5587 = vunpack.c.0.s8 %v5586
  %v5588 = vlaneseq
  %v5589 = vshrl.u32 %v5588, 7
  %v5590 = vsub.s32 %v5587, %v5589
  %v5591 = vrot.slane %v5577, %v5590
  %v5592 = vcombine.high %v5584, %v5584
  %v5593 = vcombine.high %v5591, %v5591
  %v5594 = vcombine.high %v5303, %v5303
  %v5596 = vunpack.c.l.s4 1983009808
  %v5597 = vunpack.c.0.s8 %v5596
  %v5598 = vlaneseq
  %v5599 = vshrl.u32 %v5598, 7
  %v5600 = vsub.s32 %v5597, %v5599
  %v5601 = vrot.slane %v5303, %v5600
  %v5603 = vunpack.c.l.s4 1983009808
  %v5604 = vunpack.c.0.s8 %v5603
  %v5605 = vlaneseq
  %v5606 = vshrl.u32 %v5605, 7
  %v5607 = vsub.s32 %v5604, %v5606
  %v5608 = vrot.slane %v5594, %v5607
  %v5609 = vcombine.high %v5601, %v5601
  %v5610 = vcombine.high %v5608, %v5608
  %v5611 = vcombine.high %v5304, %v5304
  %v5613 = vunpack.c.l.s4 1983009808
  %v5614 = vunpack.c.0.s8 %v5613
  %v5615 = vlaneseq
  %v5616 = vshrl.u32 %v5615, 7
  %v5617 = vsub.s32 %v5614, %v5616
  %v5618 = vrot.slane %v5304, %v5617
  %v5620 = vunpack.c.l.s4 1983009808
  %v5621 = vunpack.c.0.s8 %v5620
  %v5622 = vlaneseq
  %v5623 = vshrl.u32 %v5622, 7
  %v5624 = vsub.s32 %v5621, %v5623
  %v5625 = vrot.slane %v5611, %v5624
  %v5626 = vcombine.high %v5618, %v5618
  %v5627 = vcombine.high %v5625, %v5625
  %v5628 = vcombine.high %v5305, %v5305
  %v5630 = vunpack.c.l.s4 1983009808
  %v5631 = vunpack.c.0.s8 %v5630
  %v5632 = vlaneseq
  %v5633 = vshrl.u32 %v5632, 7
  %v5634 = vsub.s32 %v5631, %v5633
  %v5635 = vrot.slane %v5305, %v5634
  %v5637 = vunpack.c.l.s4 1983009808
  %v5638 = vunpack.c.0.s8 %v5637
  %v5639 = vlaneseq
  %v5640 = vshrl.u32 %v5639, 7
  %v5641 = vsub.s32 %v5638, %v5640
  %v5642 = vrot.slane %v5628, %v5641
  %v5643 = vcombine.high %v5635, %v5635
  %v5644 = vcombine.high %v5642, %v5642
  %v5646 = vunpack.c.l.s4 1983009808
  %v5647 = vunpack.c.0.s8 %v5646
  %v5648 = vlaneseq
  %v5649 = vshrl.u32 %v5648, 7
  %v5650 = vsub.s32 %v5647, %v5649
  %v5651 = vrot.slane %v5306, %v5650
  %v5668 = vsel %vm95, %v5651, 0
  %5670 = vmatprep.subr.mxu0 0.0
  %5671 = vmatpush1.msra.mxu0 %v5307
  %5672 = vmatprep.subr.mxu0 0.0
  %5673 = vmatpush1.msra.mxu0 %v5308
  %5674 = vmatprep.subr.mxu0 0.0
  %5675 = vmatpush1.msra.mxu0 %v5309
  %5676 = vmatprep.subr.mxu0 0.0
  %5677 = vmatpush1.msra.mxu0 %v5310
  %5678 = vmatprep.subr.mxu0 0.0
  %5679 = vmatpush1.msra.mxu0 %v5311
  %5680 = vmatprep.subr.mxu0 0.0
  %5681 = vmatpush1.msra.mxu0 %v5312
  %5682 = vmatprep.subr.mxu0 0.0
  %5683 = vmatpush1.msra.mxu0 %v5313
  %5684 = vmatprep.subr.mxu0 0.0
  %5685 = vmatpush1.msra.mxu0 %v5314
  %5686 = vmatprep.subr.mxu0 0.0
  %5687 = vmatpush1.msra.mxu0 %v5315
  %5688 = vmatprep.subr.mxu0 0.0
  %5689 = vmatpush1.msra.mxu0 %v5316
  %5690 = vmatprep.subr.mxu0 0.0
  %5691 = vmatpush1.msra.mxu0 %v5317
  %5692 = vmatprep.subr.mxu0 0.0
  %5693 = vmatpush1.msra.mxu0 %v5318
  %5694 = vmatprep.subr.mxu0 0.0
  %5695 = vmatpush1.msra.mxu0 %v5319
  %5696 = vmatprep.subr.mxu0 0.0
  %5697 = vmatpush1.msra.mxu0 %v5320
  %5698 = vmatprep.subr.mxu0 0.0
  %5699 = vmatpush1.msra.mxu0 %v5321
  %5700 = vmatprep.subr.mxu0 0.0
  %5701 = vmatpush1.msra.mxu0 %v5322
  %5702 = vmatprep.subr.mxu0 0.0
  %5703 = vmatpush1.msra.mxu0 %v5323
  %5704 = vmatprep.subr.mxu0 0.0
  %5705 = vmatpush1.msra.mxu0 %v5324
  %5706 = vmatprep.subr.mxu0 0.0
  %5707 = vmatpush1.msra.mxu0 %v5325
  %5708 = vmatprep.subr.mxu0 0.0
  %5709 = vmatpush1.msra.mxu0 %v5326
  %5710 = vmatprep.subr.mxu0 0.0
  %5711 = vmatpush1.msra.mxu0 %v5327
  %5712 = vmatprep.subr.mxu0 0.0
  %5713 = vmatpush1.msra.mxu0 %v5328
  %5714 = vmatprep.subr.mxu0 0.0
  %5715 = vmatpush1.msra.mxu0 %v5329
  %5716 = vmatprep.subr.mxu0 0.0
  %5717 = vmatpush1.msra.mxu0 %v5330
  %5718 = vmatprep.subr.mxu0 0.0
  %5719 = vmatpush1.msra.mxu0 %v5331
  %5720 = vmatprep.subr.mxu0 0.0
  %5721 = vmatpush1.msra.mxu0 %v5332
  %5722 = vmatprep.subr.mxu0 0.0
  %5723 = vmatpush1.msra.mxu0 %v5333
  %5724 = vmatprep.subr.mxu0 0.0
  %5725 = vmatpush1.msra.mxu0 %v5334
  %5726 = vmatprep.subr.mxu0 0.0
  %5727 = vmatpush1.msra.mxu0 %v5335
  %5728 = vmatprep.subr.mxu0 0.0
  %5729 = vmatpush1.msra.mxu0 %v5336
  %5730 = vmatprep.subr.mxu0 0.0
  %5731 = vmatpush1.msra.mxu0 %v5337
  %5732 = vmatprep.subr.mxu0 0.0
  %5733 = vmatpush1.msra.mxu0 %v5338
  %5734 = vmatprep.mubr.f32.mxu0 %v5592
  %5735 = vmatmul.mubr.f32.gmra.mrb[0].mxu0 %v5584
  %v5736 = vpop.f32.mrb[0].mxu0
  %v5737 = vadd.f32 %v5570, %v5736
  %v5738 = vpop.f32.mrb[0].mxu0
  %5739 = vdwg.mxu0
  %5740 = vmatprep.subr.mxu0 0.0
  %5741 = vmatpush1.msra.mxu0 %v5339
  %5742 = vmatprep.subr.mxu0 0.0
  %5743 = vmatpush1.msra.mxu0 %v5340
  %5744 = vmatprep.subr.mxu0 0.0
  %5745 = vmatpush1.msra.mxu0 %v5341
  %5746 = vmatprep.subr.mxu0 0.0
  %5747 = vmatpush1.msra.mxu0 %v5342
  %5748 = vmatprep.subr.mxu0 0.0
  %5749 = vmatpush1.msra.mxu0 %v5343
  %5750 = vmatprep.subr.mxu0 0.0
  %5751 = vmatpush1.msra.mxu0 %v5344
  %5752 = vmatprep.subr.mxu0 0.0
  %5753 = vmatpush1.msra.mxu0 %v5345
  %5754 = vmatprep.subr.mxu0 0.0
  %5755 = vmatpush1.msra.mxu0 %v5346
  %5756 = vmatprep.subr.mxu0 0.0
  %5757 = vmatpush1.msra.mxu0 %v5347
  %5758 = vmatprep.subr.mxu0 0.0
  %5759 = vmatpush1.msra.mxu0 %v5348
  %5760 = vmatprep.subr.mxu0 0.0
  %5761 = vmatpush1.msra.mxu0 %v5349
  %5762 = vmatprep.subr.mxu0 0.0
  %5763 = vmatpush1.msra.mxu0 %v5350
  %5764 = vmatprep.subr.mxu0 0.0
  %5765 = vmatpush1.msra.mxu0 %v5351
  %5766 = vmatprep.subr.mxu0 0.0
  %5767 = vmatpush1.msra.mxu0 %v5352
  %5768 = vmatprep.subr.mxu0 0.0
  %5769 = vmatpush1.msra.mxu0 %v5353
  %5770 = vmatprep.subr.mxu0 0.0
  %5771 = vmatpush1.msra.mxu0 %v5354
  %5772 = vmatprep.subr.mxu0 0.0
  %5773 = vmatpush1.msra.mxu0 %v5355
  %5774 = vmatprep.subr.mxu0 0.0
  %5775 = vmatpush1.msra.mxu0 %v5356
  %5776 = vmatprep.subr.mxu0 0.0
  %5777 = vmatpush1.msra.mxu0 %v5357
  %5778 = vmatprep.subr.mxu0 0.0
  %5779 = vmatpush1.msra.mxu0 %v5358
  %5780 = vmatprep.subr.mxu0 0.0
  %5781 = vmatpush1.msra.mxu0 %v5359
  %5782 = vmatprep.subr.mxu0 0.0
  %5783 = vmatpush1.msra.mxu0 %v5360
  %5784 = vmatprep.subr.mxu0 0.0
  %5785 = vmatpush1.msra.mxu0 %v5361
  %5786 = vmatprep.subr.mxu0 0.0
  %5787 = vmatpush1.msra.mxu0 %v5362
  %5788 = vmatprep.subr.mxu0 0.0
  %5789 = vmatpush1.msra.mxu0 %v5363
  %5790 = vmatprep.subr.mxu0 0.0
  %5791 = vmatpush1.msra.mxu0 %v5364
  %5792 = vmatprep.subr.mxu0 0.0
  %5793 = vmatpush1.msra.mxu0 %v5365
  %5794 = vmatprep.subr.mxu0 0.0
  %5795 = vmatpush1.msra.mxu0 %v5366
  %5796 = vmatprep.subr.mxu0 0.0
  %5797 = vmatpush1.msra.mxu0 %v5367
  %5798 = vmatprep.subr.mxu0 0.0
  %5799 = vmatpush1.msra.mxu0 %v5368
  %5800 = vmatprep.subr.mxu0 0.0
  %5801 = vmatpush1.msra.mxu0 %v5369
  %5802 = vmatprep.subr.mxu0 0.0
  %5803 = vmatpush1.msra.mxu0 %v5370
  %5804 = vmatprep.mubr.f32.mxu0 %v5593
  %5805 = vmatmul.mubr.f32.gmra.mrb[0].mxu0 %v5591
  %v5806 = vpop.f32.mrb[0].mxu0
  %v5807 = vadd.f32 %v5737, %v5806
  %v5808 = vpop.f32.mrb[0].mxu0
  %5809 = vdwg.mxu0
  %5810 = vmatprep.subr.mxu0 0.0
  %5811 = vmatpush1.msra.mxu0 %v5371
  %5812 = vmatprep.subr.mxu0 0.0
  %5813 = vmatpush1.msra.mxu0 %v5372
  %5814 = vmatprep.subr.mxu0 0.0
  %5815 = vmatpush1.msra.mxu0 %v5373
  %5816 = vmatprep.subr.mxu0 0.0
  %5817 = vmatpush1.msra.mxu0 %v5374
  %5818 = vmatprep.subr.mxu0 0.0
  %5819 = vmatpush1.msra.mxu0 %v5375
  %5820 = vmatprep.subr.mxu0 0.0
  %5821 = vmatpush1.msra.mxu0 %v5376
  %5822 = vmatprep.subr.mxu0 0.0
  %5823 = vmatpush1.msra.mxu0 %v5377
  %5824 = vmatprep.subr.mxu0 0.0
  %5825 = vmatpush1.msra.mxu0 %v5378
  %5826 = vmatprep.subr.mxu0 0.0
  %5827 = vmatpush1.msra.mxu0 %v5379
  %5828 = vmatprep.subr.mxu0 0.0
  %5829 = vmatpush1.msra.mxu0 %v5380
  %5830 = vmatprep.subr.mxu0 0.0
  %5831 = vmatpush1.msra.mxu0 %v5381
  %5832 = vmatprep.subr.mxu0 0.0
  %5833 = vmatpush1.msra.mxu0 %v5382
  %5834 = vmatprep.subr.mxu0 0.0
  %5835 = vmatpush1.msra.mxu0 %v5383
  %5836 = vmatprep.subr.mxu0 0.0
  %5837 = vmatpush1.msra.mxu0 %v5384
  %5838 = vmatprep.subr.mxu0 0.0
  %5839 = vmatpush1.msra.mxu0 %v5385
  %5840 = vmatprep.subr.mxu0 0.0
  %5841 = vmatpush1.msra.mxu0 %v5386
  %5842 = vmatprep.subr.mxu0 0.0
  %5843 = vmatpush1.msra.mxu0 %v5387
  %5844 = vmatprep.subr.mxu0 0.0
  %5845 = vmatpush1.msra.mxu0 %v5388
  %5846 = vmatprep.subr.mxu0 0.0
  %5847 = vmatpush1.msra.mxu0 %v5389
  %5848 = vmatprep.subr.mxu0 0.0
  %5849 = vmatpush1.msra.mxu0 %v5390
  %5850 = vmatprep.subr.mxu0 0.0
  %5851 = vmatpush1.msra.mxu0 %v5391
  %5852 = vmatprep.subr.mxu0 0.0
  %5853 = vmatpush1.msra.mxu0 %v5392
  %5854 = vmatprep.subr.mxu0 0.0
  %5855 = vmatpush1.msra.mxu0 %v5393
  %5856 = vmatprep.subr.mxu0 0.0
  %5857 = vmatpush1.msra.mxu0 %v5394
  %5858 = vmatprep.subr.mxu0 0.0
  %5859 = vmatpush1.msra.mxu0 %v5395
  %5860 = vmatprep.subr.mxu0 0.0
  %5861 = vmatpush1.msra.mxu0 %v5396
  %5862 = vmatprep.subr.mxu0 0.0
  %5863 = vmatpush1.msra.mxu0 %v5397
  %5864 = vmatprep.subr.mxu0 0.0
  %5865 = vmatpush1.msra.mxu0 %v5398
  %5866 = vmatprep.subr.mxu0 0.0
  %5867 = vmatpush1.msra.mxu0 %v5399
  %5868 = vmatprep.subr.mxu0 0.0
  %5869 = vmatpush1.msra.mxu0 %v5400
  %5870 = vmatprep.subr.mxu0 0.0
  %5871 = vmatpush1.msra.mxu0 %v5401
  %5872 = vmatprep.subr.mxu0 0.0
  %5873 = vmatpush1.msra.mxu0 %v5402
  %5874 = vmatprep.mubr.f32.mxu0 %v5609
  %5875 = vmatmul.mubr.f32.gmra.mrb[0].mxu0 %v5601
  %v5876 = vpop.f32.mrb[0].mxu0
  %v5877 = vadd.f32 %v5807, %v5876
  %v5878 = vpop.f32.mrb[0].mxu0
  %5879 = vdwg.mxu0
  %5880 = vmatprep.subr.mxu0 0.0
  %5881 = vmatpush1.msra.mxu0 %v5403
  %5882 = vmatprep.subr.mxu0 0.0
  %5883 = vmatpush1.msra.mxu0 %v5404
  %5884 = vmatprep.subr.mxu0 0.0
  %5885 = vmatpush1.msra.mxu0 %v5405
  %5886 = vmatprep.subr.mxu0 0.0
  %5887 = vmatpush1.msra.mxu0 %v5406
  %5888 = vmatprep.subr.mxu0 0.0
  %5889 = vmatpush1.msra.mxu0 %v5407
  %5890 = vmatprep.subr.mxu0 0.0
  %5891 = vmatpush1.msra.mxu0 %v5408
  %5892 = vmatprep.subr.mxu0 0.0
  %5893 = vmatpush1.msra.mxu0 %v5409
  %5894 = vmatprep.subr.mxu0 0.0
  %5895 = vmatpush1.msra.mxu0 %v5410
  %5896 = vmatprep.subr.mxu0 0.0
  %5897 = vmatpush1.msra.mxu0 %v5411
  %5898 = vmatprep.subr.mxu0 0.0
  %5899 = vmatpush1.msra.mxu0 %v5412
  %5900 = vmatprep.subr.mxu0 0.0
  %5901 = vmatpush1.msra.mxu0 %v5413
  %5902 = vmatprep.subr.mxu0 0.0
  %5903 = vmatpush1.msra.mxu0 %v5414
  %5904 = vmatprep.subr.mxu0 0.0
  %5905 = vmatpush1.msra.mxu0 %v5415
  %5906 = vmatprep.subr.mxu0 0.0
  %5907 = vmatpush1.msra.mxu0 %v5416
  %5908 = vmatprep.subr.mxu0 0.0
  %5909 = vmatpush1.msra.mxu0 %v5417
  %5910 = vmatprep.subr.mxu0 0.0
  %5911 = vmatpush1.msra.mxu0 %v5418
  %5912 = vmatprep.subr.mxu0 0.0
  %5913 = vmatpush1.msra.mxu0 %v5419
  %5914 = vmatprep.subr.mxu0 0.0
  %5915 = vmatpush1.msra.mxu0 %v5420
  %5916 = vmatprep.subr.mxu0 0.0
  %5917 = vmatpush1.msra.mxu0 %v5421
  %5918 = vmatprep.subr.mxu0 0.0
  %5919 = vmatpush1.msra.mxu0 %v5422
  %5920 = vmatprep.subr.mxu0 0.0
  %5921 = vmatpush1.msra.mxu0 %v5423
  %5922 = vmatprep.subr.mxu0 0.0
  %5923 = vmatpush1.msra.mxu0 %v5424
  %5924 = vmatprep.subr.mxu0 0.0
  %5925 = vmatpush1.msra.mxu0 %v5425
  %5926 = vmatprep.subr.mxu0 0.0
  %5927 = vmatpush1.msra.mxu0 %v5426
  %5928 = vmatprep.subr.mxu0 0.0
  %5929 = vmatpush1.msra.mxu0 %v5427
  %5930 = vmatprep.subr.mxu0 0.0
  %5931 = vmatpush1.msra.mxu0 %v5428
  %5932 = vmatprep.subr.mxu0 0.0
  %5933 = vmatpush1.msra.mxu0 %v5429
  %5934 = vmatprep.subr.mxu0 0.0
  %5935 = vmatpush1.msra.mxu0 %v5430
  %5936 = vmatprep.subr.mxu0 0.0
  %5937 = vmatpush1.msra.mxu0 %v5431
  %5938 = vmatprep.subr.mxu0 0.0
  %5939 = vmatpush1.msra.mxu0 %v5432
  %5940 = vmatprep.subr.mxu0 0.0
  %5941 = vmatpush1.msra.mxu0 %v5433
  %5942 = vmatprep.subr.mxu0 0.0
  %5943 = vmatpush1.msra.mxu0 %v5434
  %5944 = vmatprep.mubr.f32.mxu0 %v5610
  %5945 = vmatmul.mubr.f32.gmra.mrb[0].mxu0 %v5608
  %v5946 = vpop.f32.mrb[0].mxu0
  %v5947 = vadd.f32 %v5877, %v5946
  %v5948 = vpop.f32.mrb[0].mxu0
  %5949 = vdwg.mxu0
  %5950 = vmatprep.subr.mxu0 0.0
  %5951 = vmatpush1.msra.mxu0 %v5435
  %5952 = vmatprep.subr.mxu0 0.0
  %5953 = vmatpush1.msra.mxu0 %v5436
  %5954 = vmatprep.subr.mxu0 0.0
  %5955 = vmatpush1.msra.mxu0 %v5437
  %5956 = vmatprep.subr.mxu0 0.0
  %5957 = vmatpush1.msra.mxu0 %v5438
  %5958 = vmatprep.subr.mxu0 0.0
  %5959 = vmatpush1.msra.mxu0 %v5439
  %5960 = vmatprep.subr.mxu0 0.0
  %5961 = vmatpush1.msra.mxu0 %v5440
  %5962 = vmatprep.subr.mxu0 0.0
  %5963 = vmatpush1.msra.mxu0 %v5441
  %5964 = vmatprep.subr.mxu0 0.0
  %5965 = vmatpush1.msra.mxu0 %v5442
  %5966 = vmatprep.subr.mxu0 0.0
  %5967 = vmatpush1.msra.mxu0 %v5443
  %5968 = vmatprep.subr.mxu0 0.0
  %5969 = vmatpush1.msra.mxu0 %v5444
  %5970 = vmatprep.subr.mxu0 0.0
  %5971 = vmatpush1.msra.mxu0 %v5445
  %5972 = vmatprep.subr.mxu0 0.0
  %5973 = vmatpush1.msra.mxu0 %v5446
  %5974 = vmatprep.subr.mxu0 0.0
  %5975 = vmatpush1.msra.mxu0 %v5447
  %5976 = vmatprep.subr.mxu0 0.0
  %5977 = vmatpush1.msra.mxu0 %v5448
  %5978 = vmatprep.subr.mxu0 0.0
  %5979 = vmatpush1.msra.mxu0 %v5449
  %5980 = vmatprep.subr.mxu0 0.0
  %5981 = vmatpush1.msra.mxu0 %v5450
  %5982 = vmatprep.subr.mxu0 0.0
  %5983 = vmatpush1.msra.mxu0 %v5451
  %5984 = vmatprep.subr.mxu0 0.0
  %5985 = vmatpush1.msra.mxu0 %v5452
  %5986 = vmatprep.subr.mxu0 0.0
  %5987 = vmatpush1.msra.mxu0 %v5453
  %5988 = vmatprep.subr.mxu0 0.0
  %5989 = vmatpush1.msra.mxu0 %v5454
  %5990 = vmatprep.subr.mxu0 0.0
  %5991 = vmatpush1.msra.mxu0 %v5455
  %5992 = vmatprep.subr.mxu0 0.0
  %5993 = vmatpush1.msra.mxu0 %v5456
  %5994 = vmatprep.subr.mxu0 0.0
  %5995 = vmatpush1.msra.mxu0 %v5457
  %5996 = vmatprep.subr.mxu0 0.0
  %5997 = vmatpush1.msra.mxu0 %v5458
  %5998 = vmatprep.subr.mxu0 0.0
  %5999 = vmatpush1.msra.mxu0 %v5459
  %6000 = vmatprep.subr.mxu0 0.0
  %6001 = vmatpush1.msra.mxu0 %v5460
  %6002 = vmatprep.subr.mxu0 0.0
  %6003 = vmatpush1.msra.mxu0 %v5461
  %6004 = vmatprep.subr.mxu0 0.0
  %6005 = vmatpush1.msra.mxu0 %v5462
  %6006 = vmatprep.subr.mxu0 0.0
  %6007 = vmatpush1.msra.mxu0 %v5463
  %6008 = vmatprep.subr.mxu0 0.0
  %6009 = vmatpush1.msra.mxu0 %v5464
  %6010 = vmatprep.subr.mxu0 0.0
  %6011 = vmatpush1.msra.mxu0 %v5465
  %6012 = vmatprep.subr.mxu0 0.0
  %6013 = vmatpush1.msra.mxu0 %v5466
  %6014 = vmatprep.mubr.f32.mxu0 %v5626
  %6015 = vmatmul.mubr.f32.gmra.mrb[0].mxu0 %v5618
  %v6016 = vpop.f32.mrb[0].mxu0
  %v6017 = vadd.f32 %v5947, %v6016
  %v6018 = vpop.f32.mrb[0].mxu0
  %6019 = vdwg.mxu0
  %6020 = vmatprep.subr.mxu0 0.0
  %6021 = vmatpush1.msra.mxu0 %v5467
  %6022 = vmatprep.subr.mxu0 0.0
  %6023 = vmatpush1.msra.mxu0 %v5468
  %6024 = vmatprep.subr.mxu0 0.0
  %6025 = vmatpush1.msra.mxu0 %v5469
  %6026 = vmatprep.subr.mxu0 0.0
  %6027 = vmatpush1.msra.mxu0 %v5470
  %6028 = vmatprep.subr.mxu0 0.0
  %6029 = vmatpush1.msra.mxu0 %v5471
  %6030 = vmatprep.subr.mxu0 0.0
  %6031 = vmatpush1.msra.mxu0 %v5472
  %6032 = vmatprep.subr.mxu0 0.0
  %6033 = vmatpush1.msra.mxu0 %v5473
  %6034 = vmatprep.subr.mxu0 0.0
  %6035 = vmatpush1.msra.mxu0 %v5474
  %6036 = vmatprep.subr.mxu0 0.0
  %6037 = vmatpush1.msra.mxu0 %v5475
  %6038 = vmatprep.subr.mxu0 0.0
  %6039 = vmatpush1.msra.mxu0 %v5476
  %6040 = vmatprep.subr.mxu0 0.0
  %6041 = vmatpush1.msra.mxu0 %v5477
  %6042 = vmatprep.subr.mxu0 0.0
  %6043 = vmatpush1.msra.mxu0 %v5478
  %6044 = vmatprep.subr.mxu0 0.0
  %6045 = vmatpush1.msra.mxu0 %v5479
  %6046 = vmatprep.subr.mxu0 0.0
  %6047 = vmatpush1.msra.mxu0 %v5480
  %6048 = vmatprep.subr.mxu0 0.0
  %6049 = vmatpush1.msra.mxu0 %v5481
  %6050 = vmatprep.subr.mxu0 0.0
  %6051 = vmatpush1.msra.mxu0 %v5482
  %6052 = vmatprep.subr.mxu0 0.0
  %6053 = vmatpush1.msra.mxu0 %v5483
  %6054 = vmatprep.subr.mxu0 0.0
  %6055 = vmatpush1.msra.mxu0 %v5484
  %6056 = vmatprep.subr.mxu0 0.0
  %6057 = vmatpush1.msra.mxu0 %v5485
  %6058 = vmatprep.subr.mxu0 0.0
  %6059 = vmatpush1.msra.mxu0 %v5486
  %6060 = vmatprep.subr.mxu0 0.0
  %6061 = vmatpush1.msra.mxu0 %v5487
  %6062 = vmatprep.subr.mxu0 0.0
  %6063 = vmatpush1.msra.mxu0 %v5488
  %6064 = vmatprep.subr.mxu0 0.0
  %6065 = vmatpush1.msra.mxu0 %v5489
  %6066 = vmatprep.subr.mxu0 0.0
  %6067 = vmatpush1.msra.mxu0 %v5490
  %6068 = vmatprep.subr.mxu0 0.0
  %6069 = vmatpush1.msra.mxu0 %v5491
  %6070 = vmatprep.subr.mxu0 0.0
  %6071 = vmatpush1.msra.mxu0 %v5492
  %6072 = vmatprep.subr.mxu0 0.0
  %6073 = vmatpush1.msra.mxu0 %v5493
  %6074 = vmatprep.subr.mxu0 0.0
  %6075 = vmatpush1.msra.mxu0 %v5494
  %6076 = vmatprep.subr.mxu0 0.0
  %6077 = vmatpush1.msra.mxu0 %v5495
  %6078 = vmatprep.subr.mxu0 0.0
  %6079 = vmatpush1.msra.mxu0 %v5496
  %6080 = vmatprep.subr.mxu0 0.0
  %6081 = vmatpush1.msra.mxu0 %v5497
  %6082 = vmatprep.subr.mxu0 0.0
  %6083 = vmatpush1.msra.mxu0 %v5498
  %6084 = vmatprep.mubr.f32.mxu0 %v5627
  %6085 = vmatmul.mubr.f32.gmra.mrb[0].mxu0 %v5625
  %v6086 = vpop.f32.mrb[0].mxu0
  %v6087 = vadd.f32 %v6017, %v6086
  %v6088 = vpop.f32.mrb[0].mxu0
  %6089 = vdwg.mxu0
  %6090 = vmatprep.subr.mxu0 0.0
  %6091 = vmatpush1.msra.mxu0 %v5499
  %6092 = vmatprep.subr.mxu0 0.0
  %6093 = vmatpush1.msra.mxu0 %v5500
  %6094 = vmatprep.subr.mxu0 0.0
  %6095 = vmatpush1.msra.mxu0 %v5501
  %6096 = vmatprep.subr.mxu0 0.0
  %6097 = vmatpush1.msra.mxu0 %v5502
  %6098 = vmatprep.subr.mxu0 0.0
  %6099 = vmatpush1.msra.mxu0 %v5503
  %6100 = vmatprep.subr.mxu0 0.0
  %6101 = vmatpush1.msra.mxu0 %v5504
  %6102 = vmatprep.subr.mxu0 0.0
  %6103 = vmatpush1.msra.mxu0 %v5505
  %6104 = vmatprep.subr.mxu0 0.0
  %6105 = vmatpush1.msra.mxu0 %v5506
  %6106 = vmatprep.subr.mxu0 0.0
  %6107 = vmatpush1.msra.mxu0 %v5507
  %6108 = vmatprep.subr.mxu0 0.0
  %6109 = vmatpush1.msra.mxu0 %v5508
  %6110 = vmatprep.subr.mxu0 0.0
  %6111 = vmatpush1.msra.mxu0 %v5509
  %6112 = vmatprep.subr.mxu0 0.0
  %6113 = vmatpush1.msra.mxu0 %v5510
  %6114 = vmatprep.subr.mxu0 0.0
  %6115 = vmatpush1.msra.mxu0 %v5511
  %6116 = vmatprep.subr.mxu0 0.0
  %6117 = vmatpush1.msra.mxu0 %v5512
  %6118 = vmatprep.subr.mxu0 0.0
  %6119 = vmatpush1.msra.mxu0 %v5513
  %6120 = vmatprep.subr.mxu0 0.0
  %6121 = vmatpush1.msra.mxu0 %v5514
  %6122 = vmatprep.subr.mxu0 0.0
  %6123 = vmatpush1.msra.mxu0 %v5515
  %6124 = vmatprep.subr.mxu0 0.0
  %6125 = vmatpush1.msra.mxu0 %v5516
  %6126 = vmatprep.subr.mxu0 0.0
  %6127 = vmatpush1.msra.mxu0 %v5517
  %6128 = vmatprep.subr.mxu0 0.0
  %6129 = vmatpush1.msra.mxu0 %v5518
  %6130 = vmatprep.subr.mxu0 0.0
  %6131 = vmatpush1.msra.mxu0 %v5519
  %6132 = vmatprep.subr.mxu0 0.0
  %6133 = vmatpush1.msra.mxu0 %v5520
  %6134 = vmatprep.subr.mxu0 0.0
  %6135 = vmatpush1.msra.mxu0 %v5521
  %6136 = vmatprep.subr.mxu0 0.0
  %6137 = vmatpush1.msra.mxu0 %v5522
  %6138 = vmatprep.subr.mxu0 0.0
  %6139 = vmatpush1.msra.mxu0 %v5523
  %6140 = vmatprep.subr.mxu0 0.0
  %6141 = vmatpush1.msra.mxu0 %v5524
  %6142 = vmatprep.subr.mxu0 0.0
  %6143 = vmatpush1.msra.mxu0 %v5525
  %6144 = vmatprep.subr.mxu0 0.0
  %6145 = vmatpush1.msra.mxu0 %v5526
  %6146 = vmatprep.subr.mxu0 0.0
  %6147 = vmatpush1.msra.mxu0 %v5527
  %6148 = vmatprep.subr.mxu0 0.0
  %6149 = vmatpush1.msra.mxu0 %v5528
  %6150 = vmatprep.subr.mxu0 0.0
  %6151 = vmatpush1.msra.mxu0 %v5529
  %6152 = vmatprep.subr.mxu0 0.0
  %6153 = vmatpush1.msra.mxu0 %v5530
  %6154 = vmatprep.mubr.f32.mxu0 %v5643
  %6155 = vmatmul.mubr.f32.gmra.mrb[0].mxu0 %v5635
  %v6156 = vpop.f32.mrb[0].mxu0
  %v6157 = vadd.f32 %v6087, %v6156
  %v6158 = vpop.f32.mrb[0].mxu0
  %6159 = vdwg.mxu0
  %6160 = vmatprep.subr.mxu0 0.0
  %6161 = vmatpush1.msra.mxu0 %v5531
  %6162 = vmatprep.subr.mxu0 0.0
  %6163 = vmatpush1.msra.mxu0 %v5532
  %6164 = vmatprep.subr.mxu0 0.0
  %6165 = vmatpush1.msra.mxu0 %v5533
  %6166 = vmatprep.subr.mxu0 0.0
  %6167 = vmatpush1.msra.mxu0 %v5534
  %6168 = vmatprep.subr.mxu0 0.0
  %6169 = vmatpush1.msra.mxu0 %v5535
  %6170 = vmatprep.subr.mxu0 0.0
  %6171 = vmatpush1.msra.mxu0 %v5536
  %6172 = vmatprep.subr.mxu0 0.0
  %6173 = vmatpush1.msra.mxu0 %v5537
  %6174 = vmatprep.subr.mxu0 0.0
  %6175 = vmatpush1.msra.mxu0 %v5538
  %6176 = vmatprep.subr.mxu0 0.0
  %6177 = vmatpush1.msra.mxu0 %v5539
  %6178 = vmatprep.subr.mxu0 0.0
  %6179 = vmatpush1.msra.mxu0 %v5540
  %6180 = vmatprep.subr.mxu0 0.0
  %6181 = vmatpush1.msra.mxu0 %v5541
  %6182 = vmatprep.subr.mxu0 0.0
  %6183 = vmatpush1.msra.mxu0 %v5542
  %6184 = vmatprep.subr.mxu0 0.0
  %6185 = vmatpush1.msra.mxu0 %v5543
  %6186 = vmatprep.subr.mxu0 0.0
  %6187 = vmatpush1.msra.mxu0 %v5544
  %6188 = vmatprep.subr.mxu0 0.0
  %6189 = vmatpush1.msra.mxu0 %v5545
  %6190 = vmatprep.subr.mxu0 0.0
  %6191 = vmatpush1.msra.mxu0 %v5546
  %6192 = vmatprep.subr.mxu0 0.0
  %6193 = vmatpush1.msra.mxu0 %v5547
  %6194 = vmatprep.subr.mxu0 0.0
  %6195 = vmatpush1.msra.mxu0 %v5548
  %6196 = vmatprep.subr.mxu0 0.0
  %6197 = vmatpush1.msra.mxu0 %v5549
  %6198 = vmatprep.subr.mxu0 0.0
  %6199 = vmatpush1.msra.mxu0 %v5550
  %6200 = vmatprep.subr.mxu0 0.0
  %6201 = vmatpush1.msra.mxu0 %v5551
  %6202 = vmatprep.subr.mxu0 0.0
  %6203 = vmatpush1.msra.mxu0 %v5552
  %6204 = vmatprep.subr.mxu0 0.0
  %6205 = vmatpush1.msra.mxu0 %v5553
  %6206 = vmatprep.subr.mxu0 0.0
  %6207 = vmatpush1.msra.mxu0 %v5554
  %6208 = vmatprep.subr.mxu0 0.0
  %6209 = vmatpush1.msra.mxu0 %v5555
  %6210 = vmatprep.subr.mxu0 0.0
  %6211 = vmatpush1.msra.mxu0 %v5556
  %6212 = vmatprep.subr.mxu0 0.0
  %6213 = vmatpush1.msra.mxu0 %v5557
  %6214 = vmatprep.subr.mxu0 0.0
  %6215 = vmatpush1.msra.mxu0 %v5558
  %6216 = vmatprep.subr.mxu0 0.0
  %6217 = vmatpush1.msra.mxu0 %v5559
  %6218 = vmatprep.subr.mxu0 0.0
  %6219 = vmatpush1.msra.mxu0 %v5560
  %6220 = vmatprep.subr.mxu0 0.0
  %6221 = vmatpush1.msra.mxu0 %v5561
  %6222 = vmatprep.subr.mxu0 0.0
  %6223 = vmatpush1.msra.mxu0 %v5562
  %6224 = vmatprep.mubr.f32.mxu0 %v5644
  %6225 = vmatmul.mubr.f32.gmra.mrb[0].mxu0 %v5642
  %v6226 = vpop.f32.mrb[0].mxu0
  %v6227 = vadd.f32 %v6157, %v6226
  %v6228 = vpop.f32.mrb[0].mxu0
  %6229 = vdwg.mxu0
  %6230 = vmatprep.subr.mxu0 0.0
  %6231 = vmatpush1.msra.mxu0 %v5563
  %6232 = vmatprep.subr.mxu0 0.0
  %6233 = vmatpush1.msra.mxu0 %v5564
  %6234 = vmatprep.subr.mxu0 0.0
  %6235 = vmatpush1.msra.mxu0 0.0
  %6236 = vmatprep.subr.mxu0 0.0
  %6237 = vmatpush1.msra.mxu0 0.0
  %6238 = vmatprep.subr.mxu0 0.0
  %6239 = vmatpush1.msra.mxu0 0.0
  %6240 = vmatprep.subr.mxu0 0.0
  %6241 = vmatpush1.msra.mxu0 0.0
  %6242 = vmatprep.subr.mxu0 0.0
  %6243 = vmatpush1.msra.mxu0 0.0
  %6244 = vmatprep.subr.mxu0 0.0
  %6245 = vmatpush1.msra.mxu0 0.0
  %6246 = vmatprep.subr.mxu0 0.0
  %6247 = vmatpush1.msra.mxu0 0.0
  %6248 = vmatprep.subr.mxu0 0.0
  %6249 = vmatpush1.msra.mxu0 0.0
  %6250 = vmatprep.subr.mxu0 0.0
  %6251 = vmatpush1.msra.mxu0 0.0
  %6252 = vmatprep.subr.mxu0 0.0
  %6253 = vmatpush1.msra.mxu0 0.0
  %6254 = vmatprep.subr.mxu0 0.0
  %6255 = vmatpush1.msra.mxu0 0.0
  %6256 = vmatprep.subr.mxu0 0.0
  %6257 = vmatpush1.msra.mxu0 0.0
  %6258 = vmatprep.subr.mxu0 0.0
  %6259 = vmatpush1.msra.mxu0 0.0
  %6260 = vmatprep.subr.mxu0 0.0
  %6261 = vmatpush1.msra.mxu0 0.0
  %6262 = vmatprep.subr.mxu0 0.0
  %6263 = vmatpush1.msra.mxu0 0.0
  %6264 = vmatprep.subr.mxu0 0.0
  %6265 = vmatpush1.msra.mxu0 0.0
  %6266 = vmatprep.subr.mxu0 0.0
  %6267 = vmatpush1.msra.mxu0 0.0
  %6268 = vmatprep.subr.mxu0 0.0
  %6269 = vmatpush1.msra.mxu0 0.0
  %6270 = vmatprep.subr.mxu0 0.0
  %6271 = vmatpush1.msra.mxu0 0.0
  %6272 = vmatprep.subr.mxu0 0.0
  %6273 = vmatpush1.msra.mxu0 0.0
  %6274 = vmatprep.subr.mxu0 0.0
  %6275 = vmatpush1.msra.mxu0 0.0
  %6276 = vmatprep.subr.mxu0 0.0
  %6277 = vmatpush1.msra.mxu0 0.0
  %6278 = vmatprep.subr.mxu0 0.0
  %6279 = vmatpush1.msra.mxu0 0.0
  %6280 = vmatprep.subr.mxu0 0.0
  %6281 = vmatpush1.msra.mxu0 0.0
  %6282 = vmatprep.subr.mxu0 0.0
  %6283 = vmatpush1.msra.mxu0 0.0
  %6284 = vmatprep.subr.mxu0 0.0
  %6285 = vmatpush1.msra.mxu0 0.0
  %6286 = vmatprep.subr.mxu0 0.0
  %6287 = vmatpush1.msra.mxu0 0.0
  %6288 = vmatprep.subr.mxu0 0.0
  %6289 = vmatpush1.msra.mxu0 0.0
  %6290 = vmatprep.subr.mxu0 0.0
  %6291 = vmatpush1.msra.mxu0 0.0
  %6292 = vmatprep.subr.mxu0 0.0
  %6293 = vmatpush1.msra.mxu0 0.0
  %6294 = vmatprep.mubr.f32.mxu0 0.0
  %6295 = vmatmul.mubr.f32.gmra.mrb[0].mxu0 %v5668
  %v6296 = vpop.f32.mrb[0].mxu0
  %v6297 = vadd.f32 %v6227, %v6296
  %v6298 = vpop.f32.mrb[0].mxu0
  %6299 = vdwg.mxu0
  %v6300 = vmax.f32 %v6297, 0.0
  %v6301 = vld [vmem:[%s12] sm:$0xff]
  %v6302 = vld [vmem:[%s12 + $0x8] sm:$0xff]
  %v6303 = vld [vmem:[%s12 + $0x10] sm:$0xff]
  %v6304 = vld [vmem:[%s12 + $0x18] sm:$0xff]
  %v6305 = vld [vmem:[%s12 + $0x20] sm:$0xff]
  %v6306 = vld [vmem:[%s12 + $0x28] sm:$0xff]
  %v6307 = vld [vmem:[%s12 + $0x30] sm:$0xff]
  %v6308 = vld [vmem:[%s12 + $0x38] sm:$0xff]
  %v6309 = vld [vmem:[%s13] sm:$0x1]
  %v6311 = vlaneseq
  %v6312 = vshrl.u32 %v6311, 7
  %v6313 = vsub.s32 0, %v6312
  %v6314 = vrot.slane %v6309, %v6313
  %vm6316 = vcmask 523264
  %v6318 = vsel %vm6316, %v6300, 0
  %6320 = vmatprep.subr.mxu0 0.0
  %6321 = vmatpush1.msra.mxu0 %v6301
  %6322 = vmatprep.subr.mxu0 0.0
  %6323 = vmatpush1.msra.mxu0 %v6302
  %6324 = vmatprep.subr.mxu0 0.0
  %6325 = vmatpush1.msra.mxu0 %v6303
  %6326 = vmatprep.subr.mxu0 0.0
  %6327 = vmatpush1.msra.mxu0 %v6304
  %6328 = vmatprep.subr.mxu0 0.0
  %6329 = vmatpush1.msra.mxu0 %v6305
  %6330 = vmatprep.subr.mxu0 0.0
  %6331 = vmatpush1.msra.mxu0 %v6306
  %6332 = vmatprep.subr.mxu0 0.0
  %6333 = vmatpush1.msra.mxu0 %v6307
  %6334 = vmatprep.subr.mxu0 0.0
  %6335 = vmatpush1.msra.mxu0 %v6308
  %6336 = vmatprep.subr.mxu0 0.0
  %6337 = vmatpush1.msra.mxu0 0.0
  %6338 = vmatprep.subr.mxu0 0.0
  %6339 = vmatpush1.msra.mxu0 0.0
  %6340 = vmatprep.subr.mxu0 0.0
  %6341 = vmatpush1.msra.mxu0 0.0
  %6342 = vmatprep.subr.mxu0 0.0
  %6343 = vmatpush1.msra.mxu0 0.0
  %6344 = vmatprep.subr.mxu0 0.0
  %6345 = vmatpush1.msra.mxu0 0.0
  %6346 = vmatprep.subr.mxu0 0.0
  %6347 = vmatpush1.msra.mxu0 0.0
  %6348 = vmatprep.subr.mxu0 0.0
  %6349 = vmatpush1.msra.mxu0 0.0
  %6350 = vmatprep.subr.mxu0 0.0
  %6351 = vmatpush1.msra.mxu0 0.0
  %6352 = vmatprep.subr.mxu0 0.0
  %6353 = vmatpush1.msra.mxu0 0.0
  %6354 = vmatprep.subr.mxu0 0.0
  %6355 = vmatpush1.msra.mxu0 0.0
  %6356 = vmatprep.subr.mxu0 0.0
  %6357 = vmatpush1.msra.mxu0 0.0
  %6358 = vmatprep.subr.mxu0 0.0
  %6359 = vmatpush1.msra.mxu0 0.0
  %6360 = vmatprep.subr.mxu0 0.0
  %6361 = vmatpush1.msra.mxu0 0.0
  %6362 = vmatprep.subr.mxu0 0.0
  %6363 = vmatpush1.msra.mxu0 0.0
  %6364 = vmatprep.subr.mxu0 0.0
  %6365 = vmatpush1.msra.mxu0 0.0
  %6366 = vmatprep.subr.mxu0 0.0
  %6367 = vmatpush1.msra.mxu0 0.0
  %6368 = vmatprep.subr.mxu0 0.0
  %6369 = vmatpush1.msra.mxu0 0.0
  %6370 = vmatprep.subr.mxu0 0.0
  %6371 = vmatpush1.msra.mxu0 0.0
  %6372 = vmatprep.subr.mxu0 0.0
  %6373 = vmatpush1.msra.mxu0 0.0
  %6374 = vmatprep.subr.mxu0 0.0
  %6375 = vmatpush1.msra.mxu0 0.0
  %6376 = vmatprep.subr.mxu0 0.0
  %6377 = vmatpush1.msra.mxu0 0.0
  %6378 = vmatprep.subr.mxu0 0.0
  %6379 = vmatpush1.msra.mxu0 0.0
  %6380 = vmatprep.subr.mxu0 0.0
  %6381 = vmatpush1.msra.mxu0 0.0
  %6382 = vmatprep.subr.mxu0 0.0
  %6383 = vmatpush1.msra.mxu0 0.0
  %6384 = vmatprep.mubr.f32.mxu0 0.0
  %6385 = vmatmul.mubr.f32.gmra.mrb[0].mxu0 %v6318
  %v6386 = vpop.f32.mrb[0].mxu0
  %v6387 = vadd.f32 %v6314, %v6386
  %v6388 = vpop.f32.mrb[0].mxu0
  %6389 = vdwg.mxu0
  %v6390 = vmax.f32 %v6387, 0.0
  %v6391 = vld [vmem:[%s14] sm:$0xff]
  %v6392 = vld [vmem:[%s14 + $0x8] sm:$0xff]
  %v6393 = vld [vmem:[%s14 + $0x10] sm:$0xff]
  %v6394 = vld [vmem:[%s14 + $0x18] sm:$0xff]
  %v6395 = vld [vmem:[%s14 + $0x20] sm:$0xff]
  %v6396 = vld [vmem:[%s14 + $0x28] sm:$0xff]
  %v6397 = vld [vmem:[%s14 + $0x30] sm:$0xff]
  %v6398 = vld [vmem:[%s14 + $0x38] sm:$0xff]
  %v6399 = vld [vmem:[%s14 + $0x40] sm:$0xff]
  %v6400 = vld [vmem:[%s14 + $0x48] sm:$0xff]
  %v6401 = vld [vmem:[%s14 + $0x50] sm:$0xff]
  %v6402 = vld [vmem:[%s14 + $0x58] sm:$0xff]
  %v6403 = vld [vmem:[%s14 + $0x60] sm:$0xff]
  %v6404 = vld [vmem:[%s14 + $0x68] sm:$0xff]
  %v6405 = vld [vmem:[%s14 + $0x70] sm:$0xff]
  %v6406 = vld [vmem:[%s14 + $0x78] sm:$0xff]
  %v6407 = vld [vmem:[%s14 + $0x80] sm:$0xff]
  %v6408 = vld [vmem:[%s14 + $0x88] sm:$0xff]
  %v6409 = vld [vmem:[%s14 + $0x90] sm:$0xff]
  %v6410 = vld [vmem:[%s14 + $0x98] sm:$0xff]
  %v6411 = vld [vmem:[%s14 + $0xa0] sm:$0xff]
  %v6412 = vld [vmem:[%s14 + $0xa8] sm:$0xff]
  %v6413 = vld [vmem:[%s14 + $0xb0] sm:$0xff]
  %v6414 = vld [vmem:[%s14 + $0xb8] sm:$0xff]
  %v6415 = vld [vmem:[%s14 + $0xc0] sm:$0xff]
  %v6416 = vld [vmem:[%s14 + $0xc8] sm:$0xff]
  %v6417 = vld [vmem:[%s14 + $0xd0] sm:$0xff]
  %v6418 = vld [vmem:[%s14 + $0xd8] sm:$0xff]
  %v6419 = vld [vmem:[%s14 + $0xe0] sm:$0xff]
  %v6420 = vld [vmem:[%s14 + $0xe8] sm:$0xff]
  %v6421 = vld [vmem:[%s14 + $0xf0] sm:$0xff]
  %v6422 = vld [vmem:[%s14 + $0xf8] sm:$0xff]
  %v6423 = vld [vmem:[%s15] sm:$0x3]
  %v6425 = vlaneseq
  %v6426 = vshrl.u32 %v6425, 7
  %v6427 = vsub.s32 0, %v6426
  %v6428 = vrot.slane %v6423, %v6427
  %v6429 = vlaneseq
  %v6430 = vshrl.u32 %v6429, 7
  %v6431 = vsub.s32 1, %v6430
  %v6432 = vrot.slane %v6423, %v6431
  %6435 = vmatprep.subr.mxu0 %v6392
  %6436 = vmatpush1.msra.mxu0 %v6391
  %6437 = vmatprep.subr.mxu0 %v6394
  %6438 = vmatpush1.msra.mxu0 %v6393
  %6439 = vmatprep.subr.mxu0 %v6396
  %6440 = vmatpush1.msra.mxu0 %v6395
  %6441 = vmatprep.subr.mxu0 %v6398
  %6442 = vmatpush1.msra.mxu0 %v6397
  %6443 = vmatprep.subr.mxu0 %v6400
  %6444 = vmatpush1.msra.mxu0 %v6399
  %6445 = vmatprep.subr.mxu0 %v6402
  %6446 = vmatpush1.msra.mxu0 %v6401
  %6447 = vmatprep.subr.mxu0 %v6404
  %6448 = vmatpush1.msra.mxu0 %v6403
  %6449 = vmatprep.subr.mxu0 %v6406
  %6450 = vmatpush1.msra.mxu0 %v6405
  %6451 = vmatprep.subr.mxu0 %v6408
  %6452 = vmatpush1.msra.mxu0 %v6407
  %6453 = vmatprep.subr.mxu0 %v6410
  %6454 = vmatpush1.msra.mxu0 %v6409
  %6455 = vmatprep.subr.mxu0 %v6412
  %6456 = vmatpush1.msra.mxu0 %v6411
  %6457 = vmatprep.subr.mxu0 %v6414
  %6458 = vmatpush1.msra.mxu0 %v6413
  %6459 = vmatprep.subr.mxu0 %v6416
  %6460 = vmatpush1.msra.mxu0 %v6415
  %6461 = vmatprep.subr.mxu0 %v6418
  %6462 = vmatpush1.msra.mxu0 %v6417
  %6463 = vmatprep.subr.mxu0 %v6420
  %6464 = vmatpush1.msra.mxu0 %v6419
  %6465 = vmatprep.subr.mxu0 %v6422
  %6466 = vmatpush1.msra.mxu0 %v6421
  %6467 = vmatprep.subr.mxu0 0.0
  %6468 = vmatpush1.msra.mxu0 0.0
  %6469 = vmatprep.subr.mxu0 0.0
  %6470 = vmatpush1.msra.mxu0 0.0
  %6471 = vmatprep.subr.mxu0 0.0
  %6472 = vmatpush1.msra.mxu0 0.0
  %6473 = vmatprep.subr.mxu0 0.0
  %6474 = vmatpush1.msra.mxu0 0.0
  %6475 = vmatprep.subr.mxu0 0.0
  %6476 = vmatpush1.msra.mxu0 0.0
  %6477 = vmatprep.subr.mxu0 0.0
  %6478 = vmatpush1.msra.mxu0 0.0
  %6479 = vmatprep.subr.mxu0 0.0
  %6480 = vmatpush1.msra.mxu0 0.0
  %6481 = vmatprep.subr.mxu0 0.0
  %6482 = vmatpush1.msra.mxu0 0.0
  %6483 = vmatprep.subr.mxu0 0.0
  %6484 = vmatpush1.msra.mxu0 0.0
  %6485 = vmatprep.subr.mxu0 0.0
  %6486 = vmatpush1.msra.mxu0 0.0
  %6487 = vmatprep.subr.mxu0 0.0
  %6488 = vmatpush1.msra.mxu0 0.0
  %6489 = vmatprep.subr.mxu0 0.0
  %6490 = vmatpush1.msra.mxu0 0.0
  %6491 = vmatprep.subr.mxu0 0.0
  %6492 = vmatpush1.msra.mxu0 0.0
  %6493 = vmatprep.subr.mxu0 0.0
  %6494 = vmatpush1.msra.mxu0 0.0
  %6495 = vmatprep.subr.mxu0 0.0
  %6496 = vmatpush1.msra.mxu0 0.0
  %6497 = vmatprep.subr.mxu0 0.0
  %6498 = vmatpush1.msra.mxu0 0.0
  %6499 = vmatprep.mubr.f32.mxu0 0.0
  %6500 = vmatmul.mubr.f32.gmra.mrb[0].mxu0 %v6390
  %v6501 = vpop.f32.mrb[0].mxu0
  %v6502 = vadd.f32 %v6428, %v6501
  %v6503 = vpop.f32.mrb[0].mxu0
  %v6504 = vadd.f32 %v6432, %v6503
  %6505 = vdwg.mxu0
  %v6508 = vcombine.low %v6502, %v6504
  %v6510 = vunpack.c.l.s4 1983009808
  %v6511 = vunpack.c.0.s8 %v6510
  %v6512 = vlaneseq
  %v6513 = vshrl.u32 %v6512, 7
  %v6514 = vsub.s32 %v6511, %v6513
  %v6515 = vrot.slane %v6508, %v6514
  %6517 = vst [vmem:[%s16] sm:$0xf] %v6515
  // Predicated region
  $region66: #{alpha_triangle_net_pallas.1} parent=0 // pred_check
    _
  $region67: #{alpha_triangle_net_pallas.1} parent=0 // pred_check_branch
    %6519 = sbr.rel (0) target = $region69
  $region68: #{alpha_triangle_net_pallas.1} parent=0 // pred_region
    _
  $region69: #{alpha_triangle_net_pallas.1} parent=0 // pred_fallthru
    _
  // Predicated region
  $region70: #{alpha_triangle_net_pallas.1} parent=0 // pred_check
    _
  $region71: #{alpha_triangle_net_pallas.1} parent=0 // pred_check_branch
    %6521 = sbr.rel (0) target = $region73
  $region72: #{alpha_triangle_net_pallas.1} parent=0 // pred_region
    _
  $region73: #{alpha_triangle_net_pallas.1} parent=0 // pred_fallthru
    _

</llo_original>
